<compile_context>
chip_gen: v7x
topology: tpu7x:2x2x1
jax: 0.10.0
libtpu: 0.0.40
codegen_flags: <defaults>
</compile_context>

<pallas_src>
import functools

import numpy as np
import jax
import jax.numpy as jnp
from jax import lax
from jax.experimental import pallas as pl
from jax.experimental.pallas import tpu as pltpu

_VMEM = pl.BlockSpec(memory_space=pltpu.MemorySpace.VMEM)
_SMEM = pl.BlockSpec(memory_space=pltpu.MemorySpace.SMEM)
_BN_EPS = 1e-5


# ----------------------------------------------------------------------------
# In-kernel helpers
# ----------------------------------------------------------------------------
def _bn_relu(h, g, be):
    # nn.BatchNorm2d in train mode: batch statistics over all B*H*W rows,
    # biased variance, then affine; followed by ReLU.  All in f32.
    mean = jnp.mean(h, axis=0, keepdims=True)
    var = jnp.mean(jnp.square(h - mean), axis=0, keepdims=True)
    return jnp.maximum((h - mean) * lax.rsqrt(var + _BN_EPS) * g + be, 0.0)


def _scorenet_score(f_bf16, Ri, Rj, p, swap):
    """Per-(i,j) ScoreNet scalar for every flat row p = ((b*N+i)*N + j).

    swap=False -> scorenet(f)[b, i, j];  swap=True -> scorenet(f)[b, j, i]
    (i.e. the transposed output grid), obtained by swapping the expansion
    matrices — BatchNorm stats are permutation-invariant so this is exact.
    """
    (w1a, w1b, b1, g1, be1, w2, b2, g2, be2, w3, b3, g3, be3, w4, b4) = p
    # 1x1 conv1, split: project the N per-vertex features once.
    A = jnp.dot(f_bf16, w1a[...], preferred_element_type=jnp.float32)   # (B*N, 256)
    Bm = jnp.dot(f_bf16, w1b[...], preferred_element_type=jnp.float32)  # (B*N, 256)
    left, right = (Rj, Ri) if swap else (Ri, Rj)
    # Pairwise expansion via 0/1 selection matmuls (MXU, no relayout).
    # (conv biases b1..b3 cancel under train-mode BN; kept for literal fidelity)
    h = (jnp.dot(left, A, preferred_element_type=jnp.float32)
         + jnp.dot(right, Bm, preferred_element_type=jnp.float32)
         + b1[...])                                                     # (P, 256)
    h = _bn_relu(h, g1[...], be1[...])
    h = jnp.dot(h.astype(jnp.bfloat16), w2[...],
                preferred_element_type=jnp.float32) + b2[...]           # (P, 128)
    h = _bn_relu(h, g2[...], be2[...])
    h = jnp.dot(h.astype(jnp.bfloat16), w3[...],
                preferred_element_type=jnp.float32) + b3[...]           # (P, 64)
    h = _bn_relu(h, g3[...], be3[...])
    # conv4: 64 -> 1, as a per-row dot (avoids an N=1 MXU matmul).
    return jnp.sum(h * w4[...], axis=-1, keepdims=True) + b4[...]       # (P, 1)


# ----------------------------------------------------------------------------
# Fused ScoreNet1 + ScoreNet2^T + log-optimal-transport + softmax kernel
# ----------------------------------------------------------------------------
def _fused_kernel(*refs, B, N, iters, norm, nlog):
    (f_ref, ri_ref, rj_ref, csel_ref, gsel_ref) = refs[0:5]
    p1 = refs[5:20]          # ScoreNet1 params (15 refs)
    p2 = refs[20:35]         # ScoreNet2 params (15 refs)
    bs_ref = refs[35]        # bin_score scalar (SMEM)
    out_ref = refs[36]       # (B, N, N) output
    z_sc = refs[37]          # (B, N+1, N+1) VMEM scratch (coupling matrix)
    N1 = N + 1

    f = f_ref[...]                       # (B*N, D) bf16
    Ri = ri_ref[...]                     # (P, B*N) row-of-i selector
    Rj = rj_ref[...]                     # (P, B*N) row-of-j selector

    # perm_mat = scorenet1(feats) + scorenet2(feats)^T, per flat row p=(b,i,j)
    s = (_scorenet_score(f, Ri, Rj, p1, swap=False)
         + _scorenet_score(f, Ri, Rj, p2, swap=True))                   # (P, 1)

    # Fold the j index into lanes: S2d[b*N+i, j] = s[(b*N+i)*N + j]
    S2d = jnp.dot(gsel_ref[...], s * csel_ref[...],
                  preferred_element_type=jnp.float32)                   # (B*N, N)

    # Build couplings = [[scores, alpha],[alpha, alpha]] in VMEM scratch.
    alpha = bs_ref[0]
    z_sc[...] = jnp.full((B, N1, N1), alpha, jnp.float32)
    for b in range(B):                   # B is a tiny static int
        z_sc[b, 0:N, 0:N] = S2d[b * N:(b + 1) * N, :]
    Z = z_sc[...]                        # (B, N+1, N+1)

    # log_mu / log_nu (m == n == N): [norm]*N ++ [log(N) + norm]
    idx = lax.broadcasted_iota(jnp.int32, (B, N1), 1)
    log_mu = jnp.where(idx < N, jnp.float32(norm), jnp.float32(nlog + norm))
    log_nu = log_mu

    def lse(x, axis):
        mx = jnp.max(x, axis=axis)
        return jnp.log(jnp.sum(jnp.exp(x - jnp.expand_dims(mx, axis)),
                               axis=axis)) + mx

    # Sinkhorn iterations in log space — statically unrolled.
    u = jnp.zeros((B, N1), jnp.float32)
    v = jnp.zeros((B, N1), jnp.float32)
    for _ in range(iters):
        u = log_mu - lse(Z + v[:, None, :], axis=2)
        v = log_nu - lse(Z + u[:, :, None], axis=1)

    Zf = Z + u[:, :, None] + v[:, None, :] - norm
    Zs = Zf[:, 0:N, 0:N]
    Zs = Zs - jnp.max(Zs, axis=-1, keepdims=True)
    e = jnp.exp(Zs)
    out_ref[...] = e * pl.reciprocal(jnp.sum(e, axis=-1, keepdims=True),
                                     approx=True)


def fused_scorenet_sinkhorn(feats, params1, params2, bin_score,
                            n_vertices, sinkhorn_iterations):
    """feats: (B, L, D) with L = 2*n_vertices + 1.  Returns (B, N, N) perm_mat."""
    B, L, D = feats.shape
    N = n_vertices
    assert L == 2 * N + 1

    # feats[:, 1:] -> pair-mean of consecutive tokens -> (B, N, D); bf16 for MXU
    f = feats[:, 1:, :].reshape(B, N, 2, D).mean(axis=2)
    f2d = f.reshape(B * N, D).astype(jnp.bfloat16)

    # Constant 0/1 selection matrices (tiny, built once with numpy).
    P = B * N * N
    p = np.arange(P)
    b_idx, i_idx, j_idx = p // (N * N), (p // N) % N, p % N
    rows = np.arange(B * N)
    Ri = ((b_idx * N + i_idx)[:, None] == rows[None, :]).astype(np.float32)  # (P, B*N)
    Rj = ((b_idx * N + j_idx)[:, None] == rows[None, :]).astype(np.float32)  # (P, B*N)
    Csel = (j_idx[:, None] == np.arange(N)[None, :]).astype(np.float32)      # (P, N)
    Gsel = np.ascontiguousarray(Ri.T)                                        # (B*N, P)

    norm = float(-np.log(2.0 * N))      # -log(m + n), m == n == N
    nlog = float(np.log(N))

    kernel = functools.partial(_fused_kernel, B=B, N=N,
                               iters=sinkhorn_iterations, norm=norm, nlog=nlog)
    n_vmem_in = 5 + len(params1) + len(params2)

    return pl.pallas_call(
        kernel,
        out_shape=jax.ShapeDtypeStruct((B, N, N), jnp.float32),
        in_specs=[_VMEM] * n_vmem_in + [_SMEM],
        out_specs=_VMEM,
        scratch_shapes=[pltpu.VMEM((B, N + 1, N + 1), jnp.float32)],
        compiler_params=pltpu.CompilerParams(vmem_limit_bytes=32 * 1024 * 1024),
    )(f2d, jnp.asarray(Ri), jnp.asarray(Rj), jnp.asarray(Csel), jnp.asarray(Gsel),
      *params1, *params2,
      jnp.asarray(bin_score, jnp.float32).reshape(1))


# ----------------------------------------------------------------------------
# Parameter init (deterministic) and glue
# ----------------------------------------------------------------------------
def init_scorenet_params(key, in_channels):
    D = in_channels // 2
    keys = jax.random.split(key, 8)
    w1 = jax.random.normal(keys[0], (in_channels, 256), jnp.float32) / np.sqrt(in_channels)
    w1a = w1[:D].astype(jnp.bfloat16)          # conv1.weight[:, :D]
    w1b = w1[D:].astype(jnp.bfloat16)          # conv1.weight[:, D:]
    b1 = jax.random.normal(keys[1], (1, 256), jnp.float32) * 0.01
    g1, be1 = jnp.ones((1, 256), jnp.float32), jnp.zeros((1, 256), jnp.float32)
    w2 = (jax.random.normal(keys[2], (256, 128), jnp.float32) / np.sqrt(256.0)).astype(jnp.bfloat16)
    b2 = jax.random.normal(keys[3], (1, 128), jnp.float32) * 0.01
    g2, be2 = jnp.ones((1, 128), jnp.float32), jnp.zeros((1, 128), jnp.float32)
    w3 = (jax.random.normal(keys[4], (128, 64), jnp.float32) / np.sqrt(128.0)).astype(jnp.bfloat16)
    b3 = jax.random.normal(keys[5], (1, 64), jnp.float32) * 0.01
    g3, be3 = jnp.ones((1, 64), jnp.float32), jnp.zeros((1, 64), jnp.float32)
    w4 = jax.random.normal(keys[6], (1, 64), jnp.float32) / np.sqrt(64.0)
    b4 = jax.random.normal(keys[7], (1, 1), jnp.float32) * 0.01
    return (w1a, w1b, b1, g1, be1, w2, b2, g2, be2, w3, b3, g3, be3, w4, b4)


def init_decoder_params(key, vocab, d_model):
    k1, k2, k3, k4 = jax.random.split(key, 4)
    emb = jax.random.normal(k1, (vocab, d_model), jnp.float32) * 0.02
    w_dec = jax.random.normal(k2, (d_model, d_model), jnp.float32) / np.sqrt(d_model)
    b_dec = jax.random.normal(k3, (d_model,), jnp.float32) * 0.01
    w_vocab = jax.random.normal(k4, (d_model, vocab), jnp.float32) / np.sqrt(d_model)
    return emb, w_dec, b_dec, w_vocab


def decoder_forward(encoder_out, tgt, dec_params):
    # TODO(synk): the reference `decoder` is an injected nn.Module with no
    # definition; this is a minimal deterministic synthetic decoder producing
    # (preds, feats) with the shapes the rest of the forward pass requires.
    emb, w_dec, b_dec, w_vocab = dec_params
    tgt_emb = emb[tgt]                                          # (B, L, D)
    mem = jnp.mean(encoder_out, axis=1, keepdims=True)          # (B, 1, D)
    feats = jnp.tanh(tgt_emb @ w_dec + b_dec + mem)             # (B, L, D)
    preds = feats @ w_vocab                                     # (B, L, V)
    return preds, feats


def encoder_decoder_with_encoded_images_forward(encoder_out, tgt, params,
                                                n_vertices, sinkhorn_iterations):
    preds, feats = decoder_forward(encoder_out, tgt, params["decoder"])
    perm_mat = fused_scorenet_sinkhorn(feats, params["scorenet1"],
                                       params["scorenet2"], params["bin_score"],
                                       n_vertices, sinkhorn_iterations)
    return preds, perm_mat


if __name__ == "__main__":
    key = jax.random.PRNGKey(0)
    k_enc, k_tgt, k_d, k_s1, k_s2 = jax.random.split(key, 5)

    B = 2                # batch
    S = 10               # encoder sequence length
    D = 256              # decoder hidden dim -> ScoreNet in_channels = 2*D = 512
    V = 32               # vocab size
    n_vertices = 8
    L = 2 * n_vertices + 1
    sinkhorn_iterations = 10

    params = {
        "decoder": init_decoder_params(k_d, V, D),
        "scorenet1": init_scorenet_params(k_s1, 2 * D),
        "scorenet2": init_scorenet_params(k_s2, 2 * D),
        "bin_score": jnp.float32(1.0),
    }

    encoder_out = jax.random.normal(k_enc, (B, S, D), jnp.float32)
    tgt = jax.random.randint(k_tgt, (B, L), 0, V, dtype=jnp.int32)

    fwd = jax.jit(functools.partial(encoder_decoder_with_encoded_images_forward,
                                    n_vertices=n_vertices,
                                    sinkhorn_iterations=sinkhorn_iterations))
    preds, perm_mat = fwd(encoder_out, tgt, params)
    jax.block_until_ready((preds, perm_mat))

    assert preds.shape == (B, L, V)
    assert perm_mat.shape == (B, n_vertices, n_vertices)
    assert bool(jnp.all(jnp.isfinite(perm_mat)))
    print("KERNEL_OK")
</pallas_src>

<mosaic_0001>
module attributes {stable_mosaic.version = 11 : i64} {
  func.func @_fused_kernel(%arg0: memref<16x256xbf16, #tpu.memory_space<vmem>>, %arg1: memref<128x16xf32, #tpu.memory_space<vmem>>, %arg2: memref<128x16xf32, #tpu.memory_space<vmem>>, %arg3: memref<128x8xf32, #tpu.memory_space<vmem>>, %arg4: memref<16x128xf32, #tpu.memory_space<vmem>>, %arg5: memref<256x256xbf16, #tpu.memory_space<vmem>>, %arg6: memref<256x256xbf16, #tpu.memory_space<vmem>>, %arg7: memref<1x256xf32, #tpu.memory_space<vmem>>, %arg8: memref<1x256xf32, #tpu.memory_space<vmem>>, %arg9: memref<1x256xf32, #tpu.memory_space<vmem>>, %arg10: memref<256x128xbf16, #tpu.memory_space<vmem>>, %arg11: memref<1x128xf32, #tpu.memory_space<vmem>>, %arg12: memref<1x128xf32, #tpu.memory_space<vmem>>, %arg13: memref<1x128xf32, #tpu.memory_space<vmem>>, %arg14: memref<128x64xbf16, #tpu.memory_space<vmem>>, %arg15: memref<1x64xf32, #tpu.memory_space<vmem>>, %arg16: memref<1x64xf32, #tpu.memory_space<vmem>>, %arg17: memref<1x64xf32, #tpu.memory_space<vmem>>, %arg18: memref<1x64xf32, #tpu.memory_space<vmem>>, %arg19: memref<1x1xf32, #tpu.memory_space<vmem>>, %arg20: memref<256x256xbf16, #tpu.memory_space<vmem>>, %arg21: memref<256x256xbf16, #tpu.memory_space<vmem>>, %arg22: memref<1x256xf32, #tpu.memory_space<vmem>>, %arg23: memref<1x256xf32, #tpu.memory_space<vmem>>, %arg24: memref<1x256xf32, #tpu.memory_space<vmem>>, %arg25: memref<256x128xbf16, #tpu.memory_space<vmem>>, %arg26: memref<1x128xf32, #tpu.memory_space<vmem>>, %arg27: memref<1x128xf32, #tpu.memory_space<vmem>>, %arg28: memref<1x128xf32, #tpu.memory_space<vmem>>, %arg29: memref<128x64xbf16, #tpu.memory_space<vmem>>, %arg30: memref<1x64xf32, #tpu.memory_space<vmem>>, %arg31: memref<1x64xf32, #tpu.memory_space<vmem>>, %arg32: memref<1x64xf32, #tpu.memory_space<vmem>>, %arg33: memref<1x64xf32, #tpu.memory_space<vmem>>, %arg34: memref<1x1xf32, #tpu.memory_space<vmem>>, %arg35: memref<1xf32, #tpu.memory_space<smem>>, %arg36: memref<2x8x8xf32, #tpu.memory_space<vmem>>, %arg37: memref<2x9x9xf32, #tpu.memory_space<vmem>>) attributes {dimension_semantics = [], scalar_prefetch = 0 : i64, scratch_operands = 1 : i64, tpu.core_type = #tpu.core_type<tc>} {
    %c0 = arith.constant 0 : index
    %c0_0 = arith.constant 0 : index
    %0 = vector.load %arg0[%c0, %c0_0] : memref<16x256xbf16, #tpu.memory_space<vmem>>, vector<16x256xbf16>
    %c0_1 = arith.constant 0 : index
    %c0_2 = arith.constant 0 : index
    %1 = vector.load %arg1[%c0_1, %c0_2] : memref<128x16xf32, #tpu.memory_space<vmem>>, vector<128x16xf32>
    %c0_3 = arith.constant 0 : index
    %c0_4 = arith.constant 0 : index
    %2 = vector.load %arg2[%c0_3, %c0_4] : memref<128x16xf32, #tpu.memory_space<vmem>>, vector<128x16xf32>
    %c0_5 = arith.constant 0 : index
    %c0_6 = arith.constant 0 : index
    %3 = vector.load %arg5[%c0_5, %c0_6] : memref<256x256xbf16, #tpu.memory_space<vmem>>, vector<256x256xbf16>
    %cst = arith.constant dense<0.000000e+00> : vector<16x256xf32>
    %4 = tpu.matmul %0, %3, %cst {dimension_numbers = #tpu.dot_dimension_numbers<[1], [0], [0], [1], [0, 0, 1, 1], [], []>} : vector<16x256xbf16>, vector<256x256xbf16>, vector<16x256xf32> -> vector<16x256xf32>
    %c0_7 = arith.constant 0 : index
    %c0_8 = arith.constant 0 : index
    %5 = vector.load %arg6[%c0_7, %c0_8] : memref<256x256xbf16, #tpu.memory_space<vmem>>, vector<256x256xbf16>
    %cst_9 = arith.constant dense<0.000000e+00> : vector<16x256xf32>
    %6 = tpu.matmul %0, %5, %cst_9 {dimension_numbers = #tpu.dot_dimension_numbers<[1], [0], [0], [1], [0, 0, 1, 1], [], []>} : vector<16x256xbf16>, vector<256x256xbf16>, vector<16x256xf32> -> vector<16x256xf32>
    %cst_10 = arith.constant dense<0.000000e+00> : vector<128x256xf32>
    %7 = tpu.matmul %1, %4, %cst_10 {dimension_numbers = #tpu.dot_dimension_numbers<[1], [0], [0], [1], [0, 0, 1, 1], [], []>} : vector<128x16xf32>, vector<16x256xf32>, vector<128x256xf32> -> vector<128x256xf32>
    %cst_11 = arith.constant dense<0.000000e+00> : vector<128x256xf32>
    %8 = tpu.matmul %2, %6, %cst_11 {dimension_numbers = #tpu.dot_dimension_numbers<[1], [0], [0], [1], [0, 0, 1, 1], [], []>} : vector<128x16xf32>, vector<16x256xf32>, vector<128x256xf32> -> vector<128x256xf32>
    %9 = arith.addf %7, %8 : vector<128x256xf32>
    %c0_12 = arith.constant 0 : index
    %c0_13 = arith.constant 0 : index
    %10 = vector.load %arg7[%c0_12, %c0_13] : memref<1x256xf32, #tpu.memory_space<vmem>>, vector<1x256xf32>
    %11 = vector.broadcast %10 : vector<1x256xf32> to vector<128x256xf32>
    %12 = arith.addf %9, %11 : vector<128x256xf32>
    %c0_14 = arith.constant 0 : index
    %c0_15 = arith.constant 0 : index
    %13 = vector.load %arg8[%c0_14, %c0_15] : memref<1x256xf32, #tpu.memory_space<vmem>>, vector<1x256xf32>
    %c0_16 = arith.constant 0 : index
    %c0_17 = arith.constant 0 : index
    %14 = vector.load %arg9[%c0_16, %c0_17] : memref<1x256xf32, #tpu.memory_space<vmem>>, vector<1x256xf32>
    %cst_18 = arith.constant dense<0.000000e+00> : vector<256xf32>
    %15 = vector.multi_reduction <add>, %12, %cst_18 [0] : vector<128x256xf32> to vector<256xf32>
    %16 = vector.shape_cast %15 : vector<256xf32> to vector<1x256xf32>
    %cst_19 = arith.constant 1.280000e+02 : f32
    %17 = vector.broadcast %cst_19 : f32 to vector<1x256xf32>
    %18 = arith.divf %16, %17 : vector<1x256xf32>
    %19 = vector.broadcast %18 : vector<1x256xf32> to vector<128x256xf32>
    %20 = arith.subf %12, %19 : vector<128x256xf32>
    %21 = arith.mulf %20, %20 : vector<128x256xf32>
    %cst_20 = arith.constant dense<0.000000e+00> : vector<256xf32>
    %22 = vector.multi_reduction <add>, %21, %cst_20 [0] : vector<128x256xf32> to vector<256xf32>
    %23 = vector.shape_cast %22 : vector<256xf32> to vector<1x256xf32>
    %cst_21 = arith.constant 1.280000e+02 : f32
    %24 = vector.broadcast %cst_21 : f32 to vector<1x256xf32>
    %25 = arith.divf %23, %24 : vector<1x256xf32>
    %26 = vector.broadcast %18 : vector<1x256xf32> to vector<128x256xf32>
    %27 = arith.subf %12, %26 : vector<128x256xf32>
    %cst_22 = arith.constant 9.99999974E-6 : f32
    %28 = vector.broadcast %cst_22 : f32 to vector<1x256xf32>
    %29 = arith.addf %25, %28 : vector<1x256xf32>
    %30 = math.rsqrt %29 : vector<1x256xf32>
    %31 = vector.broadcast %30 : vector<1x256xf32> to vector<128x256xf32>
    %32 = arith.mulf %27, %31 : vector<128x256xf32>
    %33 = vector.broadcast %13 : vector<1x256xf32> to vector<128x256xf32>
    %34 = arith.mulf %32, %33 : vector<128x256xf32>
    %35 = vector.broadcast %14 : vector<1x256xf32> to vector<128x256xf32>
    %36 = arith.addf %34, %35 : vector<128x256xf32>
    %cst_23 = arith.constant 0.000000e+00 : f32
    %37 = vector.broadcast %cst_23 : f32 to vector<128x256xf32>
    %38 = arith.maximumf %36, %37 : vector<128x256xf32>
    %39 = arith.truncf %38 : vector<128x256xf32> to vector<128x256xbf16>
    %c0_24 = arith.constant 0 : index
    %c0_25 = arith.constant 0 : index
    %40 = vector.load %arg10[%c0_24, %c0_25] : memref<256x128xbf16, #tpu.memory_space<vmem>>, vector<256x128xbf16>
    %cst_26 = arith.constant dense<0.000000e+00> : vector<128x128xf32>
    %41 = tpu.matmul %39, %40, %cst_26 {dimension_numbers = #tpu.dot_dimension_numbers<[1], [0], [0], [1], [0, 0, 1, 1], [], []>} : vector<128x256xbf16>, vector<256x128xbf16>, vector<128x128xf32> -> vector<128x128xf32>
    %c0_27 = arith.constant 0 : index
    %c0_28 = arith.constant 0 : index
    %42 = vector.load %arg11[%c0_27, %c0_28] : memref<1x128xf32, #tpu.memory_space<vmem>>, vector<1x128xf32>
    %43 = vector.broadcast %42 : vector<1x128xf32> to vector<128x128xf32>
    %44 = arith.addf %41, %43 : vector<128x128xf32>
    %c0_29 = arith.constant 0 : index
    %c0_30 = arith.constant 0 : index
    %45 = vector.load %arg12[%c0_29, %c0_30] : memref<1x128xf32, #tpu.memory_space<vmem>>, vector<1x128xf32>
    %c0_31 = arith.constant 0 : index
    %c0_32 = arith.constant 0 : index
    %46 = vector.load %arg13[%c0_31, %c0_32] : memref<1x128xf32, #tpu.memory_space<vmem>>, vector<1x128xf32>
    %cst_33 = arith.constant dense<0.000000e+00> : vector<128xf32>
    %47 = vector.multi_reduction <add>, %44, %cst_33 [0] : vector<128x128xf32> to vector<128xf32>
    %48 = vector.shape_cast %47 : vector<128xf32> to vector<1x128xf32>
    %cst_34 = arith.constant 1.280000e+02 : f32
    %49 = vector.broadcast %cst_34 : f32 to vector<1x128xf32>
    %50 = arith.divf %48, %49 : vector<1x128xf32>
    %51 = vector.broadcast %50 : vector<1x128xf32> to vector<128x128xf32>
    %52 = arith.subf %44, %51 : vector<128x128xf32>
    %53 = arith.mulf %52, %52 : vector<128x128xf32>
    %cst_35 = arith.constant dense<0.000000e+00> : vector<128xf32>
    %54 = vector.multi_reduction <add>, %53, %cst_35 [0] : vector<128x128xf32> to vector<128xf32>
    %55 = vector.shape_cast %54 : vector<128xf32> to vector<1x128xf32>
    %cst_36 = arith.constant 1.280000e+02 : f32
    %56 = vector.broadcast %cst_36 : f32 to vector<1x128xf32>
    %57 = arith.divf %55, %56 : vector<1x128xf32>
    %58 = vector.broadcast %50 : vector<1x128xf32> to vector<128x128xf32>
    %59 = arith.subf %44, %58 : vector<128x128xf32>
    %cst_37 = arith.constant 9.99999974E-6 : f32
    %60 = vector.broadcast %cst_37 : f32 to vector<1x128xf32>
    %61 = arith.addf %57, %60 : vector<1x128xf32>
    %62 = math.rsqrt %61 : vector<1x128xf32>
    %63 = vector.broadcast %62 : vector<1x128xf32> to vector<128x128xf32>
    %64 = arith.mulf %59, %63 : vector<128x128xf32>
    %65 = vector.broadcast %45 : vector<1x128xf32> to vector<128x128xf32>
    %66 = arith.mulf %64, %65 : vector<128x128xf32>
    %67 = vector.broadcast %46 : vector<1x128xf32> to vector<128x128xf32>
    %68 = arith.addf %66, %67 : vector<128x128xf32>
    %cst_38 = arith.constant 0.000000e+00 : f32
    %69 = vector.broadcast %cst_38 : f32 to vector<128x128xf32>
    %70 = arith.maximumf %68, %69 : vector<128x128xf32>
    %71 = arith.truncf %70 : vector<128x128xf32> to vector<128x128xbf16>
    %c0_39 = arith.constant 0 : index
    %c0_40 = arith.constant 0 : index
    %72 = vector.load %arg14[%c0_39, %c0_40] : memref<128x64xbf16, #tpu.memory_space<vmem>>, vector<128x64xbf16>
    %cst_41 = arith.constant dense<0.000000e+00> : vector<128x64xf32>
    %73 = tpu.matmul %71, %72, %cst_41 {dimension_numbers = #tpu.dot_dimension_numbers<[1], [0], [0], [1], [0, 0, 1, 1], [], []>} : vector<128x128xbf16>, vector<128x64xbf16>, vector<128x64xf32> -> vector<128x64xf32>
    %c0_42 = arith.constant 0 : index
    %c0_43 = arith.constant 0 : index
    %74 = vector.load %arg15[%c0_42, %c0_43] : memref<1x64xf32, #tpu.memory_space<vmem>>, vector<1x64xf32>
    %75 = vector.broadcast %74 : vector<1x64xf32> to vector<128x64xf32>
    %76 = arith.addf %73, %75 : vector<128x64xf32>
    %c0_44 = arith.constant 0 : index
    %c0_45 = arith.constant 0 : index
    %77 = vector.load %arg16[%c0_44, %c0_45] : memref<1x64xf32, #tpu.memory_space<vmem>>, vector<1x64xf32>
    %c0_46 = arith.constant 0 : index
    %c0_47 = arith.constant 0 : index
    %78 = vector.load %arg17[%c0_46, %c0_47] : memref<1x64xf32, #tpu.memory_space<vmem>>, vector<1x64xf32>
    %cst_48 = arith.constant dense<0.000000e+00> : vector<64xf32>
    %79 = vector.multi_reduction <add>, %76, %cst_48 [0] : vector<128x64xf32> to vector<64xf32>
    %80 = vector.shape_cast %79 : vector<64xf32> to vector<1x64xf32>
    %cst_49 = arith.constant 1.280000e+02 : f32
    %81 = vector.broadcast %cst_49 : f32 to vector<1x64xf32>
    %82 = arith.divf %80, %81 : vector<1x64xf32>
    %83 = vector.broadcast %82 : vector<1x64xf32> to vector<128x64xf32>
    %84 = arith.subf %76, %83 : vector<128x64xf32>
    %85 = arith.mulf %84, %84 : vector<128x64xf32>
    %cst_50 = arith.constant dense<0.000000e+00> : vector<64xf32>
    %86 = vector.multi_reduction <add>, %85, %cst_50 [0] : vector<128x64xf32> to vector<64xf32>
    %87 = vector.shape_cast %86 : vector<64xf32> to vector<1x64xf32>
    %cst_51 = arith.constant 1.280000e+02 : f32
    %88 = vector.broadcast %cst_51 : f32 to vector<1x64xf32>
    %89 = arith.divf %87, %88 : vector<1x64xf32>
    %90 = vector.broadcast %82 : vector<1x64xf32> to vector<128x64xf32>
    %91 = arith.subf %76, %90 : vector<128x64xf32>
    %cst_52 = arith.constant 9.99999974E-6 : f32
    %92 = vector.broadcast %cst_52 : f32 to vector<1x64xf32>
    %93 = arith.addf %89, %92 : vector<1x64xf32>
    %94 = math.rsqrt %93 : vector<1x64xf32>
    %95 = vector.broadcast %94 : vector<1x64xf32> to vector<128x64xf32>
    %96 = arith.mulf %91, %95 : vector<128x64xf32>
    %97 = vector.broadcast %77 : vector<1x64xf32> to vector<128x64xf32>
    %98 = arith.mulf %96, %97 : vector<128x64xf32>
    %99 = vector.broadcast %78 : vector<1x64xf32> to vector<128x64xf32>
    %100 = arith.addf %98, %99 : vector<128x64xf32>
    %cst_53 = arith.constant 0.000000e+00 : f32
    %101 = vector.broadcast %cst_53 : f32 to vector<128x64xf32>
    %102 = arith.maximumf %100, %101 : vector<128x64xf32>
    %c0_54 = arith.constant 0 : index
    %c0_55 = arith.constant 0 : index
    %103 = vector.load %arg18[%c0_54, %c0_55] : memref<1x64xf32, #tpu.memory_space<vmem>>, vector<1x64xf32>
    %104 = vector.broadcast %103 : vector<1x64xf32> to vector<128x64xf32>
    %105 = arith.mulf %102, %104 : vector<128x64xf32>
    %cst_56 = arith.constant dense<0.000000e+00> : vector<128xf32>
    %106 = vector.multi_reduction <add>, %105, %cst_56 [1] : vector<128x64xf32> to vector<128xf32>
    %107 = vector.shape_cast %106 : vector<128xf32> to vector<128x1xf32>
    %c0_57 = arith.constant 0 : index
    %c0_58 = arith.constant 0 : index
    %108 = vector.load %arg19[%c0_57, %c0_58] : memref<1x1xf32, #tpu.memory_space<vmem>>, vector<1x1xf32>
    %109 = vector.broadcast %108 : vector<1x1xf32> to vector<128x1xf32>
    %110 = arith.addf %107, %109 : vector<128x1xf32>
    %c0_59 = arith.constant 0 : index
    %c0_60 = arith.constant 0 : index
    %111 = vector.load %arg20[%c0_59, %c0_60] : memref<256x256xbf16, #tpu.memory_space<vmem>>, vector<256x256xbf16>
    %cst_61 = arith.constant dense<0.000000e+00> : vector<16x256xf32>
    %112 = tpu.matmul %0, %111, %cst_61 {dimension_numbers = #tpu.dot_dimension_numbers<[1], [0], [0], [1], [0, 0, 1, 1], [], []>} : vector<16x256xbf16>, vector<256x256xbf16>, vector<16x256xf32> -> vector<16x256xf32>
    %c0_62 = arith.constant 0 : index
    %c0_63 = arith.constant 0 : index
    %113 = vector.load %arg21[%c0_62, %c0_63] : memref<256x256xbf16, #tpu.memory_space<vmem>>, vector<256x256xbf16>
    %cst_64 = arith.constant dense<0.000000e+00> : vector<16x256xf32>
    %114 = tpu.matmul %0, %113, %cst_64 {dimension_numbers = #tpu.dot_dimension_numbers<[1], [0], [0], [1], [0, 0, 1, 1], [], []>} : vector<16x256xbf16>, vector<256x256xbf16>, vector<16x256xf32> -> vector<16x256xf32>
    %cst_65 = arith.constant dense<0.000000e+00> : vector<128x256xf32>
    %115 = tpu.matmul %2, %112, %cst_65 {dimension_numbers = #tpu.dot_dimension_numbers<[1], [0], [0], [1], [0, 0, 1, 1], [], []>} : vector<128x16xf32>, vector<16x256xf32>, vector<128x256xf32> -> vector<128x256xf32>
    %cst_66 = arith.constant dense<0.000000e+00> : vector<128x256xf32>
    %116 = tpu.matmul %1, %114, %cst_66 {dimension_numbers = #tpu.dot_dimension_numbers<[1], [0], [0], [1], [0, 0, 1, 1], [], []>} : vector<128x16xf32>, vector<16x256xf32>, vector<128x256xf32> -> vector<128x256xf32>
    %117 = arith.addf %115, %116 : vector<128x256xf32>
    %c0_67 = arith.constant 0 : index
    %c0_68 = arith.constant 0 : index
    %118 = vector.load %arg22[%c0_67, %c0_68] : memref<1x256xf32, #tpu.memory_space<vmem>>, vector<1x256xf32>
    %119 = vector.broadcast %118 : vector<1x256xf32> to vector<128x256xf32>
    %120 = arith.addf %117, %119 : vector<128x256xf32>
    %c0_69 = arith.constant 0 : index
    %c0_70 = arith.constant 0 : index
    %121 = vector.load %arg23[%c0_69, %c0_70] : memref<1x256xf32, #tpu.memory_space<vmem>>, vector<1x256xf32>
    %c0_71 = arith.constant 0 : index
    %c0_72 = arith.constant 0 : index
    %122 = vector.load %arg24[%c0_71, %c0_72] : memref<1x256xf32, #tpu.memory_space<vmem>>, vector<1x256xf32>
    %cst_73 = arith.constant dense<0.000000e+00> : vector<256xf32>
    %123 = vector.multi_reduction <add>, %120, %cst_73 [0] : vector<128x256xf32> to vector<256xf32>
    %124 = vector.shape_cast %123 : vector<256xf32> to vector<1x256xf32>
    %cst_74 = arith.constant 1.280000e+02 : f32
    %125 = vector.broadcast %cst_74 : f32 to vector<1x256xf32>
    %126 = arith.divf %124, %125 : vector<1x256xf32>
    %127 = vector.broadcast %126 : vector<1x256xf32> to vector<128x256xf32>
    %128 = arith.subf %120, %127 : vector<128x256xf32>
    %129 = arith.mulf %128, %128 : vector<128x256xf32>
    %cst_75 = arith.constant dense<0.000000e+00> : vector<256xf32>
    %130 = vector.multi_reduction <add>, %129, %cst_75 [0] : vector<128x256xf32> to vector<256xf32>
    %131 = vector.shape_cast %130 : vector<256xf32> to vector<1x256xf32>
    %cst_76 = arith.constant 1.280000e+02 : f32
    %132 = vector.broadcast %cst_76 : f32 to vector<1x256xf32>
    %133 = arith.divf %131, %132 : vector<1x256xf32>
    %134 = vector.broadcast %126 : vector<1x256xf32> to vector<128x256xf32>
    %135 = arith.subf %120, %134 : vector<128x256xf32>
    %cst_77 = arith.constant 9.99999974E-6 : f32
    %136 = vector.broadcast %cst_77 : f32 to vector<1x256xf32>
    %137 = arith.addf %133, %136 : vector<1x256xf32>
    %138 = math.rsqrt %137 : vector<1x256xf32>
    %139 = vector.broadcast %138 : vector<1x256xf32> to vector<128x256xf32>
    %140 = arith.mulf %135, %139 : vector<128x256xf32>
    %141 = vector.broadcast %121 : vector<1x256xf32> to vector<128x256xf32>
    %142 = arith.mulf %140, %141 : vector<128x256xf32>
    %143 = vector.broadcast %122 : vector<1x256xf32> to vector<128x256xf32>
    %144 = arith.addf %142, %143 : vector<128x256xf32>
    %cst_78 = arith.constant 0.000000e+00 : f32
    %145 = vector.broadcast %cst_78 : f32 to vector<128x256xf32>
    %146 = arith.maximumf %144, %145 : vector<128x256xf32>
    %147 = arith.truncf %146 : vector<128x256xf32> to vector<128x256xbf16>
    %c0_79 = arith.constant 0 : index
    %c0_80 = arith.constant 0 : index
    %148 = vector.load %arg25[%c0_79, %c0_80] : memref<256x128xbf16, #tpu.memory_space<vmem>>, vector<256x128xbf16>
    %cst_81 = arith.constant dense<0.000000e+00> : vector<128x128xf32>
    %149 = tpu.matmul %147, %148, %cst_81 {dimension_numbers = #tpu.dot_dimension_numbers<[1], [0], [0], [1], [0, 0, 1, 1], [], []>} : vector<128x256xbf16>, vector<256x128xbf16>, vector<128x128xf32> -> vector<128x128xf32>
    %c0_82 = arith.constant 0 : index
    %c0_83 = arith.constant 0 : index
    %150 = vector.load %arg26[%c0_82, %c0_83] : memref<1x128xf32, #tpu.memory_space<vmem>>, vector<1x128xf32>
    %151 = vector.broadcast %150 : vector<1x128xf32> to vector<128x128xf32>
    %152 = arith.addf %149, %151 : vector<128x128xf32>
    %c0_84 = arith.constant 0 : index
    %c0_85 = arith.constant 0 : index
    %153 = vector.load %arg27[%c0_84, %c0_85] : memref<1x128xf32, #tpu.memory_space<vmem>>, vector<1x128xf32>
    %c0_86 = arith.constant 0 : index
    %c0_87 = arith.constant 0 : index
    %154 = vector.load %arg28[%c0_86, %c0_87] : memref<1x128xf32, #tpu.memory_space<vmem>>, vector<1x128xf32>
    %cst_88 = arith.constant dense<0.000000e+00> : vector<128xf32>
    %155 = vector.multi_reduction <add>, %152, %cst_88 [0] : vector<128x128xf32> to vector<128xf32>
    %156 = vector.shape_cast %155 : vector<128xf32> to vector<1x128xf32>
    %cst_89 = arith.constant 1.280000e+02 : f32
    %157 = vector.broadcast %cst_89 : f32 to vector<1x128xf32>
    %158 = arith.divf %156, %157 : vector<1x128xf32>
    %159 = vector.broadcast %158 : vector<1x128xf32> to vector<128x128xf32>
    %160 = arith.subf %152, %159 : vector<128x128xf32>
    %161 = arith.mulf %160, %160 : vector<128x128xf32>
    %cst_90 = arith.constant dense<0.000000e+00> : vector<128xf32>
    %162 = vector.multi_reduction <add>, %161, %cst_90 [0] : vector<128x128xf32> to vector<128xf32>
    %163 = vector.shape_cast %162 : vector<128xf32> to vector<1x128xf32>
    %cst_91 = arith.constant 1.280000e+02 : f32
    %164 = vector.broadcast %cst_91 : f32 to vector<1x128xf32>
    %165 = arith.divf %163, %164 : vector<1x128xf32>
    %166 = vector.broadcast %158 : vector<1x128xf32> to vector<128x128xf32>
    %167 = arith.subf %152, %166 : vector<128x128xf32>
    %cst_92 = arith.constant 9.99999974E-6 : f32
    %168 = vector.broadcast %cst_92 : f32 to vector<1x128xf32>
    %169 = arith.addf %165, %168 : vector<1x128xf32>
    %170 = math.rsqrt %169 : vector<1x128xf32>
    %171 = vector.broadcast %170 : vector<1x128xf32> to vector<128x128xf32>
    %172 = arith.mulf %167, %171 : vector<128x128xf32>
    %173 = vector.broadcast %153 : vector<1x128xf32> to vector<128x128xf32>
    %174 = arith.mulf %172, %173 : vector<128x128xf32>
    %175 = vector.broadcast %154 : vector<1x128xf32> to vector<128x128xf32>
    %176 = arith.addf %174, %175 : vector<128x128xf32>
    %cst_93 = arith.constant 0.000000e+00 : f32
    %177 = vector.broadcast %cst_93 : f32 to vector<128x128xf32>
    %178 = arith.maximumf %176, %177 : vector<128x128xf32>
    %179 = arith.truncf %178 : vector<128x128xf32> to vector<128x128xbf16>
    %c0_94 = arith.constant 0 : index
    %c0_95 = arith.constant 0 : index
    %180 = vector.load %arg29[%c0_94, %c0_95] : memref<128x64xbf16, #tpu.memory_space<vmem>>, vector<128x64xbf16>
    %cst_96 = arith.constant dense<0.000000e+00> : vector<128x64xf32>
    %181 = tpu.matmul %179, %180, %cst_96 {dimension_numbers = #tpu.dot_dimension_numbers<[1], [0], [0], [1], [0, 0, 1, 1], [], []>} : vector<128x128xbf16>, vector<128x64xbf16>, vector<128x64xf32> -> vector<128x64xf32>
    %c0_97 = arith.constant 0 : index
    %c0_98 = arith.constant 0 : index
    %182 = vector.load %arg30[%c0_97, %c0_98] : memref<1x64xf32, #tpu.memory_space<vmem>>, vector<1x64xf32>
    %183 = vector.broadcast %182 : vector<1x64xf32> to vector<128x64xf32>
    %184 = arith.addf %181, %183 : vector<128x64xf32>
    %c0_99 = arith.constant 0 : index
    %c0_100 = arith.constant 0 : index
    %185 = vector.load %arg31[%c0_99, %c0_100] : memref<1x64xf32, #tpu.memory_space<vmem>>, vector<1x64xf32>
    %c0_101 = arith.constant 0 : index
    %c0_102 = arith.constant 0 : index
    %186 = vector.load %arg32[%c0_101, %c0_102] : memref<1x64xf32, #tpu.memory_space<vmem>>, vector<1x64xf32>
    %cst_103 = arith.constant dense<0.000000e+00> : vector<64xf32>
    %187 = vector.multi_reduction <add>, %184, %cst_103 [0] : vector<128x64xf32> to vector<64xf32>
    %188 = vector.shape_cast %187 : vector<64xf32> to vector<1x64xf32>
    %cst_104 = arith.constant 1.280000e+02 : f32
    %189 = vector.broadcast %cst_104 : f32 to vector<1x64xf32>
    %190 = arith.divf %188, %189 : vector<1x64xf32>
    %191 = vector.broadcast %190 : vector<1x64xf32> to vector<128x64xf32>
    %192 = arith.subf %184, %191 : vector<128x64xf32>
    %193 = arith.mulf %192, %192 : vector<128x64xf32>
    %cst_105 = arith.constant dense<0.000000e+00> : vector<64xf32>
    %194 = vector.multi_reduction <add>, %193, %cst_105 [0] : vector<128x64xf32> to vector<64xf32>
    %195 = vector.shape_cast %194 : vector<64xf32> to vector<1x64xf32>
    %cst_106 = arith.constant 1.280000e+02 : f32
    %196 = vector.broadcast %cst_106 : f32 to vector<1x64xf32>
    %197 = arith.divf %195, %196 : vector<1x64xf32>
    %198 = vector.broadcast %190 : vector<1x64xf32> to vector<128x64xf32>
    %199 = arith.subf %184, %198 : vector<128x64xf32>
    %cst_107 = arith.constant 9.99999974E-6 : f32
    %200 = vector.broadcast %cst_107 : f32 to vector<1x64xf32>
    %201 = arith.addf %197, %200 : vector<1x64xf32>
    %202 = math.rsqrt %201 : vector<1x64xf32>
    %203 = vector.broadcast %202 : vector<1x64xf32> to vector<128x64xf32>
    %204 = arith.mulf %199, %203 : vector<128x64xf32>
    %205 = vector.broadcast %185 : vector<1x64xf32> to vector<128x64xf32>
    %206 = arith.mulf %204, %205 : vector<128x64xf32>
    %207 = vector.broadcast %186 : vector<1x64xf32> to vector<128x64xf32>
    %208 = arith.addf %206, %207 : vector<128x64xf32>
    %cst_108 = arith.constant 0.000000e+00 : f32
    %209 = vector.broadcast %cst_108 : f32 to vector<128x64xf32>
    %210 = arith.maximumf %208, %209 : vector<128x64xf32>
    %c0_109 = arith.constant 0 : index
    %c0_110 = arith.constant 0 : index
    %211 = vector.load %arg33[%c0_109, %c0_110] : memref<1x64xf32, #tpu.memory_space<vmem>>, vector<1x64xf32>
    %212 = vector.broadcast %211 : vector<1x64xf32> to vector<128x64xf32>
    %213 = arith.mulf %210, %212 : vector<128x64xf32>
    %cst_111 = arith.constant dense<0.000000e+00> : vector<128xf32>
    %214 = vector.multi_reduction <add>, %213, %cst_111 [1] : vector<128x64xf32> to vector<128xf32>
    %215 = vector.shape_cast %214 : vector<128xf32> to vector<128x1xf32>
    %c0_112 = arith.constant 0 : index
    %c0_113 = arith.constant 0 : index
    %216 = vector.load %arg34[%c0_112, %c0_113] : memref<1x1xf32, #tpu.memory_space<vmem>>, vector<1x1xf32>
    %217 = vector.broadcast %216 : vector<1x1xf32> to vector<128x1xf32>
    %218 = arith.addf %215, %217 : vector<128x1xf32>
    %219 = arith.addf %110, %218 : vector<128x1xf32>
    %c0_114 = arith.constant 0 : index
    %c0_115 = arith.constant 0 : index
    %220 = vector.load %arg4[%c0_114, %c0_115] : memref<16x128xf32, #tpu.memory_space<vmem>>, vector<16x128xf32>
    %c0_116 = arith.constant 0 : index
    %c0_117 = arith.constant 0 : index
    %221 = vector.load %arg3[%c0_116, %c0_117] : memref<128x8xf32, #tpu.memory_space<vmem>>, vector<128x8xf32>
    %222 = vector.broadcast %219 : vector<128x1xf32> to vector<128x8xf32>
    %223 = arith.mulf %222, %221 : vector<128x8xf32>
    %cst_118 = arith.constant dense<0.000000e+00> : vector<16x8xf32>
    %224 = tpu.matmul %220, %223, %cst_118 {dimension_numbers = #tpu.dot_dimension_numbers<[1], [0], [0], [1], [0, 0, 1, 1], [], []>} : vector<16x128xf32>, vector<128x8xf32>, vector<16x8xf32> -> vector<16x8xf32>
    %c0_119 = arith.constant 0 : index
    %225 = memref.load %arg35[%c0_119] : memref<1xf32, #tpu.memory_space<smem>>
    %226 = vector.broadcast %225 : f32 to vector<2x9x9xf32>
    %c0_120 = arith.constant 0 : index
    %c0_121 = arith.constant 0 : index
    %c0_122 = arith.constant 0 : index
    %227 = vector.load %arg37[%c0_120, %c0_121, %c0_122] : memref<2x9x9xf32, #tpu.memory_space<vmem>>, vector<2x9x9xf32>
    tpu.vector_store %arg37[%c0_120, %c0_121, %c0_122], %226 {strides = array<i32>} : memref<2x9x9xf32, #tpu.memory_space<vmem>>, vector<2x9x9xf32>,
    %228 = vector.extract_strided_slice %224 {offsets = [0, 0], sizes = [8, 8], strides = [1, 1]} : vector<16x8xf32> to vector<8x8xf32>
    %c0_123 = arith.constant 0 : index
    %c0_124 = arith.constant 0 : index
    %c0_125 = arith.constant 0 : index
    %229 = vector.load %arg37[%c0_123, %c0_124, %c0_125] : memref<2x9x9xf32, #tpu.memory_space<vmem>>, vector<1x8x8xf32>
    %230 = vector.shape_cast %229 : vector<1x8x8xf32> to vector<8x8xf32>
    %231 = vector.shape_cast %228 : vector<8x8xf32> to vector<1x8x8xf32>
    tpu.vector_store %arg37[%c0_123, %c0_124, %c0_125], %231 {strides = array<i32>} : memref<2x9x9xf32, #tpu.memory_space<vmem>>, vector<1x8x8xf32>,
    %232 = vector.extract_strided_slice %224 {offsets = [8, 0], sizes = [8, 8], strides = [1, 1]} : vector<16x8xf32> to vector<8x8xf32>
    %c1 = arith.constant 1 : index
    %c0_126 = arith.constant 0 : index
    %c0_127 = arith.constant 0 : index
    %233 = vector.load %arg37[%c1, %c0_126, %c0_127] : memref<2x9x9xf32, #tpu.memory_space<vmem>>, vector<1x8x8xf32>
    %234 = vector.shape_cast %233 : vector<1x8x8xf32> to vector<8x8xf32>
    %235 = vector.shape_cast %232 : vector<8x8xf32> to vector<1x8x8xf32>
    tpu.vector_store %arg37[%c1, %c0_126, %c0_127], %235 {strides = array<i32>} : memref<2x9x9xf32, #tpu.memory_space<vmem>>, vector<1x8x8xf32>,
    %c0_128 = arith.constant 0 : index
    %c0_129 = arith.constant 0 : index
    %c0_130 = arith.constant 0 : index
    %236 = vector.load %arg37[%c0_128, %c0_129, %c0_130] : memref<2x9x9xf32, #tpu.memory_space<vmem>>, vector<2x9x9xf32>
    %237 = tpu.iota {dimensions = array<i32: 1>} : vector<2x9xi32>
    %c8_i32 = arith.constant 8 : i32
    %238 = vector.broadcast %c8_i32 : i32 to vector<2x9xi32>
    %239 = arith.cmpi slt, %237, %238 : vector<2x9xi32>
    %cst_131 = arith.constant -2.77258873 : f32
    %cst_132 = arith.constant -0.693147182 : f32
    %240 = vector.broadcast %cst_131 : f32 to vector<2x9xf32>
    %241 = vector.broadcast %cst_132 : f32 to vector<2x9xf32>
    %242 = arith.select %239, %240, %241 : vector<2x9xi1>, vector<2x9xf32>
    %cst_133 = arith.constant 0.000000e+00 : f32
    %243 = vector.broadcast %cst_133 : f32 to vector<2x9xf32>
    %244 = vector.shape_cast %243 : vector<2x9xf32> to vector<2x1x9xf32>
    %245 = vector.broadcast %244 : vector<2x1x9xf32> to vector<2x9x9xf32>
    %246 = arith.addf %236, %245 : vector<2x9x9xf32>
    %cst_134 = arith.constant dense<0xFF800000> : vector<2x9xf32>
    %247 = vector.multi_reduction <maximumf>, %246, %cst_134 [2] : vector<2x9x9xf32> to vector<2x9xf32>
    %248 = vector.shape_cast %247 : vector<2x9xf32> to vector<2x9x1xf32>
    %249 = vector.broadcast %248 : vector<2x9x1xf32> to vector<2x9x9xf32>
    %250 = arith.subf %246, %249 : vector<2x9x9xf32>
    %251 = math.exp %250 : vector<2x9x9xf32>
    %cst_135 = arith.constant dense<0.000000e+00> : vector<2x9xf32>
    %252 = vector.multi_reduction <add>, %251, %cst_135 [2] : vector<2x9x9xf32> to vector<2x9xf32>
    %253 = math.log %252 : vector<2x9xf32>
    %254 = arith.addf %253, %247 : vector<2x9xf32>
    %255 = arith.subf %242, %254 : vector<2x9xf32>
    %256 = vector.shape_cast %255 : vector<2x9xf32> to vector<2x9x1xf32>
    %257 = vector.broadcast %256 : vector<2x9x1xf32> to vector<2x9x9xf32>
    %258 = arith.addf %236, %257 : vector<2x9x9xf32>
    %cst_136 = arith.constant dense<0xFF800000> : vector<2x9xf32>
    %259 = vector.multi_reduction <maximumf>, %258, %cst_136 [1] : vector<2x9x9xf32> to vector<2x9xf32>
    %260 = vector.shape_cast %259 : vector<2x9xf32> to vector<2x1x9xf32>
    %261 = vector.broadcast %260 : vector<2x1x9xf32> to vector<2x9x9xf32>
    %262 = arith.subf %258, %261 : vector<2x9x9xf32>
    %263 = math.exp %262 : vector<2x9x9xf32>
    %cst_137 = arith.constant dense<0.000000e+00> : vector<2x9xf32>
    %264 = vector.multi_reduction <add>, %263, %cst_137 [1] : vector<2x9x9xf32> to vector<2x9xf32>
    %265 = math.log %264 : vector<2x9xf32>
    %266 = arith.addf %265, %259 : vector<2x9xf32>
    %267 = arith.subf %242, %266 : vector<2x9xf32>
    %268 = vector.shape_cast %267 : vector<2x9xf32> to vector<2x1x9xf32>
    %269 = vector.broadcast %268 : vector<2x1x9xf32> to vector<2x9x9xf32>
    %270 = arith.addf %236, %269 : vector<2x9x9xf32>
    %cst_138 = arith.constant dense<0xFF800000> : vector<2x9xf32>
    %271 = vector.multi_reduction <maximumf>, %270, %cst_138 [2] : vector<2x9x9xf32> to vector<2x9xf32>
    %272 = vector.shape_cast %271 : vector<2x9xf32> to vector<2x9x1xf32>
    %273 = vector.broadcast %272 : vector<2x9x1xf32> to vector<2x9x9xf32>
    %274 = arith.subf %270, %273 : vector<2x9x9xf32>
    %275 = math.exp %274 : vector<2x9x9xf32>
    %cst_139 = arith.constant dense<0.000000e+00> : vector<2x9xf32>
    %276 = vector.multi_reduction <add>, %275, %cst_139 [2] : vector<2x9x9xf32> to vector<2x9xf32>
    %277 = math.log %276 : vector<2x9xf32>
    %278 = arith.addf %277, %271 : vector<2x9xf32>
    %279 = arith.subf %242, %278 : vector<2x9xf32>
    %280 = vector.shape_cast %279 : vector<2x9xf32> to vector<2x9x1xf32>
    %281 = vector.broadcast %280 : vector<2x9x1xf32> to vector<2x9x9xf32>
    %282 = arith.addf %236, %281 : vector<2x9x9xf32>
    %cst_140 = arith.constant dense<0xFF800000> : vector<2x9xf32>
    %283 = vector.multi_reduction <maximumf>, %282, %cst_140 [1] : vector<2x9x9xf32> to vector<2x9xf32>
    %284 = vector.shape_cast %283 : vector<2x9xf32> to vector<2x1x9xf32>
    %285 = vector.broadcast %284 : vector<2x1x9xf32> to vector<2x9x9xf32>
    %286 = arith.subf %282, %285 : vector<2x9x9xf32>
    %287 = math.exp %286 : vector<2x9x9xf32>
    %cst_141 = arith.constant dense<0.000000e+00> : vector<2x9xf32>
    %288 = vector.multi_reduction <add>, %287, %cst_141 [1] : vector<2x9x9xf32> to vector<2x9xf32>
    %289 = math.log %288 : vector<2x9xf32>
    %290 = arith.addf %289, %283 : vector<2x9xf32>
    %291 = arith.subf %242, %290 : vector<2x9xf32>
    %292 = vector.shape_cast %291 : vector<2x9xf32> to vector<2x1x9xf32>
    %293 = vector.broadcast %292 : vector<2x1x9xf32> to vector<2x9x9xf32>
    %294 = arith.addf %236, %293 : vector<2x9x9xf32>
    %cst_142 = arith.constant dense<0xFF800000> : vector<2x9xf32>
    %295 = vector.multi_reduction <maximumf>, %294, %cst_142 [2] : vector<2x9x9xf32> to vector<2x9xf32>
    %296 = vector.shape_cast %295 : vector<2x9xf32> to vector<2x9x1xf32>
    %297 = vector.broadcast %296 : vector<2x9x1xf32> to vector<2x9x9xf32>
    %298 = arith.subf %294, %297 : vector<2x9x9xf32>
    %299 = math.exp %298 : vector<2x9x9xf32>
    %cst_143 = arith.constant dense<0.000000e+00> : vector<2x9xf32>
    %300 = vector.multi_reduction <add>, %299, %cst_143 [2] : vector<2x9x9xf32> to vector<2x9xf32>
    %301 = math.log %300 : vector<2x9xf32>
    %302 = arith.addf %301, %295 : vector<2x9xf32>
    %303 = arith.subf %242, %302 : vector<2x9xf32>
    %304 = vector.shape_cast %303 : vector<2x9xf32> to vector<2x9x1xf32>
    %305 = vector.broadcast %304 : vector<2x9x1xf32> to vector<2x9x9xf32>
    %306 = arith.addf %236, %305 : vector<2x9x9xf32>
    %cst_144 = arith.constant dense<0xFF800000> : vector<2x9xf32>
    %307 = vector.multi_reduction <maximumf>, %306, %cst_144 [1] : vector<2x9x9xf32> to vector<2x9xf32>
    %308 = vector.shape_cast %307 : vector<2x9xf32> to vector<2x1x9xf32>
    %309 = vector.broadcast %308 : vector<2x1x9xf32> to vector<2x9x9xf32>
    %310 = arith.subf %306, %309 : vector<2x9x9xf32>
    %311 = math.exp %310 : vector<2x9x9xf32>
    %cst_145 = arith.constant dense<0.000000e+00> : vector<2x9xf32>
    %312 = vector.multi_reduction <add>, %311, %cst_145 [1] : vector<2x9x9xf32> to vector<2x9xf32>
    %313 = math.log %312 : vector<2x9xf32>
    %314 = arith.addf %313, %307 : vector<2x9xf32>
    %315 = arith.subf %242, %314 : vector<2x9xf32>
    %316 = vector.shape_cast %315 : vector<2x9xf32> to vector<2x1x9xf32>
    %317 = vector.broadcast %316 : vector<2x1x9xf32> to vector<2x9x9xf32>
    %318 = arith.addf %236, %317 : vector<2x9x9xf32>
    %cst_146 = arith.constant dense<0xFF800000> : vector<2x9xf32>
    %319 = vector.multi_reduction <maximumf>, %318, %cst_146 [2] : vector<2x9x9xf32> to vector<2x9xf32>
    %320 = vector.shape_cast %319 : vector<2x9xf32> to vector<2x9x1xf32>
    %321 = vector.broadcast %320 : vector<2x9x1xf32> to vector<2x9x9xf32>
    %322 = arith.subf %318, %321 : vector<2x9x9xf32>
    %323 = math.exp %322 : vector<2x9x9xf32>
    %cst_147 = arith.constant dense<0.000000e+00> : vector<2x9xf32>
    %324 = vector.multi_reduction <add>, %323, %cst_147 [2] : vector<2x9x9xf32> to vector<2x9xf32>
    %325 = math.log %324 : vector<2x9xf32>
    %326 = arith.addf %325, %319 : vector<2x9xf32>
    %327 = arith.subf %242, %326 : vector<2x9xf32>
    %328 = vector.shape_cast %327 : vector<2x9xf32> to vector<2x9x1xf32>
    %329 = vector.broadcast %328 : vector<2x9x1xf32> to vector<2x9x9xf32>
    %330 = arith.addf %236, %329 : vector<2x9x9xf32>
    %cst_148 = arith.constant dense<0xFF800000> : vector<2x9xf32>
    %331 = vector.multi_reduction <maximumf>, %330, %cst_148 [1] : vector<2x9x9xf32> to vector<2x9xf32>
    %332 = vector.shape_cast %331 : vector<2x9xf32> to vector<2x1x9xf32>
    %333 = vector.broadcast %332 : vector<2x1x9xf32> to vector<2x9x9xf32>
    %334 = arith.subf %330, %333 : vector<2x9x9xf32>
    %335 = math.exp %334 : vector<2x9x9xf32>
    %cst_149 = arith.constant dense<0.000000e+00> : vector<2x9xf32>
    %336 = vector.multi_reduction <add>, %335, %cst_149 [1] : vector<2x9x9xf32> to vector<2x9xf32>
    %337 = math.log %336 : vector<2x9xf32>
    %338 = arith.addf %337, %331 : vector<2x9xf32>
    %339 = arith.subf %242, %338 : vector<2x9xf32>
    %340 = vector.shape_cast %339 : vector<2x9xf32> to vector<2x1x9xf32>
    %341 = vector.broadcast %340 : vector<2x1x9xf32> to vector<2x9x9xf32>
    %342 = arith.addf %236, %341 : vector<2x9x9xf32>
    %cst_150 = arith.constant dense<0xFF800000> : vector<2x9xf32>
    %343 = vector.multi_reduction <maximumf>, %342, %cst_150 [2] : vector<2x9x9xf32> to vector<2x9xf32>
    %344 = vector.shape_cast %343 : vector<2x9xf32> to vector<2x9x1xf32>
    %345 = vector.broadcast %344 : vector<2x9x1xf32> to vector<2x9x9xf32>
    %346 = arith.subf %342, %345 : vector<2x9x9xf32>
    %347 = math.exp %346 : vector<2x9x9xf32>
    %cst_151 = arith.constant dense<0.000000e+00> : vector<2x9xf32>
    %348 = vector.multi_reduction <add>, %347, %cst_151 [2] : vector<2x9x9xf32> to vector<2x9xf32>
    %349 = math.log %348 : vector<2x9xf32>
    %350 = arith.addf %349, %343 : vector<2x9xf32>
    %351 = arith.subf %242, %350 : vector<2x9xf32>
    %352 = vector.shape_cast %351 : vector<2x9xf32> to vector<2x9x1xf32>
    %353 = vector.broadcast %352 : vector<2x9x1xf32> to vector<2x9x9xf32>
    %354 = arith.addf %236, %353 : vector<2x9x9xf32>
    %cst_152 = arith.constant dense<0xFF800000> : vector<2x9xf32>
    %355 = vector.multi_reduction <maximumf>, %354, %cst_152 [1] : vector<2x9x9xf32> to vector<2x9xf32>
    %356 = vector.shape_cast %355 : vector<2x9xf32> to vector<2x1x9xf32>
    %357 = vector.broadcast %356 : vector<2x1x9xf32> to vector<2x9x9xf32>
    %358 = arith.subf %354, %357 : vector<2x9x9xf32>
    %359 = math.exp %358 : vector<2x9x9xf32>
    %cst_153 = arith.constant dense<0.000000e+00> : vector<2x9xf32>
    %360 = vector.multi_reduction <add>, %359, %cst_153 [1] : vector<2x9x9xf32> to vector<2x9xf32>
    %361 = math.log %360 : vector<2x9xf32>
    %362 = arith.addf %361, %355 : vector<2x9xf32>
    %363 = arith.subf %242, %362 : vector<2x9xf32>
    %364 = vector.shape_cast %363 : vector<2x9xf32> to vector<2x1x9xf32>
    %365 = vector.broadcast %364 : vector<2x1x9xf32> to vector<2x9x9xf32>
    %366 = arith.addf %236, %365 : vector<2x9x9xf32>
    %cst_154 = arith.constant dense<0xFF800000> : vector<2x9xf32>
    %367 = vector.multi_reduction <maximumf>, %366, %cst_154 [2] : vector<2x9x9xf32> to vector<2x9xf32>
    %368 = vector.shape_cast %367 : vector<2x9xf32> to vector<2x9x1xf32>
    %369 = vector.broadcast %368 : vector<2x9x1xf32> to vector<2x9x9xf32>
    %370 = arith.subf %366, %369 : vector<2x9x9xf32>
    %371 = math.exp %370 : vector<2x9x9xf32>
    %cst_155 = arith.constant dense<0.000000e+00> : vector<2x9xf32>
    %372 = vector.multi_reduction <add>, %371, %cst_155 [2] : vector<2x9x9xf32> to vector<2x9xf32>
    %373 = math.log %372 : vector<2x9xf32>
    %374 = arith.addf %373, %367 : vector<2x9xf32>
    %375 = arith.subf %242, %374 : vector<2x9xf32>
    %376 = vector.shape_cast %375 : vector<2x9xf32> to vector<2x9x1xf32>
    %377 = vector.broadcast %376 : vector<2x9x1xf32> to vector<2x9x9xf32>
    %378 = arith.addf %236, %377 : vector<2x9x9xf32>
    %cst_156 = arith.constant dense<0xFF800000> : vector<2x9xf32>
    %379 = vector.multi_reduction <maximumf>, %378, %cst_156 [1] : vector<2x9x9xf32> to vector<2x9xf32>
    %380 = vector.shape_cast %379 : vector<2x9xf32> to vector<2x1x9xf32>
    %381 = vector.broadcast %380 : vector<2x1x9xf32> to vector<2x9x9xf32>
    %382 = arith.subf %378, %381 : vector<2x9x9xf32>
    %383 = math.exp %382 : vector<2x9x9xf32>
    %cst_157 = arith.constant dense<0.000000e+00> : vector<2x9xf32>
    %384 = vector.multi_reduction <add>, %383, %cst_157 [1] : vector<2x9x9xf32> to vector<2x9xf32>
    %385 = math.log %384 : vector<2x9xf32>
    %386 = arith.addf %385, %379 : vector<2x9xf32>
    %387 = arith.subf %242, %386 : vector<2x9xf32>
    %388 = vector.shape_cast %387 : vector<2x9xf32> to vector<2x1x9xf32>
    %389 = vector.broadcast %388 : vector<2x1x9xf32> to vector<2x9x9xf32>
    %390 = arith.addf %236, %389 : vector<2x9x9xf32>
    %cst_158 = arith.constant dense<0xFF800000> : vector<2x9xf32>
    %391 = vector.multi_reduction <maximumf>, %390, %cst_158 [2] : vector<2x9x9xf32> to vector<2x9xf32>
    %392 = vector.shape_cast %391 : vector<2x9xf32> to vector<2x9x1xf32>
    %393 = vector.broadcast %392 : vector<2x9x1xf32> to vector<2x9x9xf32>
    %394 = arith.subf %390, %393 : vector<2x9x9xf32>
    %395 = math.exp %394 : vector<2x9x9xf32>
    %cst_159 = arith.constant dense<0.000000e+00> : vector<2x9xf32>
    %396 = vector.multi_reduction <add>, %395, %cst_159 [2] : vector<2x9x9xf32> to vector<2x9xf32>
    %397 = math.log %396 : vector<2x9xf32>
    %398 = arith.addf %397, %391 : vector<2x9xf32>
    %399 = arith.subf %242, %398 : vector<2x9xf32>
    %400 = vector.shape_cast %399 : vector<2x9xf32> to vector<2x9x1xf32>
    %401 = vector.broadcast %400 : vector<2x9x1xf32> to vector<2x9x9xf32>
    %402 = arith.addf %236, %401 : vector<2x9x9xf32>
    %cst_160 = arith.constant dense<0xFF800000> : vector<2x9xf32>
    %403 = vector.multi_reduction <maximumf>, %402, %cst_160 [1] : vector<2x9x9xf32> to vector<2x9xf32>
    %404 = vector.shape_cast %403 : vector<2x9xf32> to vector<2x1x9xf32>
    %405 = vector.broadcast %404 : vector<2x1x9xf32> to vector<2x9x9xf32>
    %406 = arith.subf %402, %405 : vector<2x9x9xf32>
    %407 = math.exp %406 : vector<2x9x9xf32>
    %cst_161 = arith.constant dense<0.000000e+00> : vector<2x9xf32>
    %408 = vector.multi_reduction <add>, %407, %cst_161 [1] : vector<2x9x9xf32> to vector<2x9xf32>
    %409 = math.log %408 : vector<2x9xf32>
    %410 = arith.addf %409, %403 : vector<2x9xf32>
    %411 = arith.subf %242, %410 : vector<2x9xf32>
    %412 = vector.shape_cast %411 : vector<2x9xf32> to vector<2x1x9xf32>
    %413 = vector.broadcast %412 : vector<2x1x9xf32> to vector<2x9x9xf32>
    %414 = arith.addf %236, %413 : vector<2x9x9xf32>
    %cst_162 = arith.constant dense<0xFF800000> : vector<2x9xf32>
    %415 = vector.multi_reduction <maximumf>, %414, %cst_162 [2] : vector<2x9x9xf32> to vector<2x9xf32>
    %416 = vector.shape_cast %415 : vector<2x9xf32> to vector<2x9x1xf32>
    %417 = vector.broadcast %416 : vector<2x9x1xf32> to vector<2x9x9xf32>
    %418 = arith.subf %414, %417 : vector<2x9x9xf32>
    %419 = math.exp %418 : vector<2x9x9xf32>
    %cst_163 = arith.constant dense<0.000000e+00> : vector<2x9xf32>
    %420 = vector.multi_reduction <add>, %419, %cst_163 [2] : vector<2x9x9xf32> to vector<2x9xf32>
    %421 = math.log %420 : vector<2x9xf32>
    %422 = arith.addf %421, %415 : vector<2x9xf32>
    %423 = arith.subf %242, %422 : vector<2x9xf32>
    %424 = vector.shape_cast %423 : vector<2x9xf32> to vector<2x9x1xf32>
    %425 = vector.broadcast %424 : vector<2x9x1xf32> to vector<2x9x9xf32>
    %426 = arith.addf %236, %425 : vector<2x9x9xf32>
    %cst_164 = arith.constant dense<0xFF800000> : vector<2x9xf32>
    %427 = vector.multi_reduction <maximumf>, %426, %cst_164 [1] : vector<2x9x9xf32> to vector<2x9xf32>
    %428 = vector.shape_cast %427 : vector<2x9xf32> to vector<2x1x9xf32>
    %429 = vector.broadcast %428 : vector<2x1x9xf32> to vector<2x9x9xf32>
    %430 = arith.subf %426, %429 : vector<2x9x9xf32>
    %431 = math.exp %430 : vector<2x9x9xf32>
    %cst_165 = arith.constant dense<0.000000e+00> : vector<2x9xf32>
    %432 = vector.multi_reduction <add>, %431, %cst_165 [1] : vector<2x9x9xf32> to vector<2x9xf32>
    %433 = math.log %432 : vector<2x9xf32>
    %434 = arith.addf %433, %427 : vector<2x9xf32>
    %435 = arith.subf %242, %434 : vector<2x9xf32>
    %436 = vector.shape_cast %435 : vector<2x9xf32> to vector<2x1x9xf32>
    %437 = vector.broadcast %436 : vector<2x1x9xf32> to vector<2x9x9xf32>
    %438 = arith.addf %236, %437 : vector<2x9x9xf32>
    %cst_166 = arith.constant dense<0xFF800000> : vector<2x9xf32>
    %439 = vector.multi_reduction <maximumf>, %438, %cst_166 [2] : vector<2x9x9xf32> to vector<2x9xf32>
    %440 = vector.shape_cast %439 : vector<2x9xf32> to vector<2x9x1xf32>
    %441 = vector.broadcast %440 : vector<2x9x1xf32> to vector<2x9x9xf32>
    %442 = arith.subf %438, %441 : vector<2x9x9xf32>
    %443 = math.exp %442 : vector<2x9x9xf32>
    %cst_167 = arith.constant dense<0.000000e+00> : vector<2x9xf32>
    %444 = vector.multi_reduction <add>, %443, %cst_167 [2] : vector<2x9x9xf32> to vector<2x9xf32>
    %445 = math.log %444 : vector<2x9xf32>
    %446 = arith.addf %445, %439 : vector<2x9xf32>
    %447 = arith.subf %242, %446 : vector<2x9xf32>
    %448 = vector.shape_cast %447 : vector<2x9xf32> to vector<2x9x1xf32>
    %449 = vector.broadcast %448 : vector<2x9x1xf32> to vector<2x9x9xf32>
    %450 = arith.addf %236, %449 : vector<2x9x9xf32>
    %cst_168 = arith.constant dense<0xFF800000> : vector<2x9xf32>
    %451 = vector.multi_reduction <maximumf>, %450, %cst_168 [1] : vector<2x9x9xf32> to vector<2x9xf32>
    %452 = vector.shape_cast %451 : vector<2x9xf32> to vector<2x1x9xf32>
    %453 = vector.broadcast %452 : vector<2x1x9xf32> to vector<2x9x9xf32>
    %454 = arith.subf %450, %453 : vector<2x9x9xf32>
    %455 = math.exp %454 : vector<2x9x9xf32>
    %cst_169 = arith.constant dense<0.000000e+00> : vector<2x9xf32>
    %456 = vector.multi_reduction <add>, %455, %cst_169 [1] : vector<2x9x9xf32> to vector<2x9xf32>
    %457 = math.log %456 : vector<2x9xf32>
    %458 = arith.addf %457, %451 : vector<2x9xf32>
    %459 = arith.subf %242, %458 : vector<2x9xf32>
    %460 = vector.shape_cast %459 : vector<2x9xf32> to vector<2x1x9xf32>
    %461 = vector.broadcast %460 : vector<2x1x9xf32> to vector<2x9x9xf32>
    %462 = arith.addf %236, %461 : vector<2x9x9xf32>
    %cst_170 = arith.constant dense<0xFF800000> : vector<2x9xf32>
    %463 = vector.multi_reduction <maximumf>, %462, %cst_170 [2] : vector<2x9x9xf32> to vector<2x9xf32>
    %464 = vector.shape_cast %463 : vector<2x9xf32> to vector<2x9x1xf32>
    %465 = vector.broadcast %464 : vector<2x9x1xf32> to vector<2x9x9xf32>
    %466 = arith.subf %462, %465 : vector<2x9x9xf32>
    %467 = math.exp %466 : vector<2x9x9xf32>
    %cst_171 = arith.constant dense<0.000000e+00> : vector<2x9xf32>
    %468 = vector.multi_reduction <add>, %467, %cst_171 [2] : vector<2x9x9xf32> to vector<2x9xf32>
    %469 = math.log %468 : vector<2x9xf32>
    %470 = arith.addf %469, %463 : vector<2x9xf32>
    %471 = arith.subf %242, %470 : vector<2x9xf32>
    %472 = vector.shape_cast %471 : vector<2x9xf32> to vector<2x9x1xf32>
    %473 = vector.broadcast %472 : vector<2x9x1xf32> to vector<2x9x9xf32>
    %474 = arith.addf %236, %473 : vector<2x9x9xf32>
    %cst_172 = arith.constant dense<0xFF800000> : vector<2x9xf32>
    %475 = vector.multi_reduction <maximumf>, %474, %cst_172 [1] : vector<2x9x9xf32> to vector<2x9xf32>
    %476 = vector.shape_cast %475 : vector<2x9xf32> to vector<2x1x9xf32>
    %477 = vector.broadcast %476 : vector<2x1x9xf32> to vector<2x9x9xf32>
    %478 = arith.subf %474, %477 : vector<2x9x9xf32>
    %479 = math.exp %478 : vector<2x9x9xf32>
    %cst_173 = arith.constant dense<0.000000e+00> : vector<2x9xf32>
    %480 = vector.multi_reduction <add>, %479, %cst_173 [1] : vector<2x9x9xf32> to vector<2x9xf32>
    %481 = math.log %480 : vector<2x9xf32>
    %482 = arith.addf %481, %475 : vector<2x9xf32>
    %483 = arith.subf %242, %482 : vector<2x9xf32>
    %484 = vector.shape_cast %471 : vector<2x9xf32> to vector<2x9x1xf32>
    %485 = vector.broadcast %484 : vector<2x9x1xf32> to vector<2x9x9xf32>
    %486 = arith.addf %236, %485 : vector<2x9x9xf32>
    %487 = vector.shape_cast %483 : vector<2x9xf32> to vector<2x1x9xf32>
    %488 = vector.broadcast %487 : vector<2x1x9xf32> to vector<2x9x9xf32>
    %489 = arith.addf %486, %488 : vector<2x9x9xf32>
    %cst_174 = arith.constant -2.77258873 : f32
    %490 = vector.broadcast %cst_174 : f32 to vector<2x9x9xf32>
    %491 = arith.subf %489, %490 : vector<2x9x9xf32>
    %492 = vector.extract_strided_slice %491 {offsets = [0, 0, 0], sizes = [2, 8, 8], strides = [1, 1, 1]} : vector<2x9x9xf32> to vector<2x8x8xf32>
    %cst_175 = arith.constant dense<0xFF800000> : vector<2x8xf32>
    %493 = vector.multi_reduction <maximumf>, %492, %cst_175 [2] : vector<2x8x8xf32> to vector<2x8xf32>
    %494 = vector.shape_cast %493 : vector<2x8xf32> to vector<2x8x1xf32>
    %495 = vector.broadcast %494 : vector<2x8x1xf32> to vector<2x8x8xf32>
    %496 = arith.subf %492, %495 : vector<2x8x8xf32>
    %497 = math.exp %496 : vector<2x8x8xf32>
    %cst_176 = arith.constant dense<0.000000e+00> : vector<2x8xf32>
    %498 = vector.multi_reduction <add>, %497, %cst_176 [2] : vector<2x8x8xf32> to vector<2x8xf32>
    %499 = vector.shape_cast %498 : vector<2x8xf32> to vector<2x8x1xf32>
    %500 = tpu.reciprocal %499 {approx = true} : vector<2x8x1xf32> -> vector<2x8x1xf32>
    %501 = vector.broadcast %500 : vector<2x8x1xf32> to vector<2x8x8xf32>
    %502 = arith.mulf %497, %501 : vector<2x8x8xf32>
    %c0_177 = arith.constant 0 : index
    %c0_178 = arith.constant 0 : index
    %c0_179 = arith.constant 0 : index
    %503 = vector.load %arg36[%c0_177, %c0_178, %c0_179] : memref<2x8x8xf32, #tpu.memory_space<vmem>>, vector<2x8x8xf32>
    tpu.vector_store %arg36[%c0_177, %c0_178, %c0_179], %502 {strides = array<i32>} : memref<2x8x8xf32, #tpu.memory_space<vmem>>, vector<2x8x8xf32>,
    return
  }
}

</mosaic_0001>

<llo_original>
// kernel: encoder_decoder_with_encoded_images_forward.1
$region0: #{encoder_decoder_with_encoded_images_forward.1}
  #allocation0 [shape = 'u32[]', space=smem, size = 0x4, offset = 0x4, fixed_abs, tag = 'smem constant byte address 0x4 - core index']
  #allocation1 [shape = 'u32[144,128]{1,0:T(1,128)}', space=vmem, size = 0x12000, scoped, tag = 'internal scratch']
  #allocation2 [shape = 'f32[2,9,9]{2,1,0:T(8,128)}', space=vmem, size = 0x4000, scoped, tag = 'scratch operand']
  #allocation3 [shape = 'f32[1,1]{1,0:T(1,128)S(1)}', space=vmem, size = 0x200, scoped, tag = 'scoped memory for encoder_decoder_with_encoded_images_forward.1']
  #allocation4 [shape = 'f32[1,1]{1,0:T(1,128)S(1)}', space=vmem, size = 0x200, scoped, tag = 'scoped memory for encoder_decoder_with_encoded_images_forward.1']
  #allocation5 [shape = 'f32[1]{0:T(128)S(6)}', space=smem, size = 0x200, scoped, tag = 'scoped memory for encoder_decoder_with_encoded_images_forward.1']
  %s0 = inlined_call_operand.smem [shape: u32[37], index: -1, kind: input, shape index: {}]
  %s1 = sld [smem:[%s0]]
  %s2 = scalar_lea.smem %s0, 1
  %s3 = sld [smem:[%s2]]
  %s4 = scalar_lea.smem %s0, 2
  %s5 = sld [smem:[%s4]]
  %s6 = scalar_lea.smem %s0, 3
  %s7 = sld [smem:[%s6]]
  %s8 = scalar_lea.smem %s0, 4
  %s9 = sld [smem:[%s8]]
  %s10 = scalar_lea.smem %s0, 5
  %s11 = sld [smem:[%s10]]
  %s12 = scalar_lea.smem %s0, 6
  %s13 = sld [smem:[%s12]]
  %s14 = scalar_lea.smem %s0, 7
  %s15 = sld [smem:[%s14]]
  %s16 = scalar_lea.smem %s0, 8
  %s17 = sld [smem:[%s16]]
  %s18 = scalar_lea.smem %s0, 9
  %s19 = sld [smem:[%s18]]
  %s20 = scalar_lea.smem %s0, 10
  %s21 = sld [smem:[%s20]]
  %s22 = scalar_lea.smem %s0, 11
  %s23 = sld [smem:[%s22]]
  %s24 = scalar_lea.smem %s0, 12
  %s25 = sld [smem:[%s24]]
  %s26 = scalar_lea.smem %s0, 13
  %s27 = sld [smem:[%s26]]
  %s28 = scalar_lea.smem %s0, 14
  %s29 = sld [smem:[%s28]]
  %s30 = scalar_lea.smem %s0, 15
  %s31 = sld [smem:[%s30]]
  %s32 = scalar_lea.smem %s0, 16
  %s33 = sld [smem:[%s32]]
  %s34 = scalar_lea.smem %s0, 17
  %s35 = sld [smem:[%s34]]
  %s36 = scalar_lea.smem %s0, 18
  %s37 = sld [smem:[%s36]]
  %s38 = scalar_lea.smem %s0, 19
  %s39 = sld [smem:[%s38]]
  %s40 = scalar_lea.smem %s0, 20
  %s41 = sld [smem:[%s40]]
  %s42 = scalar_lea.smem %s0, 21
  %s43 = sld [smem:[%s42]]
  %s44 = scalar_lea.smem %s0, 22
  %s45 = sld [smem:[%s44]]
  %s46 = scalar_lea.smem %s0, 23
  %s47 = sld [smem:[%s46]]
  %s48 = scalar_lea.smem %s0, 24
  %s49 = sld [smem:[%s48]]
  %s50 = scalar_lea.smem %s0, 25
  %s51 = sld [smem:[%s50]]
  %s52 = scalar_lea.smem %s0, 26
  %s53 = sld [smem:[%s52]]
  %s54 = scalar_lea.smem %s0, 27
  %s55 = sld [smem:[%s54]]
  %s56 = scalar_lea.smem %s0, 28
  %s57 = sld [smem:[%s56]]
  %s58 = scalar_lea.smem %s0, 29
  %s59 = sld [smem:[%s58]]
  %s60 = scalar_lea.smem %s0, 30
  %s61 = sld [smem:[%s60]]
  %s62 = scalar_lea.smem %s0, 31
  %s63 = sld [smem:[%s62]]
  %s64 = scalar_lea.smem %s0, 32
  %s65 = sld [smem:[%s64]]
  %s66 = scalar_lea.smem %s0, 33
  %s67 = sld [smem:[%s66]]
  %s68 = scalar_lea.smem %s0, 34
  %s69 = sld [smem:[%s68]]
  %s70 = scalar_lea.smem %s0, 35
  %s71 = sld [smem:[%s70]]
  %s72 = scalar_lea.smem %s0, 36
  %s73 = sld [smem:[%s72]]
  %s74 = sld [smem:[#allocation0]]
  $region154: #{encoder_decoder_with_encoded_images_forward.1} parent=0
    _
  %s76 = ssub.s32 1, %s74
  %s77 = scalar_select 0, %s76, %s74
  %v78 = vstv %s39
  %79 = vst [vmem:[#allocation3] sm:$0x1] %v78
  %v80 = vstv %s69
  %81 = vst [vmem:[#allocation4] sm:$0x1] %v80
  %82 = sst [smem:[#allocation5]] %s71
  $region1: #{encoder_decoder_with_encoded_images_forward.1} parent=0
    #allocation6 [shape = 'u8[8192]{0}', space=vmem, size = 0x2000, scoped, tag = 'output window, operand 0, single buffered']
    #allocation7 [shape = 's32[1]{0}', space=sflag, size = 0x4, scoped, tag = 'scoped memory for encoder_decoder_with_encoded_images_forward.1']
    %83 = vsyncpa [#allocation7], 0
    // Predicated region
    $region2: #{encoder_decoder_with_encoded_images_forward.1} parent=1 // pred_check
      _
    $region3: #{encoder_decoder_with_encoded_images_forward.1} parent=1 // pred_check_branch
      %85 = sbr.rel (0) target = $region5
    $region4: #{encoder_decoder_with_encoded_images_forward.1} parent=1 // pred_region
      _
    $region5: #{encoder_decoder_with_encoded_images_forward.1} parent=1 // pred_fallthru
      _
    // Predicated region
    $region6: #{encoder_decoder_with_encoded_images_forward.1} parent=1 // pred_check
      _
    $region7: #{encoder_decoder_with_encoded_images_forward.1} parent=1 // pred_check_branch
      %87 = sbr.rel (0) target = $region9
    $region8: #{encoder_decoder_with_encoded_images_forward.1} parent=1 // pred_region
      _
    $region9: #{encoder_decoder_with_encoded_images_forward.1} parent=1 // pred_fallthru
      _
    // Predicated region
    $region10: #{encoder_decoder_with_encoded_images_forward.1} parent=1 // pred_check
      _
    $region11: #{encoder_decoder_with_encoded_images_forward.1} parent=1 // pred_check_branch
      %89 = sbr.rel (0) target = $region13
    $region12: #{encoder_decoder_with_encoded_images_forward.1} parent=1 // pred_region
      _
    $region13: #{encoder_decoder_with_encoded_images_forward.1} parent=1 // pred_fallthru
      _
    // Predicated region
    $region14: #{encoder_decoder_with_encoded_images_forward.1} parent=1 // pred_check
      _
    $region15: #{encoder_decoder_with_encoded_images_forward.1} parent=1 // pred_check_branch
      %91 = sbr.rel (0) target = $region17
    $region16: #{encoder_decoder_with_encoded_images_forward.1} parent=1 // pred_region
      _
    $region17: #{encoder_decoder_with_encoded_images_forward.1} parent=1 // pred_fallthru
      _
    // Predicated region
    $region18: #{encoder_decoder_with_encoded_images_forward.1} parent=1 // pred_check
      _
    $region19: #{encoder_decoder_with_encoded_images_forward.1} parent=1 // pred_check_branch
      %93 = sbr.rel (0) target = $region21
    $region20: #{encoder_decoder_with_encoded_images_forward.1} parent=1 // pred_region
      _
    $region21: #{encoder_decoder_with_encoded_images_forward.1} parent=1 // pred_fallthru
      _
    // Predicated region
    $region22: #{encoder_decoder_with_encoded_images_forward.1} parent=1 // pred_check
      _
    $region23: #{encoder_decoder_with_encoded_images_forward.1} parent=1 // pred_check_branch
      %95 = sbr.rel (0) target = $region25
    $region24: #{encoder_decoder_with_encoded_images_forward.1} parent=1 // pred_region
      _
    $region25: #{encoder_decoder_with_encoded_images_forward.1} parent=1 // pred_fallthru
      _
    // Predicated region
    $region26: #{encoder_decoder_with_encoded_images_forward.1} parent=1 // pred_check
      _
    $region27: #{encoder_decoder_with_encoded_images_forward.1} parent=1 // pred_check_branch
      %97 = sbr.rel (0) target = $region29
    $region28: #{encoder_decoder_with_encoded_images_forward.1} parent=1 // pred_region
      _
    $region29: #{encoder_decoder_with_encoded_images_forward.1} parent=1 // pred_fallthru
      _
    // Predicated region
    $region30: #{encoder_decoder_with_encoded_images_forward.1} parent=1 // pred_check
      _
    $region31: #{encoder_decoder_with_encoded_images_forward.1} parent=1 // pred_check_branch
      %99 = sbr.rel (0) target = $region33
    $region32: #{encoder_decoder_with_encoded_images_forward.1} parent=1 // pred_region
      _
    $region33: #{encoder_decoder_with_encoded_images_forward.1} parent=1 // pred_fallthru
      _
    // Predicated region
    $region34: #{encoder_decoder_with_encoded_images_forward.1} parent=1 // pred_check
      _
    $region35: #{encoder_decoder_with_encoded_images_forward.1} parent=1 // pred_check_branch
      %101 = sbr.rel (0) target = $region37
    $region36: #{encoder_decoder_with_encoded_images_forward.1} parent=1 // pred_region
      _
    $region37: #{encoder_decoder_with_encoded_images_forward.1} parent=1 // pred_fallthru
      _
    // Predicated region
    $region38: #{encoder_decoder_with_encoded_images_forward.1} parent=1 // pred_check
      _
    $region39: #{encoder_decoder_with_encoded_images_forward.1} parent=1 // pred_check_branch
      %103 = sbr.rel (0) target = $region41
    $region40: #{encoder_decoder_with_encoded_images_forward.1} parent=1 // pred_region
      _
    $region41: #{encoder_decoder_with_encoded_images_forward.1} parent=1 // pred_fallthru
      _
    // Predicated region
    $region42: #{encoder_decoder_with_encoded_images_forward.1} parent=1 // pred_check
      _
    $region43: #{encoder_decoder_with_encoded_images_forward.1} parent=1 // pred_check_branch
      %105 = sbr.rel (0) target = $region45
    $region44: #{encoder_decoder_with_encoded_images_forward.1} parent=1 // pred_region
      _
    $region45: #{encoder_decoder_with_encoded_images_forward.1} parent=1 // pred_fallthru
      _
    // Predicated region
    $region46: #{encoder_decoder_with_encoded_images_forward.1} parent=1 // pred_check
      _
    $region47: #{encoder_decoder_with_encoded_images_forward.1} parent=1 // pred_check_branch
      %107 = sbr.rel (0) target = $region49
    $region48: #{encoder_decoder_with_encoded_images_forward.1} parent=1 // pred_region
      _
    $region49: #{encoder_decoder_with_encoded_images_forward.1} parent=1 // pred_fallthru
      _
    // Predicated region
    $region50: #{encoder_decoder_with_encoded_images_forward.1} parent=1 // pred_check
      _
    $region51: #{encoder_decoder_with_encoded_images_forward.1} parent=1 // pred_check_branch
      %109 = sbr.rel (0) target = $region53
    $region52: #{encoder_decoder_with_encoded_images_forward.1} parent=1 // pred_region
      _
    $region53: #{encoder_decoder_with_encoded_images_forward.1} parent=1 // pred_fallthru
      _
    // Predicated region
    $region54: #{encoder_decoder_with_encoded_images_forward.1} parent=1 // pred_check
      _
    $region55: #{encoder_decoder_with_encoded_images_forward.1} parent=1 // pred_check_branch
      %111 = sbr.rel (0) target = $region57
    $region56: #{encoder_decoder_with_encoded_images_forward.1} parent=1 // pred_region
      _
    $region57: #{encoder_decoder_with_encoded_images_forward.1} parent=1 // pred_fallthru
      _
    // Predicated region
    $region58: #{encoder_decoder_with_encoded_images_forward.1} parent=1 // pred_check
      _
    $region59: #{encoder_decoder_with_encoded_images_forward.1} parent=1 // pred_check_branch
      %113 = sbr.rel (0) target = $region61
    $region60: #{encoder_decoder_with_encoded_images_forward.1} parent=1 // pred_region
      _
    $region61: #{encoder_decoder_with_encoded_images_forward.1} parent=1 // pred_fallthru
      _
    // Predicated region
    $region62: #{encoder_decoder_with_encoded_images_forward.1} parent=1 // pred_check
      _
    $region63: #{encoder_decoder_with_encoded_images_forward.1} parent=1 // pred_check_branch
      %115 = sbr.rel (0) target = $region65
    $region64: #{encoder_decoder_with_encoded_images_forward.1} parent=1 // pred_region
      _
    $region65: #{encoder_decoder_with_encoded_images_forward.1} parent=1 // pred_fallthru
      _
    // Predicated region
    $region66: #{encoder_decoder_with_encoded_images_forward.1} parent=1 // pred_check
      _
    $region67: #{encoder_decoder_with_encoded_images_forward.1} parent=1 // pred_check_branch
      %117 = sbr.rel (0) target = $region69
    $region68: #{encoder_decoder_with_encoded_images_forward.1} parent=1 // pred_region
      _
    $region69: #{encoder_decoder_with_encoded_images_forward.1} parent=1 // pred_fallthru
      _
    // Predicated region
    $region70: #{encoder_decoder_with_encoded_images_forward.1} parent=1 // pred_check
      _
    $region71: #{encoder_decoder_with_encoded_images_forward.1} parent=1 // pred_check_branch
      %119 = sbr.rel (0) target = $region73
    $region72: #{encoder_decoder_with_encoded_images_forward.1} parent=1 // pred_region
      _
    $region73: #{encoder_decoder_with_encoded_images_forward.1} parent=1 // pred_fallthru
      _
    // Predicated region
    $region74: #{encoder_decoder_with_encoded_images_forward.1} parent=1 // pred_check
      _
    $region75: #{encoder_decoder_with_encoded_images_forward.1} parent=1 // pred_check_branch
      %121 = sbr.rel (0) target = $region77
    $region76: #{encoder_decoder_with_encoded_images_forward.1} parent=1 // pred_region
      _
    $region77: #{encoder_decoder_with_encoded_images_forward.1} parent=1 // pred_fallthru
      _
    // Predicated region
    $region78: #{encoder_decoder_with_encoded_images_forward.1} parent=1 // pred_check
      _
    $region79: #{encoder_decoder_with_encoded_images_forward.1} parent=1 // pred_check_branch
      %123 = sbr.rel (0) target = $region81
    $region80: #{encoder_decoder_with_encoded_images_forward.1} parent=1 // pred_region
      _
    $region81: #{encoder_decoder_with_encoded_images_forward.1} parent=1 // pred_fallthru
      _
    // Predicated region
    $region82: #{encoder_decoder_with_encoded_images_forward.1} parent=1 // pred_check
      _
    $region83: #{encoder_decoder_with_encoded_images_forward.1} parent=1 // pred_check_branch
      %125 = sbr.rel (0) target = $region85
    $region84: #{encoder_decoder_with_encoded_images_forward.1} parent=1 // pred_region
      _
    $region85: #{encoder_decoder_with_encoded_images_forward.1} parent=1 // pred_fallthru
      _
    // Predicated region
    $region86: #{encoder_decoder_with_encoded_images_forward.1} parent=1 // pred_check
      _
    $region87: #{encoder_decoder_with_encoded_images_forward.1} parent=1 // pred_check_branch
      %127 = sbr.rel (0) target = $region89
    $region88: #{encoder_decoder_with_encoded_images_forward.1} parent=1 // pred_region
      _
    $region89: #{encoder_decoder_with_encoded_images_forward.1} parent=1 // pred_fallthru
      _
    // Predicated region
    $region90: #{encoder_decoder_with_encoded_images_forward.1} parent=1 // pred_check
      _
    $region91: #{encoder_decoder_with_encoded_images_forward.1} parent=1 // pred_check_branch
      %129 = sbr.rel (0) target = $region93
    $region92: #{encoder_decoder_with_encoded_images_forward.1} parent=1 // pred_region
      _
    $region93: #{encoder_decoder_with_encoded_images_forward.1} parent=1 // pred_fallthru
      _
    // Predicated region
    $region94: #{encoder_decoder_with_encoded_images_forward.1} parent=1 // pred_check
      _
    $region95: #{encoder_decoder_with_encoded_images_forward.1} parent=1 // pred_check_branch
      %131 = sbr.rel (0) target = $region97
    $region96: #{encoder_decoder_with_encoded_images_forward.1} parent=1 // pred_region
      _
    $region97: #{encoder_decoder_with_encoded_images_forward.1} parent=1 // pred_fallthru
      _
    // Predicated region
    $region98: #{encoder_decoder_with_encoded_images_forward.1} parent=1 // pred_check
      _
    $region99: #{encoder_decoder_with_encoded_images_forward.1} parent=1 // pred_check_branch
      %133 = sbr.rel (0) target = $region101
    $region100: #{encoder_decoder_with_encoded_images_forward.1} parent=1 // pred_region
      _
    $region101: #{encoder_decoder_with_encoded_images_forward.1} parent=1 // pred_fallthru
      _
    // Predicated region
    $region102: #{encoder_decoder_with_encoded_images_forward.1} parent=1 // pred_check
      _
    $region103: #{encoder_decoder_with_encoded_images_forward.1} parent=1 // pred_check_branch
      %135 = sbr.rel (0) target = $region105
    $region104: #{encoder_decoder_with_encoded_images_forward.1} parent=1 // pred_region
      _
    $region105: #{encoder_decoder_with_encoded_images_forward.1} parent=1 // pred_fallthru
      _
    // Predicated region
    $region106: #{encoder_decoder_with_encoded_images_forward.1} parent=1 // pred_check
      _
    $region107: #{encoder_decoder_with_encoded_images_forward.1} parent=1 // pred_check_branch
      %137 = sbr.rel (0) target = $region109
    $region108: #{encoder_decoder_with_encoded_images_forward.1} parent=1 // pred_region
      _
    $region109: #{encoder_decoder_with_encoded_images_forward.1} parent=1 // pred_fallthru
      _
    // Predicated region
    $region110: #{encoder_decoder_with_encoded_images_forward.1} parent=1 // pred_check
      _
    $region111: #{encoder_decoder_with_encoded_images_forward.1} parent=1 // pred_check_branch
      %139 = sbr.rel (0) target = $region113
    $region112: #{encoder_decoder_with_encoded_images_forward.1} parent=1 // pred_region
      _
    $region113: #{encoder_decoder_with_encoded_images_forward.1} parent=1 // pred_fallthru
      _
    // Predicated region
    $region114: #{encoder_decoder_with_encoded_images_forward.1} parent=1 // pred_check
      _
    $region115: #{encoder_decoder_with_encoded_images_forward.1} parent=1 // pred_check_branch
      %141 = sbr.rel (0) target = $region117
    $region116: #{encoder_decoder_with_encoded_images_forward.1} parent=1 // pred_region
      _
    $region117: #{encoder_decoder_with_encoded_images_forward.1} parent=1 // pred_fallthru
      _
    // Predicated region
    $region118: #{encoder_decoder_with_encoded_images_forward.1} parent=1 // pred_check
      _
    $region119: #{encoder_decoder_with_encoded_images_forward.1} parent=1 // pred_check_branch
      %143 = sbr.rel (0) target = $region121
    $region120: #{encoder_decoder_with_encoded_images_forward.1} parent=1 // pred_region
      _
    $region121: #{encoder_decoder_with_encoded_images_forward.1} parent=1 // pred_fallthru
      _
    // Predicated region
    $region122: #{encoder_decoder_with_encoded_images_forward.1} parent=1 // pred_check
      _
    $region123: #{encoder_decoder_with_encoded_images_forward.1} parent=1 // pred_check_branch
      %145 = sbr.rel (0) target = $region125
    $region124: #{encoder_decoder_with_encoded_images_forward.1} parent=1 // pred_region
      _
    $region125: #{encoder_decoder_with_encoded_images_forward.1} parent=1 // pred_fallthru
      _
    // Predicated region
    $region126: #{encoder_decoder_with_encoded_images_forward.1} parent=1 // pred_check
      _
    $region127: #{encoder_decoder_with_encoded_images_forward.1} parent=1 // pred_check_branch
      %147 = sbr.rel (0) target = $region129
    $region128: #{encoder_decoder_with_encoded_images_forward.1} parent=1 // pred_region
      _
    $region129: #{encoder_decoder_with_encoded_images_forward.1} parent=1 // pred_fallthru
      _
    // Predicated region
    $region130: #{encoder_decoder_with_encoded_images_forward.1} parent=1 // pred_check
      _
    $region131: #{encoder_decoder_with_encoded_images_forward.1} parent=1 // pred_check_branch
      %149 = sbr.rel (0) target = $region133
    $region132: #{encoder_decoder_with_encoded_images_forward.1} parent=1 // pred_region
      _
    $region133: #{encoder_decoder_with_encoded_images_forward.1} parent=1 // pred_fallthru
      _
    // Predicated region
    $region134: #{encoder_decoder_with_encoded_images_forward.1} parent=1 // pred_check
      _
    $region135: #{encoder_decoder_with_encoded_images_forward.1} parent=1 // pred_check_branch
      %151 = sbr.rel (0) target = $region137
    $region136: #{encoder_decoder_with_encoded_images_forward.1} parent=1 // pred_region
      _
    $region137: #{encoder_decoder_with_encoded_images_forward.1} parent=1 // pred_fallthru
      _
    // Predicated region
    $region138: #{encoder_decoder_with_encoded_images_forward.1} parent=1 // pred_check
      _
    $region139: #{encoder_decoder_with_encoded_images_forward.1} parent=1 // pred_check_branch
      %153 = sbr.rel (0) target = $region141
    $region140: #{encoder_decoder_with_encoded_images_forward.1} parent=1 // pred_region
      _
    $region141: #{encoder_decoder_with_encoded_images_forward.1} parent=1 // pred_fallthru
      _
    // Predicated region
    $region142: #{encoder_decoder_with_encoded_images_forward.1} parent=1 // pred_check
      _
    $region143: #{encoder_decoder_with_encoded_images_forward.1} parent=1 // pred_check_branch
      %155 = sbr.rel (0) target = $region145
    $region144: #{encoder_decoder_with_encoded_images_forward.1} parent=1 // pred_region
      _
    $region145: #{encoder_decoder_with_encoded_images_forward.1} parent=1 // pred_fallthru
      _
    %v157 = vld [vmem:[%s1] sm:$0xff]
    %v158 = vld [vmem:[%s1 + $0x8] sm:$0xff]
    %v159 = vld [vmem:[%s3] sm:$0xff]
    %v160 = vld [vmem:[%s3 + $0x8] sm:$0xff]
    %v161 = vld [vmem:[%s3 + $0x10] sm:$0xff]
    %v162 = vld [vmem:[%s3 + $0x18] sm:$0xff]
    %v163 = vld [vmem:[%s3 + $0x20] sm:$0xff]
    %v164 = vld [vmem:[%s3 + $0x28] sm:$0xff]
    %v165 = vld [vmem:[%s3 + $0x30] sm:$0xff]
    %v166 = vld [vmem:[%s3 + $0x38] sm:$0xff]
    %v167 = vld [vmem:[%s3 + $0x40] sm:$0xff]
    %v168 = vld [vmem:[%s3 + $0x48] sm:$0xff]
    %v169 = vld [vmem:[%s3 + $0x50] sm:$0xff]
    %v170 = vld [vmem:[%s3 + $0x58] sm:$0xff]
    %v171 = vld [vmem:[%s3 + $0x60] sm:$0xff]
    %v172 = vld [vmem:[%s3 + $0x68] sm:$0xff]
    %v173 = vld [vmem:[%s3 + $0x70] sm:$0xff]
    %v174 = vld [vmem:[%s3 + $0x78] sm:$0xff]
    %v175 = vld [vmem:[%s5] sm:$0xff]
    %v176 = vld [vmem:[%s5 + $0x8] sm:$0xff]
    %v177 = vld [vmem:[%s5 + $0x10] sm:$0xff]
    %v178 = vld [vmem:[%s5 + $0x18] sm:$0xff]
    %v179 = vld [vmem:[%s5 + $0x20] sm:$0xff]
    %v180 = vld [vmem:[%s5 + $0x28] sm:$0xff]
    %v181 = vld [vmem:[%s5 + $0x30] sm:$0xff]
    %v182 = vld [vmem:[%s5 + $0x38] sm:$0xff]
    %v183 = vld [vmem:[%s5 + $0x40] sm:$0xff]
    %v184 = vld [vmem:[%s5 + $0x48] sm:$0xff]
    %v185 = vld [vmem:[%s5 + $0x50] sm:$0xff]
    %v186 = vld [vmem:[%s5 + $0x58] sm:$0xff]
    %v187 = vld [vmem:[%s5 + $0x60] sm:$0xff]
    %v188 = vld [vmem:[%s5 + $0x68] sm:$0xff]
    %v189 = vld [vmem:[%s5 + $0x70] sm:$0xff]
    %v190 = vld [vmem:[%s5 + $0x78] sm:$0xff]
    %v191 = vld [vmem:[%s11] sm:$0xff]
    %v192 = vld [vmem:[%s11 + $0x8] sm:$0xff]
    %v193 = vld [vmem:[%s11 + $0x10] sm:$0xff]
    %v194 = vld [vmem:[%s11 + $0x18] sm:$0xff]
    %v195 = vld [vmem:[%s11 + $0x20] sm:$0xff]
    %v196 = vld [vmem:[%s11 + $0x28] sm:$0xff]
    %v197 = vld [vmem:[%s11 + $0x30] sm:$0xff]
    %v198 = vld [vmem:[%s11 + $0x38] sm:$0xff]
    %v199 = vld [vmem:[%s11 + $0x40] sm:$0xff]
    %v200 = vld [vmem:[%s11 + $0x48] sm:$0xff]
    %v201 = vld [vmem:[%s11 + $0x50] sm:$0xff]
    %v202 = vld [vmem:[%s11 + $0x58] sm:$0xff]
    %v203 = vld [vmem:[%s11 + $0x60] sm:$0xff]
    %v204 = vld [vmem:[%s11 + $0x68] sm:$0xff]
    %v205 = vld [vmem:[%s11 + $0x70] sm:$0xff]
    %v206 = vld [vmem:[%s11 + $0x78] sm:$0xff]
    %v207 = vld [vmem:[%s11 + $0x80] sm:$0xff]
    %v208 = vld [vmem:[%s11 + $0x88] sm:$0xff]
    %v209 = vld [vmem:[%s11 + $0x90] sm:$0xff]
    %v210 = vld [vmem:[%s11 + $0x98] sm:$0xff]
    %v211 = vld [vmem:[%s11 + $0xa0] sm:$0xff]
    %v212 = vld [vmem:[%s11 + $0xa8] sm:$0xff]
    %v213 = vld [vmem:[%s11 + $0xb0] sm:$0xff]
    %v214 = vld [vmem:[%s11 + $0xb8] sm:$0xff]
    %v215 = vld [vmem:[%s11 + $0xc0] sm:$0xff]
    %v216 = vld [vmem:[%s11 + $0xc8] sm:$0xff]
    %v217 = vld [vmem:[%s11 + $0xd0] sm:$0xff]
    %v218 = vld [vmem:[%s11 + $0xd8] sm:$0xff]
    %v219 = vld [vmem:[%s11 + $0xe0] sm:$0xff]
    %v220 = vld [vmem:[%s11 + $0xe8] sm:$0xff]
    %v221 = vld [vmem:[%s11 + $0xf0] sm:$0xff]
    %v222 = vld [vmem:[%s11 + $0xf8] sm:$0xff]
    %v225 = vunpack.c.l.b16 %v157
    %v226 = vunpack.c.h.b16 %v157
    %v227 = vunpack.c.l.b16 %v158
    %v228 = vunpack.c.h.b16 %v158
    %v229 = vpack.c.b16 %v227, %v225
    %v230 = vpack.c.b16 %v228, %v226
    %v265 = vunpack.c.l.b16 %v191
    %v266 = vunpack.c.h.b16 %v191
    %v267 = vunpack.c.l.b16 %v192
    %v268 = vunpack.c.h.b16 %v192
    %v269 = vunpack.c.l.b16 %v193
    %v270 = vunpack.c.h.b16 %v193
    %v271 = vunpack.c.l.b16 %v194
    %v272 = vunpack.c.h.b16 %v194
    %v273 = vunpack.c.l.b16 %v195
    %v274 = vunpack.c.h.b16 %v195
    %v275 = vunpack.c.l.b16 %v196
    %v276 = vunpack.c.h.b16 %v196
    %v277 = vunpack.c.l.b16 %v197
    %v278 = vunpack.c.h.b16 %v197
    %v279 = vunpack.c.l.b16 %v198
    %v280 = vunpack.c.h.b16 %v198
    %v281 = vunpack.c.l.b16 %v199
    %v282 = vunpack.c.h.b16 %v199
    %v283 = vunpack.c.l.b16 %v200
    %v284 = vunpack.c.h.b16 %v200
    %v285 = vunpack.c.l.b16 %v201
    %v286 = vunpack.c.h.b16 %v201
    %v287 = vunpack.c.l.b16 %v202
    %v288 = vunpack.c.h.b16 %v202
    %v289 = vunpack.c.l.b16 %v203
    %v290 = vunpack.c.h.b16 %v203
    %v291 = vunpack.c.l.b16 %v204
    %v292 = vunpack.c.h.b16 %v204
    %v293 = vunpack.c.l.b16 %v205
    %v294 = vunpack.c.h.b16 %v205
    %v295 = vunpack.c.l.b16 %v206
    %v296 = vunpack.c.h.b16 %v206
    %v297 = vunpack.c.l.b16 %v207
    %v298 = vunpack.c.h.b16 %v207
    %v299 = vunpack.c.l.b16 %v208
    %v300 = vunpack.c.h.b16 %v208
    %v301 = vunpack.c.l.b16 %v209
    %v302 = vunpack.c.h.b16 %v209
    %v303 = vunpack.c.l.b16 %v210
    %v304 = vunpack.c.h.b16 %v210
    %v305 = vunpack.c.l.b16 %v211
    %v306 = vunpack.c.h.b16 %v211
    %v307 = vunpack.c.l.b16 %v212
    %v308 = vunpack.c.h.b16 %v212
    %v309 = vunpack.c.l.b16 %v213
    %v310 = vunpack.c.h.b16 %v213
    %v311 = vunpack.c.l.b16 %v214
    %v312 = vunpack.c.h.b16 %v214
    %v313 = vunpack.c.l.b16 %v215
    %v314 = vunpack.c.h.b16 %v215
    %v315 = vunpack.c.l.b16 %v216
    %v316 = vunpack.c.h.b16 %v216
    %v317 = vunpack.c.l.b16 %v217
    %v318 = vunpack.c.h.b16 %v217
    %v319 = vunpack.c.l.b16 %v218
    %v320 = vunpack.c.h.b16 %v218
    %v321 = vunpack.c.l.b16 %v219
    %v322 = vunpack.c.h.b16 %v219
    %v323 = vunpack.c.l.b16 %v220
    %v324 = vunpack.c.h.b16 %v220
    %v325 = vunpack.c.l.b16 %v221
    %v326 = vunpack.c.h.b16 %v221
    %v327 = vunpack.c.l.b16 %v222
    %v328 = vunpack.c.h.b16 %v222
    %v329 = vpack.c.b16 %v267, %v265
    %v330 = vpack.c.b16 %v268, %v266
    %v331 = vpack.c.b16 %v271, %v269
    %v332 = vpack.c.b16 %v272, %v270
    %v333 = vpack.c.b16 %v275, %v273
    %v334 = vpack.c.b16 %v276, %v274
    %v335 = vpack.c.b16 %v279, %v277
    %v336 = vpack.c.b16 %v280, %v278
    %v337 = vpack.c.b16 %v283, %v281
    %v338 = vpack.c.b16 %v284, %v282
    %v339 = vpack.c.b16 %v287, %v285
    %v340 = vpack.c.b16 %v288, %v286
    %v341 = vpack.c.b16 %v291, %v289
    %v342 = vpack.c.b16 %v292, %v290
    %v343 = vpack.c.b16 %v295, %v293
    %v344 = vpack.c.b16 %v296, %v294
    %v345 = vpack.c.b16 %v299, %v297
    %v346 = vpack.c.b16 %v300, %v298
    %v347 = vpack.c.b16 %v303, %v301
    %v348 = vpack.c.b16 %v304, %v302
    %v349 = vpack.c.b16 %v307, %v305
    %v350 = vpack.c.b16 %v308, %v306
    %v351 = vpack.c.b16 %v311, %v309
    %v352 = vpack.c.b16 %v312, %v310
    %v353 = vpack.c.b16 %v315, %v313
    %v354 = vpack.c.b16 %v316, %v314
    %v355 = vpack.c.b16 %v319, %v317
    %v356 = vpack.c.b16 %v320, %v318
    %v357 = vpack.c.b16 %v323, %v321
    %v358 = vpack.c.b16 %v324, %v322
    %v359 = vpack.c.b16 %v327, %v325
    %v360 = vpack.c.b16 %v328, %v326
    %393 = vmatprep.subr.bf16.mxu0 %v330
    %394 = vmatpush1.bf16.msra.mxu0 %v329
    %395 = vmatprep.subr.bf16.mxu0 %v332
    %396 = vmatpush1.bf16.msra.mxu0 %v331
    %397 = vmatprep.subr.bf16.mxu0 %v334
    %398 = vmatpush1.bf16.msra.mxu0 %v333
    %399 = vmatprep.subr.bf16.mxu0 %v336
    %400 = vmatpush1.bf16.msra.mxu0 %v335
    %401 = vmatprep.subr.bf16.mxu0 %v338
    %402 = vmatpush1.bf16.msra.mxu0 %v337
    %403 = vmatprep.subr.bf16.mxu0 %v340
    %404 = vmatpush1.bf16.msra.mxu0 %v339
    %405 = vmatprep.subr.bf16.mxu0 %v342
    %406 = vmatpush1.bf16.msra.mxu0 %v341
    %407 = vmatprep.subr.bf16.mxu0 %v344
    %408 = vmatpush1.bf16.msra.mxu0 %v343
    %409 = vmatprep.subr.bf16.mxu0 %v346
    %410 = vmatpush1.bf16.msra.mxu0 %v345
    %411 = vmatprep.subr.bf16.mxu0 %v348
    %412 = vmatpush1.bf16.msra.mxu0 %v347
    %413 = vmatprep.subr.bf16.mxu0 %v350
    %414 = vmatpush1.bf16.msra.mxu0 %v349
    %415 = vmatprep.subr.bf16.mxu0 %v352
    %416 = vmatpush1.bf16.msra.mxu0 %v351
    %417 = vmatprep.subr.bf16.mxu0 %v354
    %418 = vmatpush1.bf16.msra.mxu0 %v353
    %419 = vmatprep.subr.bf16.mxu0 %v356
    %420 = vmatpush1.bf16.msra.mxu0 %v355
    %421 = vmatprep.subr.bf16.mxu0 %v358
    %422 = vmatpush1.bf16.msra.mxu0 %v357
    %423 = vmatprep.subr.bf16.mxu0 %v360
    %424 = vmatpush1.bf16.msra.mxu0 %v359
    %425 = vmatprep.mubr.bf16.mxu0 %v230
    %426 = vmatmul.mubr.bf16.gmra.mrb[0].mxu0 %v229
    %v427 = vpop.f32.mrb[0].mxu0
    %v428 = vadd.f32 0.0, %v427
    %v429 = vpop.f32.mrb[0].mxu0
    %v430 = vadd.f32 0.0, %v429
    %v431 = vpop.f32.mrb[0].mxu0
    %v432 = vadd.f32 0.0, %v431
    %v433 = vpop.f32.mrb[0].mxu0
    %v434 = vadd.f32 0.0, %v433
    %435 = vdwg.mxu0
    %v436 = vld [vmem:[%s13] sm:$0xff]
    %v437 = vld [vmem:[%s13 + $0x8] sm:$0xff]
    %v438 = vld [vmem:[%s13 + $0x10] sm:$0xff]
    %v439 = vld [vmem:[%s13 + $0x18] sm:$0xff]
    %v440 = vld [vmem:[%s13 + $0x20] sm:$0xff]
    %v441 = vld [vmem:[%s13 + $0x28] sm:$0xff]
    %v442 = vld [vmem:[%s13 + $0x30] sm:$0xff]
    %v443 = vld [vmem:[%s13 + $0x38] sm:$0xff]
    %v444 = vld [vmem:[%s13 + $0x40] sm:$0xff]
    %v445 = vld [vmem:[%s13 + $0x48] sm:$0xff]
    %v446 = vld [vmem:[%s13 + $0x50] sm:$0xff]
    %v447 = vld [vmem:[%s13 + $0x58] sm:$0xff]
    %v448 = vld [vmem:[%s13 + $0x60] sm:$0xff]
    %v449 = vld [vmem:[%s13 + $0x68] sm:$0xff]
    %v450 = vld [vmem:[%s13 + $0x70] sm:$0xff]
    %v451 = vld [vmem:[%s13 + $0x78] sm:$0xff]
    %v452 = vld [vmem:[%s13 + $0x80] sm:$0xff]
    %v453 = vld [vmem:[%s13 + $0x88] sm:$0xff]
    %v454 = vld [vmem:[%s13 + $0x90] sm:$0xff]
    %v455 = vld [vmem:[%s13 + $0x98] sm:$0xff]
    %v456 = vld [vmem:[%s13 + $0xa0] sm:$0xff]
    %v457 = vld [vmem:[%s13 + $0xa8] sm:$0xff]
    %v458 = vld [vmem:[%s13 + $0xb0] sm:$0xff]
    %v459 = vld [vmem:[%s13 + $0xb8] sm:$0xff]
    %v460 = vld [vmem:[%s13 + $0xc0] sm:$0xff]
    %v461 = vld [vmem:[%s13 + $0xc8] sm:$0xff]
    %v462 = vld [vmem:[%s13 + $0xd0] sm:$0xff]
    %v463 = vld [vmem:[%s13 + $0xd8] sm:$0xff]
    %v464 = vld [vmem:[%s13 + $0xe0] sm:$0xff]
    %v465 = vld [vmem:[%s13 + $0xe8] sm:$0xff]
    %v466 = vld [vmem:[%s13 + $0xf0] sm:$0xff]
    %v467 = vld [vmem:[%s13 + $0xf8] sm:$0xff]
    %v500 = vunpack.c.l.b16 %v436
    %v501 = vunpack.c.h.b16 %v436
    %v502 = vunpack.c.l.b16 %v437
    %v503 = vunpack.c.h.b16 %v437
    %v504 = vunpack.c.l.b16 %v438
    %v505 = vunpack.c.h.b16 %v438
    %v506 = vunpack.c.l.b16 %v439
    %v507 = vunpack.c.h.b16 %v439
    %v508 = vunpack.c.l.b16 %v440
    %v509 = vunpack.c.h.b16 %v440
    %v510 = vunpack.c.l.b16 %v441
    %v511 = vunpack.c.h.b16 %v441
    %v512 = vunpack.c.l.b16 %v442
    %v513 = vunpack.c.h.b16 %v442
    %v514 = vunpack.c.l.b16 %v443
    %v515 = vunpack.c.h.b16 %v443
    %v516 = vunpack.c.l.b16 %v444
    %v517 = vunpack.c.h.b16 %v444
    %v518 = vunpack.c.l.b16 %v445
    %v519 = vunpack.c.h.b16 %v445
    %v520 = vunpack.c.l.b16 %v446
    %v521 = vunpack.c.h.b16 %v446
    %v522 = vunpack.c.l.b16 %v447
    %v523 = vunpack.c.h.b16 %v447
    %v524 = vunpack.c.l.b16 %v448
    %v525 = vunpack.c.h.b16 %v448
    %v526 = vunpack.c.l.b16 %v449
    %v527 = vunpack.c.h.b16 %v449
    %v528 = vunpack.c.l.b16 %v450
    %v529 = vunpack.c.h.b16 %v450
    %v530 = vunpack.c.l.b16 %v451
    %v531 = vunpack.c.h.b16 %v451
    %v532 = vunpack.c.l.b16 %v452
    %v533 = vunpack.c.h.b16 %v452
    %v534 = vunpack.c.l.b16 %v453
    %v535 = vunpack.c.h.b16 %v453
    %v536 = vunpack.c.l.b16 %v454
    %v537 = vunpack.c.h.b16 %v454
    %v538 = vunpack.c.l.b16 %v455
    %v539 = vunpack.c.h.b16 %v455
    %v540 = vunpack.c.l.b16 %v456
    %v541 = vunpack.c.h.b16 %v456
    %v542 = vunpack.c.l.b16 %v457
    %v543 = vunpack.c.h.b16 %v457
    %v544 = vunpack.c.l.b16 %v458
    %v545 = vunpack.c.h.b16 %v458
    %v546 = vunpack.c.l.b16 %v459
    %v547 = vunpack.c.h.b16 %v459
    %v548 = vunpack.c.l.b16 %v460
    %v549 = vunpack.c.h.b16 %v460
    %v550 = vunpack.c.l.b16 %v461
    %v551 = vunpack.c.h.b16 %v461
    %v552 = vunpack.c.l.b16 %v462
    %v553 = vunpack.c.h.b16 %v462
    %v554 = vunpack.c.l.b16 %v463
    %v555 = vunpack.c.h.b16 %v463
    %v556 = vunpack.c.l.b16 %v464
    %v557 = vunpack.c.h.b16 %v464
    %v558 = vunpack.c.l.b16 %v465
    %v559 = vunpack.c.h.b16 %v465
    %v560 = vunpack.c.l.b16 %v466
    %v561 = vunpack.c.h.b16 %v466
    %v562 = vunpack.c.l.b16 %v467
    %v563 = vunpack.c.h.b16 %v467
    %v564 = vpack.c.b16 %v502, %v500
    %v565 = vpack.c.b16 %v503, %v501
    %v566 = vpack.c.b16 %v506, %v504
    %v567 = vpack.c.b16 %v507, %v505
    %v568 = vpack.c.b16 %v510, %v508
    %v569 = vpack.c.b16 %v511, %v509
    %v570 = vpack.c.b16 %v514, %v512
    %v571 = vpack.c.b16 %v515, %v513
    %v572 = vpack.c.b16 %v518, %v516
    %v573 = vpack.c.b16 %v519, %v517
    %v574 = vpack.c.b16 %v522, %v520
    %v575 = vpack.c.b16 %v523, %v521
    %v576 = vpack.c.b16 %v526, %v524
    %v577 = vpack.c.b16 %v527, %v525
    %v578 = vpack.c.b16 %v530, %v528
    %v579 = vpack.c.b16 %v531, %v529
    %v580 = vpack.c.b16 %v534, %v532
    %v581 = vpack.c.b16 %v535, %v533
    %v582 = vpack.c.b16 %v538, %v536
    %v583 = vpack.c.b16 %v539, %v537
    %v584 = vpack.c.b16 %v542, %v540
    %v585 = vpack.c.b16 %v543, %v541
    %v586 = vpack.c.b16 %v546, %v544
    %v587 = vpack.c.b16 %v547, %v545
    %v588 = vpack.c.b16 %v550, %v548
    %v589 = vpack.c.b16 %v551, %v549
    %v590 = vpack.c.b16 %v554, %v552
    %v591 = vpack.c.b16 %v555, %v553
    %v592 = vpack.c.b16 %v558, %v556
    %v593 = vpack.c.b16 %v559, %v557
    %v594 = vpack.c.b16 %v562, %v560
    %v595 = vpack.c.b16 %v563, %v561
    %628 = vmatprep.subr.bf16.mxu0 %v565
    %629 = vmatpush1.bf16.msra.mxu0 %v564
    %630 = vmatprep.subr.bf16.mxu0 %v567
    %631 = vmatpush1.bf16.msra.mxu0 %v566
    %632 = vmatprep.subr.bf16.mxu0 %v569
    %633 = vmatpush1.bf16.msra.mxu0 %v568
    %634 = vmatprep.subr.bf16.mxu0 %v571
    %635 = vmatpush1.bf16.msra.mxu0 %v570
    %636 = vmatprep.subr.bf16.mxu0 %v573
    %637 = vmatpush1.bf16.msra.mxu0 %v572
    %638 = vmatprep.subr.bf16.mxu0 %v575
    %639 = vmatpush1.bf16.msra.mxu0 %v574
    %640 = vmatprep.subr.bf16.mxu0 %v577
    %641 = vmatpush1.bf16.msra.mxu0 %v576
    %642 = vmatprep.subr.bf16.mxu0 %v579
    %643 = vmatpush1.bf16.msra.mxu0 %v578
    %644 = vmatprep.subr.bf16.mxu0 %v581
    %645 = vmatpush1.bf16.msra.mxu0 %v580
    %646 = vmatprep.subr.bf16.mxu0 %v583
    %647 = vmatpush1.bf16.msra.mxu0 %v582
    %648 = vmatprep.subr.bf16.mxu0 %v585
    %649 = vmatpush1.bf16.msra.mxu0 %v584
    %650 = vmatprep.subr.bf16.mxu0 %v587
    %651 = vmatpush1.bf16.msra.mxu0 %v586
    %652 = vmatprep.subr.bf16.mxu0 %v589
    %653 = vmatpush1.bf16.msra.mxu0 %v588
    %654 = vmatprep.subr.bf16.mxu0 %v591
    %655 = vmatpush1.bf16.msra.mxu0 %v590
    %656 = vmatprep.subr.bf16.mxu0 %v593
    %657 = vmatpush1.bf16.msra.mxu0 %v592
    %658 = vmatprep.subr.bf16.mxu0 %v595
    %659 = vmatpush1.bf16.msra.mxu0 %v594
    %660 = vmatprep.mubr.bf16.mxu0 %v230
    %661 = vmatmul.mubr.bf16.gmra.mrb[0].mxu0 %v229
    %v662 = vpop.f32.mrb[0].mxu0
    %v663 = vadd.f32 0.0, %v662
    %v664 = vpop.f32.mrb[0].mxu0
    %v665 = vadd.f32 0.0, %v664
    %v666 = vpop.f32.mrb[0].mxu0
    %v667 = vadd.f32 0.0, %v666
    %v668 = vpop.f32.mrb[0].mxu0
    %v669 = vadd.f32 0.0, %v668
    %670 = vdwg.mxu0
    %vm671 = vcmask 130048
    %v673 = vsel %vm671, %v175, 0
    %v676 = vsel %vm671, %v176, 0
    %v679 = vsel %vm671, %v177, 0
    %v682 = vsel %vm671, %v178, 0
    %v685 = vsel %vm671, %v179, 0
    %v688 = vsel %vm671, %v180, 0
    %v691 = vsel %vm671, %v181, 0
    %v694 = vsel %vm671, %v182, 0
    %v697 = vsel %vm671, %v183, 0
    %v700 = vsel %vm671, %v184, 0
    %v703 = vsel %vm671, %v185, 0
    %v706 = vsel %vm671, %v186, 0
    %v709 = vsel %vm671, %v187, 0
    %v712 = vsel %vm671, %v188, 0
    %v715 = vsel %vm671, %v189, 0
    %v718 = vsel %vm671, %v190, 0
    %720 = vmatprep.subr.mxu0 %v665
    %721 = vmatpush1.msra.mxu0 %v663
    %722 = vmatprep.subr.mxu0 %v669
    %723 = vmatpush1.msra.mxu0 %v667
    %724 = vmatprep.subr.mxu0 0.0
    %725 = vmatpush1.msra.mxu0 0.0
    %726 = vmatprep.subr.mxu0 0.0
    %727 = vmatpush1.msra.mxu0 0.0
    %728 = vmatprep.subr.mxu0 0.0
    %729 = vmatpush1.msra.mxu0 0.0
    %730 = vmatprep.subr.mxu0 0.0
    %731 = vmatpush1.msra.mxu0 0.0
    %732 = vmatprep.subr.mxu0 0.0
    %733 = vmatpush1.msra.mxu0 0.0
    %734 = vmatprep.subr.mxu0 0.0
    %735 = vmatpush1.msra.mxu0 0.0
    %736 = vmatprep.subr.mxu0 0.0
    %737 = vmatpush1.msra.mxu0 0.0
    %738 = vmatprep.subr.mxu0 0.0
    %739 = vmatpush1.msra.mxu0 0.0
    %740 = vmatprep.subr.mxu0 0.0
    %741 = vmatpush1.msra.mxu0 0.0
    %742 = vmatprep.subr.mxu0 0.0
    %743 = vmatpush1.msra.mxu0 0.0
    %744 = vmatprep.subr.mxu0 0.0
    %745 = vmatpush1.msra.mxu0 0.0
    %746 = vmatprep.subr.mxu0 0.0
    %747 = vmatpush1.msra.mxu0 0.0
    %748 = vmatprep.subr.mxu0 0.0
    %749 = vmatpush1.msra.mxu0 0.0
    %750 = vmatprep.subr.mxu0 0.0
    %751 = vmatpush1.msra.mxu0 0.0
    %752 = vmatprep.subr.mxu0 0.0
    %753 = vmatpush1.msra.mxu0 0.0
    %754 = vmatprep.subr.mxu0 0.0
    %755 = vmatpush1.msra.mxu0 0.0
    %756 = vmatprep.subr.mxu0 0.0
    %757 = vmatpush1.msra.mxu0 0.0
    %758 = vmatprep.subr.mxu0 0.0
    %759 = vmatpush1.msra.mxu0 0.0
    %760 = vmatprep.subr.mxu0 0.0
    %761 = vmatpush1.msra.mxu0 0.0
    %762 = vmatprep.subr.mxu0 0.0
    %763 = vmatpush1.msra.mxu0 0.0
    %764 = vmatprep.subr.mxu0 0.0
    %765 = vmatpush1.msra.mxu0 0.0
    %766 = vmatprep.subr.mxu0 0.0
    %767 = vmatpush1.msra.mxu0 0.0
    %768 = vmatprep.subr.mxu0 0.0
    %769 = vmatpush1.msra.mxu0 0.0
    %770 = vmatprep.subr.mxu0 0.0
    %771 = vmatpush1.msra.mxu0 0.0
    %772 = vmatprep.subr.mxu0 0.0
    %773 = vmatpush1.msra.mxu0 0.0
    %774 = vmatprep.subr.mxu0 0.0
    %775 = vmatpush1.msra.mxu0 0.0
    %776 = vmatprep.subr.mxu0 0.0
    %777 = vmatpush1.msra.mxu0 0.0
    %778 = vmatprep.subr.mxu0 0.0
    %779 = vmatpush1.msra.mxu0 0.0
    %780 = vmatprep.subr.mxu0 0.0
    %781 = vmatpush1.msra.mxu0 0.0
    %782 = vmatprep.subr.mxu0 0.0
    %783 = vmatpush1.msra.mxu0 0.0
    %784 = vmatprep.mubr.f32.mxu0 0.0
    %785 = vmatmul.mubr.f32.gmra.mrb[0].mxu0 %v673
    %v786 = vpop.f32.mrb[0].mxu0
    %v787 = vadd.f32 0.0, %v786
    %v788 = vpop.f32.mrb[0].mxu0
    %v789 = vadd.f32 0.0, %v788
    %790 = vmatprep.mubr.f32.mxu0 0.0
    %791 = vmatmul.mubr.f32.gmra.mrb[0].mxu0 %v676
    %v792 = vpop.f32.mrb[0].mxu0
    %v793 = vadd.f32 0.0, %v792
    %v794 = vpop.f32.mrb[0].mxu0
    %v795 = vadd.f32 0.0, %v794
    %796 = vmatprep.mubr.f32.mxu0 0.0
    %797 = vmatmul.mubr.f32.gmra.mrb[0].mxu0 %v679
    %v798 = vpop.f32.mrb[0].mxu0
    %v799 = vadd.f32 0.0, %v798
    %v800 = vpop.f32.mrb[0].mxu0
    %v801 = vadd.f32 0.0, %v800
    %802 = vmatprep.mubr.f32.mxu0 0.0
    %803 = vmatmul.mubr.f32.gmra.mrb[0].mxu0 %v682
    %v804 = vpop.f32.mrb[0].mxu0
    %v805 = vadd.f32 0.0, %v804
    %v806 = vpop.f32.mrb[0].mxu0
    %v807 = vadd.f32 0.0, %v806
    %808 = vmatprep.mubr.f32.mxu0 0.0
    %809 = vmatmul.mubr.f32.gmra.mrb[0].mxu0 %v685
    %v810 = vpop.f32.mrb[0].mxu0
    %v811 = vadd.f32 0.0, %v810
    %v812 = vpop.f32.mrb[0].mxu0
    %v813 = vadd.f32 0.0, %v812
    %814 = vmatprep.mubr.f32.mxu0 0.0
    %815 = vmatmul.mubr.f32.gmra.mrb[0].mxu0 %v688
    %v816 = vpop.f32.mrb[0].mxu0
    %v817 = vadd.f32 0.0, %v816
    %v818 = vpop.f32.mrb[0].mxu0
    %v819 = vadd.f32 0.0, %v818
    %820 = vmatprep.mubr.f32.mxu0 0.0
    %821 = vmatmul.mubr.f32.gmra.mrb[0].mxu0 %v691
    %v822 = vpop.f32.mrb[0].mxu0
    %v823 = vadd.f32 0.0, %v822
    %v824 = vpop.f32.mrb[0].mxu0
    %v825 = vadd.f32 0.0, %v824
    %826 = vmatprep.mubr.f32.mxu0 0.0
    %827 = vmatmul.mubr.f32.gmra.mrb[0].mxu0 %v694
    %v828 = vpop.f32.mrb[0].mxu0
    %v829 = vadd.f32 0.0, %v828
    %v830 = vpop.f32.mrb[0].mxu0
    %v831 = vadd.f32 0.0, %v830
    %832 = vmatprep.mubr.f32.mxu0 0.0
    %833 = vmatmul.mubr.f32.gmra.mrb[0].mxu0 %v697
    %v834 = vpop.f32.mrb[0].mxu0
    %v835 = vadd.f32 0.0, %v834
    %v836 = vpop.f32.mrb[0].mxu0
    %v837 = vadd.f32 0.0, %v836
    %838 = vmatprep.mubr.f32.mxu0 0.0
    %839 = vmatmul.mubr.f32.gmra.mrb[0].mxu0 %v700
    %v840 = vpop.f32.mrb[0].mxu0
    %v841 = vadd.f32 0.0, %v840
    %v842 = vpop.f32.mrb[0].mxu0
    %v843 = vadd.f32 0.0, %v842
    %844 = vmatprep.mubr.f32.mxu0 0.0
    %845 = vmatmul.mubr.f32.gmra.mrb[0].mxu0 %v703
    %v846 = vpop.f32.mrb[0].mxu0
    %v847 = vadd.f32 0.0, %v846
    %v848 = vpop.f32.mrb[0].mxu0
    %v849 = vadd.f32 0.0, %v848
    %850 = vmatprep.mubr.f32.mxu0 0.0
    %851 = vmatmul.mubr.f32.gmra.mrb[0].mxu0 %v706
    %v852 = vpop.f32.mrb[0].mxu0
    %v853 = vadd.f32 0.0, %v852
    %v854 = vpop.f32.mrb[0].mxu0
    %v855 = vadd.f32 0.0, %v854
    %856 = vmatprep.mubr.f32.mxu0 0.0
    %857 = vmatmul.mubr.f32.gmra.mrb[0].mxu0 %v709
    %v858 = vpop.f32.mrb[0].mxu0
    %v859 = vadd.f32 0.0, %v858
    %v860 = vpop.f32.mrb[0].mxu0
    %v861 = vadd.f32 0.0, %v860
    %862 = vmatprep.mubr.f32.mxu0 0.0
    %863 = vmatmul.mubr.f32.gmra.mrb[0].mxu0 %v712
    %v864 = vpop.f32.mrb[0].mxu0
    %v865 = vadd.f32 0.0, %v864
    %v866 = vpop.f32.mrb[0].mxu0
    %v867 = vadd.f32 0.0, %v866
    %868 = vmatprep.mubr.f32.mxu0 0.0
    %869 = vmatmul.mubr.f32.gmra.mrb[0].mxu0 %v715
    %v870 = vpop.f32.mrb[0].mxu0
    %v871 = vadd.f32 0.0, %v870
    %v872 = vpop.f32.mrb[0].mxu0
    %v873 = vadd.f32 0.0, %v872
    %874 = vmatprep.mubr.f32.mxu0 0.0
    %875 = vmatmul.mubr.f32.gmra.mrb[0].mxu0 %v718
    %v876 = vpop.f32.mrb[0].mxu0
    %v877 = vadd.f32 0.0, %v876
    %v878 = vpop.f32.mrb[0].mxu0
    %v879 = vadd.f32 0.0, %v878
    %880 = vdwg.mxu0
    %v882 = vsel %vm671, %v159, 0
    %v885 = vsel %vm671, %v160, 0
    %v888 = vsel %vm671, %v161, 0
    %v891 = vsel %vm671, %v162, 0
    %v894 = vsel %vm671, %v163, 0
    %v897 = vsel %vm671, %v164, 0
    %v900 = vsel %vm671, %v165, 0
    %v903 = vsel %vm671, %v166, 0
    %v906 = vsel %vm671, %v167, 0
    %v909 = vsel %vm671, %v168, 0
    %v912 = vsel %vm671, %v169, 0
    %v915 = vsel %vm671, %v170, 0
    %v918 = vsel %vm671, %v171, 0
    %v921 = vsel %vm671, %v172, 0
    %v924 = vsel %vm671, %v173, 0
    %v927 = vsel %vm671, %v174, 0
    %929 = vmatprep.subr.mxu0 %v430
    %930 = vmatpush1.msra.mxu0 %v428
    %931 = vmatprep.subr.mxu0 %v434
    %932 = vmatpush1.msra.mxu0 %v432
    %933 = vmatprep.subr.mxu0 0.0
    %934 = vmatpush1.msra.mxu0 0.0
    %935 = vmatprep.subr.mxu0 0.0
    %936 = vmatpush1.msra.mxu0 0.0
    %937 = vmatprep.subr.mxu0 0.0
    %938 = vmatpush1.msra.mxu0 0.0
    %939 = vmatprep.subr.mxu0 0.0
    %940 = vmatpush1.msra.mxu0 0.0
    %941 = vmatprep.subr.mxu0 0.0
    %942 = vmatpush1.msra.mxu0 0.0
    %943 = vmatprep.subr.mxu0 0.0
    %944 = vmatpush1.msra.mxu0 0.0
    %945 = vmatprep.subr.mxu0 0.0
    %946 = vmatpush1.msra.mxu0 0.0
    %947 = vmatprep.subr.mxu0 0.0
    %948 = vmatpush1.msra.mxu0 0.0
    %949 = vmatprep.subr.mxu0 0.0
    %950 = vmatpush1.msra.mxu0 0.0
    %951 = vmatprep.subr.mxu0 0.0
    %952 = vmatpush1.msra.mxu0 0.0
    %953 = vmatprep.subr.mxu0 0.0
    %954 = vmatpush1.msra.mxu0 0.0
    %955 = vmatprep.subr.mxu0 0.0
    %956 = vmatpush1.msra.mxu0 0.0
    %957 = vmatprep.subr.mxu0 0.0
    %958 = vmatpush1.msra.mxu0 0.0
    %959 = vmatprep.subr.mxu0 0.0
    %960 = vmatpush1.msra.mxu0 0.0
    %961 = vmatprep.subr.mxu0 0.0
    %962 = vmatpush1.msra.mxu0 0.0
    %963 = vmatprep.subr.mxu0 0.0
    %964 = vmatpush1.msra.mxu0 0.0
    %965 = vmatprep.subr.mxu0 0.0
    %966 = vmatpush1.msra.mxu0 0.0
    %967 = vmatprep.subr.mxu0 0.0
    %968 = vmatpush1.msra.mxu0 0.0
    %969 = vmatprep.subr.mxu0 0.0
    %970 = vmatpush1.msra.mxu0 0.0
    %971 = vmatprep.subr.mxu0 0.0
    %972 = vmatpush1.msra.mxu0 0.0
    %973 = vmatprep.subr.mxu0 0.0
    %974 = vmatpush1.msra.mxu0 0.0
    %975 = vmatprep.subr.mxu0 0.0
    %976 = vmatpush1.msra.mxu0 0.0
    %977 = vmatprep.subr.mxu0 0.0
    %978 = vmatpush1.msra.mxu0 0.0
    %979 = vmatprep.subr.mxu0 0.0
    %980 = vmatpush1.msra.mxu0 0.0
    %981 = vmatprep.subr.mxu0 0.0
    %982 = vmatpush1.msra.mxu0 0.0
    %983 = vmatprep.subr.mxu0 0.0
    %984 = vmatpush1.msra.mxu0 0.0
    %985 = vmatprep.subr.mxu0 0.0
    %986 = vmatpush1.msra.mxu0 0.0
    %987 = vmatprep.subr.mxu0 0.0
    %988 = vmatpush1.msra.mxu0 0.0
    %989 = vmatprep.subr.mxu0 0.0
    %990 = vmatpush1.msra.mxu0 0.0
    %991 = vmatprep.subr.mxu0 0.0
    %992 = vmatpush1.msra.mxu0 0.0
    %993 = vmatprep.mubr.f32.mxu0 0.0
    %994 = vmatmul.mubr.f32.gmra.mrb[0].mxu0 %v882
    %v995 = vpop.f32.mrb[0].mxu0
    %v996 = vadd.f32 %v787, %v995
    %v997 = vpop.f32.mrb[0].mxu0
    %v998 = vadd.f32 %v789, %v997
    %999 = vmatprep.mubr.f32.mxu0 0.0
    %1000 = vmatmul.mubr.f32.gmra.mrb[0].mxu0 %v885
    %v1001 = vpop.f32.mrb[0].mxu0
    %v1002 = vadd.f32 %v793, %v1001
    %v1003 = vpop.f32.mrb[0].mxu0
    %v1004 = vadd.f32 %v795, %v1003
    %1005 = vmatprep.mubr.f32.mxu0 0.0
    %1006 = vmatmul.mubr.f32.gmra.mrb[0].mxu0 %v888
    %v1007 = vpop.f32.mrb[0].mxu0
    %v1008 = vadd.f32 %v799, %v1007
    %v1009 = vpop.f32.mrb[0].mxu0
    %v1010 = vadd.f32 %v801, %v1009
    %1011 = vmatprep.mubr.f32.mxu0 0.0
    %1012 = vmatmul.mubr.f32.gmra.mrb[0].mxu0 %v891
    %v1013 = vpop.f32.mrb[0].mxu0
    %v1014 = vadd.f32 %v805, %v1013
    %v1015 = vpop.f32.mrb[0].mxu0
    %v1016 = vadd.f32 %v807, %v1015
    %1017 = vmatprep.mubr.f32.mxu0 0.0
    %1018 = vmatmul.mubr.f32.gmra.mrb[0].mxu0 %v894
    %v1019 = vpop.f32.mrb[0].mxu0
    %v1020 = vadd.f32 %v811, %v1019
    %v1021 = vpop.f32.mrb[0].mxu0
    %v1022 = vadd.f32 %v813, %v1021
    %1023 = vmatprep.mubr.f32.mxu0 0.0
    %1024 = vmatmul.mubr.f32.gmra.mrb[0].mxu0 %v897
    %v1025 = vpop.f32.mrb[0].mxu0
    %v1026 = vadd.f32 %v817, %v1025
    %v1027 = vpop.f32.mrb[0].mxu0
    %v1028 = vadd.f32 %v819, %v1027
    %1029 = vmatprep.mubr.f32.mxu0 0.0
    %1030 = vmatmul.mubr.f32.gmra.mrb[0].mxu0 %v900
    %v1031 = vpop.f32.mrb[0].mxu0
    %v1032 = vadd.f32 %v823, %v1031
    %v1033 = vpop.f32.mrb[0].mxu0
    %v1034 = vadd.f32 %v825, %v1033
    %1035 = vmatprep.mubr.f32.mxu0 0.0
    %1036 = vmatmul.mubr.f32.gmra.mrb[0].mxu0 %v903
    %v1037 = vpop.f32.mrb[0].mxu0
    %v1038 = vadd.f32 %v829, %v1037
    %v1039 = vpop.f32.mrb[0].mxu0
    %v1040 = vadd.f32 %v831, %v1039
    %1041 = vmatprep.mubr.f32.mxu0 0.0
    %1042 = vmatmul.mubr.f32.gmra.mrb[0].mxu0 %v906
    %v1043 = vpop.f32.mrb[0].mxu0
    %v1044 = vadd.f32 %v835, %v1043
    %v1045 = vpop.f32.mrb[0].mxu0
    %v1046 = vadd.f32 %v837, %v1045
    %1047 = vmatprep.mubr.f32.mxu0 0.0
    %1048 = vmatmul.mubr.f32.gmra.mrb[0].mxu0 %v909
    %v1049 = vpop.f32.mrb[0].mxu0
    %v1050 = vadd.f32 %v841, %v1049
    %v1051 = vpop.f32.mrb[0].mxu0
    %v1052 = vadd.f32 %v843, %v1051
    %1053 = vmatprep.mubr.f32.mxu0 0.0
    %1054 = vmatmul.mubr.f32.gmra.mrb[0].mxu0 %v912
    %v1055 = vpop.f32.mrb[0].mxu0
    %v1056 = vadd.f32 %v847, %v1055
    %v1057 = vpop.f32.mrb[0].mxu0
    %v1058 = vadd.f32 %v849, %v1057
    %1059 = vmatprep.mubr.f32.mxu0 0.0
    %1060 = vmatmul.mubr.f32.gmra.mrb[0].mxu0 %v915
    %v1061 = vpop.f32.mrb[0].mxu0
    %v1062 = vadd.f32 %v853, %v1061
    %v1063 = vpop.f32.mrb[0].mxu0
    %v1064 = vadd.f32 %v855, %v1063
    %1065 = vmatprep.mubr.f32.mxu0 0.0
    %1066 = vmatmul.mubr.f32.gmra.mrb[0].mxu0 %v918
    %v1067 = vpop.f32.mrb[0].mxu0
    %v1068 = vadd.f32 %v859, %v1067
    %v1069 = vpop.f32.mrb[0].mxu0
    %v1070 = vadd.f32 %v861, %v1069
    %1071 = vmatprep.mubr.f32.mxu0 0.0
    %1072 = vmatmul.mubr.f32.gmra.mrb[0].mxu0 %v921
    %v1073 = vpop.f32.mrb[0].mxu0
    %v1074 = vadd.f32 %v865, %v1073
    %v1075 = vpop.f32.mrb[0].mxu0
    %v1076 = vadd.f32 %v867, %v1075
    %1077 = vmatprep.mubr.f32.mxu0 0.0
    %1078 = vmatmul.mubr.f32.gmra.mrb[0].mxu0 %v924
    %v1079 = vpop.f32.mrb[0].mxu0
    %v1080 = vadd.f32 %v871, %v1079
    %v1081 = vpop.f32.mrb[0].mxu0
    %v1082 = vadd.f32 %v873, %v1081
    %1083 = vmatprep.mubr.f32.mxu0 0.0
    %1084 = vmatmul.mubr.f32.gmra.mrb[0].mxu0 %v927
    %v1085 = vpop.f32.mrb[0].mxu0
    %v1086 = vadd.f32 %v877, %v1085
    %v1087 = vpop.f32.mrb[0].mxu0
    %v1088 = vadd.f32 %v879, %v1087
    %1089 = vdwg.mxu0
    %v1090 = vld [vmem:[%s15] sm:$0x3]
    %v1092 = vlaneseq
    %v1093 = vshrl.u32 %v1092, 7
    %v1094 = vsub.s32 0, %v1093
    %v1095 = vrot.slane %v1090, %v1094
    %v1096 = vlaneseq
    %v1097 = vshrl.u32 %v1096, 7
    %v1098 = vsub.s32 1, %v1097
    %v1099 = vrot.slane %v1090, %v1098
    %v1102 = vadd.f32 %v996, %v1095
    %v1103 = vadd.f32 %v998, %v1099
    %v1104 = vadd.f32 %v1002, %v1095
    %v1105 = vadd.f32 %v1004, %v1099
    %v1106 = vadd.f32 %v1008, %v1095
    %v1107 = vadd.f32 %v1010, %v1099
    %v1108 = vadd.f32 %v1014, %v1095
    %v1109 = vadd.f32 %v1016, %v1099
    %v1110 = vadd.f32 %v1020, %v1095
    %v1111 = vadd.f32 %v1022, %v1099
    %v1112 = vadd.f32 %v1026, %v1095
    %v1113 = vadd.f32 %v1028, %v1099
    %v1114 = vadd.f32 %v1032, %v1095
    %v1115 = vadd.f32 %v1034, %v1099
    %v1116 = vadd.f32 %v1038, %v1095
    %v1117 = vadd.f32 %v1040, %v1099
    %v1118 = vadd.f32 %v1044, %v1095
    %v1119 = vadd.f32 %v1046, %v1099
    %v1120 = vadd.f32 %v1050, %v1095
    %v1121 = vadd.f32 %v1052, %v1099
    %v1122 = vadd.f32 %v1056, %v1095
    %v1123 = vadd.f32 %v1058, %v1099
    %v1124 = vadd.f32 %v1062, %v1095
    %v1125 = vadd.f32 %v1064, %v1099
    %v1126 = vadd.f32 %v1068, %v1095
    %v1127 = vadd.f32 %v1070, %v1099
    %v1128 = vadd.f32 %v1074, %v1095
    %v1129 = vadd.f32 %v1076, %v1099
    %v1130 = vadd.f32 %v1080, %v1095
    %v1131 = vadd.f32 %v1082, %v1099
    %v1132 = vadd.f32 %v1086, %v1095
    %v1133 = vadd.f32 %v1088, %v1099
    %v1134 = vld [vmem:[%s17] sm:$0x3]
    %v1135 = vld [vmem:[%s19] sm:$0x3]
    %v1136 = vadd.f32 %v1102, %v1104
    %v1137 = vadd.f32 %v1136, %v1106
    %v1138 = vadd.f32 %v1137, %v1108
    %v1139 = vadd.f32 %v1138, %v1110
    %v1140 = vadd.f32 %v1139, %v1112
    %v1141 = vadd.f32 %v1140, %v1114
    %v1142 = vadd.f32 %v1141, %v1116
    %v1143 = vadd.f32 %v1142, %v1118
    %v1144 = vadd.f32 %v1143, %v1120
    %v1145 = vadd.f32 %v1144, %v1122
    %v1146 = vadd.f32 %v1145, %v1124
    %v1147 = vadd.f32 %v1146, %v1126
    %v1148 = vadd.f32 %v1147, %v1128
    %v1149 = vadd.f32 %v1148, %v1130
    %v1150 = vadd.f32 %v1149, %v1132
    %v1151 = vrot.slane %v1150, 4
    %v1152 = vadd.f32 %v1150, %v1151
    %v1153 = vrot.slane %v1152, 2
    %v1154 = vadd.f32 %v1152, %v1153
    %v1155 = vrot.slane %v1154, 1
    %v1156 = vadd.f32 %v1154, %v1155
    %v1157 = vadd.f32 %v1103, %v1105
    %v1158 = vadd.f32 %v1157, %v1107
    %v1159 = vadd.f32 %v1158, %v1109
    %v1160 = vadd.f32 %v1159, %v1111
    %v1161 = vadd.f32 %v1160, %v1113
    %v1162 = vadd.f32 %v1161, %v1115
    %v1163 = vadd.f32 %v1162, %v1117
    %v1164 = vadd.f32 %v1163, %v1119
    %v1165 = vadd.f32 %v1164, %v1121
    %v1166 = vadd.f32 %v1165, %v1123
    %v1167 = vadd.f32 %v1166, %v1125
    %v1168 = vadd.f32 %v1167, %v1127
    %v1169 = vadd.f32 %v1168, %v1129
    %v1170 = vadd.f32 %v1169, %v1131
    %v1171 = vadd.f32 %v1170, %v1133
    %v1172 = vrot.slane %v1171, 4
    %v1173 = vadd.f32 %v1171, %v1172
    %v1174 = vrot.slane %v1173, 2
    %v1175 = vadd.f32 %v1173, %v1174
    %v1176 = vrot.slane %v1175, 1
    %v1177 = vadd.f32 %v1175, %v1176
    %v1178 = vrcp.pop 128.0
    %v1179 = vmul.f32 %v1156, %v1178
    %v1180 = vmul.f32 %v1177, %v1178
    %v1181 = vsub.f32 %v1102, %v1179
    %v1182 = vsub.f32 %v1103, %v1180
    %v1183 = vsub.f32 %v1104, %v1179
    %v1184 = vsub.f32 %v1105, %v1180
    %v1185 = vsub.f32 %v1106, %v1179
    %v1186 = vsub.f32 %v1107, %v1180
    %v1187 = vsub.f32 %v1108, %v1179
    %v1188 = vsub.f32 %v1109, %v1180
    %v1189 = vsub.f32 %v1110, %v1179
    %v1190 = vsub.f32 %v1111, %v1180
    %v1191 = vsub.f32 %v1112, %v1179
    %v1192 = vsub.f32 %v1113, %v1180
    %v1193 = vsub.f32 %v1114, %v1179
    %v1194 = vsub.f32 %v1115, %v1180
    %v1195 = vsub.f32 %v1116, %v1179
    %v1196 = vsub.f32 %v1117, %v1180
    %v1197 = vsub.f32 %v1118, %v1179
    %v1198 = vsub.f32 %v1119, %v1180
    %v1199 = vsub.f32 %v1120, %v1179
    %v1200 = vsub.f32 %v1121, %v1180
    %v1201 = vsub.f32 %v1122, %v1179
    %v1202 = vsub.f32 %v1123, %v1180
    %v1203 = vsub.f32 %v1124, %v1179
    %v1204 = vsub.f32 %v1125, %v1180
    %v1205 = vsub.f32 %v1126, %v1179
    %v1206 = vsub.f32 %v1127, %v1180
    %v1207 = vsub.f32 %v1128, %v1179
    %v1208 = vsub.f32 %v1129, %v1180
    %v1209 = vsub.f32 %v1130, %v1179
    %v1210 = vsub.f32 %v1131, %v1180
    %v1211 = vsub.f32 %v1132, %v1179
    %v1212 = vsub.f32 %v1133, %v1180
    %v1213 = vmul.f32 %v1181, %v1181
    %v1214 = vmul.f32 %v1182, %v1182
    %v1215 = vmul.f32 %v1183, %v1183
    %v1216 = vmul.f32 %v1184, %v1184
    %v1217 = vmul.f32 %v1185, %v1185
    %v1218 = vmul.f32 %v1186, %v1186
    %v1219 = vmul.f32 %v1187, %v1187
    %v1220 = vmul.f32 %v1188, %v1188
    %v1221 = vmul.f32 %v1189, %v1189
    %v1222 = vmul.f32 %v1190, %v1190
    %v1223 = vmul.f32 %v1191, %v1191
    %v1224 = vmul.f32 %v1192, %v1192
    %v1225 = vmul.f32 %v1193, %v1193
    %v1226 = vmul.f32 %v1194, %v1194
    %v1227 = vmul.f32 %v1195, %v1195
    %v1228 = vmul.f32 %v1196, %v1196
    %v1229 = vmul.f32 %v1197, %v1197
    %v1230 = vmul.f32 %v1198, %v1198
    %v1231 = vmul.f32 %v1199, %v1199
    %v1232 = vmul.f32 %v1200, %v1200
    %v1233 = vmul.f32 %v1201, %v1201
    %v1234 = vmul.f32 %v1202, %v1202
    %v1235 = vmul.f32 %v1203, %v1203
    %v1236 = vmul.f32 %v1204, %v1204
    %v1237 = vmul.f32 %v1205, %v1205
    %v1238 = vmul.f32 %v1206, %v1206
    %v1239 = vmul.f32 %v1207, %v1207
    %v1240 = vmul.f32 %v1208, %v1208
    %v1241 = vmul.f32 %v1209, %v1209
    %v1242 = vmul.f32 %v1210, %v1210
    %v1243 = vmul.f32 %v1211, %v1211
    %v1244 = vmul.f32 %v1212, %v1212
    %v1245 = vadd.f32 %v1213, %v1215
    %v1246 = vadd.f32 %v1245, %v1217
    %v1247 = vadd.f32 %v1246, %v1219
    %v1248 = vadd.f32 %v1247, %v1221
    %v1249 = vadd.f32 %v1248, %v1223
    %v1250 = vadd.f32 %v1249, %v1225
    %v1251 = vadd.f32 %v1250, %v1227
    %v1252 = vadd.f32 %v1251, %v1229
    %v1253 = vadd.f32 %v1252, %v1231
    %v1254 = vadd.f32 %v1253, %v1233
    %v1255 = vadd.f32 %v1254, %v1235
    %v1256 = vadd.f32 %v1255, %v1237
    %v1257 = vadd.f32 %v1256, %v1239
    %v1258 = vadd.f32 %v1257, %v1241
    %v1259 = vadd.f32 %v1258, %v1243
    %v1260 = vrot.slane %v1259, 4
    %v1261 = vadd.f32 %v1259, %v1260
    %v1262 = vrot.slane %v1261, 2
    %v1263 = vadd.f32 %v1261, %v1262
    %v1264 = vrot.slane %v1263, 1
    %v1265 = vadd.f32 %v1263, %v1264
    %v1266 = vadd.f32 %v1214, %v1216
    %v1267 = vadd.f32 %v1266, %v1218
    %v1268 = vadd.f32 %v1267, %v1220
    %v1269 = vadd.f32 %v1268, %v1222
    %v1270 = vadd.f32 %v1269, %v1224
    %v1271 = vadd.f32 %v1270, %v1226
    %v1272 = vadd.f32 %v1271, %v1228
    %v1273 = vadd.f32 %v1272, %v1230
    %v1274 = vadd.f32 %v1273, %v1232
    %v1275 = vadd.f32 %v1274, %v1234
    %v1276 = vadd.f32 %v1275, %v1236
    %v1277 = vadd.f32 %v1276, %v1238
    %v1278 = vadd.f32 %v1277, %v1240
    %v1279 = vadd.f32 %v1278, %v1242
    %v1280 = vadd.f32 %v1279, %v1244
    %v1281 = vrot.slane %v1280, 4
    %v1282 = vadd.f32 %v1280, %v1281
    %v1283 = vrot.slane %v1282, 2
    %v1284 = vadd.f32 %v1282, %v1283
    %v1285 = vrot.slane %v1284, 1
    %v1286 = vadd.f32 %v1284, %v1285
    %v1287 = vmul.f32 %v1265, %v1178
    %v1288 = vmul.f32 %v1286, %v1178
    %v1289 = vadd.f32 %v1287, 1e-05
    %v1290 = vadd.f32 %v1288, 1e-05
    %v1291 = vrsqrt.pop %v1289
    %v1292 = vrsqrt.pop %v1290
    %v1293 = vmul.f32 %v1181, %v1291
    %v1294 = vmul.f32 %v1182, %v1292
    %v1295 = vmul.f32 %v1183, %v1291
    %v1296 = vmul.f32 %v1184, %v1292
    %v1297 = vmul.f32 %v1185, %v1291
    %v1298 = vmul.f32 %v1186, %v1292
    %v1299 = vmul.f32 %v1187, %v1291
    %v1300 = vmul.f32 %v1188, %v1292
    %v1301 = vmul.f32 %v1189, %v1291
    %v1302 = vmul.f32 %v1190, %v1292
    %v1303 = vmul.f32 %v1191, %v1291
    %v1304 = vmul.f32 %v1192, %v1292
    %v1305 = vmul.f32 %v1193, %v1291
    %v1306 = vmul.f32 %v1194, %v1292
    %v1307 = vmul.f32 %v1195, %v1291
    %v1308 = vmul.f32 %v1196, %v1292
    %v1309 = vmul.f32 %v1197, %v1291
    %v1310 = vmul.f32 %v1198, %v1292
    %v1311 = vmul.f32 %v1199, %v1291
    %v1312 = vmul.f32 %v1200, %v1292
    %v1313 = vmul.f32 %v1201, %v1291
    %v1314 = vmul.f32 %v1202, %v1292
    %v1315 = vmul.f32 %v1203, %v1291
    %v1316 = vmul.f32 %v1204, %v1292
    %v1317 = vmul.f32 %v1205, %v1291
    %v1318 = vmul.f32 %v1206, %v1292
    %v1319 = vmul.f32 %v1207, %v1291
    %v1320 = vmul.f32 %v1208, %v1292
    %v1321 = vmul.f32 %v1209, %v1291
    %v1322 = vmul.f32 %v1210, %v1292
    %v1323 = vmul.f32 %v1211, %v1291
    %v1324 = vmul.f32 %v1212, %v1292
    %v1326 = vlaneseq
    %v1327 = vshrl.u32 %v1326, 7
    %v1328 = vsub.s32 0, %v1327
    %v1329 = vrot.slane %v1134, %v1328
    %v1330 = vlaneseq
    %v1331 = vshrl.u32 %v1330, 7
    %v1332 = vsub.s32 1, %v1331
    %v1333 = vrot.slane %v1134, %v1332
    %v1336 = vmul.f32 %v1293, %v1329
    %v1337 = vmul.f32 %v1294, %v1333
    %v1338 = vmul.f32 %v1295, %v1329
    %v1339 = vmul.f32 %v1296, %v1333
    %v1340 = vmul.f32 %v1297, %v1329
    %v1341 = vmul.f32 %v1298, %v1333
    %v1342 = vmul.f32 %v1299, %v1329
    %v1343 = vmul.f32 %v1300, %v1333
    %v1344 = vmul.f32 %v1301, %v1329
    %v1345 = vmul.f32 %v1302, %v1333
    %v1346 = vmul.f32 %v1303, %v1329
    %v1347 = vmul.f32 %v1304, %v1333
    %v1348 = vmul.f32 %v1305, %v1329
    %v1349 = vmul.f32 %v1306, %v1333
    %v1350 = vmul.f32 %v1307, %v1329
    %v1351 = vmul.f32 %v1308, %v1333
    %v1352 = vmul.f32 %v1309, %v1329
    %v1353 = vmul.f32 %v1310, %v1333
    %v1354 = vmul.f32 %v1311, %v1329
    %v1355 = vmul.f32 %v1312, %v1333
    %v1356 = vmul.f32 %v1313, %v1329
    %v1357 = vmul.f32 %v1314, %v1333
    %v1358 = vmul.f32 %v1315, %v1329
    %v1359 = vmul.f32 %v1316, %v1333
    %v1360 = vmul.f32 %v1317, %v1329
    %v1361 = vmul.f32 %v1318, %v1333
    %v1362 = vmul.f32 %v1319, %v1329
    %v1363 = vmul.f32 %v1320, %v1333
    %v1364 = vmul.f32 %v1321, %v1329
    %v1365 = vmul.f32 %v1322, %v1333
    %v1366 = vmul.f32 %v1323, %v1329
    %v1367 = vmul.f32 %v1324, %v1333
    %v1369 = vlaneseq
    %v1370 = vshrl.u32 %v1369, 7
    %v1371 = vsub.s32 0, %v1370
    %v1372 = vrot.slane %v1135, %v1371
    %v1373 = vlaneseq
    %v1374 = vshrl.u32 %v1373, 7
    %v1375 = vsub.s32 1, %v1374
    %v1376 = vrot.slane %v1135, %v1375
    %v1379 = vadd.f32 %v1336, %v1372
    %v1380 = vadd.f32 %v1337, %v1376
    %v1381 = vadd.f32 %v1338, %v1372
    %v1382 = vadd.f32 %v1339, %v1376
    %v1383 = vadd.f32 %v1340, %v1372
    %v1384 = vadd.f32 %v1341, %v1376
    %v1385 = vadd.f32 %v1342, %v1372
    %v1386 = vadd.f32 %v1343, %v1376
    %v1387 = vadd.f32 %v1344, %v1372
    %v1388 = vadd.f32 %v1345, %v1376
    %v1389 = vadd.f32 %v1346, %v1372
    %v1390 = vadd.f32 %v1347, %v1376
    %v1391 = vadd.f32 %v1348, %v1372
    %v1392 = vadd.f32 %v1349, %v1376
    %v1393 = vadd.f32 %v1350, %v1372
    %v1394 = vadd.f32 %v1351, %v1376
    %v1395 = vadd.f32 %v1352, %v1372
    %v1396 = vadd.f32 %v1353, %v1376
    %v1397 = vadd.f32 %v1354, %v1372
    %v1398 = vadd.f32 %v1355, %v1376
    %v1399 = vadd.f32 %v1356, %v1372
    %v1400 = vadd.f32 %v1357, %v1376
    %v1401 = vadd.f32 %v1358, %v1372
    %v1402 = vadd.f32 %v1359, %v1376
    %v1403 = vadd.f32 %v1360, %v1372
    %v1404 = vadd.f32 %v1361, %v1376
    %v1405 = vadd.f32 %v1362, %v1372
    %v1406 = vadd.f32 %v1363, %v1376
    %v1407 = vadd.f32 %v1364, %v1372
    %v1408 = vadd.f32 %v1365, %v1376
    %v1409 = vadd.f32 %v1366, %v1372
    %v1410 = vadd.f32 %v1367, %v1376
    %v1411 = vmax.f32 %v1379, 0.0
    %v1412 = vmax.f32 %v1380, 0.0
    %v1413 = vmax.f32 %v1381, 0.0
    %v1414 = vmax.f32 %v1382, 0.0
    %v1415 = vmax.f32 %v1383, 0.0
    %v1416 = vmax.f32 %v1384, 0.0
    %v1417 = vmax.f32 %v1385, 0.0
    %v1418 = vmax.f32 %v1386, 0.0
    %v1419 = vmax.f32 %v1387, 0.0
    %v1420 = vmax.f32 %v1388, 0.0
    %v1421 = vmax.f32 %v1389, 0.0
    %v1422 = vmax.f32 %v1390, 0.0
    %v1423 = vmax.f32 %v1391, 0.0
    %v1424 = vmax.f32 %v1392, 0.0
    %v1425 = vmax.f32 %v1393, 0.0
    %v1426 = vmax.f32 %v1394, 0.0
    %v1427 = vmax.f32 %v1395, 0.0
    %v1428 = vmax.f32 %v1396, 0.0
    %v1429 = vmax.f32 %v1397, 0.0
    %v1430 = vmax.f32 %v1398, 0.0
    %v1431 = vmax.f32 %v1399, 0.0
    %v1432 = vmax.f32 %v1400, 0.0
    %v1433 = vmax.f32 %v1401, 0.0
    %v1434 = vmax.f32 %v1402, 0.0
    %v1435 = vmax.f32 %v1403, 0.0
    %v1436 = vmax.f32 %v1404, 0.0
    %v1437 = vmax.f32 %v1405, 0.0
    %v1438 = vmax.f32 %v1406, 0.0
    %v1439 = vmax.f32 %v1407, 0.0
    %v1440 = vmax.f32 %v1408, 0.0
    %v1441 = vmax.f32 %v1409, 0.0
    %v1442 = vmax.f32 %v1410, 0.0
    %v1443 = vpack.c.bf16 %v1413, %v1411
    %v1444 = vpack.c.bf16 %v1414, %v1412
    %v1445 = vpack.c.bf16 %v1417, %v1415
    %v1446 = vpack.c.bf16 %v1418, %v1416
    %v1447 = vpack.c.bf16 %v1421, %v1419
    %v1448 = vpack.c.bf16 %v1422, %v1420
    %v1449 = vpack.c.bf16 %v1425, %v1423
    %v1450 = vpack.c.bf16 %v1426, %v1424
    %v1451 = vpack.c.bf16 %v1429, %v1427
    %v1452 = vpack.c.bf16 %v1430, %v1428
    %v1453 = vpack.c.bf16 %v1433, %v1431
    %v1454 = vpack.c.bf16 %v1434, %v1432
    %v1455 = vpack.c.bf16 %v1437, %v1435
    %v1456 = vpack.c.bf16 %v1438, %v1436
    %v1457 = vpack.c.bf16 %v1441, %v1439
    %v1458 = vpack.c.bf16 %v1442, %v1440
    %v1459 = vld [vmem:[%s21] sm:$0xf]
    %v1460 = vld [vmem:[%s21 + $0x4] sm:$0xf]
    %v1461 = vld [vmem:[%s21 + $0x8] sm:$0xf]
    %v1462 = vld [vmem:[%s21 + $0xc] sm:$0xf]
    %v1463 = vld [vmem:[%s21 + $0x10] sm:$0xf]
    %v1464 = vld [vmem:[%s21 + $0x14] sm:$0xf]
    %v1465 = vld [vmem:[%s21 + $0x18] sm:$0xf]
    %v1466 = vld [vmem:[%s21 + $0x1c] sm:$0xf]
    %v1467 = vld [vmem:[%s21 + $0x20] sm:$0xf]
    %v1468 = vld [vmem:[%s21 + $0x24] sm:$0xf]
    %v1469 = vld [vmem:[%s21 + $0x28] sm:$0xf]
    %v1470 = vld [vmem:[%s21 + $0x2c] sm:$0xf]
    %v1471 = vld [vmem:[%s21 + $0x30] sm:$0xf]
    %v1472 = vld [vmem:[%s21 + $0x34] sm:$0xf]
    %v1473 = vld [vmem:[%s21 + $0x38] sm:$0xf]
    %v1474 = vld [vmem:[%s21 + $0x3c] sm:$0xf]
    %v1475 = vld [vmem:[%s21 + $0x40] sm:$0xf]
    %v1476 = vld [vmem:[%s21 + $0x44] sm:$0xf]
    %v1477 = vld [vmem:[%s21 + $0x48] sm:$0xf]
    %v1478 = vld [vmem:[%s21 + $0x4c] sm:$0xf]
    %v1479 = vld [vmem:[%s21 + $0x50] sm:$0xf]
    %v1480 = vld [vmem:[%s21 + $0x54] sm:$0xf]
    %v1481 = vld [vmem:[%s21 + $0x58] sm:$0xf]
    %v1482 = vld [vmem:[%s21 + $0x5c] sm:$0xf]
    %v1483 = vld [vmem:[%s21 + $0x60] sm:$0xf]
    %v1484 = vld [vmem:[%s21 + $0x64] sm:$0xf]
    %v1485 = vld [vmem:[%s21 + $0x68] sm:$0xf]
    %v1486 = vld [vmem:[%s21 + $0x6c] sm:$0xf]
    %v1487 = vld [vmem:[%s21 + $0x70] sm:$0xf]
    %v1488 = vld [vmem:[%s21 + $0x74] sm:$0xf]
    %v1489 = vld [vmem:[%s21 + $0x78] sm:$0xf]
    %v1490 = vld [vmem:[%s21 + $0x7c] sm:$0xf]
    %v1491 = vld [vmem:[%s23] sm:$0x1]
    %v1493 = vlaneseq
    %v1494 = vshrl.u32 %v1493, 7
    %v1495 = vsub.s32 0, %v1494
    %v1496 = vrot.slane %v1491, %v1495
    %v1530 = vunpack.c.l.b16 %v1459
    %v1531 = vunpack.c.l.b16 %v1460
    %v1532 = vunpack.c.l.b16 %v1461
    %v1533 = vunpack.c.l.b16 %v1462
    %v1534 = vunpack.c.l.b16 %v1463
    %v1535 = vunpack.c.l.b16 %v1464
    %v1536 = vunpack.c.l.b16 %v1465
    %v1537 = vunpack.c.l.b16 %v1466
    %v1538 = vunpack.c.l.b16 %v1467
    %v1539 = vunpack.c.l.b16 %v1468
    %v1540 = vunpack.c.l.b16 %v1469
    %v1541 = vunpack.c.l.b16 %v1470
    %v1542 = vunpack.c.l.b16 %v1471
    %v1543 = vunpack.c.l.b16 %v1472
    %v1544 = vunpack.c.l.b16 %v1473
    %v1545 = vunpack.c.l.b16 %v1474
    %v1546 = vunpack.c.l.b16 %v1475
    %v1547 = vunpack.c.l.b16 %v1476
    %v1548 = vunpack.c.l.b16 %v1477
    %v1549 = vunpack.c.l.b16 %v1478
    %v1550 = vunpack.c.l.b16 %v1479
    %v1551 = vunpack.c.l.b16 %v1480
    %v1552 = vunpack.c.l.b16 %v1481
    %v1553 = vunpack.c.l.b16 %v1482
    %v1554 = vunpack.c.l.b16 %v1483
    %v1555 = vunpack.c.l.b16 %v1484
    %v1556 = vunpack.c.l.b16 %v1485
    %v1557 = vunpack.c.l.b16 %v1486
    %v1558 = vunpack.c.l.b16 %v1487
    %v1559 = vunpack.c.l.b16 %v1488
    %v1560 = vunpack.c.l.b16 %v1489
    %v1561 = vunpack.c.l.b16 %v1490
    %v1562 = vpack.c.b16 %v1531, %v1530
    %v1563 = vpack.c.b16 %v1533, %v1532
    %v1564 = vpack.c.b16 %v1535, %v1534
    %v1565 = vpack.c.b16 %v1537, %v1536
    %v1566 = vpack.c.b16 %v1539, %v1538
    %v1567 = vpack.c.b16 %v1541, %v1540
    %v1568 = vpack.c.b16 %v1543, %v1542
    %v1569 = vpack.c.b16 %v1545, %v1544
    %v1570 = vpack.c.b16 %v1547, %v1546
    %v1571 = vpack.c.b16 %v1549, %v1548
    %v1572 = vpack.c.b16 %v1551, %v1550
    %v1573 = vpack.c.b16 %v1553, %v1552
    %v1574 = vpack.c.b16 %v1555, %v1554
    %v1575 = vpack.c.b16 %v1557, %v1556
    %v1576 = vpack.c.b16 %v1559, %v1558
    %v1577 = vpack.c.b16 %v1561, %v1560
    %1594 = vmatprep.subr.bf16.mxu0 0
    %1595 = vmatpush1.bf16.msra.mxu0 %v1562
    %1596 = vmatprep.subr.bf16.mxu0 0
    %1597 = vmatpush1.bf16.msra.mxu0 %v1563
    %1598 = vmatprep.subr.bf16.mxu0 0
    %1599 = vmatpush1.bf16.msra.mxu0 %v1564
    %1600 = vmatprep.subr.bf16.mxu0 0
    %1601 = vmatpush1.bf16.msra.mxu0 %v1565
    %1602 = vmatprep.subr.bf16.mxu0 0
    %1603 = vmatpush1.bf16.msra.mxu0 %v1566
    %1604 = vmatprep.subr.bf16.mxu0 0
    %1605 = vmatpush1.bf16.msra.mxu0 %v1567
    %1606 = vmatprep.subr.bf16.mxu0 0
    %1607 = vmatpush1.bf16.msra.mxu0 %v1568
    %1608 = vmatprep.subr.bf16.mxu0 0
    %1609 = vmatpush1.bf16.msra.mxu0 %v1569
    %1610 = vmatprep.subr.bf16.mxu0 0
    %1611 = vmatpush1.bf16.msra.mxu0 %v1570
    %1612 = vmatprep.subr.bf16.mxu0 0
    %1613 = vmatpush1.bf16.msra.mxu0 %v1571
    %1614 = vmatprep.subr.bf16.mxu0 0
    %1615 = vmatpush1.bf16.msra.mxu0 %v1572
    %1616 = vmatprep.subr.bf16.mxu0 0
    %1617 = vmatpush1.bf16.msra.mxu0 %v1573
    %1618 = vmatprep.subr.bf16.mxu0 0
    %1619 = vmatpush1.bf16.msra.mxu0 %v1574
    %1620 = vmatprep.subr.bf16.mxu0 0
    %1621 = vmatpush1.bf16.msra.mxu0 %v1575
    %1622 = vmatprep.subr.bf16.mxu0 0
    %1623 = vmatpush1.bf16.msra.mxu0 %v1576
    %1624 = vmatprep.subr.bf16.mxu0 0
    %1625 = vmatpush1.bf16.msra.mxu0 %v1577
    %1626 = vmatprep.mubr.bf16.mxu0 %v1444
    %1627 = vmatmul.mubr.bf16.gmra.mrb[0].mxu0 %v1443
    %v1628 = vpop.f32.mrb[0].mxu0
    %v1629 = vadd.f32 %v1496, %v1628
    %v1630 = vpop.f32.mrb[0].mxu0
    %v1631 = vpop.f32.mrb[0].mxu0
    %v1632 = vadd.f32 %v1496, %v1631
    %v1633 = vpop.f32.mrb[0].mxu0
    %1634 = vmatprep.mubr.bf16.mxu0 %v1446
    %1635 = vmatmul.mubr.bf16.gmra.mrb[0].mxu0 %v1445
    %v1636 = vpop.f32.mrb[0].mxu0
    %v1637 = vadd.f32 %v1496, %v1636
    %v1638 = vpop.f32.mrb[0].mxu0
    %v1639 = vpop.f32.mrb[0].mxu0
    %v1640 = vadd.f32 %v1496, %v1639
    %v1641 = vpop.f32.mrb[0].mxu0
    %1642 = vmatprep.mubr.bf16.mxu0 %v1448
    %1643 = vmatmul.mubr.bf16.gmra.mrb[0].mxu0 %v1447
    %v1644 = vpop.f32.mrb[0].mxu0
    %v1645 = vadd.f32 %v1496, %v1644
    %v1646 = vpop.f32.mrb[0].mxu0
    %v1647 = vpop.f32.mrb[0].mxu0
    %v1648 = vadd.f32 %v1496, %v1647
    %v1649 = vpop.f32.mrb[0].mxu0
    %1650 = vmatprep.mubr.bf16.mxu0 %v1450
    %1651 = vmatmul.mubr.bf16.gmra.mrb[0].mxu0 %v1449
    %v1652 = vpop.f32.mrb[0].mxu0
    %v1653 = vadd.f32 %v1496, %v1652
    %v1654 = vpop.f32.mrb[0].mxu0
    %v1655 = vpop.f32.mrb[0].mxu0
    %v1656 = vadd.f32 %v1496, %v1655
    %v1657 = vpop.f32.mrb[0].mxu0
    %1658 = vmatprep.mubr.bf16.mxu0 %v1452
    %1659 = vmatmul.mubr.bf16.gmra.mrb[0].mxu0 %v1451
    %v1660 = vpop.f32.mrb[0].mxu0
    %v1661 = vadd.f32 %v1496, %v1660
    %v1662 = vpop.f32.mrb[0].mxu0
    %v1663 = vpop.f32.mrb[0].mxu0
    %v1664 = vadd.f32 %v1496, %v1663
    %v1665 = vpop.f32.mrb[0].mxu0
    %1666 = vmatprep.mubr.bf16.mxu0 %v1454
    %1667 = vmatmul.mubr.bf16.gmra.mrb[0].mxu0 %v1453
    %v1668 = vpop.f32.mrb[0].mxu0
    %v1669 = vadd.f32 %v1496, %v1668
    %v1670 = vpop.f32.mrb[0].mxu0
    %v1671 = vpop.f32.mrb[0].mxu0
    %v1672 = vadd.f32 %v1496, %v1671
    %v1673 = vpop.f32.mrb[0].mxu0
    %1674 = vmatprep.mubr.bf16.mxu0 %v1456
    %1675 = vmatmul.mubr.bf16.gmra.mrb[0].mxu0 %v1455
    %v1676 = vpop.f32.mrb[0].mxu0
    %v1677 = vadd.f32 %v1496, %v1676
    %v1678 = vpop.f32.mrb[0].mxu0
    %v1679 = vpop.f32.mrb[0].mxu0
    %v1680 = vadd.f32 %v1496, %v1679
    %v1681 = vpop.f32.mrb[0].mxu0
    %1682 = vmatprep.mubr.bf16.mxu0 %v1458
    %1683 = vmatmul.mubr.bf16.gmra.mrb[0].mxu0 %v1457
    %v1684 = vpop.f32.mrb[0].mxu0
    %v1685 = vadd.f32 %v1496, %v1684
    %v1686 = vpop.f32.mrb[0].mxu0
    %v1687 = vpop.f32.mrb[0].mxu0
    %v1688 = vadd.f32 %v1496, %v1687
    %v1689 = vpop.f32.mrb[0].mxu0
    %1690 = vdwg.mxu0
    %v1691 = vld [vmem:[%s25] sm:$0x1]
    %v1692 = vld [vmem:[%s27] sm:$0x1]
    %v1693 = vadd.f32 %v1629, %v1632
    %v1694 = vadd.f32 %v1693, %v1637
    %v1695 = vadd.f32 %v1694, %v1640
    %v1696 = vadd.f32 %v1695, %v1645
    %v1697 = vadd.f32 %v1696, %v1648
    %v1698 = vadd.f32 %v1697, %v1653
    %v1699 = vadd.f32 %v1698, %v1656
    %v1700 = vadd.f32 %v1699, %v1661
    %v1701 = vadd.f32 %v1700, %v1664
    %v1702 = vadd.f32 %v1701, %v1669
    %v1703 = vadd.f32 %v1702, %v1672
    %v1704 = vadd.f32 %v1703, %v1677
    %v1705 = vadd.f32 %v1704, %v1680
    %v1706 = vadd.f32 %v1705, %v1685
    %v1707 = vadd.f32 %v1706, %v1688
    %v1708 = vrot.slane %v1707, 4
    %v1709 = vadd.f32 %v1707, %v1708
    %v1710 = vrot.slane %v1709, 2
    %v1711 = vadd.f32 %v1709, %v1710
    %v1712 = vrot.slane %v1711, 1
    %v1713 = vadd.f32 %v1711, %v1712
    %v1714 = vmul.f32 %v1713, %v1178
    %v1715 = vsub.f32 %v1629, %v1714
    %v1716 = vsub.f32 %v1632, %v1714
    %v1717 = vsub.f32 %v1637, %v1714
    %v1718 = vsub.f32 %v1640, %v1714
    %v1719 = vsub.f32 %v1645, %v1714
    %v1720 = vsub.f32 %v1648, %v1714
    %v1721 = vsub.f32 %v1653, %v1714
    %v1722 = vsub.f32 %v1656, %v1714
    %v1723 = vsub.f32 %v1661, %v1714
    %v1724 = vsub.f32 %v1664, %v1714
    %v1725 = vsub.f32 %v1669, %v1714
    %v1726 = vsub.f32 %v1672, %v1714
    %v1727 = vsub.f32 %v1677, %v1714
    %v1728 = vsub.f32 %v1680, %v1714
    %v1729 = vsub.f32 %v1685, %v1714
    %v1730 = vsub.f32 %v1688, %v1714
    %v1731 = vmul.f32 %v1715, %v1715
    %v1732 = vmul.f32 %v1716, %v1716
    %v1733 = vmul.f32 %v1717, %v1717
    %v1734 = vmul.f32 %v1718, %v1718
    %v1735 = vmul.f32 %v1719, %v1719
    %v1736 = vmul.f32 %v1720, %v1720
    %v1737 = vmul.f32 %v1721, %v1721
    %v1738 = vmul.f32 %v1722, %v1722
    %v1739 = vmul.f32 %v1723, %v1723
    %v1740 = vmul.f32 %v1724, %v1724
    %v1741 = vmul.f32 %v1725, %v1725
    %v1742 = vmul.f32 %v1726, %v1726
    %v1743 = vmul.f32 %v1727, %v1727
    %v1744 = vmul.f32 %v1728, %v1728
    %v1745 = vmul.f32 %v1729, %v1729
    %v1746 = vmul.f32 %v1730, %v1730
    %v1747 = vadd.f32 %v1731, %v1732
    %v1748 = vadd.f32 %v1747, %v1733
    %v1749 = vadd.f32 %v1748, %v1734
    %v1750 = vadd.f32 %v1749, %v1735
    %v1751 = vadd.f32 %v1750, %v1736
    %v1752 = vadd.f32 %v1751, %v1737
    %v1753 = vadd.f32 %v1752, %v1738
    %v1754 = vadd.f32 %v1753, %v1739
    %v1755 = vadd.f32 %v1754, %v1740
    %v1756 = vadd.f32 %v1755, %v1741
    %v1757 = vadd.f32 %v1756, %v1742
    %v1758 = vadd.f32 %v1757, %v1743
    %v1759 = vadd.f32 %v1758, %v1744
    %v1760 = vadd.f32 %v1759, %v1745
    %v1761 = vadd.f32 %v1760, %v1746
    %v1762 = vrot.slane %v1761, 4
    %v1763 = vadd.f32 %v1761, %v1762
    %v1764 = vrot.slane %v1763, 2
    %v1765 = vadd.f32 %v1763, %v1764
    %v1766 = vrot.slane %v1765, 1
    %v1767 = vadd.f32 %v1765, %v1766
    %v1768 = vmul.f32 %v1767, %v1178
    %v1769 = vadd.f32 %v1768, 1e-05
    %v1770 = vrsqrt.pop %v1769
    %v1771 = vmul.f32 %v1715, %v1770
    %v1772 = vmul.f32 %v1716, %v1770
    %v1773 = vmul.f32 %v1717, %v1770
    %v1774 = vmul.f32 %v1718, %v1770
    %v1775 = vmul.f32 %v1719, %v1770
    %v1776 = vmul.f32 %v1720, %v1770
    %v1777 = vmul.f32 %v1721, %v1770
    %v1778 = vmul.f32 %v1722, %v1770
    %v1779 = vmul.f32 %v1723, %v1770
    %v1780 = vmul.f32 %v1724, %v1770
    %v1781 = vmul.f32 %v1725, %v1770
    %v1782 = vmul.f32 %v1726, %v1770
    %v1783 = vmul.f32 %v1727, %v1770
    %v1784 = vmul.f32 %v1728, %v1770
    %v1785 = vmul.f32 %v1729, %v1770
    %v1786 = vmul.f32 %v1730, %v1770
    %v1788 = vlaneseq
    %v1789 = vshrl.u32 %v1788, 7
    %v1790 = vsub.s32 0, %v1789
    %v1791 = vrot.slane %v1691, %v1790
    %v1793 = vmul.f32 %v1771, %v1791
    %v1794 = vmul.f32 %v1772, %v1791
    %v1795 = vmul.f32 %v1773, %v1791
    %v1796 = vmul.f32 %v1774, %v1791
    %v1797 = vmul.f32 %v1775, %v1791
    %v1798 = vmul.f32 %v1776, %v1791
    %v1799 = vmul.f32 %v1777, %v1791
    %v1800 = vmul.f32 %v1778, %v1791
    %v1801 = vmul.f32 %v1779, %v1791
    %v1802 = vmul.f32 %v1780, %v1791
    %v1803 = vmul.f32 %v1781, %v1791
    %v1804 = vmul.f32 %v1782, %v1791
    %v1805 = vmul.f32 %v1783, %v1791
    %v1806 = vmul.f32 %v1784, %v1791
    %v1807 = vmul.f32 %v1785, %v1791
    %v1808 = vmul.f32 %v1786, %v1791
    %v1810 = vlaneseq
    %v1811 = vshrl.u32 %v1810, 7
    %v1812 = vsub.s32 0, %v1811
    %v1813 = vrot.slane %v1692, %v1812
    %v1815 = vadd.f32 %v1793, %v1813
    %v1816 = vadd.f32 %v1794, %v1813
    %v1817 = vadd.f32 %v1795, %v1813
    %v1818 = vadd.f32 %v1796, %v1813
    %v1819 = vadd.f32 %v1797, %v1813
    %v1820 = vadd.f32 %v1798, %v1813
    %v1821 = vadd.f32 %v1799, %v1813
    %v1822 = vadd.f32 %v1800, %v1813
    %v1823 = vadd.f32 %v1801, %v1813
    %v1824 = vadd.f32 %v1802, %v1813
    %v1825 = vadd.f32 %v1803, %v1813
    %v1826 = vadd.f32 %v1804, %v1813
    %v1827 = vadd.f32 %v1805, %v1813
    %v1828 = vadd.f32 %v1806, %v1813
    %v1829 = vadd.f32 %v1807, %v1813
    %v1830 = vadd.f32 %v1808, %v1813
    %v1831 = vmax.f32 %v1815, 0.0
    %v1832 = vmax.f32 %v1816, 0.0
    %v1833 = vmax.f32 %v1817, 0.0
    %v1834 = vmax.f32 %v1818, 0.0
    %v1835 = vmax.f32 %v1819, 0.0
    %v1836 = vmax.f32 %v1820, 0.0
    %v1837 = vmax.f32 %v1821, 0.0
    %v1838 = vmax.f32 %v1822, 0.0
    %v1839 = vmax.f32 %v1823, 0.0
    %v1840 = vmax.f32 %v1824, 0.0
    %v1841 = vmax.f32 %v1825, 0.0
    %v1842 = vmax.f32 %v1826, 0.0
    %v1843 = vmax.f32 %v1827, 0.0
    %v1844 = vmax.f32 %v1828, 0.0
    %v1845 = vmax.f32 %v1829, 0.0
    %v1846 = vmax.f32 %v1830, 0.0
    %v1847 = vpack.c.bf16 %v1832, %v1831
    %v1848 = vpack.c.bf16 %v1834, %v1833
    %v1849 = vpack.c.bf16 %v1836, %v1835
    %v1850 = vpack.c.bf16 %v1838, %v1837
    %v1851 = vpack.c.bf16 %v1840, %v1839
    %v1852 = vpack.c.bf16 %v1842, %v1841
    %v1853 = vpack.c.bf16 %v1844, %v1843
    %v1854 = vpack.c.bf16 %v1846, %v1845
    %v1855 = vld [vmem:[%s29] sm:$0xf]
    %v1856 = vld [vmem:[%s29 + $0x4] sm:$0xf]
    %v1857 = vld [vmem:[%s29 + $0x8] sm:$0xf]
    %v1858 = vld [vmem:[%s29 + $0xc] sm:$0xf]
    %v1859 = vld [vmem:[%s29 + $0x10] sm:$0xf]
    %v1860 = vld [vmem:[%s29 + $0x14] sm:$0xf]
    %v1861 = vld [vmem:[%s29 + $0x18] sm:$0xf]
    %v1862 = vld [vmem:[%s29 + $0x1c] sm:$0xf]
    %v1863 = vld [vmem:[%s29 + $0x20] sm:$0xf]
    %v1864 = vld [vmem:[%s29 + $0x24] sm:$0xf]
    %v1865 = vld [vmem:[%s29 + $0x28] sm:$0xf]
    %v1866 = vld [vmem:[%s29 + $0x2c] sm:$0xf]
    %v1867 = vld [vmem:[%s29 + $0x30] sm:$0xf]
    %v1868 = vld [vmem:[%s29 + $0x34] sm:$0xf]
    %v1869 = vld [vmem:[%s29 + $0x38] sm:$0xf]
    %v1870 = vld [vmem:[%s29 + $0x3c] sm:$0xf]
    %v1871 = vld [vmem:[%s31] sm:$0x1]
    %v1873 = vlaneseq
    %v1874 = vshrl.u32 %v1873, 7
    %v1875 = vsub.s32 0, %v1874
    %v1876 = vrot.slane %v1871, %v1875
    %v1894 = vunpack.c.l.b16 %v1855
    %v1895 = vunpack.c.l.b16 %v1856
    %v1896 = vunpack.c.l.b16 %v1857
    %v1897 = vunpack.c.l.b16 %v1858
    %v1898 = vunpack.c.l.b16 %v1859
    %v1899 = vunpack.c.l.b16 %v1860
    %v1900 = vunpack.c.l.b16 %v1861
    %v1901 = vunpack.c.l.b16 %v1862
    %v1902 = vunpack.c.l.b16 %v1863
    %v1903 = vunpack.c.l.b16 %v1864
    %v1904 = vunpack.c.l.b16 %v1865
    %v1905 = vunpack.c.l.b16 %v1866
    %v1906 = vunpack.c.l.b16 %v1867
    %v1907 = vunpack.c.l.b16 %v1868
    %v1908 = vunpack.c.l.b16 %v1869
    %v1909 = vunpack.c.l.b16 %v1870
    %v1910 = vpack.c.b16 %v1895, %v1894
    %v1911 = vpack.c.b16 %v1897, %v1896
    %v1912 = vpack.c.b16 %v1899, %v1898
    %v1913 = vpack.c.b16 %v1901, %v1900
    %v1914 = vpack.c.b16 %v1903, %v1902
    %v1915 = vpack.c.b16 %v1905, %v1904
    %v1916 = vpack.c.b16 %v1907, %v1906
    %v1917 = vpack.c.b16 %v1909, %v1908
    %1926 = vmatprep.subr.bf16.mxu0 0
    %1927 = vmatpush1.bf16.msra.mxu0 %v1910
    %1928 = vmatprep.subr.bf16.mxu0 0
    %1929 = vmatpush1.bf16.msra.mxu0 %v1911
    %1930 = vmatprep.subr.bf16.mxu0 0
    %1931 = vmatpush1.bf16.msra.mxu0 %v1912
    %1932 = vmatprep.subr.bf16.mxu0 0
    %1933 = vmatpush1.bf16.msra.mxu0 %v1913
    %1934 = vmatprep.subr.bf16.mxu0 0
    %1935 = vmatpush1.bf16.msra.mxu0 %v1914
    %1936 = vmatprep.subr.bf16.mxu0 0
    %1937 = vmatpush1.bf16.msra.mxu0 %v1915
    %1938 = vmatprep.subr.bf16.mxu0 0
    %1939 = vmatpush1.bf16.msra.mxu0 %v1916
    %1940 = vmatprep.subr.bf16.mxu0 0
    %1941 = vmatpush1.bf16.msra.mxu0 %v1917
    %1942 = vmatprep.subr.bf16.mxu0 0
    %1943 = vmatpush1.bf16.msra.mxu0 0
    %1944 = vmatprep.subr.bf16.mxu0 0
    %1945 = vmatpush1.bf16.msra.mxu0 0
    %1946 = vmatprep.subr.bf16.mxu0 0
    %1947 = vmatpush1.bf16.msra.mxu0 0
    %1948 = vmatprep.subr.bf16.mxu0 0
    %1949 = vmatpush1.bf16.msra.mxu0 0
    %1950 = vmatprep.subr.bf16.mxu0 0
    %1951 = vmatpush1.bf16.msra.mxu0 0
    %1952 = vmatprep.subr.bf16.mxu0 0
    %1953 = vmatpush1.bf16.msra.mxu0 0
    %1954 = vmatprep.subr.bf16.mxu0 0
    %1955 = vmatpush1.bf16.msra.mxu0 0
    %1956 = vmatprep.subr.bf16.mxu0 0
    %1957 = vmatpush1.bf16.msra.mxu0 0
    %1958 = vmatprep.mubr.bf16.mxu0 0
    %1959 = vmatmul.mubr.bf16.gmra.mrb[0].mxu0 %v1847
    %v1960 = vpop.f32.mrb[0].mxu0
    %v1961 = vadd.f32 %v1876, %v1960
    %v1962 = vpop.f32.mrb[0].mxu0
    %v1963 = vpop.f32.mrb[0].mxu0
    %v1964 = vadd.f32 %v1876, %v1963
    %v1965 = vpop.f32.mrb[0].mxu0
    %1966 = vmatprep.mubr.bf16.mxu0 0
    %1967 = vmatmul.mubr.bf16.gmra.mrb[0].mxu0 %v1848
    %v1968 = vpop.f32.mrb[0].mxu0
    %v1969 = vadd.f32 %v1876, %v1968
    %v1970 = vpop.f32.mrb[0].mxu0
    %v1971 = vpop.f32.mrb[0].mxu0
    %v1972 = vadd.f32 %v1876, %v1971
    %v1973 = vpop.f32.mrb[0].mxu0
    %1974 = vmatprep.mubr.bf16.mxu0 0
    %1975 = vmatmul.mubr.bf16.gmra.mrb[0].mxu0 %v1849
    %v1976 = vpop.f32.mrb[0].mxu0
    %v1977 = vadd.f32 %v1876, %v1976
    %v1978 = vpop.f32.mrb[0].mxu0
    %v1979 = vpop.f32.mrb[0].mxu0
    %v1980 = vadd.f32 %v1876, %v1979
    %v1981 = vpop.f32.mrb[0].mxu0
    %1982 = vmatprep.mubr.bf16.mxu0 0
    %1983 = vmatmul.mubr.bf16.gmra.mrb[0].mxu0 %v1850
    %v1984 = vpop.f32.mrb[0].mxu0
    %v1985 = vadd.f32 %v1876, %v1984
    %v1986 = vpop.f32.mrb[0].mxu0
    %v1987 = vpop.f32.mrb[0].mxu0
    %v1988 = vadd.f32 %v1876, %v1987
    %v1989 = vpop.f32.mrb[0].mxu0
    %1990 = vmatprep.mubr.bf16.mxu0 0
    %1991 = vmatmul.mubr.bf16.gmra.mrb[0].mxu0 %v1851
    %v1992 = vpop.f32.mrb[0].mxu0
    %v1993 = vadd.f32 %v1876, %v1992
    %v1994 = vpop.f32.mrb[0].mxu0
    %v1995 = vpop.f32.mrb[0].mxu0
    %v1996 = vadd.f32 %v1876, %v1995
    %v1997 = vpop.f32.mrb[0].mxu0
    %1998 = vmatprep.mubr.bf16.mxu0 0
    %1999 = vmatmul.mubr.bf16.gmra.mrb[0].mxu0 %v1852
    %v2000 = vpop.f32.mrb[0].mxu0
    %v2001 = vadd.f32 %v1876, %v2000
    %v2002 = vpop.f32.mrb[0].mxu0
    %v2003 = vpop.f32.mrb[0].mxu0
    %v2004 = vadd.f32 %v1876, %v2003
    %v2005 = vpop.f32.mrb[0].mxu0
    %2006 = vmatprep.mubr.bf16.mxu0 0
    %2007 = vmatmul.mubr.bf16.gmra.mrb[0].mxu0 %v1853
    %v2008 = vpop.f32.mrb[0].mxu0
    %v2009 = vadd.f32 %v1876, %v2008
    %v2010 = vpop.f32.mrb[0].mxu0
    %v2011 = vpop.f32.mrb[0].mxu0
    %v2012 = vadd.f32 %v1876, %v2011
    %v2013 = vpop.f32.mrb[0].mxu0
    %2014 = vmatprep.mubr.bf16.mxu0 0
    %2015 = vmatmul.mubr.bf16.gmra.mrb[0].mxu0 %v1854
    %v2016 = vpop.f32.mrb[0].mxu0
    %v2017 = vadd.f32 %v1876, %v2016
    %v2018 = vpop.f32.mrb[0].mxu0
    %v2019 = vpop.f32.mrb[0].mxu0
    %v2020 = vadd.f32 %v1876, %v2019
    %v2021 = vpop.f32.mrb[0].mxu0
    %2022 = vdwg.mxu0
    %v2023 = vld [vmem:[%s33] sm:$0x1]
    %v2024 = vld [vmem:[%s35] sm:$0x1]
    %vm2025 = vcmask 523264
    %v2026 = vsel %vm2025, %v1961, 0.0
    %v2027 = vsel %vm2025, %v1964, 0.0
    %v2028 = vadd.f32 %v2026, %v2027
    %v2029 = vsel %vm2025, %v1969, 0.0
    %v2030 = vadd.f32 %v2028, %v2029
    %v2031 = vsel %vm2025, %v1972, 0.0
    %v2032 = vadd.f32 %v2030, %v2031
    %v2033 = vsel %vm2025, %v1977, 0.0
    %v2034 = vadd.f32 %v2032, %v2033
    %v2035 = vsel %vm2025, %v1980, 0.0
    %v2036 = vadd.f32 %v2034, %v2035
    %v2037 = vsel %vm2025, %v1985, 0.0
    %v2038 = vadd.f32 %v2036, %v2037
    %v2039 = vsel %vm2025, %v1988, 0.0
    %v2040 = vadd.f32 %v2038, %v2039
    %v2041 = vsel %vm2025, %v1993, 0.0
    %v2042 = vadd.f32 %v2040, %v2041
    %v2043 = vsel %vm2025, %v1996, 0.0
    %v2044 = vadd.f32 %v2042, %v2043
    %v2045 = vsel %vm2025, %v2001, 0.0
    %v2046 = vadd.f32 %v2044, %v2045
    %v2047 = vsel %vm2025, %v2004, 0.0
    %v2048 = vadd.f32 %v2046, %v2047
    %v2049 = vsel %vm2025, %v2009, 0.0
    %v2050 = vadd.f32 %v2048, %v2049
    %v2051 = vsel %vm2025, %v2012, 0.0
    %v2052 = vadd.f32 %v2050, %v2051
    %v2053 = vsel %vm2025, %v2017, 0.0
    %v2054 = vadd.f32 %v2052, %v2053
    %v2055 = vsel %vm2025, %v2020, 0.0
    %v2056 = vadd.f32 %v2054, %v2055
    %v2057 = vrot.slane %v2056, 4
    %v2058 = vadd.f32 %v2056, %v2057
    %v2059 = vrot.slane %v2058, 2
    %v2060 = vadd.f32 %v2058, %v2059
    %v2061 = vrot.slane %v2060, 1
    %v2062 = vadd.f32 %v2060, %v2061
    %v2063 = vmul.f32 %v2062, %v1178
    %v2064 = vsub.f32 %v1961, %v2063
    %v2065 = vsub.f32 %v1964, %v2063
    %v2066 = vsub.f32 %v1969, %v2063
    %v2067 = vsub.f32 %v1972, %v2063
    %v2068 = vsub.f32 %v1977, %v2063
    %v2069 = vsub.f32 %v1980, %v2063
    %v2070 = vsub.f32 %v1985, %v2063
    %v2071 = vsub.f32 %v1988, %v2063
    %v2072 = vsub.f32 %v1993, %v2063
    %v2073 = vsub.f32 %v1996, %v2063
    %v2074 = vsub.f32 %v2001, %v2063
    %v2075 = vsub.f32 %v2004, %v2063
    %v2076 = vsub.f32 %v2009, %v2063
    %v2077 = vsub.f32 %v2012, %v2063
    %v2078 = vsub.f32 %v2017, %v2063
    %v2079 = vsub.f32 %v2020, %v2063
    %v2080 = vmul.f32 %v2064, %v2064
    %v2081 = vmul.f32 %v2065, %v2065
    %v2082 = vmul.f32 %v2066, %v2066
    %v2083 = vmul.f32 %v2067, %v2067
    %v2084 = vmul.f32 %v2068, %v2068
    %v2085 = vmul.f32 %v2069, %v2069
    %v2086 = vmul.f32 %v2070, %v2070
    %v2087 = vmul.f32 %v2071, %v2071
    %v2088 = vmul.f32 %v2072, %v2072
    %v2089 = vmul.f32 %v2073, %v2073
    %v2090 = vmul.f32 %v2074, %v2074
    %v2091 = vmul.f32 %v2075, %v2075
    %v2092 = vmul.f32 %v2076, %v2076
    %v2093 = vmul.f32 %v2077, %v2077
    %v2094 = vmul.f32 %v2078, %v2078
    %v2095 = vmul.f32 %v2079, %v2079
    %v2096 = vsel %vm2025, %v2080, 0.0
    %v2097 = vsel %vm2025, %v2081, 0.0
    %v2098 = vadd.f32 %v2096, %v2097
    %v2099 = vsel %vm2025, %v2082, 0.0
    %v2100 = vadd.f32 %v2098, %v2099
    %v2101 = vsel %vm2025, %v2083, 0.0
    %v2102 = vadd.f32 %v2100, %v2101
    %v2103 = vsel %vm2025, %v2084, 0.0
    %v2104 = vadd.f32 %v2102, %v2103
    %v2105 = vsel %vm2025, %v2085, 0.0
    %v2106 = vadd.f32 %v2104, %v2105
    %v2107 = vsel %vm2025, %v2086, 0.0
    %v2108 = vadd.f32 %v2106, %v2107
    %v2109 = vsel %vm2025, %v2087, 0.0
    %v2110 = vadd.f32 %v2108, %v2109
    %v2111 = vsel %vm2025, %v2088, 0.0
    %v2112 = vadd.f32 %v2110, %v2111
    %v2113 = vsel %vm2025, %v2089, 0.0
    %v2114 = vadd.f32 %v2112, %v2113
    %v2115 = vsel %vm2025, %v2090, 0.0
    %v2116 = vadd.f32 %v2114, %v2115
    %v2117 = vsel %vm2025, %v2091, 0.0
    %v2118 = vadd.f32 %v2116, %v2117
    %v2119 = vsel %vm2025, %v2092, 0.0
    %v2120 = vadd.f32 %v2118, %v2119
    %v2121 = vsel %vm2025, %v2093, 0.0
    %v2122 = vadd.f32 %v2120, %v2121
    %v2123 = vsel %vm2025, %v2094, 0.0
    %v2124 = vadd.f32 %v2122, %v2123
    %v2125 = vsel %vm2025, %v2095, 0.0
    %v2126 = vadd.f32 %v2124, %v2125
    %v2127 = vrot.slane %v2126, 4
    %v2128 = vadd.f32 %v2126, %v2127
    %v2129 = vrot.slane %v2128, 2
    %v2130 = vadd.f32 %v2128, %v2129
    %v2131 = vrot.slane %v2130, 1
    %v2132 = vadd.f32 %v2130, %v2131
    %v2133 = vmul.f32 %v2132, %v1178
    %v2134 = vadd.f32 %v2133, 1e-05
    %v2135 = vrsqrt.pop %v2134
    %v2136 = vmul.f32 %v2064, %v2135
    %v2137 = vmul.f32 %v2065, %v2135
    %v2138 = vmul.f32 %v2066, %v2135
    %v2139 = vmul.f32 %v2067, %v2135
    %v2140 = vmul.f32 %v2068, %v2135
    %v2141 = vmul.f32 %v2069, %v2135
    %v2142 = vmul.f32 %v2070, %v2135
    %v2143 = vmul.f32 %v2071, %v2135
    %v2144 = vmul.f32 %v2072, %v2135
    %v2145 = vmul.f32 %v2073, %v2135
    %v2146 = vmul.f32 %v2074, %v2135
    %v2147 = vmul.f32 %v2075, %v2135
    %v2148 = vmul.f32 %v2076, %v2135
    %v2149 = vmul.f32 %v2077, %v2135
    %v2150 = vmul.f32 %v2078, %v2135
    %v2151 = vmul.f32 %v2079, %v2135
    %v2153 = vlaneseq
    %v2154 = vshrl.u32 %v2153, 7
    %v2155 = vsub.s32 0, %v2154
    %v2156 = vrot.slane %v2023, %v2155
    %v2158 = vmul.f32 %v2136, %v2156
    %v2159 = vmul.f32 %v2137, %v2156
    %v2160 = vmul.f32 %v2138, %v2156
    %v2161 = vmul.f32 %v2139, %v2156
    %v2162 = vmul.f32 %v2140, %v2156
    %v2163 = vmul.f32 %v2141, %v2156
    %v2164 = vmul.f32 %v2142, %v2156
    %v2165 = vmul.f32 %v2143, %v2156
    %v2166 = vmul.f32 %v2144, %v2156
    %v2167 = vmul.f32 %v2145, %v2156
    %v2168 = vmul.f32 %v2146, %v2156
    %v2169 = vmul.f32 %v2147, %v2156
    %v2170 = vmul.f32 %v2148, %v2156
    %v2171 = vmul.f32 %v2149, %v2156
    %v2172 = vmul.f32 %v2150, %v2156
    %v2173 = vmul.f32 %v2151, %v2156
    %v2175 = vlaneseq
    %v2176 = vshrl.u32 %v2175, 7
    %v2177 = vsub.s32 0, %v2176
    %v2178 = vrot.slane %v2024, %v2177
    %v2180 = vadd.f32 %v2158, %v2178
    %v2181 = vadd.f32 %v2159, %v2178
    %v2182 = vadd.f32 %v2160, %v2178
    %v2183 = vadd.f32 %v2161, %v2178
    %v2184 = vadd.f32 %v2162, %v2178
    %v2185 = vadd.f32 %v2163, %v2178
    %v2186 = vadd.f32 %v2164, %v2178
    %v2187 = vadd.f32 %v2165, %v2178
    %v2188 = vadd.f32 %v2166, %v2178
    %v2189 = vadd.f32 %v2167, %v2178
    %v2190 = vadd.f32 %v2168, %v2178
    %v2191 = vadd.f32 %v2169, %v2178
    %v2192 = vadd.f32 %v2170, %v2178
    %v2193 = vadd.f32 %v2171, %v2178
    %v2194 = vadd.f32 %v2172, %v2178
    %v2195 = vadd.f32 %v2173, %v2178
    %v2196 = vmax.f32 %v2180, 0.0
    %v2197 = vmax.f32 %v2181, 0.0
    %v2198 = vmax.f32 %v2182, 0.0
    %v2199 = vmax.f32 %v2183, 0.0
    %v2200 = vmax.f32 %v2184, 0.0
    %v2201 = vmax.f32 %v2185, 0.0
    %v2202 = vmax.f32 %v2186, 0.0
    %v2203 = vmax.f32 %v2187, 0.0
    %v2204 = vmax.f32 %v2188, 0.0
    %v2205 = vmax.f32 %v2189, 0.0
    %v2206 = vmax.f32 %v2190, 0.0
    %v2207 = vmax.f32 %v2191, 0.0
    %v2208 = vmax.f32 %v2192, 0.0
    %v2209 = vmax.f32 %v2193, 0.0
    %v2210 = vmax.f32 %v2194, 0.0
    %v2211 = vmax.f32 %v2195, 0.0
    %v2212 = vld [vmem:[%s37] sm:$0x1]
    %v2214 = vlaneseq
    %v2215 = vshrl.u32 %v2214, 7
    %v2216 = vsub.s32 0, %v2215
    %v2217 = vrot.slane %v2212, %v2216
    %v2219 = vmul.f32 %v2196, %v2217
    %v2220 = vmul.f32 %v2197, %v2217
    %v2221 = vmul.f32 %v2198, %v2217
    %v2222 = vmul.f32 %v2199, %v2217
    %v2223 = vmul.f32 %v2200, %v2217
    %v2224 = vmul.f32 %v2201, %v2217
    %v2225 = vmul.f32 %v2202, %v2217
    %v2226 = vmul.f32 %v2203, %v2217
    %v2227 = vmul.f32 %v2204, %v2217
    %v2228 = vmul.f32 %v2205, %v2217
    %v2229 = vmul.f32 %v2206, %v2217
    %v2230 = vmul.f32 %v2207, %v2217
    %v2231 = vmul.f32 %v2208, %v2217
    %v2232 = vmul.f32 %v2209, %v2217
    %v2233 = vmul.f32 %v2210, %v2217
    %v2234 = vmul.f32 %v2211, %v2217
    %v2235 = vsel %vm2025, %v2219, 0.0
    %2236 = vadd.xlane.f32.xlu0 %v2235
    %v2237 = vpop.xlane.xlu0 %2236
    %v2238 = vsel %vm2025, %v2220, 0.0
    %2239 = vadd.xlane.f32.xlu0 %v2238
    %v2240 = vpop.xlane.xlu0 %2239
    %v2241 = vsel %vm2025, %v2221, 0.0
    %2242 = vadd.xlane.f32.xlu0 %v2241
    %v2243 = vpop.xlane.xlu0 %2242
    %v2244 = vsel %vm2025, %v2222, 0.0
    %2245 = vadd.xlane.f32.xlu0 %v2244
    %v2246 = vpop.xlane.xlu0 %2245
    %v2247 = vsel %vm2025, %v2223, 0.0
    %2248 = vadd.xlane.f32.xlu0 %v2247
    %v2249 = vpop.xlane.xlu0 %2248
    %v2250 = vsel %vm2025, %v2224, 0.0
    %2251 = vadd.xlane.f32.xlu0 %v2250
    %v2252 = vpop.xlane.xlu0 %2251
    %v2253 = vsel %vm2025, %v2225, 0.0
    %2254 = vadd.xlane.f32.xlu0 %v2253
    %v2255 = vpop.xlane.xlu0 %2254
    %v2256 = vsel %vm2025, %v2226, 0.0
    %2257 = vadd.xlane.f32.xlu0 %v2256
    %v2258 = vpop.xlane.xlu0 %2257
    %v2259 = vsel %vm2025, %v2227, 0.0
    %2260 = vadd.xlane.f32.xlu0 %v2259
    %v2261 = vpop.xlane.xlu0 %2260
    %v2262 = vsel %vm2025, %v2228, 0.0
    %2263 = vadd.xlane.f32.xlu0 %v2262
    %v2264 = vpop.xlane.xlu0 %2263
    %v2265 = vsel %vm2025, %v2229, 0.0
    %2266 = vadd.xlane.f32.xlu0 %v2265
    %v2267 = vpop.xlane.xlu0 %2266
    %v2268 = vsel %vm2025, %v2230, 0.0
    %2269 = vadd.xlane.f32.xlu0 %v2268
    %v2270 = vpop.xlane.xlu0 %2269
    %v2271 = vsel %vm2025, %v2231, 0.0
    %2272 = vadd.xlane.f32.xlu0 %v2271
    %v2273 = vpop.xlane.xlu0 %2272
    %v2274 = vsel %vm2025, %v2232, 0.0
    %2275 = vadd.xlane.f32.xlu0 %v2274
    %v2276 = vpop.xlane.xlu0 %2275
    %v2277 = vsel %vm2025, %v2233, 0.0
    %2278 = vadd.xlane.f32.xlu0 %v2277
    %v2279 = vpop.xlane.xlu0 %2278
    %v2280 = vsel %vm2025, %v2234, 0.0
    %2281 = vadd.xlane.f32.xlu0 %v2280
    %v2282 = vpop.xlane.xlu0 %2281
    %v2283 = vld [vmem:[#allocation3] sm:$0x1]
    %v2285 = vlaneseq
    %v2286 = vshrl.u32 %v2285, 7
    %v2287 = vsub.s32 0, %v2286
    %v2288 = vrot.slane %v2283, %v2287
    %v2290 = vadd.f32 %v2237, %v2288
    %v2291 = vadd.f32 %v2240, %v2288
    %v2292 = vadd.f32 %v2243, %v2288
    %v2293 = vadd.f32 %v2246, %v2288
    %v2294 = vadd.f32 %v2249, %v2288
    %v2295 = vadd.f32 %v2252, %v2288
    %v2296 = vadd.f32 %v2255, %v2288
    %v2297 = vadd.f32 %v2258, %v2288
    %v2298 = vadd.f32 %v2261, %v2288
    %v2299 = vadd.f32 %v2264, %v2288
    %v2300 = vadd.f32 %v2267, %v2288
    %v2301 = vadd.f32 %v2270, %v2288
    %v2302 = vadd.f32 %v2273, %v2288
    %v2303 = vadd.f32 %v2276, %v2288
    %v2304 = vadd.f32 %v2279, %v2288
    %v2305 = vadd.f32 %v2282, %v2288
    %v2306 = vld [vmem:[%s41] sm:$0xff]
    %v2307 = vld [vmem:[%s41 + $0x8] sm:$0xff]
    %v2308 = vld [vmem:[%s41 + $0x10] sm:$0xff]
    %v2309 = vld [vmem:[%s41 + $0x18] sm:$0xff]
    %v2310 = vld [vmem:[%s41 + $0x20] sm:$0xff]
    %v2311 = vld [vmem:[%s41 + $0x28] sm:$0xff]
    %v2312 = vld [vmem:[%s41 + $0x30] sm:$0xff]
    %v2313 = vld [vmem:[%s41 + $0x38] sm:$0xff]
    %v2314 = vld [vmem:[%s41 + $0x40] sm:$0xff]
    %v2315 = vld [vmem:[%s41 + $0x48] sm:$0xff]
    %v2316 = vld [vmem:[%s41 + $0x50] sm:$0xff]
    %v2317 = vld [vmem:[%s41 + $0x58] sm:$0xff]
    %v2318 = vld [vmem:[%s41 + $0x60] sm:$0xff]
    %v2319 = vld [vmem:[%s41 + $0x68] sm:$0xff]
    %v2320 = vld [vmem:[%s41 + $0x70] sm:$0xff]
    %v2321 = vld [vmem:[%s41 + $0x78] sm:$0xff]
    %v2322 = vld [vmem:[%s41 + $0x80] sm:$0xff]
    %v2323 = vld [vmem:[%s41 + $0x88] sm:$0xff]
    %v2324 = vld [vmem:[%s41 + $0x90] sm:$0xff]
    %v2325 = vld [vmem:[%s41 + $0x98] sm:$0xff]
    %v2326 = vld [vmem:[%s41 + $0xa0] sm:$0xff]
    %v2327 = vld [vmem:[%s41 + $0xa8] sm:$0xff]
    %v2328 = vld [vmem:[%s41 + $0xb0] sm:$0xff]
    %v2329 = vld [vmem:[%s41 + $0xb8] sm:$0xff]
    %v2330 = vld [vmem:[%s41 + $0xc0] sm:$0xff]
    %v2331 = vld [vmem:[%s41 + $0xc8] sm:$0xff]
    %v2332 = vld [vmem:[%s41 + $0xd0] sm:$0xff]
    %v2333 = vld [vmem:[%s41 + $0xd8] sm:$0xff]
    %v2334 = vld [vmem:[%s41 + $0xe0] sm:$0xff]
    %v2335 = vld [vmem:[%s41 + $0xe8] sm:$0xff]
    %v2336 = vld [vmem:[%s41 + $0xf0] sm:$0xff]
    %v2337 = vld [vmem:[%s41 + $0xf8] sm:$0xff]
    %v2370 = vunpack.c.l.b16 %v2306
    %v2371 = vunpack.c.h.b16 %v2306
    %v2372 = vunpack.c.l.b16 %v2307
    %v2373 = vunpack.c.h.b16 %v2307
    %v2374 = vunpack.c.l.b16 %v2308
    %v2375 = vunpack.c.h.b16 %v2308
    %v2376 = vunpack.c.l.b16 %v2309
    %v2377 = vunpack.c.h.b16 %v2309
    %v2378 = vunpack.c.l.b16 %v2310
    %v2379 = vunpack.c.h.b16 %v2310
    %v2380 = vunpack.c.l.b16 %v2311
    %v2381 = vunpack.c.h.b16 %v2311
    %v2382 = vunpack.c.l.b16 %v2312
    %v2383 = vunpack.c.h.b16 %v2312
    %v2384 = vunpack.c.l.b16 %v2313
    %v2385 = vunpack.c.h.b16 %v2313
    %v2386 = vunpack.c.l.b16 %v2314
    %v2387 = vunpack.c.h.b16 %v2314
    %v2388 = vunpack.c.l.b16 %v2315
    %v2389 = vunpack.c.h.b16 %v2315
    %v2390 = vunpack.c.l.b16 %v2316
    %v2391 = vunpack.c.h.b16 %v2316
    %v2392 = vunpack.c.l.b16 %v2317
    %v2393 = vunpack.c.h.b16 %v2317
    %v2394 = vunpack.c.l.b16 %v2318
    %v2395 = vunpack.c.h.b16 %v2318
    %v2396 = vunpack.c.l.b16 %v2319
    %v2397 = vunpack.c.h.b16 %v2319
    %v2398 = vunpack.c.l.b16 %v2320
    %v2399 = vunpack.c.h.b16 %v2320
    %v2400 = vunpack.c.l.b16 %v2321
    %v2401 = vunpack.c.h.b16 %v2321
    %v2402 = vunpack.c.l.b16 %v2322
    %v2403 = vunpack.c.h.b16 %v2322
    %v2404 = vunpack.c.l.b16 %v2323
    %v2405 = vunpack.c.h.b16 %v2323
    %v2406 = vunpack.c.l.b16 %v2324
    %v2407 = vunpack.c.h.b16 %v2324
    %v2408 = vunpack.c.l.b16 %v2325
    %v2409 = vunpack.c.h.b16 %v2325
    %v2410 = vunpack.c.l.b16 %v2326
    %v2411 = vunpack.c.h.b16 %v2326
    %v2412 = vunpack.c.l.b16 %v2327
    %v2413 = vunpack.c.h.b16 %v2327
    %v2414 = vunpack.c.l.b16 %v2328
    %v2415 = vunpack.c.h.b16 %v2328
    %v2416 = vunpack.c.l.b16 %v2329
    %v2417 = vunpack.c.h.b16 %v2329
    %v2418 = vunpack.c.l.b16 %v2330
    %v2419 = vunpack.c.h.b16 %v2330
    %v2420 = vunpack.c.l.b16 %v2331
    %v2421 = vunpack.c.h.b16 %v2331
    %v2422 = vunpack.c.l.b16 %v2332
    %v2423 = vunpack.c.h.b16 %v2332
    %v2424 = vunpack.c.l.b16 %v2333
    %v2425 = vunpack.c.h.b16 %v2333
    %v2426 = vunpack.c.l.b16 %v2334
    %v2427 = vunpack.c.h.b16 %v2334
    %v2428 = vunpack.c.l.b16 %v2335
    %v2429 = vunpack.c.h.b16 %v2335
    %v2430 = vunpack.c.l.b16 %v2336
    %v2431 = vunpack.c.h.b16 %v2336
    %v2432 = vunpack.c.l.b16 %v2337
    %v2433 = vunpack.c.h.b16 %v2337
    %v2434 = vpack.c.b16 %v2372, %v2370
    %v2435 = vpack.c.b16 %v2373, %v2371
    %v2436 = vpack.c.b16 %v2376, %v2374
    %v2437 = vpack.c.b16 %v2377, %v2375
    %v2438 = vpack.c.b16 %v2380, %v2378
    %v2439 = vpack.c.b16 %v2381, %v2379
    %v2440 = vpack.c.b16 %v2384, %v2382
    %v2441 = vpack.c.b16 %v2385, %v2383
    %v2442 = vpack.c.b16 %v2388, %v2386
    %v2443 = vpack.c.b16 %v2389, %v2387
    %v2444 = vpack.c.b16 %v2392, %v2390
    %v2445 = vpack.c.b16 %v2393, %v2391
    %v2446 = vpack.c.b16 %v2396, %v2394
    %v2447 = vpack.c.b16 %v2397, %v2395
    %v2448 = vpack.c.b16 %v2400, %v2398
    %v2449 = vpack.c.b16 %v2401, %v2399
    %v2450 = vpack.c.b16 %v2404, %v2402
    %v2451 = vpack.c.b16 %v2405, %v2403
    %v2452 = vpack.c.b16 %v2408, %v2406
    %v2453 = vpack.c.b16 %v2409, %v2407
    %v2454 = vpack.c.b16 %v2412, %v2410
    %v2455 = vpack.c.b16 %v2413, %v2411
    %v2456 = vpack.c.b16 %v2416, %v2414
    %v2457 = vpack.c.b16 %v2417, %v2415
    %v2458 = vpack.c.b16 %v2420, %v2418
    %v2459 = vpack.c.b16 %v2421, %v2419
    %v2460 = vpack.c.b16 %v2424, %v2422
    %v2461 = vpack.c.b16 %v2425, %v2423
    %v2462 = vpack.c.b16 %v2428, %v2426
    %v2463 = vpack.c.b16 %v2429, %v2427
    %v2464 = vpack.c.b16 %v2432, %v2430
    %v2465 = vpack.c.b16 %v2433, %v2431
    %2498 = vmatprep.subr.bf16.mxu0 %v2435
    %2499 = vmatpush1.bf16.msra.mxu0 %v2434
    %2500 = vmatprep.subr.bf16.mxu0 %v2437
    %2501 = vmatpush1.bf16.msra.mxu0 %v2436
    %2502 = vmatprep.subr.bf16.mxu0 %v2439
    %2503 = vmatpush1.bf16.msra.mxu0 %v2438
    %2504 = vmatprep.subr.bf16.mxu0 %v2441
    %2505 = vmatpush1.bf16.msra.mxu0 %v2440
    %2506 = vmatprep.subr.bf16.mxu0 %v2443
    %2507 = vmatpush1.bf16.msra.mxu0 %v2442
    %2508 = vmatprep.subr.bf16.mxu0 %v2445
    %2509 = vmatpush1.bf16.msra.mxu0 %v2444
    %2510 = vmatprep.subr.bf16.mxu0 %v2447
    %2511 = vmatpush1.bf16.msra.mxu0 %v2446
    %2512 = vmatprep.subr.bf16.mxu0 %v2449
    %2513 = vmatpush1.bf16.msra.mxu0 %v2448
    %2514 = vmatprep.subr.bf16.mxu0 %v2451
    %2515 = vmatpush1.bf16.msra.mxu0 %v2450
    %2516 = vmatprep.subr.bf16.mxu0 %v2453
    %2517 = vmatpush1.bf16.msra.mxu0 %v2452
    %2518 = vmatprep.subr.bf16.mxu0 %v2455
    %2519 = vmatpush1.bf16.msra.mxu0 %v2454
    %2520 = vmatprep.subr.bf16.mxu0 %v2457
    %2521 = vmatpush1.bf16.msra.mxu0 %v2456
    %2522 = vmatprep.subr.bf16.mxu0 %v2459
    %2523 = vmatpush1.bf16.msra.mxu0 %v2458
    %2524 = vmatprep.subr.bf16.mxu0 %v2461
    %2525 = vmatpush1.bf16.msra.mxu0 %v2460
    %2526 = vmatprep.subr.bf16.mxu0 %v2463
    %2527 = vmatpush1.bf16.msra.mxu0 %v2462
    %2528 = vmatprep.subr.bf16.mxu0 %v2465
    %2529 = vmatpush1.bf16.msra.mxu0 %v2464
    %2530 = vmatprep.mubr.bf16.mxu0 %v230
    %2531 = vmatmul.mubr.bf16.gmra.mrb[0].mxu0 %v229
    %v2532 = vpop.f32.mrb[0].mxu0
    %v2533 = vadd.f32 0.0, %v2532
    %v2534 = vpop.f32.mrb[0].mxu0
    %v2535 = vadd.f32 0.0, %v2534
    %v2536 = vpop.f32.mrb[0].mxu0
    %v2537 = vadd.f32 0.0, %v2536
    %v2538 = vpop.f32.mrb[0].mxu0
    %v2539 = vadd.f32 0.0, %v2538
    %2540 = vdwg.mxu0
    %v2541 = vld [vmem:[%s43] sm:$0xff]
    %v2542 = vld [vmem:[%s43 + $0x8] sm:$0xff]
    %v2543 = vld [vmem:[%s43 + $0x10] sm:$0xff]
    %v2544 = vld [vmem:[%s43 + $0x18] sm:$0xff]
    %v2545 = vld [vmem:[%s43 + $0x20] sm:$0xff]
    %v2546 = vld [vmem:[%s43 + $0x28] sm:$0xff]
    %v2547 = vld [vmem:[%s43 + $0x30] sm:$0xff]
    %v2548 = vld [vmem:[%s43 + $0x38] sm:$0xff]
    %v2549 = vld [vmem:[%s43 + $0x40] sm:$0xff]
    %v2550 = vld [vmem:[%s43 + $0x48] sm:$0xff]
    %v2551 = vld [vmem:[%s43 + $0x50] sm:$0xff]
    %v2552 = vld [vmem:[%s43 + $0x58] sm:$0xff]
    %v2553 = vld [vmem:[%s43 + $0x60] sm:$0xff]
    %v2554 = vld [vmem:[%s43 + $0x68] sm:$0xff]
    %v2555 = vld [vmem:[%s43 + $0x70] sm:$0xff]
    %v2556 = vld [vmem:[%s43 + $0x78] sm:$0xff]
    %v2557 = vld [vmem:[%s43 + $0x80] sm:$0xff]
    %v2558 = vld [vmem:[%s43 + $0x88] sm:$0xff]
    %v2559 = vld [vmem:[%s43 + $0x90] sm:$0xff]
    %v2560 = vld [vmem:[%s43 + $0x98] sm:$0xff]
    %v2561 = vld [vmem:[%s43 + $0xa0] sm:$0xff]
    %v2562 = vld [vmem:[%s43 + $0xa8] sm:$0xff]
    %v2563 = vld [vmem:[%s43 + $0xb0] sm:$0xff]
    %v2564 = vld [vmem:[%s43 + $0xb8] sm:$0xff]
    %v2565 = vld [vmem:[%s43 + $0xc0] sm:$0xff]
    %v2566 = vld [vmem:[%s43 + $0xc8] sm:$0xff]
    %v2567 = vld [vmem:[%s43 + $0xd0] sm:$0xff]
    %v2568 = vld [vmem:[%s43 + $0xd8] sm:$0xff]
    %v2569 = vld [vmem:[%s43 + $0xe0] sm:$0xff]
    %v2570 = vld [vmem:[%s43 + $0xe8] sm:$0xff]
    %v2571 = vld [vmem:[%s43 + $0xf0] sm:$0xff]
    %v2572 = vld [vmem:[%s43 + $0xf8] sm:$0xff]
    %v2605 = vunpack.c.l.b16 %v2541
    %v2606 = vunpack.c.h.b16 %v2541
    %v2607 = vunpack.c.l.b16 %v2542
    %v2608 = vunpack.c.h.b16 %v2542
    %v2609 = vunpack.c.l.b16 %v2543
    %v2610 = vunpack.c.h.b16 %v2543
    %v2611 = vunpack.c.l.b16 %v2544
    %v2612 = vunpack.c.h.b16 %v2544
    %v2613 = vunpack.c.l.b16 %v2545
    %v2614 = vunpack.c.h.b16 %v2545
    %v2615 = vunpack.c.l.b16 %v2546
    %v2616 = vunpack.c.h.b16 %v2546
    %v2617 = vunpack.c.l.b16 %v2547
    %v2618 = vunpack.c.h.b16 %v2547
    %v2619 = vunpack.c.l.b16 %v2548
    %v2620 = vunpack.c.h.b16 %v2548
    %v2621 = vunpack.c.l.b16 %v2549
    %v2622 = vunpack.c.h.b16 %v2549
    %v2623 = vunpack.c.l.b16 %v2550
    %v2624 = vunpack.c.h.b16 %v2550
    %v2625 = vunpack.c.l.b16 %v2551
    %v2626 = vunpack.c.h.b16 %v2551
    %v2627 = vunpack.c.l.b16 %v2552
    %v2628 = vunpack.c.h.b16 %v2552
    %v2629 = vunpack.c.l.b16 %v2553
    %v2630 = vunpack.c.h.b16 %v2553
    %v2631 = vunpack.c.l.b16 %v2554
    %v2632 = vunpack.c.h.b16 %v2554
    %v2633 = vunpack.c.l.b16 %v2555
    %v2634 = vunpack.c.h.b16 %v2555
    %v2635 = vunpack.c.l.b16 %v2556
    %v2636 = vunpack.c.h.b16 %v2556
    %v2637 = vunpack.c.l.b16 %v2557
    %v2638 = vunpack.c.h.b16 %v2557
    %v2639 = vunpack.c.l.b16 %v2558
    %v2640 = vunpack.c.h.b16 %v2558
    %v2641 = vunpack.c.l.b16 %v2559
    %v2642 = vunpack.c.h.b16 %v2559
    %v2643 = vunpack.c.l.b16 %v2560
    %v2644 = vunpack.c.h.b16 %v2560
    %v2645 = vunpack.c.l.b16 %v2561
    %v2646 = vunpack.c.h.b16 %v2561
    %v2647 = vunpack.c.l.b16 %v2562
    %v2648 = vunpack.c.h.b16 %v2562
    %v2649 = vunpack.c.l.b16 %v2563
    %v2650 = vunpack.c.h.b16 %v2563
    %v2651 = vunpack.c.l.b16 %v2564
    %v2652 = vunpack.c.h.b16 %v2564
    %v2653 = vunpack.c.l.b16 %v2565
    %v2654 = vunpack.c.h.b16 %v2565
    %v2655 = vunpack.c.l.b16 %v2566
    %v2656 = vunpack.c.h.b16 %v2566
    %v2657 = vunpack.c.l.b16 %v2567
    %v2658 = vunpack.c.h.b16 %v2567
    %v2659 = vunpack.c.l.b16 %v2568
    %v2660 = vunpack.c.h.b16 %v2568
    %v2661 = vunpack.c.l.b16 %v2569
    %v2662 = vunpack.c.h.b16 %v2569
    %v2663 = vunpack.c.l.b16 %v2570
    %v2664 = vunpack.c.h.b16 %v2570
    %v2665 = vunpack.c.l.b16 %v2571
    %v2666 = vunpack.c.h.b16 %v2571
    %v2667 = vunpack.c.l.b16 %v2572
    %v2668 = vunpack.c.h.b16 %v2572
    %v2669 = vpack.c.b16 %v2607, %v2605
    %v2670 = vpack.c.b16 %v2608, %v2606
    %v2671 = vpack.c.b16 %v2611, %v2609
    %v2672 = vpack.c.b16 %v2612, %v2610
    %v2673 = vpack.c.b16 %v2615, %v2613
    %v2674 = vpack.c.b16 %v2616, %v2614
    %v2675 = vpack.c.b16 %v2619, %v2617
    %v2676 = vpack.c.b16 %v2620, %v2618
    %v2677 = vpack.c.b16 %v2623, %v2621
    %v2678 = vpack.c.b16 %v2624, %v2622
    %v2679 = vpack.c.b16 %v2627, %v2625
    %v2680 = vpack.c.b16 %v2628, %v2626
    %v2681 = vpack.c.b16 %v2631, %v2629
    %v2682 = vpack.c.b16 %v2632, %v2630
    %v2683 = vpack.c.b16 %v2635, %v2633
    %v2684 = vpack.c.b16 %v2636, %v2634
    %v2685 = vpack.c.b16 %v2639, %v2637
    %v2686 = vpack.c.b16 %v2640, %v2638
    %v2687 = vpack.c.b16 %v2643, %v2641
    %v2688 = vpack.c.b16 %v2644, %v2642
    %v2689 = vpack.c.b16 %v2647, %v2645
    %v2690 = vpack.c.b16 %v2648, %v2646
    %v2691 = vpack.c.b16 %v2651, %v2649
    %v2692 = vpack.c.b16 %v2652, %v2650
    %v2693 = vpack.c.b16 %v2655, %v2653
    %v2694 = vpack.c.b16 %v2656, %v2654
    %v2695 = vpack.c.b16 %v2659, %v2657
    %v2696 = vpack.c.b16 %v2660, %v2658
    %v2697 = vpack.c.b16 %v2663, %v2661
    %v2698 = vpack.c.b16 %v2664, %v2662
    %v2699 = vpack.c.b16 %v2667, %v2665
    %v2700 = vpack.c.b16 %v2668, %v2666
    %2733 = vmatprep.subr.bf16.mxu0 %v2670
    %2734 = vmatpush1.bf16.msra.mxu0 %v2669
    %2735 = vmatprep.subr.bf16.mxu0 %v2672
    %2736 = vmatpush1.bf16.msra.mxu0 %v2671
    %2737 = vmatprep.subr.bf16.mxu0 %v2674
    %2738 = vmatpush1.bf16.msra.mxu0 %v2673
    %2739 = vmatprep.subr.bf16.mxu0 %v2676
    %2740 = vmatpush1.bf16.msra.mxu0 %v2675
    %2741 = vmatprep.subr.bf16.mxu0 %v2678
    %2742 = vmatpush1.bf16.msra.mxu0 %v2677
    %2743 = vmatprep.subr.bf16.mxu0 %v2680
    %2744 = vmatpush1.bf16.msra.mxu0 %v2679
    %2745 = vmatprep.subr.bf16.mxu0 %v2682
    %2746 = vmatpush1.bf16.msra.mxu0 %v2681
    %2747 = vmatprep.subr.bf16.mxu0 %v2684
    %2748 = vmatpush1.bf16.msra.mxu0 %v2683
    %2749 = vmatprep.subr.bf16.mxu0 %v2686
    %2750 = vmatpush1.bf16.msra.mxu0 %v2685
    %2751 = vmatprep.subr.bf16.mxu0 %v2688
    %2752 = vmatpush1.bf16.msra.mxu0 %v2687
    %2753 = vmatprep.subr.bf16.mxu0 %v2690
    %2754 = vmatpush1.bf16.msra.mxu0 %v2689
    %2755 = vmatprep.subr.bf16.mxu0 %v2692
    %2756 = vmatpush1.bf16.msra.mxu0 %v2691
    %2757 = vmatprep.subr.bf16.mxu0 %v2694
    %2758 = vmatpush1.bf16.msra.mxu0 %v2693
    %2759 = vmatprep.subr.bf16.mxu0 %v2696
    %2760 = vmatpush1.bf16.msra.mxu0 %v2695
    %2761 = vmatprep.subr.bf16.mxu0 %v2698
    %2762 = vmatpush1.bf16.msra.mxu0 %v2697
    %2763 = vmatprep.subr.bf16.mxu0 %v2700
    %2764 = vmatpush1.bf16.msra.mxu0 %v2699
    %2765 = vmatprep.mubr.bf16.mxu0 %v230
    %2766 = vmatmul.mubr.bf16.gmra.mrb[0].mxu0 %v229
    %v2767 = vpop.f32.mrb[0].mxu0
    %v2768 = vadd.f32 0.0, %v2767
    %v2769 = vpop.f32.mrb[0].mxu0
    %v2770 = vadd.f32 0.0, %v2769
    %v2771 = vpop.f32.mrb[0].mxu0
    %v2772 = vadd.f32 0.0, %v2771
    %v2773 = vpop.f32.mrb[0].mxu0
    %v2774 = vadd.f32 0.0, %v2773
    %2775 = vdwg.mxu0
    %2776 = vmatprep.subr.mxu0 %v2770
    %2777 = vmatpush1.msra.mxu0 %v2768
    %2778 = vmatprep.subr.mxu0 %v2774
    %2779 = vmatpush1.msra.mxu0 %v2772
    %2780 = vmatprep.subr.mxu0 0.0
    %2781 = vmatpush1.msra.mxu0 0.0
    %2782 = vmatprep.subr.mxu0 0.0
    %2783 = vmatpush1.msra.mxu0 0.0
    %2784 = vmatprep.subr.mxu0 0.0
    %2785 = vmatpush1.msra.mxu0 0.0
    %2786 = vmatprep.subr.mxu0 0.0
    %2787 = vmatpush1.msra.mxu0 0.0
    %2788 = vmatprep.subr.mxu0 0.0
    %2789 = vmatpush1.msra.mxu0 0.0
    %2790 = vmatprep.subr.mxu0 0.0
    %2791 = vmatpush1.msra.mxu0 0.0
    %2792 = vmatprep.subr.mxu0 0.0
    %2793 = vmatpush1.msra.mxu0 0.0
    %2794 = vmatprep.subr.mxu0 0.0
    %2795 = vmatpush1.msra.mxu0 0.0
    %2796 = vmatprep.subr.mxu0 0.0
    %2797 = vmatpush1.msra.mxu0 0.0
    %2798 = vmatprep.subr.mxu0 0.0
    %2799 = vmatpush1.msra.mxu0 0.0
    %2800 = vmatprep.subr.mxu0 0.0
    %2801 = vmatpush1.msra.mxu0 0.0
    %2802 = vmatprep.subr.mxu0 0.0
    %2803 = vmatpush1.msra.mxu0 0.0
    %2804 = vmatprep.subr.mxu0 0.0
    %2805 = vmatpush1.msra.mxu0 0.0
    %2806 = vmatprep.subr.mxu0 0.0
    %2807 = vmatpush1.msra.mxu0 0.0
    %2808 = vmatprep.subr.mxu0 0.0
    %2809 = vmatpush1.msra.mxu0 0.0
    %2810 = vmatprep.subr.mxu0 0.0
    %2811 = vmatpush1.msra.mxu0 0.0
    %2812 = vmatprep.subr.mxu0 0.0
    %2813 = vmatpush1.msra.mxu0 0.0
    %2814 = vmatprep.subr.mxu0 0.0
    %2815 = vmatpush1.msra.mxu0 0.0
    %2816 = vmatprep.subr.mxu0 0.0
    %2817 = vmatpush1.msra.mxu0 0.0
    %2818 = vmatprep.subr.mxu0 0.0
    %2819 = vmatpush1.msra.mxu0 0.0
    %2820 = vmatprep.subr.mxu0 0.0
    %2821 = vmatpush1.msra.mxu0 0.0
    %2822 = vmatprep.subr.mxu0 0.0
    %2823 = vmatpush1.msra.mxu0 0.0
    %2824 = vmatprep.subr.mxu0 0.0
    %2825 = vmatpush1.msra.mxu0 0.0
    %2826 = vmatprep.subr.mxu0 0.0
    %2827 = vmatpush1.msra.mxu0 0.0
    %2828 = vmatprep.subr.mxu0 0.0
    %2829 = vmatpush1.msra.mxu0 0.0
    %2830 = vmatprep.subr.mxu0 0.0
    %2831 = vmatpush1.msra.mxu0 0.0
    %2832 = vmatprep.subr.mxu0 0.0
    %2833 = vmatpush1.msra.mxu0 0.0
    %2834 = vmatprep.subr.mxu0 0.0
    %2835 = vmatpush1.msra.mxu0 0.0
    %2836 = vmatprep.subr.mxu0 0.0
    %2837 = vmatpush1.msra.mxu0 0.0
    %2838 = vmatprep.subr.mxu0 0.0
    %2839 = vmatpush1.msra.mxu0 0.0
    %2840 = vmatprep.mubr.f32.mxu0 0.0
    %2841 = vmatmul.mubr.f32.gmra.mrb[0].mxu0 %v882
    %v2842 = vpop.f32.mrb[0].mxu0
    %v2843 = vadd.f32 0.0, %v2842
    %v2844 = vpop.f32.mrb[0].mxu0
    %v2845 = vadd.f32 0.0, %v2844
    %2846 = vmatprep.mubr.f32.mxu0 0.0
    %2847 = vmatmul.mubr.f32.gmra.mrb[0].mxu0 %v885
    %v2848 = vpop.f32.mrb[0].mxu0
    %v2849 = vadd.f32 0.0, %v2848
    %v2850 = vpop.f32.mrb[0].mxu0
    %v2851 = vadd.f32 0.0, %v2850
    %2852 = vmatprep.mubr.f32.mxu0 0.0
    %2853 = vmatmul.mubr.f32.gmra.mrb[0].mxu0 %v888
    %v2854 = vpop.f32.mrb[0].mxu0
    %v2855 = vadd.f32 0.0, %v2854
    %v2856 = vpop.f32.mrb[0].mxu0
    %v2857 = vadd.f32 0.0, %v2856
    %2858 = vmatprep.mubr.f32.mxu0 0.0
    %2859 = vmatmul.mubr.f32.gmra.mrb[0].mxu0 %v891
    %v2860 = vpop.f32.mrb[0].mxu0
    %v2861 = vadd.f32 0.0, %v2860
    %v2862 = vpop.f32.mrb[0].mxu0
    %v2863 = vadd.f32 0.0, %v2862
    %2864 = vmatprep.mubr.f32.mxu0 0.0
    %2865 = vmatmul.mubr.f32.gmra.mrb[0].mxu0 %v894
    %v2866 = vpop.f32.mrb[0].mxu0
    %v2867 = vadd.f32 0.0, %v2866
    %v2868 = vpop.f32.mrb[0].mxu0
    %v2869 = vadd.f32 0.0, %v2868
    %2870 = vmatprep.mubr.f32.mxu0 0.0
    %2871 = vmatmul.mubr.f32.gmra.mrb[0].mxu0 %v897
    %v2872 = vpop.f32.mrb[0].mxu0
    %v2873 = vadd.f32 0.0, %v2872
    %v2874 = vpop.f32.mrb[0].mxu0
    %v2875 = vadd.f32 0.0, %v2874
    %2876 = vmatprep.mubr.f32.mxu0 0.0
    %2877 = vmatmul.mubr.f32.gmra.mrb[0].mxu0 %v900
    %v2878 = vpop.f32.mrb[0].mxu0
    %v2879 = vadd.f32 0.0, %v2878
    %v2880 = vpop.f32.mrb[0].mxu0
    %v2881 = vadd.f32 0.0, %v2880
    %2882 = vmatprep.mubr.f32.mxu0 0.0
    %2883 = vmatmul.mubr.f32.gmra.mrb[0].mxu0 %v903
    %v2884 = vpop.f32.mrb[0].mxu0
    %v2885 = vadd.f32 0.0, %v2884
    %v2886 = vpop.f32.mrb[0].mxu0
    %v2887 = vadd.f32 0.0, %v2886
    %2888 = vmatprep.mubr.f32.mxu0 0.0
    %2889 = vmatmul.mubr.f32.gmra.mrb[0].mxu0 %v906
    %v2890 = vpop.f32.mrb[0].mxu0
    %v2891 = vadd.f32 0.0, %v2890
    %v2892 = vpop.f32.mrb[0].mxu0
    %v2893 = vadd.f32 0.0, %v2892
    %2894 = vmatprep.mubr.f32.mxu0 0.0
    %2895 = vmatmul.mubr.f32.gmra.mrb[0].mxu0 %v909
    %v2896 = vpop.f32.mrb[0].mxu0
    %v2897 = vadd.f32 0.0, %v2896
    %v2898 = vpop.f32.mrb[0].mxu0
    %v2899 = vadd.f32 0.0, %v2898
    %2900 = vmatprep.mubr.f32.mxu0 0.0
    %2901 = vmatmul.mubr.f32.gmra.mrb[0].mxu0 %v912
    %v2902 = vpop.f32.mrb[0].mxu0
    %v2903 = vadd.f32 0.0, %v2902
    %v2904 = vpop.f32.mrb[0].mxu0
    %v2905 = vadd.f32 0.0, %v2904
    %2906 = vmatprep.mubr.f32.mxu0 0.0
    %2907 = vmatmul.mubr.f32.gmra.mrb[0].mxu0 %v915
    %v2908 = vpop.f32.mrb[0].mxu0
    %v2909 = vadd.f32 0.0, %v2908
    %v2910 = vpop.f32.mrb[0].mxu0
    %v2911 = vadd.f32 0.0, %v2910
    %2912 = vmatprep.mubr.f32.mxu0 0.0
    %2913 = vmatmul.mubr.f32.gmra.mrb[0].mxu0 %v918
    %v2914 = vpop.f32.mrb[0].mxu0
    %v2915 = vadd.f32 0.0, %v2914
    %v2916 = vpop.f32.mrb[0].mxu0
    %v2917 = vadd.f32 0.0, %v2916
    %2918 = vmatprep.mubr.f32.mxu0 0.0
    %2919 = vmatmul.mubr.f32.gmra.mrb[0].mxu0 %v921
    %v2920 = vpop.f32.mrb[0].mxu0
    %v2921 = vadd.f32 0.0, %v2920
    %v2922 = vpop.f32.mrb[0].mxu0
    %v2923 = vadd.f32 0.0, %v2922
    %2924 = vmatprep.mubr.f32.mxu0 0.0
    %2925 = vmatmul.mubr.f32.gmra.mrb[0].mxu0 %v924
    %v2926 = vpop.f32.mrb[0].mxu0
    %v2927 = vadd.f32 0.0, %v2926
    %v2928 = vpop.f32.mrb[0].mxu0
    %v2929 = vadd.f32 0.0, %v2928
    %2930 = vmatprep.mubr.f32.mxu0 0.0
    %2931 = vmatmul.mubr.f32.gmra.mrb[0].mxu0 %v927
    %v2932 = vpop.f32.mrb[0].mxu0
    %v2933 = vadd.f32 0.0, %v2932
    %v2934 = vpop.f32.mrb[0].mxu0
    %v2935 = vadd.f32 0.0, %v2934
    %2936 = vdwg.mxu0
    %2937 = vmatprep.subr.mxu0 %v2535
    %2938 = vmatpush1.msra.mxu0 %v2533
    %2939 = vmatprep.subr.mxu0 %v2539
    %2940 = vmatpush1.msra.mxu0 %v2537
    %2941 = vmatprep.subr.mxu0 0.0
    %2942 = vmatpush1.msra.mxu0 0.0
    %2943 = vmatprep.subr.mxu0 0.0
    %2944 = vmatpush1.msra.mxu0 0.0
    %2945 = vmatprep.subr.mxu0 0.0
    %2946 = vmatpush1.msra.mxu0 0.0
    %2947 = vmatprep.subr.mxu0 0.0
    %2948 = vmatpush1.msra.mxu0 0.0
    %2949 = vmatprep.subr.mxu0 0.0
    %2950 = vmatpush1.msra.mxu0 0.0
    %2951 = vmatprep.subr.mxu0 0.0
    %2952 = vmatpush1.msra.mxu0 0.0
    %2953 = vmatprep.subr.mxu0 0.0
    %2954 = vmatpush1.msra.mxu0 0.0
    %2955 = vmatprep.subr.mxu0 0.0
    %2956 = vmatpush1.msra.mxu0 0.0
    %2957 = vmatprep.subr.mxu0 0.0
    %2958 = vmatpush1.msra.mxu0 0.0
    %2959 = vmatprep.subr.mxu0 0.0
    %2960 = vmatpush1.msra.mxu0 0.0
    %2961 = vmatprep.subr.mxu0 0.0
    %2962 = vmatpush1.msra.mxu0 0.0
    %2963 = vmatprep.subr.mxu0 0.0
    %2964 = vmatpush1.msra.mxu0 0.0
    %2965 = vmatprep.subr.mxu0 0.0
    %2966 = vmatpush1.msra.mxu0 0.0
    %2967 = vmatprep.subr.mxu0 0.0
    %2968 = vmatpush1.msra.mxu0 0.0
    %2969 = vmatprep.subr.mxu0 0.0
    %2970 = vmatpush1.msra.mxu0 0.0
    %2971 = vmatprep.subr.mxu0 0.0
    %2972 = vmatpush1.msra.mxu0 0.0
    %2973 = vmatprep.subr.mxu0 0.0
    %2974 = vmatpush1.msra.mxu0 0.0
    %2975 = vmatprep.subr.mxu0 0.0
    %2976 = vmatpush1.msra.mxu0 0.0
    %2977 = vmatprep.subr.mxu0 0.0
    %2978 = vmatpush1.msra.mxu0 0.0
    %2979 = vmatprep.subr.mxu0 0.0
    %2980 = vmatpush1.msra.mxu0 0.0
    %2981 = vmatprep.subr.mxu0 0.0
    %2982 = vmatpush1.msra.mxu0 0.0
    %2983 = vmatprep.subr.mxu0 0.0
    %2984 = vmatpush1.msra.mxu0 0.0
    %2985 = vmatprep.subr.mxu0 0.0
    %2986 = vmatpush1.msra.mxu0 0.0
    %2987 = vmatprep.subr.mxu0 0.0
    %2988 = vmatpush1.msra.mxu0 0.0
    %2989 = vmatprep.subr.mxu0 0.0
    %2990 = vmatpush1.msra.mxu0 0.0
    %2991 = vmatprep.subr.mxu0 0.0
    %2992 = vmatpush1.msra.mxu0 0.0
    %2993 = vmatprep.subr.mxu0 0.0
    %2994 = vmatpush1.msra.mxu0 0.0
    %2995 = vmatprep.subr.mxu0 0.0
    %2996 = vmatpush1.msra.mxu0 0.0
    %2997 = vmatprep.subr.mxu0 0.0
    %2998 = vmatpush1.msra.mxu0 0.0
    %2999 = vmatprep.subr.mxu0 0.0
    %3000 = vmatpush1.msra.mxu0 0.0
    %3001 = vmatprep.mubr.f32.mxu0 0.0
    %3002 = vmatmul.mubr.f32.gmra.mrb[0].mxu0 %v673
    %v3003 = vpop.f32.mrb[0].mxu0
    %v3004 = vadd.f32 %v2843, %v3003
    %v3005 = vpop.f32.mrb[0].mxu0
    %v3006 = vadd.f32 %v2845, %v3005
    %3007 = vmatprep.mubr.f32.mxu0 0.0
    %3008 = vmatmul.mubr.f32.gmra.mrb[0].mxu0 %v676
    %v3009 = vpop.f32.mrb[0].mxu0
    %v3010 = vadd.f32 %v2849, %v3009
    %v3011 = vpop.f32.mrb[0].mxu0
    %v3012 = vadd.f32 %v2851, %v3011
    %3013 = vmatprep.mubr.f32.mxu0 0.0
    %3014 = vmatmul.mubr.f32.gmra.mrb[0].mxu0 %v679
    %v3015 = vpop.f32.mrb[0].mxu0
    %v3016 = vadd.f32 %v2855, %v3015
    %v3017 = vpop.f32.mrb[0].mxu0
    %v3018 = vadd.f32 %v2857, %v3017
    %3019 = vmatprep.mubr.f32.mxu0 0.0
    %3020 = vmatmul.mubr.f32.gmra.mrb[0].mxu0 %v682
    %v3021 = vpop.f32.mrb[0].mxu0
    %v3022 = vadd.f32 %v2861, %v3021
    %v3023 = vpop.f32.mrb[0].mxu0
    %v3024 = vadd.f32 %v2863, %v3023
    %3025 = vmatprep.mubr.f32.mxu0 0.0
    %3026 = vmatmul.mubr.f32.gmra.mrb[0].mxu0 %v685
    %v3027 = vpop.f32.mrb[0].mxu0
    %v3028 = vadd.f32 %v2867, %v3027
    %v3029 = vpop.f32.mrb[0].mxu0
    %v3030 = vadd.f32 %v2869, %v3029
    %3031 = vmatprep.mubr.f32.mxu0 0.0
    %3032 = vmatmul.mubr.f32.gmra.mrb[0].mxu0 %v688
    %v3033 = vpop.f32.mrb[0].mxu0
    %v3034 = vadd.f32 %v2873, %v3033
    %v3035 = vpop.f32.mrb[0].mxu0
    %v3036 = vadd.f32 %v2875, %v3035
    %3037 = vmatprep.mubr.f32.mxu0 0.0
    %3038 = vmatmul.mubr.f32.gmra.mrb[0].mxu0 %v691
    %v3039 = vpop.f32.mrb[0].mxu0
    %v3040 = vadd.f32 %v2879, %v3039
    %v3041 = vpop.f32.mrb[0].mxu0
    %v3042 = vadd.f32 %v2881, %v3041
    %3043 = vmatprep.mubr.f32.mxu0 0.0
    %3044 = vmatmul.mubr.f32.gmra.mrb[0].mxu0 %v694
    %v3045 = vpop.f32.mrb[0].mxu0
    %v3046 = vadd.f32 %v2885, %v3045
    %v3047 = vpop.f32.mrb[0].mxu0
    %v3048 = vadd.f32 %v2887, %v3047
    %3049 = vmatprep.mubr.f32.mxu0 0.0
    %3050 = vmatmul.mubr.f32.gmra.mrb[0].mxu0 %v697
    %v3051 = vpop.f32.mrb[0].mxu0
    %v3052 = vadd.f32 %v2891, %v3051
    %v3053 = vpop.f32.mrb[0].mxu0
    %v3054 = vadd.f32 %v2893, %v3053
    %3055 = vmatprep.mubr.f32.mxu0 0.0
    %3056 = vmatmul.mubr.f32.gmra.mrb[0].mxu0 %v700
    %v3057 = vpop.f32.mrb[0].mxu0
    %v3058 = vadd.f32 %v2897, %v3057
    %v3059 = vpop.f32.mrb[0].mxu0
    %v3060 = vadd.f32 %v2899, %v3059
    %3061 = vmatprep.mubr.f32.mxu0 0.0
    %3062 = vmatmul.mubr.f32.gmra.mrb[0].mxu0 %v703
    %v3063 = vpop.f32.mrb[0].mxu0
    %v3064 = vadd.f32 %v2903, %v3063
    %v3065 = vpop.f32.mrb[0].mxu0
    %v3066 = vadd.f32 %v2905, %v3065
    %3067 = vmatprep.mubr.f32.mxu0 0.0
    %3068 = vmatmul.mubr.f32.gmra.mrb[0].mxu0 %v706
    %v3069 = vpop.f32.mrb[0].mxu0
    %v3070 = vadd.f32 %v2909, %v3069
    %v3071 = vpop.f32.mrb[0].mxu0
    %v3072 = vadd.f32 %v2911, %v3071
    %3073 = vmatprep.mubr.f32.mxu0 0.0
    %3074 = vmatmul.mubr.f32.gmra.mrb[0].mxu0 %v709
    %v3075 = vpop.f32.mrb[0].mxu0
    %v3076 = vadd.f32 %v2915, %v3075
    %v3077 = vpop.f32.mrb[0].mxu0
    %v3078 = vadd.f32 %v2917, %v3077
    %3079 = vmatprep.mubr.f32.mxu0 0.0
    %3080 = vmatmul.mubr.f32.gmra.mrb[0].mxu0 %v712
    %v3081 = vpop.f32.mrb[0].mxu0
    %v3082 = vadd.f32 %v2921, %v3081
    %v3083 = vpop.f32.mrb[0].mxu0
    %v3084 = vadd.f32 %v2923, %v3083
    %3085 = vmatprep.mubr.f32.mxu0 0.0
    %3086 = vmatmul.mubr.f32.gmra.mrb[0].mxu0 %v715
    %v3087 = vpop.f32.mrb[0].mxu0
    %v3088 = vadd.f32 %v2927, %v3087
    %v3089 = vpop.f32.mrb[0].mxu0
    %v3090 = vadd.f32 %v2929, %v3089
    %3091 = vmatprep.mubr.f32.mxu0 0.0
    %3092 = vmatmul.mubr.f32.gmra.mrb[0].mxu0 %v718
    %v3093 = vpop.f32.mrb[0].mxu0
    %v3094 = vadd.f32 %v2933, %v3093
    %v3095 = vpop.f32.mrb[0].mxu0
    %v3096 = vadd.f32 %v2935, %v3095
    %3097 = vdwg.mxu0
    %v3098 = vld [vmem:[%s45] sm:$0x3]
    %v3100 = vlaneseq
    %v3101 = vshrl.u32 %v3100, 7
    %v3102 = vsub.s32 0, %v3101
    %v3103 = vrot.slane %v3098, %v3102
    %v3104 = vlaneseq
    %v3105 = vshrl.u32 %v3104, 7
    %v3106 = vsub.s32 1, %v3105
    %v3107 = vrot.slane %v3098, %v3106
    %v3110 = vadd.f32 %v3004, %v3103
    %v3111 = vadd.f32 %v3006, %v3107
    %v3112 = vadd.f32 %v3010, %v3103
    %v3113 = vadd.f32 %v3012, %v3107
    %v3114 = vadd.f32 %v3016, %v3103
    %v3115 = vadd.f32 %v3018, %v3107
    %v3116 = vadd.f32 %v3022, %v3103
    %v3117 = vadd.f32 %v3024, %v3107
    %v3118 = vadd.f32 %v3028, %v3103
    %v3119 = vadd.f32 %v3030, %v3107
    %v3120 = vadd.f32 %v3034, %v3103
    %v3121 = vadd.f32 %v3036, %v3107
    %v3122 = vadd.f32 %v3040, %v3103
    %v3123 = vadd.f32 %v3042, %v3107
    %v3124 = vadd.f32 %v3046, %v3103
    %v3125 = vadd.f32 %v3048, %v3107
    %v3126 = vadd.f32 %v3052, %v3103
    %v3127 = vadd.f32 %v3054, %v3107
    %v3128 = vadd.f32 %v3058, %v3103
    %v3129 = vadd.f32 %v3060, %v3107
    %v3130 = vadd.f32 %v3064, %v3103
    %v3131 = vadd.f32 %v3066, %v3107
    %v3132 = vadd.f32 %v3070, %v3103
    %v3133 = vadd.f32 %v3072, %v3107
    %v3134 = vadd.f32 %v3076, %v3103
    %v3135 = vadd.f32 %v3078, %v3107
    %v3136 = vadd.f32 %v3082, %v3103
    %v3137 = vadd.f32 %v3084, %v3107
    %v3138 = vadd.f32 %v3088, %v3103
    %v3139 = vadd.f32 %v3090, %v3107
    %v3140 = vadd.f32 %v3094, %v3103
    %v3141 = vadd.f32 %v3096, %v3107
    %v3142 = vld [vmem:[%s47] sm:$0x3]
    %v3143 = vld [vmem:[%s49] sm:$0x3]
    %v3144 = vadd.f32 %v3110, %v3112
    %v3145 = vadd.f32 %v3144, %v3114
    %v3146 = vadd.f32 %v3145, %v3116
    %v3147 = vadd.f32 %v3146, %v3118
    %v3148 = vadd.f32 %v3147, %v3120
    %v3149 = vadd.f32 %v3148, %v3122
    %v3150 = vadd.f32 %v3149, %v3124
    %v3151 = vadd.f32 %v3150, %v3126
    %v3152 = vadd.f32 %v3151, %v3128
    %v3153 = vadd.f32 %v3152, %v3130
    %v3154 = vadd.f32 %v3153, %v3132
    %v3155 = vadd.f32 %v3154, %v3134
    %v3156 = vadd.f32 %v3155, %v3136
    %v3157 = vadd.f32 %v3156, %v3138
    %v3158 = vadd.f32 %v3157, %v3140
    %v3159 = vrot.slane %v3158, 4
    %v3160 = vadd.f32 %v3158, %v3159
    %v3161 = vrot.slane %v3160, 2
    %v3162 = vadd.f32 %v3160, %v3161
    %v3163 = vrot.slane %v3162, 1
    %v3164 = vadd.f32 %v3162, %v3163
    %v3165 = vadd.f32 %v3111, %v3113
    %v3166 = vadd.f32 %v3165, %v3115
    %v3167 = vadd.f32 %v3166, %v3117
    %v3168 = vadd.f32 %v3167, %v3119
    %v3169 = vadd.f32 %v3168, %v3121
    %v3170 = vadd.f32 %v3169, %v3123
    %v3171 = vadd.f32 %v3170, %v3125
    %v3172 = vadd.f32 %v3171, %v3127
    %v3173 = vadd.f32 %v3172, %v3129
    %v3174 = vadd.f32 %v3173, %v3131
    %v3175 = vadd.f32 %v3174, %v3133
    %v3176 = vadd.f32 %v3175, %v3135
    %v3177 = vadd.f32 %v3176, %v3137
    %v3178 = vadd.f32 %v3177, %v3139
    %v3179 = vadd.f32 %v3178, %v3141
    %v3180 = vrot.slane %v3179, 4
    %v3181 = vadd.f32 %v3179, %v3180
    %v3182 = vrot.slane %v3181, 2
    %v3183 = vadd.f32 %v3181, %v3182
    %v3184 = vrot.slane %v3183, 1
    %v3185 = vadd.f32 %v3183, %v3184
    %v3186 = vmul.f32 %v3164, %v1178
    %v3187 = vmul.f32 %v3185, %v1178
    %v3188 = vsub.f32 %v3110, %v3186
    %v3189 = vsub.f32 %v3111, %v3187
    %v3190 = vsub.f32 %v3112, %v3186
    %v3191 = vsub.f32 %v3113, %v3187
    %v3192 = vsub.f32 %v3114, %v3186
    %v3193 = vsub.f32 %v3115, %v3187
    %v3194 = vsub.f32 %v3116, %v3186
    %v3195 = vsub.f32 %v3117, %v3187
    %v3196 = vsub.f32 %v3118, %v3186
    %v3197 = vsub.f32 %v3119, %v3187
    %v3198 = vsub.f32 %v3120, %v3186
    %v3199 = vsub.f32 %v3121, %v3187
    %v3200 = vsub.f32 %v3122, %v3186
    %v3201 = vsub.f32 %v3123, %v3187
    %v3202 = vsub.f32 %v3124, %v3186
    %v3203 = vsub.f32 %v3125, %v3187
    %v3204 = vsub.f32 %v3126, %v3186
    %v3205 = vsub.f32 %v3127, %v3187
    %v3206 = vsub.f32 %v3128, %v3186
    %v3207 = vsub.f32 %v3129, %v3187
    %v3208 = vsub.f32 %v3130, %v3186
    %v3209 = vsub.f32 %v3131, %v3187
    %v3210 = vsub.f32 %v3132, %v3186
    %v3211 = vsub.f32 %v3133, %v3187
    %v3212 = vsub.f32 %v3134, %v3186
    %v3213 = vsub.f32 %v3135, %v3187
    %v3214 = vsub.f32 %v3136, %v3186
    %v3215 = vsub.f32 %v3137, %v3187
    %v3216 = vsub.f32 %v3138, %v3186
    %v3217 = vsub.f32 %v3139, %v3187
    %v3218 = vsub.f32 %v3140, %v3186
    %v3219 = vsub.f32 %v3141, %v3187
    %v3220 = vmul.f32 %v3188, %v3188
    %v3221 = vmul.f32 %v3189, %v3189
    %v3222 = vmul.f32 %v3190, %v3190
    %v3223 = vmul.f32 %v3191, %v3191
    %v3224 = vmul.f32 %v3192, %v3192
    %v3225 = vmul.f32 %v3193, %v3193
    %v3226 = vmul.f32 %v3194, %v3194
    %v3227 = vmul.f32 %v3195, %v3195
    %v3228 = vmul.f32 %v3196, %v3196
    %v3229 = vmul.f32 %v3197, %v3197
    %v3230 = vmul.f32 %v3198, %v3198
    %v3231 = vmul.f32 %v3199, %v3199
    %v3232 = vmul.f32 %v3200, %v3200
    %v3233 = vmul.f32 %v3201, %v3201
    %v3234 = vmul.f32 %v3202, %v3202
    %v3235 = vmul.f32 %v3203, %v3203
    %v3236 = vmul.f32 %v3204, %v3204
    %v3237 = vmul.f32 %v3205, %v3205
    %v3238 = vmul.f32 %v3206, %v3206
    %v3239 = vmul.f32 %v3207, %v3207
    %v3240 = vmul.f32 %v3208, %v3208
    %v3241 = vmul.f32 %v3209, %v3209
    %v3242 = vmul.f32 %v3210, %v3210
    %v3243 = vmul.f32 %v3211, %v3211
    %v3244 = vmul.f32 %v3212, %v3212
    %v3245 = vmul.f32 %v3213, %v3213
    %v3246 = vmul.f32 %v3214, %v3214
    %v3247 = vmul.f32 %v3215, %v3215
    %v3248 = vmul.f32 %v3216, %v3216
    %v3249 = vmul.f32 %v3217, %v3217
    %v3250 = vmul.f32 %v3218, %v3218
    %v3251 = vmul.f32 %v3219, %v3219
    %v3252 = vadd.f32 %v3220, %v3222
    %v3253 = vadd.f32 %v3252, %v3224
    %v3254 = vadd.f32 %v3253, %v3226
    %v3255 = vadd.f32 %v3254, %v3228
    %v3256 = vadd.f32 %v3255, %v3230
    %v3257 = vadd.f32 %v3256, %v3232
    %v3258 = vadd.f32 %v3257, %v3234
    %v3259 = vadd.f32 %v3258, %v3236
    %v3260 = vadd.f32 %v3259, %v3238
    %v3261 = vadd.f32 %v3260, %v3240
    %v3262 = vadd.f32 %v3261, %v3242
    %v3263 = vadd.f32 %v3262, %v3244
    %v3264 = vadd.f32 %v3263, %v3246
    %v3265 = vadd.f32 %v3264, %v3248
    %v3266 = vadd.f32 %v3265, %v3250
    %v3267 = vrot.slane %v3266, 4
    %v3268 = vadd.f32 %v3266, %v3267
    %v3269 = vrot.slane %v3268, 2
    %v3270 = vadd.f32 %v3268, %v3269
    %v3271 = vrot.slane %v3270, 1
    %v3272 = vadd.f32 %v3270, %v3271
    %v3273 = vadd.f32 %v3221, %v3223
    %v3274 = vadd.f32 %v3273, %v3225
    %v3275 = vadd.f32 %v3274, %v3227
    %v3276 = vadd.f32 %v3275, %v3229
    %v3277 = vadd.f32 %v3276, %v3231
    %v3278 = vadd.f32 %v3277, %v3233
    %v3279 = vadd.f32 %v3278, %v3235
    %v3280 = vadd.f32 %v3279, %v3237
    %v3281 = vadd.f32 %v3280, %v3239
    %v3282 = vadd.f32 %v3281, %v3241
    %v3283 = vadd.f32 %v3282, %v3243
    %v3284 = vadd.f32 %v3283, %v3245
    %v3285 = vadd.f32 %v3284, %v3247
    %v3286 = vadd.f32 %v3285, %v3249
    %v3287 = vadd.f32 %v3286, %v3251
    %v3288 = vrot.slane %v3287, 4
    %v3289 = vadd.f32 %v3287, %v3288
    %v3290 = vrot.slane %v3289, 2
    %v3291 = vadd.f32 %v3289, %v3290
    %v3292 = vrot.slane %v3291, 1
    %v3293 = vadd.f32 %v3291, %v3292
    %v3294 = vmul.f32 %v3272, %v1178
    %v3295 = vmul.f32 %v3293, %v1178
    %v3296 = vadd.f32 %v3294, 1e-05
    %v3297 = vadd.f32 %v3295, 1e-05
    %v3298 = vrsqrt.pop %v3296
    %v3299 = vrsqrt.pop %v3297
    %v3300 = vmul.f32 %v3188, %v3298
    %v3301 = vmul.f32 %v3189, %v3299
    %v3302 = vmul.f32 %v3190, %v3298
    %v3303 = vmul.f32 %v3191, %v3299
    %v3304 = vmul.f32 %v3192, %v3298
    %v3305 = vmul.f32 %v3193, %v3299
    %v3306 = vmul.f32 %v3194, %v3298
    %v3307 = vmul.f32 %v3195, %v3299
    %v3308 = vmul.f32 %v3196, %v3298
    %v3309 = vmul.f32 %v3197, %v3299
    %v3310 = vmul.f32 %v3198, %v3298
    %v3311 = vmul.f32 %v3199, %v3299
    %v3312 = vmul.f32 %v3200, %v3298
    %v3313 = vmul.f32 %v3201, %v3299
    %v3314 = vmul.f32 %v3202, %v3298
    %v3315 = vmul.f32 %v3203, %v3299
    %v3316 = vmul.f32 %v3204, %v3298
    %v3317 = vmul.f32 %v3205, %v3299
    %v3318 = vmul.f32 %v3206, %v3298
    %v3319 = vmul.f32 %v3207, %v3299
    %v3320 = vmul.f32 %v3208, %v3298
    %v3321 = vmul.f32 %v3209, %v3299
    %v3322 = vmul.f32 %v3210, %v3298
    %v3323 = vmul.f32 %v3211, %v3299
    %v3324 = vmul.f32 %v3212, %v3298
    %v3325 = vmul.f32 %v3213, %v3299
    %v3326 = vmul.f32 %v3214, %v3298
    %v3327 = vmul.f32 %v3215, %v3299
    %v3328 = vmul.f32 %v3216, %v3298
    %v3329 = vmul.f32 %v3217, %v3299
    %v3330 = vmul.f32 %v3218, %v3298
    %v3331 = vmul.f32 %v3219, %v3299
    %v3333 = vlaneseq
    %v3334 = vshrl.u32 %v3333, 7
    %v3335 = vsub.s32 0, %v3334
    %v3336 = vrot.slane %v3142, %v3335
    %v3337 = vlaneseq
    %v3338 = vshrl.u32 %v3337, 7
    %v3339 = vsub.s32 1, %v3338
    %v3340 = vrot.slane %v3142, %v3339
    %v3343 = vmul.f32 %v3300, %v3336
    %v3344 = vmul.f32 %v3301, %v3340
    %v3345 = vmul.f32 %v3302, %v3336
    %v3346 = vmul.f32 %v3303, %v3340
    %v3347 = vmul.f32 %v3304, %v3336
    %v3348 = vmul.f32 %v3305, %v3340
    %v3349 = vmul.f32 %v3306, %v3336
    %v3350 = vmul.f32 %v3307, %v3340
    %v3351 = vmul.f32 %v3308, %v3336
    %v3352 = vmul.f32 %v3309, %v3340
    %v3353 = vmul.f32 %v3310, %v3336
    %v3354 = vmul.f32 %v3311, %v3340
    %v3355 = vmul.f32 %v3312, %v3336
    %v3356 = vmul.f32 %v3313, %v3340
    %v3357 = vmul.f32 %v3314, %v3336
    %v3358 = vmul.f32 %v3315, %v3340
    %v3359 = vmul.f32 %v3316, %v3336
    %v3360 = vmul.f32 %v3317, %v3340
    %v3361 = vmul.f32 %v3318, %v3336
    %v3362 = vmul.f32 %v3319, %v3340
    %v3363 = vmul.f32 %v3320, %v3336
    %v3364 = vmul.f32 %v3321, %v3340
    %v3365 = vmul.f32 %v3322, %v3336
    %v3366 = vmul.f32 %v3323, %v3340
    %v3367 = vmul.f32 %v3324, %v3336
    %v3368 = vmul.f32 %v3325, %v3340
    %v3369 = vmul.f32 %v3326, %v3336
    %v3370 = vmul.f32 %v3327, %v3340
    %v3371 = vmul.f32 %v3328, %v3336
    %v3372 = vmul.f32 %v3329, %v3340
    %v3373 = vmul.f32 %v3330, %v3336
    %v3374 = vmul.f32 %v3331, %v3340
    %v3376 = vlaneseq
    %v3377 = vshrl.u32 %v3376, 7
    %v3378 = vsub.s32 0, %v3377
    %v3379 = vrot.slane %v3143, %v3378
    %v3380 = vlaneseq
    %v3381 = vshrl.u32 %v3380, 7
    %v3382 = vsub.s32 1, %v3381
    %v3383 = vrot.slane %v3143, %v3382
    %v3386 = vadd.f32 %v3343, %v3379
    %v3387 = vadd.f32 %v3344, %v3383
    %v3388 = vadd.f32 %v3345, %v3379
    %v3389 = vadd.f32 %v3346, %v3383
    %v3390 = vadd.f32 %v3347, %v3379
    %v3391 = vadd.f32 %v3348, %v3383
    %v3392 = vadd.f32 %v3349, %v3379
    %v3393 = vadd.f32 %v3350, %v3383
    %v3394 = vadd.f32 %v3351, %v3379
    %v3395 = vadd.f32 %v3352, %v3383
    %v3396 = vadd.f32 %v3353, %v3379
    %v3397 = vadd.f32 %v3354, %v3383
    %v3398 = vadd.f32 %v3355, %v3379
    %v3399 = vadd.f32 %v3356, %v3383
    %v3400 = vadd.f32 %v3357, %v3379
    %v3401 = vadd.f32 %v3358, %v3383
    %v3402 = vadd.f32 %v3359, %v3379
    %v3403 = vadd.f32 %v3360, %v3383
    %v3404 = vadd.f32 %v3361, %v3379
    %v3405 = vadd.f32 %v3362, %v3383
    %v3406 = vadd.f32 %v3363, %v3379
    %v3407 = vadd.f32 %v3364, %v3383
    %v3408 = vadd.f32 %v3365, %v3379
    %v3409 = vadd.f32 %v3366, %v3383
    %v3410 = vadd.f32 %v3367, %v3379
    %v3411 = vadd.f32 %v3368, %v3383
    %v3412 = vadd.f32 %v3369, %v3379
    %v3413 = vadd.f32 %v3370, %v3383
    %v3414 = vadd.f32 %v3371, %v3379
    %v3415 = vadd.f32 %v3372, %v3383
    %v3416 = vadd.f32 %v3373, %v3379
    %v3417 = vadd.f32 %v3374, %v3383
    %v3418 = vmax.f32 %v3386, 0.0
    %v3419 = vmax.f32 %v3387, 0.0
    %v3420 = vmax.f32 %v3388, 0.0
    %v3421 = vmax.f32 %v3389, 0.0
    %v3422 = vmax.f32 %v3390, 0.0
    %v3423 = vmax.f32 %v3391, 0.0
    %v3424 = vmax.f32 %v3392, 0.0
    %v3425 = vmax.f32 %v3393, 0.0
    %v3426 = vmax.f32 %v3394, 0.0
    %v3427 = vmax.f32 %v3395, 0.0
    %v3428 = vmax.f32 %v3396, 0.0
    %v3429 = vmax.f32 %v3397, 0.0
    %v3430 = vmax.f32 %v3398, 0.0
    %v3431 = vmax.f32 %v3399, 0.0
    %v3432 = vmax.f32 %v3400, 0.0
    %v3433 = vmax.f32 %v3401, 0.0
    %v3434 = vmax.f32 %v3402, 0.0
    %v3435 = vmax.f32 %v3403, 0.0
    %v3436 = vmax.f32 %v3404, 0.0
    %v3437 = vmax.f32 %v3405, 0.0
    %v3438 = vmax.f32 %v3406, 0.0
    %v3439 = vmax.f32 %v3407, 0.0
    %v3440 = vmax.f32 %v3408, 0.0
    %v3441 = vmax.f32 %v3409, 0.0
    %v3442 = vmax.f32 %v3410, 0.0
    %v3443 = vmax.f32 %v3411, 0.0
    %v3444 = vmax.f32 %v3412, 0.0
    %v3445 = vmax.f32 %v3413, 0.0
    %v3446 = vmax.f32 %v3414, 0.0
    %v3447 = vmax.f32 %v3415, 0.0
    %v3448 = vmax.f32 %v3416, 0.0
    %v3449 = vmax.f32 %v3417, 0.0
    %v3450 = vpack.c.bf16 %v3420, %v3418
    %v3451 = vpack.c.bf16 %v3421, %v3419
    %v3452 = vpack.c.bf16 %v3424, %v3422
    %v3453 = vpack.c.bf16 %v3425, %v3423
    %v3454 = vpack.c.bf16 %v3428, %v3426
    %v3455 = vpack.c.bf16 %v3429, %v3427
    %v3456 = vpack.c.bf16 %v3432, %v3430
    %v3457 = vpack.c.bf16 %v3433, %v3431
    %v3458 = vpack.c.bf16 %v3436, %v3434
    %v3459 = vpack.c.bf16 %v3437, %v3435
    %v3460 = vpack.c.bf16 %v3440, %v3438
    %v3461 = vpack.c.bf16 %v3441, %v3439
    %v3462 = vpack.c.bf16 %v3444, %v3442
    %v3463 = vpack.c.bf16 %v3445, %v3443
    %v3464 = vpack.c.bf16 %v3448, %v3446
    %v3465 = vpack.c.bf16 %v3449, %v3447
    %v3466 = vld [vmem:[%s51] sm:$0xf]
    %v3467 = vld [vmem:[%s51 + $0x4] sm:$0xf]
    %v3468 = vld [vmem:[%s51 + $0x8] sm:$0xf]
    %v3469 = vld [vmem:[%s51 + $0xc] sm:$0xf]
    %v3470 = vld [vmem:[%s51 + $0x10] sm:$0xf]
    %v3471 = vld [vmem:[%s51 + $0x14] sm:$0xf]
    %v3472 = vld [vmem:[%s51 + $0x18] sm:$0xf]
    %v3473 = vld [vmem:[%s51 + $0x1c] sm:$0xf]
    %v3474 = vld [vmem:[%s51 + $0x20] sm:$0xf]
    %v3475 = vld [vmem:[%s51 + $0x24] sm:$0xf]
    %v3476 = vld [vmem:[%s51 + $0x28] sm:$0xf]
    %v3477 = vld [vmem:[%s51 + $0x2c] sm:$0xf]
    %v3478 = vld [vmem:[%s51 + $0x30] sm:$0xf]
    %v3479 = vld [vmem:[%s51 + $0x34] sm:$0xf]
    %v3480 = vld [vmem:[%s51 + $0x38] sm:$0xf]
    %v3481 = vld [vmem:[%s51 + $0x3c] sm:$0xf]
    %v3482 = vld [vmem:[%s51 + $0x40] sm:$0xf]
    %v3483 = vld [vmem:[%s51 + $0x44] sm:$0xf]
    %v3484 = vld [vmem:[%s51 + $0x48] sm:$0xf]
    %v3485 = vld [vmem:[%s51 + $0x4c] sm:$0xf]
    %v3486 = vld [vmem:[%s51 + $0x50] sm:$0xf]
    %v3487 = vld [vmem:[%s51 + $0x54] sm:$0xf]
    %v3488 = vld [vmem:[%s51 + $0x58] sm:$0xf]
    %v3489 = vld [vmem:[%s51 + $0x5c] sm:$0xf]
    %v3490 = vld [vmem:[%s51 + $0x60] sm:$0xf]
    %v3491 = vld [vmem:[%s51 + $0x64] sm:$0xf]
    %v3492 = vld [vmem:[%s51 + $0x68] sm:$0xf]
    %v3493 = vld [vmem:[%s51 + $0x6c] sm:$0xf]
    %v3494 = vld [vmem:[%s51 + $0x70] sm:$0xf]
    %v3495 = vld [vmem:[%s51 + $0x74] sm:$0xf]
    %v3496 = vld [vmem:[%s51 + $0x78] sm:$0xf]
    %v3497 = vld [vmem:[%s51 + $0x7c] sm:$0xf]
    %v3498 = vld [vmem:[%s53] sm:$0x1]
    %v3500 = vlaneseq
    %v3501 = vshrl.u32 %v3500, 7
    %v3502 = vsub.s32 0, %v3501
    %v3503 = vrot.slane %v3498, %v3502
    %v3537 = vunpack.c.l.b16 %v3466
    %v3538 = vunpack.c.l.b16 %v3467
    %v3539 = vunpack.c.l.b16 %v3468
    %v3540 = vunpack.c.l.b16 %v3469
    %v3541 = vunpack.c.l.b16 %v3470
    %v3542 = vunpack.c.l.b16 %v3471
    %v3543 = vunpack.c.l.b16 %v3472
    %v3544 = vunpack.c.l.b16 %v3473
    %v3545 = vunpack.c.l.b16 %v3474
    %v3546 = vunpack.c.l.b16 %v3475
    %v3547 = vunpack.c.l.b16 %v3476
    %v3548 = vunpack.c.l.b16 %v3477
    %v3549 = vunpack.c.l.b16 %v3478
    %v3550 = vunpack.c.l.b16 %v3479
    %v3551 = vunpack.c.l.b16 %v3480
    %v3552 = vunpack.c.l.b16 %v3481
    %v3553 = vunpack.c.l.b16 %v3482
    %v3554 = vunpack.c.l.b16 %v3483
    %v3555 = vunpack.c.l.b16 %v3484
    %v3556 = vunpack.c.l.b16 %v3485
    %v3557 = vunpack.c.l.b16 %v3486
    %v3558 = vunpack.c.l.b16 %v3487
    %v3559 = vunpack.c.l.b16 %v3488
    %v3560 = vunpack.c.l.b16 %v3489
    %v3561 = vunpack.c.l.b16 %v3490
    %v3562 = vunpack.c.l.b16 %v3491
    %v3563 = vunpack.c.l.b16 %v3492
    %v3564 = vunpack.c.l.b16 %v3493
    %v3565 = vunpack.c.l.b16 %v3494
    %v3566 = vunpack.c.l.b16 %v3495
    %v3567 = vunpack.c.l.b16 %v3496
    %v3568 = vunpack.c.l.b16 %v3497
    %v3569 = vpack.c.b16 %v3538, %v3537
    %v3570 = vpack.c.b16 %v3540, %v3539
    %v3571 = vpack.c.b16 %v3542, %v3541
    %v3572 = vpack.c.b16 %v3544, %v3543
    %v3573 = vpack.c.b16 %v3546, %v3545
    %v3574 = vpack.c.b16 %v3548, %v3547
    %v3575 = vpack.c.b16 %v3550, %v3549
    %v3576 = vpack.c.b16 %v3552, %v3551
    %v3577 = vpack.c.b16 %v3554, %v3553
    %v3578 = vpack.c.b16 %v3556, %v3555
    %v3579 = vpack.c.b16 %v3558, %v3557
    %v3580 = vpack.c.b16 %v3560, %v3559
    %v3581 = vpack.c.b16 %v3562, %v3561
    %v3582 = vpack.c.b16 %v3564, %v3563
    %v3583 = vpack.c.b16 %v3566, %v3565
    %v3584 = vpack.c.b16 %v3568, %v3567
    %3601 = vmatprep.subr.bf16.mxu0 0
    %3602 = vmatpush1.bf16.msra.mxu0 %v3569
    %3603 = vmatprep.subr.bf16.mxu0 0
    %3604 = vmatpush1.bf16.msra.mxu0 %v3570
    %3605 = vmatprep.subr.bf16.mxu0 0
    %3606 = vmatpush1.bf16.msra.mxu0 %v3571
    %3607 = vmatprep.subr.bf16.mxu0 0
    %3608 = vmatpush1.bf16.msra.mxu0 %v3572
    %3609 = vmatprep.subr.bf16.mxu0 0
    %3610 = vmatpush1.bf16.msra.mxu0 %v3573
    %3611 = vmatprep.subr.bf16.mxu0 0
    %3612 = vmatpush1.bf16.msra.mxu0 %v3574
    %3613 = vmatprep.subr.bf16.mxu0 0
    %3614 = vmatpush1.bf16.msra.mxu0 %v3575
    %3615 = vmatprep.subr.bf16.mxu0 0
    %3616 = vmatpush1.bf16.msra.mxu0 %v3576
    %3617 = vmatprep.subr.bf16.mxu0 0
    %3618 = vmatpush1.bf16.msra.mxu0 %v3577
    %3619 = vmatprep.subr.bf16.mxu0 0
    %3620 = vmatpush1.bf16.msra.mxu0 %v3578
    %3621 = vmatprep.subr.bf16.mxu0 0
    %3622 = vmatpush1.bf16.msra.mxu0 %v3579
    %3623 = vmatprep.subr.bf16.mxu0 0
    %3624 = vmatpush1.bf16.msra.mxu0 %v3580
    %3625 = vmatprep.subr.bf16.mxu0 0
    %3626 = vmatpush1.bf16.msra.mxu0 %v3581
    %3627 = vmatprep.subr.bf16.mxu0 0
    %3628 = vmatpush1.bf16.msra.mxu0 %v3582
    %3629 = vmatprep.subr.bf16.mxu0 0
    %3630 = vmatpush1.bf16.msra.mxu0 %v3583
    %3631 = vmatprep.subr.bf16.mxu0 0
    %3632 = vmatpush1.bf16.msra.mxu0 %v3584
    %3633 = vmatprep.mubr.bf16.mxu0 %v3451
    %3634 = vmatmul.mubr.bf16.gmra.mrb[0].mxu0 %v3450
    %v3635 = vpop.f32.mrb[0].mxu0
    %v3636 = vadd.f32 %v3503, %v3635
    %v3637 = vpop.f32.mrb[0].mxu0
    %v3638 = vpop.f32.mrb[0].mxu0
    %v3639 = vadd.f32 %v3503, %v3638
    %v3640 = vpop.f32.mrb[0].mxu0
    %3641 = vmatprep.mubr.bf16.mxu0 %v3453
    %3642 = vmatmul.mubr.bf16.gmra.mrb[0].mxu0 %v3452
    %v3643 = vpop.f32.mrb[0].mxu0
    %v3644 = vadd.f32 %v3503, %v3643
    %v3645 = vpop.f32.mrb[0].mxu0
    %v3646 = vpop.f32.mrb[0].mxu0
    %v3647 = vadd.f32 %v3503, %v3646
    %v3648 = vpop.f32.mrb[0].mxu0
    %3649 = vmatprep.mubr.bf16.mxu0 %v3455
    %3650 = vmatmul.mubr.bf16.gmra.mrb[0].mxu0 %v3454
    %v3651 = vpop.f32.mrb[0].mxu0
    %v3652 = vadd.f32 %v3503, %v3651
    %v3653 = vpop.f32.mrb[0].mxu0
    %v3654 = vpop.f32.mrb[0].mxu0
    %v3655 = vadd.f32 %v3503, %v3654
    %v3656 = vpop.f32.mrb[0].mxu0
    %3657 = vmatprep.mubr.bf16.mxu0 %v3457
    %3658 = vmatmul.mubr.bf16.gmra.mrb[0].mxu0 %v3456
    %v3659 = vpop.f32.mrb[0].mxu0
    %v3660 = vadd.f32 %v3503, %v3659
    %v3661 = vpop.f32.mrb[0].mxu0
    %v3662 = vpop.f32.mrb[0].mxu0
    %v3663 = vadd.f32 %v3503, %v3662
    %v3664 = vpop.f32.mrb[0].mxu0
    %3665 = vmatprep.mubr.bf16.mxu0 %v3459
    %3666 = vmatmul.mubr.bf16.gmra.mrb[0].mxu0 %v3458
    %v3667 = vpop.f32.mrb[0].mxu0
    %v3668 = vadd.f32 %v3503, %v3667
    %v3669 = vpop.f32.mrb[0].mxu0
    %v3670 = vpop.f32.mrb[0].mxu0
    %v3671 = vadd.f32 %v3503, %v3670
    %v3672 = vpop.f32.mrb[0].mxu0
    %3673 = vmatprep.mubr.bf16.mxu0 %v3461
    %3674 = vmatmul.mubr.bf16.gmra.mrb[0].mxu0 %v3460
    %v3675 = vpop.f32.mrb[0].mxu0
    %v3676 = vadd.f32 %v3503, %v3675
    %v3677 = vpop.f32.mrb[0].mxu0
    %v3678 = vpop.f32.mrb[0].mxu0
    %v3679 = vadd.f32 %v3503, %v3678
    %v3680 = vpop.f32.mrb[0].mxu0
    %3681 = vmatprep.mubr.bf16.mxu0 %v3463
    %3682 = vmatmul.mubr.bf16.gmra.mrb[0].mxu0 %v3462
    %v3683 = vpop.f32.mrb[0].mxu0
    %v3684 = vadd.f32 %v3503, %v3683
    %v3685 = vpop.f32.mrb[0].mxu0
    %v3686 = vpop.f32.mrb[0].mxu0
    %v3687 = vadd.f32 %v3503, %v3686
    %v3688 = vpop.f32.mrb[0].mxu0
    %3689 = vmatprep.mubr.bf16.mxu0 %v3465
    %3690 = vmatmul.mubr.bf16.gmra.mrb[0].mxu0 %v3464
    %v3691 = vpop.f32.mrb[0].mxu0
    %v3692 = vadd.f32 %v3503, %v3691
    %v3693 = vpop.f32.mrb[0].mxu0
    %v3694 = vpop.f32.mrb[0].mxu0
    %v3695 = vadd.f32 %v3503, %v3694
    %v3696 = vpop.f32.mrb[0].mxu0
    %3697 = vdwg.mxu0
    %v3698 = vld [vmem:[%s55] sm:$0x1]
    %v3699 = vld [vmem:[%s57] sm:$0x1]
    %v3700 = vadd.f32 %v3636, %v3639
    %v3701 = vadd.f32 %v3700, %v3644
    %v3702 = vadd.f32 %v3701, %v3647
    %v3703 = vadd.f32 %v3702, %v3652
    %v3704 = vadd.f32 %v3703, %v3655
    %v3705 = vadd.f32 %v3704, %v3660
    %v3706 = vadd.f32 %v3705, %v3663
    %v3707 = vadd.f32 %v3706, %v3668
    %v3708 = vadd.f32 %v3707, %v3671
    %v3709 = vadd.f32 %v3708, %v3676
    %v3710 = vadd.f32 %v3709, %v3679
    %v3711 = vadd.f32 %v3710, %v3684
    %v3712 = vadd.f32 %v3711, %v3687
    %v3713 = vadd.f32 %v3712, %v3692
    %v3714 = vadd.f32 %v3713, %v3695
    %v3715 = vrot.slane %v3714, 4
    %v3716 = vadd.f32 %v3714, %v3715
    %v3717 = vrot.slane %v3716, 2
    %v3718 = vadd.f32 %v3716, %v3717
    %v3719 = vrot.slane %v3718, 1
    %v3720 = vadd.f32 %v3718, %v3719
    %v3721 = vmul.f32 %v3720, %v1178
    %v3722 = vsub.f32 %v3636, %v3721
    %v3723 = vsub.f32 %v3639, %v3721
    %v3724 = vsub.f32 %v3644, %v3721
    %v3725 = vsub.f32 %v3647, %v3721
    %v3726 = vsub.f32 %v3652, %v3721
    %v3727 = vsub.f32 %v3655, %v3721
    %v3728 = vsub.f32 %v3660, %v3721
    %v3729 = vsub.f32 %v3663, %v3721
    %v3730 = vsub.f32 %v3668, %v3721
    %v3731 = vsub.f32 %v3671, %v3721
    %v3732 = vsub.f32 %v3676, %v3721
    %v3733 = vsub.f32 %v3679, %v3721
    %v3734 = vsub.f32 %v3684, %v3721
    %v3735 = vsub.f32 %v3687, %v3721
    %v3736 = vsub.f32 %v3692, %v3721
    %v3737 = vsub.f32 %v3695, %v3721
    %v3738 = vmul.f32 %v3722, %v3722
    %v3739 = vmul.f32 %v3723, %v3723
    %v3740 = vmul.f32 %v3724, %v3724
    %v3741 = vmul.f32 %v3725, %v3725
    %v3742 = vmul.f32 %v3726, %v3726
    %v3743 = vmul.f32 %v3727, %v3727
    %v3744 = vmul.f32 %v3728, %v3728
    %v3745 = vmul.f32 %v3729, %v3729
    %v3746 = vmul.f32 %v3730, %v3730
    %v3747 = vmul.f32 %v3731, %v3731
    %v3748 = vmul.f32 %v3732, %v3732
    %v3749 = vmul.f32 %v3733, %v3733
    %v3750 = vmul.f32 %v3734, %v3734
    %v3751 = vmul.f32 %v3735, %v3735
    %v3752 = vmul.f32 %v3736, %v3736
    %v3753 = vmul.f32 %v3737, %v3737
    %v3754 = vadd.f32 %v3738, %v3739
    %v3755 = vadd.f32 %v3754, %v3740
    %v3756 = vadd.f32 %v3755, %v3741
    %v3757 = vadd.f32 %v3756, %v3742
    %v3758 = vadd.f32 %v3757, %v3743
    %v3759 = vadd.f32 %v3758, %v3744
    %v3760 = vadd.f32 %v3759, %v3745
    %v3761 = vadd.f32 %v3760, %v3746
    %v3762 = vadd.f32 %v3761, %v3747
    %v3763 = vadd.f32 %v3762, %v3748
    %v3764 = vadd.f32 %v3763, %v3749
    %v3765 = vadd.f32 %v3764, %v3750
    %v3766 = vadd.f32 %v3765, %v3751
    %v3767 = vadd.f32 %v3766, %v3752
    %v3768 = vadd.f32 %v3767, %v3753
    %v3769 = vrot.slane %v3768, 4
    %v3770 = vadd.f32 %v3768, %v3769
    %v3771 = vrot.slane %v3770, 2
    %v3772 = vadd.f32 %v3770, %v3771
    %v3773 = vrot.slane %v3772, 1
    %v3774 = vadd.f32 %v3772, %v3773
    %v3775 = vmul.f32 %v3774, %v1178
    %v3776 = vadd.f32 %v3775, 1e-05
    %v3777 = vrsqrt.pop %v3776
    %v3778 = vmul.f32 %v3722, %v3777
    %v3779 = vmul.f32 %v3723, %v3777
    %v3780 = vmul.f32 %v3724, %v3777
    %v3781 = vmul.f32 %v3725, %v3777
    %v3782 = vmul.f32 %v3726, %v3777
    %v3783 = vmul.f32 %v3727, %v3777
    %v3784 = vmul.f32 %v3728, %v3777
    %v3785 = vmul.f32 %v3729, %v3777
    %v3786 = vmul.f32 %v3730, %v3777
    %v3787 = vmul.f32 %v3731, %v3777
    %v3788 = vmul.f32 %v3732, %v3777
    %v3789 = vmul.f32 %v3733, %v3777
    %v3790 = vmul.f32 %v3734, %v3777
    %v3791 = vmul.f32 %v3735, %v3777
    %v3792 = vmul.f32 %v3736, %v3777
    %v3793 = vmul.f32 %v3737, %v3777
    %v3795 = vlaneseq
    %v3796 = vshrl.u32 %v3795, 7
    %v3797 = vsub.s32 0, %v3796
    %v3798 = vrot.slane %v3698, %v3797
    %v3800 = vmul.f32 %v3778, %v3798
    %v3801 = vmul.f32 %v3779, %v3798
    %v3802 = vmul.f32 %v3780, %v3798
    %v3803 = vmul.f32 %v3781, %v3798
    %v3804 = vmul.f32 %v3782, %v3798
    %v3805 = vmul.f32 %v3783, %v3798
    %v3806 = vmul.f32 %v3784, %v3798
    %v3807 = vmul.f32 %v3785, %v3798
    %v3808 = vmul.f32 %v3786, %v3798
    %v3809 = vmul.f32 %v3787, %v3798
    %v3810 = vmul.f32 %v3788, %v3798
    %v3811 = vmul.f32 %v3789, %v3798
    %v3812 = vmul.f32 %v3790, %v3798
    %v3813 = vmul.f32 %v3791, %v3798
    %v3814 = vmul.f32 %v3792, %v3798
    %v3815 = vmul.f32 %v3793, %v3798
    %v3817 = vlaneseq
    %v3818 = vshrl.u32 %v3817, 7
    %v3819 = vsub.s32 0, %v3818
    %v3820 = vrot.slane %v3699, %v3819
    %v3822 = vadd.f32 %v3800, %v3820
    %v3823 = vadd.f32 %v3801, %v3820
    %v3824 = vadd.f32 %v3802, %v3820
    %v3825 = vadd.f32 %v3803, %v3820
    %v3826 = vadd.f32 %v3804, %v3820
    %v3827 = vadd.f32 %v3805, %v3820
    %v3828 = vadd.f32 %v3806, %v3820
    %v3829 = vadd.f32 %v3807, %v3820
    %v3830 = vadd.f32 %v3808, %v3820
    %v3831 = vadd.f32 %v3809, %v3820
    %v3832 = vadd.f32 %v3810, %v3820
    %v3833 = vadd.f32 %v3811, %v3820
    %v3834 = vadd.f32 %v3812, %v3820
    %v3835 = vadd.f32 %v3813, %v3820
    %v3836 = vadd.f32 %v3814, %v3820
    %v3837 = vadd.f32 %v3815, %v3820
    %v3838 = vmax.f32 %v3822, 0.0
    %v3839 = vmax.f32 %v3823, 0.0
    %v3840 = vmax.f32 %v3824, 0.0
    %v3841 = vmax.f32 %v3825, 0.0
    %v3842 = vmax.f32 %v3826, 0.0
    %v3843 = vmax.f32 %v3827, 0.0
    %v3844 = vmax.f32 %v3828, 0.0
    %v3845 = vmax.f32 %v3829, 0.0
    %v3846 = vmax.f32 %v3830, 0.0
    %v3847 = vmax.f32 %v3831, 0.0
    %v3848 = vmax.f32 %v3832, 0.0
    %v3849 = vmax.f32 %v3833, 0.0
    %v3850 = vmax.f32 %v3834, 0.0
    %v3851 = vmax.f32 %v3835, 0.0
    %v3852 = vmax.f32 %v3836, 0.0
    %v3853 = vmax.f32 %v3837, 0.0
    %v3854 = vpack.c.bf16 %v3839, %v3838
    %v3855 = vpack.c.bf16 %v3841, %v3840
    %v3856 = vpack.c.bf16 %v3843, %v3842
    %v3857 = vpack.c.bf16 %v3845, %v3844
    %v3858 = vpack.c.bf16 %v3847, %v3846
    %v3859 = vpack.c.bf16 %v3849, %v3848
    %v3860 = vpack.c.bf16 %v3851, %v3850
    %v3861 = vpack.c.bf16 %v3853, %v3852
    %v3862 = vld [vmem:[%s59] sm:$0xf]
    %v3863 = vld [vmem:[%s59 + $0x4] sm:$0xf]
    %v3864 = vld [vmem:[%s59 + $0x8] sm:$0xf]
    %v3865 = vld [vmem:[%s59 + $0xc] sm:$0xf]
    %v3866 = vld [vmem:[%s59 + $0x10] sm:$0xf]
    %v3867 = vld [vmem:[%s59 + $0x14] sm:$0xf]
    %v3868 = vld [vmem:[%s59 + $0x18] sm:$0xf]
    %v3869 = vld [vmem:[%s59 + $0x1c] sm:$0xf]
    %v3870 = vld [vmem:[%s59 + $0x20] sm:$0xf]
    %v3871 = vld [vmem:[%s59 + $0x24] sm:$0xf]
    %v3872 = vld [vmem:[%s59 + $0x28] sm:$0xf]
    %v3873 = vld [vmem:[%s59 + $0x2c] sm:$0xf]
    %v3874 = vld [vmem:[%s59 + $0x30] sm:$0xf]
    %v3875 = vld [vmem:[%s59 + $0x34] sm:$0xf]
    %v3876 = vld [vmem:[%s59 + $0x38] sm:$0xf]
    %v3877 = vld [vmem:[%s59 + $0x3c] sm:$0xf]
    %v3878 = vld [vmem:[%s61] sm:$0x1]
    %v3880 = vlaneseq
    %v3881 = vshrl.u32 %v3880, 7
    %v3882 = vsub.s32 0, %v3881
    %v3883 = vrot.slane %v3878, %v3882
    %v3901 = vunpack.c.l.b16 %v3862
    %v3902 = vunpack.c.l.b16 %v3863
    %v3903 = vunpack.c.l.b16 %v3864
    %v3904 = vunpack.c.l.b16 %v3865
    %v3905 = vunpack.c.l.b16 %v3866
    %v3906 = vunpack.c.l.b16 %v3867
    %v3907 = vunpack.c.l.b16 %v3868
    %v3908 = vunpack.c.l.b16 %v3869
    %v3909 = vunpack.c.l.b16 %v3870
    %v3910 = vunpack.c.l.b16 %v3871
    %v3911 = vunpack.c.l.b16 %v3872
    %v3912 = vunpack.c.l.b16 %v3873
    %v3913 = vunpack.c.l.b16 %v3874
    %v3914 = vunpack.c.l.b16 %v3875
    %v3915 = vunpack.c.l.b16 %v3876
    %v3916 = vunpack.c.l.b16 %v3877
    %v3917 = vpack.c.b16 %v3902, %v3901
    %v3918 = vpack.c.b16 %v3904, %v3903
    %v3919 = vpack.c.b16 %v3906, %v3905
    %v3920 = vpack.c.b16 %v3908, %v3907
    %v3921 = vpack.c.b16 %v3910, %v3909
    %v3922 = vpack.c.b16 %v3912, %v3911
    %v3923 = vpack.c.b16 %v3914, %v3913
    %v3924 = vpack.c.b16 %v3916, %v3915
    %3933 = vmatprep.subr.bf16.mxu0 0
    %3934 = vmatpush1.bf16.msra.mxu0 %v3917
    %3935 = vmatprep.subr.bf16.mxu0 0
    %3936 = vmatpush1.bf16.msra.mxu0 %v3918
    %3937 = vmatprep.subr.bf16.mxu0 0
    %3938 = vmatpush1.bf16.msra.mxu0 %v3919
    %3939 = vmatprep.subr.bf16.mxu0 0
    %3940 = vmatpush1.bf16.msra.mxu0 %v3920
    %3941 = vmatprep.subr.bf16.mxu0 0
    %3942 = vmatpush1.bf16.msra.mxu0 %v3921
    %3943 = vmatprep.subr.bf16.mxu0 0
    %3944 = vmatpush1.bf16.msra.mxu0 %v3922
    %3945 = vmatprep.subr.bf16.mxu0 0
    %3946 = vmatpush1.bf16.msra.mxu0 %v3923
    %3947 = vmatprep.subr.bf16.mxu0 0
    %3948 = vmatpush1.bf16.msra.mxu0 %v3924
    %3949 = vmatprep.subr.bf16.mxu0 0
    %3950 = vmatpush1.bf16.msra.mxu0 0
    %3951 = vmatprep.subr.bf16.mxu0 0
    %3952 = vmatpush1.bf16.msra.mxu0 0
    %3953 = vmatprep.subr.bf16.mxu0 0
    %3954 = vmatpush1.bf16.msra.mxu0 0
    %3955 = vmatprep.subr.bf16.mxu0 0
    %3956 = vmatpush1.bf16.msra.mxu0 0
    %3957 = vmatprep.subr.bf16.mxu0 0
    %3958 = vmatpush1.bf16.msra.mxu0 0
    %3959 = vmatprep.subr.bf16.mxu0 0
    %3960 = vmatpush1.bf16.msra.mxu0 0
    %3961 = vmatprep.subr.bf16.mxu0 0
    %3962 = vmatpush1.bf16.msra.mxu0 0
    %3963 = vmatprep.subr.bf16.mxu0 0
    %3964 = vmatpush1.bf16.msra.mxu0 0
    %3965 = vmatprep.mubr.bf16.mxu0 0
    %3966 = vmatmul.mubr.bf16.gmra.mrb[0].mxu0 %v3854
    %v3967 = vpop.f32.mrb[0].mxu0
    %v3968 = vadd.f32 %v3883, %v3967
    %v3969 = vpop.f32.mrb[0].mxu0
    %v3970 = vpop.f32.mrb[0].mxu0
    %v3971 = vadd.f32 %v3883, %v3970
    %v3972 = vpop.f32.mrb[0].mxu0
    %3973 = vmatprep.mubr.bf16.mxu0 0
    %3974 = vmatmul.mubr.bf16.gmra.mrb[0].mxu0 %v3855
    %v3975 = vpop.f32.mrb[0].mxu0
    %v3976 = vadd.f32 %v3883, %v3975
    %v3977 = vpop.f32.mrb[0].mxu0
    %v3978 = vpop.f32.mrb[0].mxu0
    %v3979 = vadd.f32 %v3883, %v3978
    %v3980 = vpop.f32.mrb[0].mxu0
    %3981 = vmatprep.mubr.bf16.mxu0 0
    %3982 = vmatmul.mubr.bf16.gmra.mrb[0].mxu0 %v3856
    %v3983 = vpop.f32.mrb[0].mxu0
    %v3984 = vadd.f32 %v3883, %v3983
    %v3985 = vpop.f32.mrb[0].mxu0
    %v3986 = vpop.f32.mrb[0].mxu0
    %v3987 = vadd.f32 %v3883, %v3986
    %v3988 = vpop.f32.mrb[0].mxu0
    %3989 = vmatprep.mubr.bf16.mxu0 0
    %3990 = vmatmul.mubr.bf16.gmra.mrb[0].mxu0 %v3857
    %v3991 = vpop.f32.mrb[0].mxu0
    %v3992 = vadd.f32 %v3883, %v3991
    %v3993 = vpop.f32.mrb[0].mxu0
    %v3994 = vpop.f32.mrb[0].mxu0
    %v3995 = vadd.f32 %v3883, %v3994
    %v3996 = vpop.f32.mrb[0].mxu0
    %3997 = vmatprep.mubr.bf16.mxu0 0
    %3998 = vmatmul.mubr.bf16.gmra.mrb[0].mxu0 %v3858
    %v3999 = vpop.f32.mrb[0].mxu0
    %v4000 = vadd.f32 %v3883, %v3999
    %v4001 = vpop.f32.mrb[0].mxu0
    %v4002 = vpop.f32.mrb[0].mxu0
    %v4003 = vadd.f32 %v3883, %v4002
    %v4004 = vpop.f32.mrb[0].mxu0
    %4005 = vmatprep.mubr.bf16.mxu0 0
    %4006 = vmatmul.mubr.bf16.gmra.mrb[0].mxu0 %v3859
    %v4007 = vpop.f32.mrb[0].mxu0
    %v4008 = vadd.f32 %v3883, %v4007
    %v4009 = vpop.f32.mrb[0].mxu0
    %v4010 = vpop.f32.mrb[0].mxu0
    %v4011 = vadd.f32 %v3883, %v4010
    %v4012 = vpop.f32.mrb[0].mxu0
    %4013 = vmatprep.mubr.bf16.mxu0 0
    %4014 = vmatmul.mubr.bf16.gmra.mrb[0].mxu0 %v3860
    %v4015 = vpop.f32.mrb[0].mxu0
    %v4016 = vadd.f32 %v3883, %v4015
    %v4017 = vpop.f32.mrb[0].mxu0
    %v4018 = vpop.f32.mrb[0].mxu0
    %v4019 = vadd.f32 %v3883, %v4018
    %v4020 = vpop.f32.mrb[0].mxu0
    %4021 = vmatprep.mubr.bf16.mxu0 0
    %4022 = vmatmul.mubr.bf16.gmra.mrb[0].mxu0 %v3861
    %v4023 = vpop.f32.mrb[0].mxu0
    %v4024 = vadd.f32 %v3883, %v4023
    %v4025 = vpop.f32.mrb[0].mxu0
    %v4026 = vpop.f32.mrb[0].mxu0
    %v4027 = vadd.f32 %v3883, %v4026
    %v4028 = vpop.f32.mrb[0].mxu0
    %4029 = vdwg.mxu0
    %v4030 = vld [vmem:[%s63] sm:$0x1]
    %v4031 = vld [vmem:[%s65] sm:$0x1]
    %v4032 = vsel %vm2025, %v3968, 0.0
    %v4033 = vsel %vm2025, %v3971, 0.0
    %v4034 = vadd.f32 %v4032, %v4033
    %v4035 = vsel %vm2025, %v3976, 0.0
    %v4036 = vadd.f32 %v4034, %v4035
    %v4037 = vsel %vm2025, %v3979, 0.0
    %v4038 = vadd.f32 %v4036, %v4037
    %v4039 = vsel %vm2025, %v3984, 0.0
    %v4040 = vadd.f32 %v4038, %v4039
    %v4041 = vsel %vm2025, %v3987, 0.0
    %v4042 = vadd.f32 %v4040, %v4041
    %v4043 = vsel %vm2025, %v3992, 0.0
    %v4044 = vadd.f32 %v4042, %v4043
    %v4045 = vsel %vm2025, %v3995, 0.0
    %v4046 = vadd.f32 %v4044, %v4045
    %v4047 = vsel %vm2025, %v4000, 0.0
    %v4048 = vadd.f32 %v4046, %v4047
    %v4049 = vsel %vm2025, %v4003, 0.0
    %v4050 = vadd.f32 %v4048, %v4049
    %v4051 = vsel %vm2025, %v4008, 0.0
    %v4052 = vadd.f32 %v4050, %v4051
    %v4053 = vsel %vm2025, %v4011, 0.0
    %v4054 = vadd.f32 %v4052, %v4053
    %v4055 = vsel %vm2025, %v4016, 0.0
    %v4056 = vadd.f32 %v4054, %v4055
    %v4057 = vsel %vm2025, %v4019, 0.0
    %v4058 = vadd.f32 %v4056, %v4057
    %v4059 = vsel %vm2025, %v4024, 0.0
    %v4060 = vadd.f32 %v4058, %v4059
    %v4061 = vsel %vm2025, %v4027, 0.0
    %v4062 = vadd.f32 %v4060, %v4061
    %v4063 = vrot.slane %v4062, 4
    %v4064 = vadd.f32 %v4062, %v4063
    %v4065 = vrot.slane %v4064, 2
    %v4066 = vadd.f32 %v4064, %v4065
    %v4067 = vrot.slane %v4066, 1
    %v4068 = vadd.f32 %v4066, %v4067
    %v4069 = vmul.f32 %v4068, %v1178
    %v4070 = vsub.f32 %v3968, %v4069
    %v4071 = vsub.f32 %v3971, %v4069
    %v4072 = vsub.f32 %v3976, %v4069
    %v4073 = vsub.f32 %v3979, %v4069
    %v4074 = vsub.f32 %v3984, %v4069
    %v4075 = vsub.f32 %v3987, %v4069
    %v4076 = vsub.f32 %v3992, %v4069
    %v4077 = vsub.f32 %v3995, %v4069
    %v4078 = vsub.f32 %v4000, %v4069
    %v4079 = vsub.f32 %v4003, %v4069
    %v4080 = vsub.f32 %v4008, %v4069
    %v4081 = vsub.f32 %v4011, %v4069
    %v4082 = vsub.f32 %v4016, %v4069
    %v4083 = vsub.f32 %v4019, %v4069
    %v4084 = vsub.f32 %v4024, %v4069
    %v4085 = vsub.f32 %v4027, %v4069
    %v4086 = vmul.f32 %v4070, %v4070
    %v4087 = vmul.f32 %v4071, %v4071
    %v4088 = vmul.f32 %v4072, %v4072
    %v4089 = vmul.f32 %v4073, %v4073
    %v4090 = vmul.f32 %v4074, %v4074
    %v4091 = vmul.f32 %v4075, %v4075
    %v4092 = vmul.f32 %v4076, %v4076
    %v4093 = vmul.f32 %v4077, %v4077
    %v4094 = vmul.f32 %v4078, %v4078
    %v4095 = vmul.f32 %v4079, %v4079
    %v4096 = vmul.f32 %v4080, %v4080
    %v4097 = vmul.f32 %v4081, %v4081
    %v4098 = vmul.f32 %v4082, %v4082
    %v4099 = vmul.f32 %v4083, %v4083
    %v4100 = vmul.f32 %v4084, %v4084
    %v4101 = vmul.f32 %v4085, %v4085
    %v4102 = vsel %vm2025, %v4086, 0.0
    %v4103 = vsel %vm2025, %v4087, 0.0
    %v4104 = vadd.f32 %v4102, %v4103
    %v4105 = vsel %vm2025, %v4088, 0.0
    %v4106 = vadd.f32 %v4104, %v4105
    %v4107 = vsel %vm2025, %v4089, 0.0
    %v4108 = vadd.f32 %v4106, %v4107
    %v4109 = vsel %vm2025, %v4090, 0.0
    %v4110 = vadd.f32 %v4108, %v4109
    %v4111 = vsel %vm2025, %v4091, 0.0
    %v4112 = vadd.f32 %v4110, %v4111
    %v4113 = vsel %vm2025, %v4092, 0.0
    %v4114 = vadd.f32 %v4112, %v4113
    %v4115 = vsel %vm2025, %v4093, 0.0
    %v4116 = vadd.f32 %v4114, %v4115
    %v4117 = vsel %vm2025, %v4094, 0.0
    %v4118 = vadd.f32 %v4116, %v4117
    %v4119 = vsel %vm2025, %v4095, 0.0
    %v4120 = vadd.f32 %v4118, %v4119
    %v4121 = vsel %vm2025, %v4096, 0.0
    %v4122 = vadd.f32 %v4120, %v4121
    %v4123 = vsel %vm2025, %v4097, 0.0
    %v4124 = vadd.f32 %v4122, %v4123
    %v4125 = vsel %vm2025, %v4098, 0.0
    %v4126 = vadd.f32 %v4124, %v4125
    %v4127 = vsel %vm2025, %v4099, 0.0
    %v4128 = vadd.f32 %v4126, %v4127
    %v4129 = vsel %vm2025, %v4100, 0.0
    %v4130 = vadd.f32 %v4128, %v4129
    %v4131 = vsel %vm2025, %v4101, 0.0
    %v4132 = vadd.f32 %v4130, %v4131
    %v4133 = vrot.slane %v4132, 4
    %v4134 = vadd.f32 %v4132, %v4133
    %v4135 = vrot.slane %v4134, 2
    %v4136 = vadd.f32 %v4134, %v4135
    %v4137 = vrot.slane %v4136, 1
    %v4138 = vadd.f32 %v4136, %v4137
    %v4139 = vmul.f32 %v4138, %v1178
    %v4140 = vadd.f32 %v4139, 1e-05
    %v4141 = vrsqrt.pop %v4140
    %v4142 = vmul.f32 %v4070, %v4141
    %v4143 = vmul.f32 %v4071, %v4141
    %v4144 = vmul.f32 %v4072, %v4141
    %v4145 = vmul.f32 %v4073, %v4141
    %v4146 = vmul.f32 %v4074, %v4141
    %v4147 = vmul.f32 %v4075, %v4141
    %v4148 = vmul.f32 %v4076, %v4141
    %v4149 = vmul.f32 %v4077, %v4141
    %v4150 = vmul.f32 %v4078, %v4141
    %v4151 = vmul.f32 %v4079, %v4141
    %v4152 = vmul.f32 %v4080, %v4141
    %v4153 = vmul.f32 %v4081, %v4141
    %v4154 = vmul.f32 %v4082, %v4141
    %v4155 = vmul.f32 %v4083, %v4141
    %v4156 = vmul.f32 %v4084, %v4141
    %v4157 = vmul.f32 %v4085, %v4141
    %v4159 = vlaneseq
    %v4160 = vshrl.u32 %v4159, 7
    %v4161 = vsub.s32 0, %v4160
    %v4162 = vrot.slane %v4030, %v4161
    %v4164 = vmul.f32 %v4142, %v4162
    %v4165 = vmul.f32 %v4143, %v4162
    %v4166 = vmul.f32 %v4144, %v4162
    %v4167 = vmul.f32 %v4145, %v4162
    %v4168 = vmul.f32 %v4146, %v4162
    %v4169 = vmul.f32 %v4147, %v4162
    %v4170 = vmul.f32 %v4148, %v4162
    %v4171 = vmul.f32 %v4149, %v4162
    %v4172 = vmul.f32 %v4150, %v4162
    %v4173 = vmul.f32 %v4151, %v4162
    %v4174 = vmul.f32 %v4152, %v4162
    %v4175 = vmul.f32 %v4153, %v4162
    %v4176 = vmul.f32 %v4154, %v4162
    %v4177 = vmul.f32 %v4155, %v4162
    %v4178 = vmul.f32 %v4156, %v4162
    %v4179 = vmul.f32 %v4157, %v4162
    %v4181 = vlaneseq
    %v4182 = vshrl.u32 %v4181, 7
    %v4183 = vsub.s32 0, %v4182
    %v4184 = vrot.slane %v4031, %v4183
    %v4186 = vadd.f32 %v4164, %v4184
    %v4187 = vadd.f32 %v4165, %v4184
    %v4188 = vadd.f32 %v4166, %v4184
    %v4189 = vadd.f32 %v4167, %v4184
    %v4190 = vadd.f32 %v4168, %v4184
    %v4191 = vadd.f32 %v4169, %v4184
    %v4192 = vadd.f32 %v4170, %v4184
    %v4193 = vadd.f32 %v4171, %v4184
    %v4194 = vadd.f32 %v4172, %v4184
    %v4195 = vadd.f32 %v4173, %v4184
    %v4196 = vadd.f32 %v4174, %v4184
    %v4197 = vadd.f32 %v4175, %v4184
    %v4198 = vadd.f32 %v4176, %v4184
    %v4199 = vadd.f32 %v4177, %v4184
    %v4200 = vadd.f32 %v4178, %v4184
    %v4201 = vadd.f32 %v4179, %v4184
    %v4202 = vmax.f32 %v4186, 0.0
    %v4203 = vmax.f32 %v4187, 0.0
    %v4204 = vmax.f32 %v4188, 0.0
    %v4205 = vmax.f32 %v4189, 0.0
    %v4206 = vmax.f32 %v4190, 0.0
    %v4207 = vmax.f32 %v4191, 0.0
    %v4208 = vmax.f32 %v4192, 0.0
    %v4209 = vmax.f32 %v4193, 0.0
    %v4210 = vmax.f32 %v4194, 0.0
    %v4211 = vmax.f32 %v4195, 0.0
    %v4212 = vmax.f32 %v4196, 0.0
    %v4213 = vmax.f32 %v4197, 0.0
    %v4214 = vmax.f32 %v4198, 0.0
    %v4215 = vmax.f32 %v4199, 0.0
    %v4216 = vmax.f32 %v4200, 0.0
    %v4217 = vmax.f32 %v4201, 0.0
    %v4218 = vld [vmem:[%s67] sm:$0x1]
    %v4220 = vlaneseq
    %v4221 = vshrl.u32 %v4220, 7
    %v4222 = vsub.s32 0, %v4221
    %v4223 = vrot.slane %v4218, %v4222
    %v4225 = vmul.f32 %v4202, %v4223
    %v4226 = vmul.f32 %v4203, %v4223
    %v4227 = vmul.f32 %v4204, %v4223
    %v4228 = vmul.f32 %v4205, %v4223
    %v4229 = vmul.f32 %v4206, %v4223
    %v4230 = vmul.f32 %v4207, %v4223
    %v4231 = vmul.f32 %v4208, %v4223
    %v4232 = vmul.f32 %v4209, %v4223
    %v4233 = vmul.f32 %v4210, %v4223
    %v4234 = vmul.f32 %v4211, %v4223
    %v4235 = vmul.f32 %v4212, %v4223
    %v4236 = vmul.f32 %v4213, %v4223
    %v4237 = vmul.f32 %v4214, %v4223
    %v4238 = vmul.f32 %v4215, %v4223
    %v4239 = vmul.f32 %v4216, %v4223
    %v4240 = vmul.f32 %v4217, %v4223
    %v4241 = vsel %vm2025, %v4225, 0.0
    %4242 = vadd.xlane.f32.xlu0 %v4241
    %v4243 = vpop.xlane.xlu0 %4242
    %v4244 = vsel %vm2025, %v4226, 0.0
    %4245 = vadd.xlane.f32.xlu0 %v4244
    %v4246 = vpop.xlane.xlu0 %4245
    %v4247 = vsel %vm2025, %v4227, 0.0
    %4248 = vadd.xlane.f32.xlu0 %v4247
    %v4249 = vpop.xlane.xlu0 %4248
    %v4250 = vsel %vm2025, %v4228, 0.0
    %4251 = vadd.xlane.f32.xlu0 %v4250
    %v4252 = vpop.xlane.xlu0 %4251
    %v4253 = vsel %vm2025, %v4229, 0.0
    %4254 = vadd.xlane.f32.xlu0 %v4253
    %v4255 = vpop.xlane.xlu0 %4254
    %v4256 = vsel %vm2025, %v4230, 0.0
    %4257 = vadd.xlane.f32.xlu0 %v4256
    %v4258 = vpop.xlane.xlu0 %4257
    %v4259 = vsel %vm2025, %v4231, 0.0
    %4260 = vadd.xlane.f32.xlu0 %v4259
    %v4261 = vpop.xlane.xlu0 %4260
    %v4262 = vsel %vm2025, %v4232, 0.0
    %4263 = vadd.xlane.f32.xlu0 %v4262
    %v4264 = vpop.xlane.xlu0 %4263
    %v4265 = vsel %vm2025, %v4233, 0.0
    %4266 = vadd.xlane.f32.xlu0 %v4265
    %v4267 = vpop.xlane.xlu0 %4266
    %v4268 = vsel %vm2025, %v4234, 0.0
    %4269 = vadd.xlane.f32.xlu0 %v4268
    %v4270 = vpop.xlane.xlu0 %4269
    %v4271 = vsel %vm2025, %v4235, 0.0
    %4272 = vadd.xlane.f32.xlu0 %v4271
    %v4273 = vpop.xlane.xlu0 %4272
    %v4274 = vsel %vm2025, %v4236, 0.0
    %4275 = vadd.xlane.f32.xlu0 %v4274
    %v4276 = vpop.xlane.xlu0 %4275
    %v4277 = vsel %vm2025, %v4237, 0.0
    %4278 = vadd.xlane.f32.xlu0 %v4277
    %v4279 = vpop.xlane.xlu0 %4278
    %v4280 = vsel %vm2025, %v4238, 0.0
    %4281 = vadd.xlane.f32.xlu0 %v4280
    %v4282 = vpop.xlane.xlu0 %4281
    %v4283 = vsel %vm2025, %v4239, 0.0
    %4284 = vadd.xlane.f32.xlu0 %v4283
    %v4285 = vpop.xlane.xlu0 %4284
    %v4286 = vsel %vm2025, %v4240, 0.0
    %4287 = vadd.xlane.f32.xlu0 %v4286
    %v4288 = vpop.xlane.xlu0 %4287
    %v4289 = vld [vmem:[#allocation4] sm:$0x1]
    %v4291 = vlaneseq
    %v4292 = vshrl.u32 %v4291, 7
    %v4293 = vsub.s32 0, %v4292
    %v4294 = vrot.slane %v4289, %v4293
    %v4296 = vadd.f32 %v4243, %v4294
    %v4297 = vadd.f32 %v4246, %v4294
    %v4298 = vadd.f32 %v4249, %v4294
    %v4299 = vadd.f32 %v4252, %v4294
    %v4300 = vadd.f32 %v4255, %v4294
    %v4301 = vadd.f32 %v4258, %v4294
    %v4302 = vadd.f32 %v4261, %v4294
    %v4303 = vadd.f32 %v4264, %v4294
    %v4304 = vadd.f32 %v4267, %v4294
    %v4305 = vadd.f32 %v4270, %v4294
    %v4306 = vadd.f32 %v4273, %v4294
    %v4307 = vadd.f32 %v4276, %v4294
    %v4308 = vadd.f32 %v4279, %v4294
    %v4309 = vadd.f32 %v4282, %v4294
    %v4310 = vadd.f32 %v4285, %v4294
    %v4311 = vadd.f32 %v4288, %v4294
    %v4312 = vadd.f32 %v2290, %v4296
    %v4313 = vadd.f32 %v2291, %v4297
    %v4314 = vadd.f32 %v2292, %v4298
    %v4315 = vadd.f32 %v2293, %v4299
    %v4316 = vadd.f32 %v2294, %v4300
    %v4317 = vadd.f32 %v2295, %v4301
    %v4318 = vadd.f32 %v2296, %v4302
    %v4319 = vadd.f32 %v2297, %v4303
    %v4320 = vadd.f32 %v2298, %v4304
    %v4321 = vadd.f32 %v2299, %v4305
    %v4322 = vadd.f32 %v2300, %v4306
    %v4323 = vadd.f32 %v2301, %v4307
    %v4324 = vadd.f32 %v2302, %v4308
    %v4325 = vadd.f32 %v2303, %v4309
    %v4326 = vadd.f32 %v2304, %v4310
    %v4327 = vadd.f32 %v2305, %v4311
    %v4328 = vld [vmem:[%s9] sm:$0xff]
    %v4329 = vld [vmem:[%s9 + $0x8] sm:$0xff]
    %v4330 = vld [vmem:[%s7] sm:$0xff]
    %v4331 = vld [vmem:[%s7 + $0x8] sm:$0xff]
    %v4332 = vld [vmem:[%s7 + $0x10] sm:$0xff]
    %v4333 = vld [vmem:[%s7 + $0x18] sm:$0xff]
    %v4334 = vld [vmem:[%s7 + $0x20] sm:$0xff]
    %v4335 = vld [vmem:[%s7 + $0x28] sm:$0xff]
    %v4336 = vld [vmem:[%s7 + $0x30] sm:$0xff]
    %v4337 = vld [vmem:[%s7 + $0x38] sm:$0xff]
    %v4338 = vld [vmem:[%s7 + $0x40] sm:$0xff]
    %v4339 = vld [vmem:[%s7 + $0x48] sm:$0xff]
    %v4340 = vld [vmem:[%s7 + $0x50] sm:$0xff]
    %v4341 = vld [vmem:[%s7 + $0x58] sm:$0xff]
    %v4342 = vld [vmem:[%s7 + $0x60] sm:$0xff]
    %v4343 = vld [vmem:[%s7 + $0x68] sm:$0xff]
    %v4344 = vld [vmem:[%s7 + $0x70] sm:$0xff]
    %v4345 = vld [vmem:[%s7 + $0x78] sm:$0xff]
    %4347 = vset.pattern.permute.xlu0 0
    %4348 = vperm.xlu0 %4347, %v4312
    %v4349 = vpop.permute.xlu0 %4348
    %4352 = vset.pattern.permute.xlu0 0
    %4353 = vperm.xlu0 %4352, %v4313
    %v4354 = vpop.permute.xlu0 %4353
    %4357 = vset.pattern.permute.xlu0 0
    %4358 = vperm.xlu0 %4357, %v4314
    %v4359 = vpop.permute.xlu0 %4358
    %4362 = vset.pattern.permute.xlu0 0
    %4363 = vperm.xlu0 %4362, %v4315
    %v4364 = vpop.permute.xlu0 %4363
    %4367 = vset.pattern.permute.xlu0 0
    %4368 = vperm.xlu0 %4367, %v4316
    %v4369 = vpop.permute.xlu0 %4368
    %4372 = vset.pattern.permute.xlu0 0
    %4373 = vperm.xlu0 %4372, %v4317
    %v4374 = vpop.permute.xlu0 %4373
    %4377 = vset.pattern.permute.xlu0 0
    %4378 = vperm.xlu0 %4377, %v4318
    %v4379 = vpop.permute.xlu0 %4378
    %4382 = vset.pattern.permute.xlu0 0
    %4383 = vperm.xlu0 %4382, %v4319
    %v4384 = vpop.permute.xlu0 %4383
    %4387 = vset.pattern.permute.xlu0 0
    %4388 = vperm.xlu0 %4387, %v4320
    %v4389 = vpop.permute.xlu0 %4388
    %4392 = vset.pattern.permute.xlu0 0
    %4393 = vperm.xlu0 %4392, %v4321
    %v4394 = vpop.permute.xlu0 %4393
    %4397 = vset.pattern.permute.xlu0 0
    %4398 = vperm.xlu0 %4397, %v4322
    %v4399 = vpop.permute.xlu0 %4398
    %4402 = vset.pattern.permute.xlu0 0
    %4403 = vperm.xlu0 %4402, %v4323
    %v4404 = vpop.permute.xlu0 %4403
    %4407 = vset.pattern.permute.xlu0 0
    %4408 = vperm.xlu0 %4407, %v4324
    %v4409 = vpop.permute.xlu0 %4408
    %4412 = vset.pattern.permute.xlu0 0
    %4413 = vperm.xlu0 %4412, %v4325
    %v4414 = vpop.permute.xlu0 %4413
    %4417 = vset.pattern.permute.xlu0 0
    %4418 = vperm.xlu0 %4417, %v4326
    %v4419 = vpop.permute.xlu0 %4418
    %4422 = vset.pattern.permute.xlu0 0
    %4423 = vperm.xlu0 %4422, %v4327
    %v4424 = vpop.permute.xlu0 %4423
    %v4426 = vmul.f32 %v4349, %v4330
    %v4427 = vmul.f32 %v4354, %v4331
    %v4428 = vmul.f32 %v4359, %v4332
    %v4429 = vmul.f32 %v4364, %v4333
    %v4430 = vmul.f32 %v4369, %v4334
    %v4431 = vmul.f32 %v4374, %v4335
    %v4432 = vmul.f32 %v4379, %v4336
    %v4433 = vmul.f32 %v4384, %v4337
    %v4434 = vmul.f32 %v4389, %v4338
    %v4435 = vmul.f32 %v4394, %v4339
    %v4436 = vmul.f32 %v4399, %v4340
    %v4437 = vmul.f32 %v4404, %v4341
    %v4438 = vmul.f32 %v4409, %v4342
    %v4439 = vmul.f32 %v4414, %v4343
    %v4440 = vmul.f32 %v4419, %v4344
    %v4441 = vmul.f32 %v4424, %v4345
    %4442 = vmatprep.subr.mxu0 0.0
    %4443 = vmatpush1.msra.mxu0 %v4426
    %4444 = vmatprep.subr.mxu0 0.0
    %4445 = vmatpush1.msra.mxu0 %v4427
    %4446 = vmatprep.subr.mxu0 0.0
    %4447 = vmatpush1.msra.mxu0 %v4428
    %4448 = vmatprep.subr.mxu0 0.0
    %4449 = vmatpush1.msra.mxu0 %v4429
    %4450 = vmatprep.subr.mxu0 0.0
    %4451 = vmatpush1.msra.mxu0 %v4430
    %4452 = vmatprep.subr.mxu0 0.0
    %4453 = vmatpush1.msra.mxu0 %v4431
    %4454 = vmatprep.subr.mxu0 0.0
    %4455 = vmatpush1.msra.mxu0 %v4432
    %4456 = vmatprep.subr.mxu0 0.0
    %4457 = vmatpush1.msra.mxu0 %v4433
    %4458 = vmatprep.subr.mxu0 0.0
    %4459 = vmatpush1.msra.mxu0 %v4434
    %4460 = vmatprep.subr.mxu0 0.0
    %4461 = vmatpush1.msra.mxu0 %v4435
    %4462 = vmatprep.subr.mxu0 0.0
    %4463 = vmatpush1.msra.mxu0 %v4436
    %4464 = vmatprep.subr.mxu0 0.0
    %4465 = vmatpush1.msra.mxu0 %v4437
    %4466 = vmatprep.subr.mxu0 0.0
    %4467 = vmatpush1.msra.mxu0 %v4438
    %4468 = vmatprep.subr.mxu0 0.0
    %4469 = vmatpush1.msra.mxu0 %v4439
    %4470 = vmatprep.subr.mxu0 0.0
    %4471 = vmatpush1.msra.mxu0 %v4440
    %4472 = vmatprep.subr.mxu0 0.0
    %4473 = vmatpush1.msra.mxu0 %v4441
    %4474 = vmatprep.subr.mxu0 0.0
    %4475 = vmatpush1.msra.mxu0 0.0
    %4476 = vmatprep.subr.mxu0 0.0
    %4477 = vmatpush1.msra.mxu0 0.0
    %4478 = vmatprep.subr.mxu0 0.0
    %4479 = vmatpush1.msra.mxu0 0.0
    %4480 = vmatprep.subr.mxu0 0.0
    %4481 = vmatpush1.msra.mxu0 0.0
    %4482 = vmatprep.subr.mxu0 0.0
    %4483 = vmatpush1.msra.mxu0 0.0
    %4484 = vmatprep.subr.mxu0 0.0
    %4485 = vmatpush1.msra.mxu0 0.0
    %4486 = vmatprep.subr.mxu0 0.0
    %4487 = vmatpush1.msra.mxu0 0.0
    %4488 = vmatprep.subr.mxu0 0.0
    %4489 = vmatpush1.msra.mxu0 0.0
    %4490 = vmatprep.subr.mxu0 0.0
    %4491 = vmatpush1.msra.mxu0 0.0
    %4492 = vmatprep.subr.mxu0 0.0
    %4493 = vmatpush1.msra.mxu0 0.0
    %4494 = vmatprep.subr.mxu0 0.0
    %4495 = vmatpush1.msra.mxu0 0.0
    %4496 = vmatprep.subr.mxu0 0.0
    %4497 = vmatpush1.msra.mxu0 0.0
    %4498 = vmatprep.subr.mxu0 0.0
    %4499 = vmatpush1.msra.mxu0 0.0
    %4500 = vmatprep.subr.mxu0 0.0
    %4501 = vmatpush1.msra.mxu0 0.0
    %4502 = vmatprep.subr.mxu0 0.0
    %4503 = vmatpush1.msra.mxu0 0.0
    %4504 = vmatprep.subr.mxu0 0.0
    %4505 = vmatpush1.msra.mxu0 0.0
    %4506 = vmatprep.mubr.f32.mxu0 0.0
    %4507 = vmatmul.mubr.f32.gmra.mrb[0].mxu0 %v4328
    %v4508 = vpop.f32.mrb[0].mxu0
    %v4509 = vadd.f32 0.0, %v4508
    %v4510 = vpop.f32.mrb[0].mxu0
    %4511 = vmatprep.mubr.f32.mxu0 0.0
    %4512 = vmatmul.mubr.f32.gmra.mrb[0].mxu0 %v4329
    %v4513 = vpop.f32.mrb[0].mxu0
    %v4514 = vadd.f32 0.0, %v4513
    %v4515 = vpop.f32.mrb[0].mxu0
    %4516 = vdwg.mxu0
    %s4517 = sld [smem:[#allocation5]]
    %v4518 = vstv %s4517
    %vm4519 = vcmask 72704
    %4520 = vst.msk [vmem:[#allocation2] sm:$0xff] %vm4519, %v4518
    %vm4521 = vcmask 65536
    %4522 = vst.msk [vmem:[#allocation2 + $0x8] sm:$0x1] %vm4521, %v4518
    %4523 = vst.msk [vmem:[#allocation2 + $0x10] sm:$0xff] %vm4519, %v4518
    %4524 = vst.msk [vmem:[#allocation2 + $0x18] sm:$0x1] %vm4521, %v4518
    %vm4525 = vcmask 64512
    %4526 = vst.msk [vmem:[#allocation2] sm:$0xff] %vm4525, %v4509
    %s4527 = scalar_lea.vmem [#allocation2], 16
    %4528 = vst.msk [vmem:[%s4527] sm:$0xff] %vm4525, %v4514
    %v4529 = vld [vmem:[#allocation2] sm:$0xff]
    %v4530 = vld [vmem:[#allocation2 + $0x8] sm:$0x1]
    %v4531 = vld [vmem:[#allocation2 + $0x10] sm:$0xff]
    %v4532 = vld [vmem:[#allocation2 + $0x18] sm:$0x1]
    %v4533 = vlaneseq
    %v4534 = vand.u32 %v4533, 127
    %vm4535 = vcmp.lt.s32.totalorder %v4534, 8
    %v4536 = vsel %vm4535, -2.7725887, -0.6931472
    %v4537 = vadd.f32 %v4529, 0.0
    %v4538 = vadd.f32 %v4530, 0.0
    %v4539 = vadd.f32 %v4531, 0.0
    %v4540 = vadd.f32 %v4532, 0.0
    %v4541 = vsel %vm4519, %v4537, -inf
    %4542 = vmax.xlane.f32.xlu0 %v4541
    %v4543 = vpop.xlane.xlu0 %4542
    %v4544 = vsel %vm4521, %v4538, -inf
    %4545 = vmax.xlane.f32.xlu0 %v4544
    %v4546 = vpop.xlane.xlu0 %4545
    %v4547 = vsel %vm4519, %v4539, -inf
    %4548 = vmax.xlane.f32.xlu0 %v4547
    %v4549 = vpop.xlane.xlu0 %4548
    %v4550 = vsel %vm4521, %v4540, -inf
    %4551 = vmax.xlane.f32.xlu0 %v4550
    %v4552 = vpop.xlane.xlu0 %4551
    %v4553 = vsub.f32 %v4537, %v4543
    %v4554 = vsub.f32 %v4538, %v4546
    %v4555 = vsub.f32 %v4539, %v4549
    %v4556 = vsub.f32 %v4540, %v4552
    %v4557 = vmul.f32 %v4553, 1.442695
    %v4558 = vpow.pop %v4557
    %v4559 = vmul.f32 %v4554, 1.442695
    %v4560 = vpow.pop %v4559
    %v4561 = vmul.f32 %v4555, 1.442695
    %v4562 = vpow.pop %v4561
    %v4563 = vmul.f32 %v4556, 1.442695
    %v4564 = vpow.pop %v4563
    %v4565 = vsel %vm4519, %v4558, 0.0
    %4566 = vadd.xlane.f32.xlu0 %v4565
    %v4567 = vpop.xlane.xlu0 %4566
    %v4568 = vsel %vm4521, %v4560, 0.0
    %4569 = vadd.xlane.f32.xlu0 %v4568
    %v4570 = vpop.xlane.xlu0 %4569
    %v4571 = vsel %vm4519, %v4562, 0.0
    %4572 = vadd.xlane.f32.xlu0 %v4571
    %v4573 = vpop.xlane.xlu0 %4572
    %v4574 = vsel %vm4521, %v4564, 0.0
    %4575 = vadd.xlane.f32.xlu0 %v4574
    %v4576 = vpop.xlane.xlu0 %4575
    %v4577 = vlog2.pop %v4567
    %v4578 = vmul.f32 %v4577, 0.6931472
    %v4579 = vlog2.pop %v4570
    %v4580 = vmul.f32 %v4579, 0.6931472
    %v4581 = vlog2.pop %v4573
    %v4582 = vmul.f32 %v4581, 0.6931472
    %v4583 = vlog2.pop %v4576
    %v4584 = vmul.f32 %v4583, 0.6931472
    %v4585 = vadd.f32 %v4578, %v4543
    %v4586 = vadd.f32 %v4580, %v4546
    %v4587 = vadd.f32 %v4582, %v4549
    %v4588 = vadd.f32 %v4584, %v4552
    %v4593 = vlaneseq
    %v4594 = vshrl.u32 %v4593, 7
    %v4595 = vsub.s32 %v4534, %v4594
    %v4596 = vrot.slane %v4585, %v4595
    %v4597 = vadd.s32 %v4534, 4294967288
    %v4598 = vlaneseq
    %v4599 = vshrl.u32 %v4598, 7
    %v4600 = vsub.s32 %v4597, %v4599
    %v4601 = vrot.slane %v4586, %v4600
    %vm4602 = vcmask 130112
    %v4603 = vsel %vm4602, %v4601, %v4596
    %v4604 = vlaneseq
    %v4605 = vshrl.u32 %v4604, 7
    %v4606 = vsub.s32 %v4534, %v4605
    %v4607 = vrot.slane %v4587, %v4606
    %v4608 = vlaneseq
    %v4609 = vshrl.u32 %v4608, 7
    %v4610 = vsub.s32 %v4597, %v4609
    %v4611 = vrot.slane %v4588, %v4610
    %v4612 = vsel %vm4602, %v4611, %v4607
    %vm4613 = vcmask 1041409
    %v4614 = vsel %vm4613, %v4612, %v4603
    %v4616 = vsub.f32 %v4536, %v4614
    %v4617 = vlaneseq
    %v4618 = vshrl.u32 %v4617, 7
    %v4619 = vsub.s32 0, %v4618
    %v4620 = vrot.slane %v4616, %v4619
    %4622 = vbcast.lane.b32.xlu0 %v4620, 256
    %v4623 = vpop.permute.xlu0 %4622
    %s4625 = sor.u32 256, 8
    %4626 = vbcast.lane.b32.xlu0 %v4620, %s4625
    %v4627 = vpop.permute.xlu0 %4626
    %v4628 = vlaneseq
    %v4629 = vshrl.u32 %v4628, 7
    %v4630 = vsub.s32 1, %v4629
    %v4631 = vrot.slane %v4616, %v4630
    %4633 = vbcast.lane.b32.xlu0 %v4631, 256
    %v4634 = vpop.permute.xlu0 %4633
    %s4636 = sor.u32 256, 8
    %4637 = vbcast.lane.b32.xlu0 %v4631, %s4636
    %v4638 = vpop.permute.xlu0 %4637
    %v4639 = vadd.f32 %v4529, %v4623
    %v4640 = vadd.f32 %v4530, %v4627
    %v4641 = vadd.f32 %v4531, %v4634
    %v4642 = vadd.f32 %v4532, %v4638
    %v4643 = vsel %vm4519, %v4639, -inf
    %v4644 = vsel %vm4521, %v4640, -inf
    %v4645 = vmax.f32 %v4643, %v4644
    %v4646 = vrot.slane %v4645, 4
    %v4647 = vmax.f32 %v4645, %v4646
    %v4648 = vrot.slane %v4647, 2
    %v4649 = vmax.f32 %v4647, %v4648
    %v4650 = vrot.slane %v4649, 1
    %v4651 = vmax.f32 %v4649, %v4650
    %v4652 = vsel %vm4519, %v4641, -inf
    %v4653 = vsel %vm4521, %v4642, -inf
    %v4654 = vmax.f32 %v4652, %v4653
    %v4655 = vrot.slane %v4654, 4
    %v4656 = vmax.f32 %v4654, %v4655
    %v4657 = vrot.slane %v4656, 2
    %v4658 = vmax.f32 %v4656, %v4657
    %v4659 = vrot.slane %v4658, 1
    %v4660 = vmax.f32 %v4658, %v4659
    %v4661 = vsub.f32 %v4639, %v4651
    %v4662 = vsub.f32 %v4640, %v4651
    %v4663 = vsub.f32 %v4641, %v4660
    %v4664 = vsub.f32 %v4642, %v4660
    %v4665 = vmul.f32 %v4661, 1.442695
    %v4666 = vpow.pop %v4665
    %v4667 = vmul.f32 %v4662, 1.442695
    %v4668 = vpow.pop %v4667
    %v4669 = vmul.f32 %v4663, 1.442695
    %v4670 = vpow.pop %v4669
    %v4671 = vmul.f32 %v4664, 1.442695
    %v4672 = vpow.pop %v4671
    %v4673 = vsel %vm4519, %v4666, 0.0
    %v4674 = vsel %vm4521, %v4668, 0.0
    %v4675 = vadd.f32 %v4673, %v4674
    %v4676 = vrot.slane %v4675, 4
    %v4677 = vadd.f32 %v4675, %v4676
    %v4678 = vrot.slane %v4677, 2
    %v4679 = vadd.f32 %v4677, %v4678
    %v4680 = vrot.slane %v4679, 1
    %v4681 = vadd.f32 %v4679, %v4680
    %v4682 = vsel %vm4519, %v4670, 0.0
    %v4683 = vsel %vm4521, %v4672, 0.0
    %v4684 = vadd.f32 %v4682, %v4683
    %v4685 = vrot.slane %v4684, 4
    %v4686 = vadd.f32 %v4684, %v4685
    %v4687 = vrot.slane %v4686, 2
    %v4688 = vadd.f32 %v4686, %v4687
    %v4689 = vrot.slane %v4688, 1
    %v4690 = vadd.f32 %v4688, %v4689
    %v4691 = vlog2.pop %v4681
    %v4692 = vmul.f32 %v4691, 0.6931472
    %v4693 = vlog2.pop %v4690
    %v4694 = vmul.f32 %v4693, 0.6931472
    %v4695 = vadd.f32 %v4692, %v4651
    %v4696 = vadd.f32 %v4694, %v4660
    %v4699 = vsel %vm4613, %v4696, %v4695
    %v4701 = vsub.f32 %v4536, %v4699
    %v4704 = vunpack.c.l.s4 1966171168
    %v4705 = vunpack.c.0.s8 %v4704
    %v4706 = vlaneseq
    %v4707 = vshrl.u32 %v4706, 7
    %v4708 = vsub.s32 %v4705, %v4707
    %v4709 = vrot.slane %v4701, %v4708
    %v4710 = vcombine.high %v4709, %v4709
    %v4712 = vunpack.c.l.s4 1966171168
    %v4713 = vunpack.c.0.s8 %v4712
    %v4714 = vlaneseq
    %v4715 = vshrl.u32 %v4714, 7
    %v4716 = vsub.s32 %v4713, %v4715
    %v4717 = vrot.slane %v4709, %v4716
    %v4719 = vunpack.c.l.s4 1966171168
    %v4720 = vunpack.c.0.s8 %v4719
    %v4721 = vlaneseq
    %v4722 = vshrl.u32 %v4721, 7
    %v4723 = vsub.s32 %v4720, %v4722
    %v4724 = vrot.slane %v4710, %v4723
    %v4725 = vlaneseq
    %v4726 = vshrl.u32 %v4725, 7
    %v4727 = vsub.s32 0, %v4726
    %v4728 = vrot.slane %v4717, %v4727
    %v4729 = vlaneseq
    %v4730 = vshrl.u32 %v4729, 7
    %v4731 = vsub.s32 0, %v4730
    %v4732 = vrot.slane %v4724, %v4731
    %v4735 = vadd.f32 %v4529, %v4728
    %v4736 = vadd.f32 %v4530, %v4728
    %v4737 = vadd.f32 %v4531, %v4732
    %v4738 = vadd.f32 %v4532, %v4732
    %v4739 = vsel %vm4519, %v4735, -inf
    %4740 = vmax.xlane.f32.xlu0 %v4739
    %v4741 = vpop.xlane.xlu0 %4740
    %v4742 = vsel %vm4521, %v4736, -inf
    %4743 = vmax.xlane.f32.xlu0 %v4742
    %v4744 = vpop.xlane.xlu0 %4743
    %v4745 = vsel %vm4519, %v4737, -inf
    %4746 = vmax.xlane.f32.xlu0 %v4745
    %v4747 = vpop.xlane.xlu0 %4746
    %v4748 = vsel %vm4521, %v4738, -inf
    %4749 = vmax.xlane.f32.xlu0 %v4748
    %v4750 = vpop.xlane.xlu0 %4749
    %v4751 = vsub.f32 %v4735, %v4741
    %v4752 = vsub.f32 %v4736, %v4744
    %v4753 = vsub.f32 %v4737, %v4747
    %v4754 = vsub.f32 %v4738, %v4750
    %v4755 = vmul.f32 %v4751, 1.442695
    %v4756 = vpow.pop %v4755
    %v4757 = vmul.f32 %v4752, 1.442695
    %v4758 = vpow.pop %v4757
    %v4759 = vmul.f32 %v4753, 1.442695
    %v4760 = vpow.pop %v4759
    %v4761 = vmul.f32 %v4754, 1.442695
    %v4762 = vpow.pop %v4761
    %v4763 = vsel %vm4519, %v4756, 0.0
    %4764 = vadd.xlane.f32.xlu0 %v4763
    %v4765 = vpop.xlane.xlu0 %4764
    %v4766 = vsel %vm4521, %v4758, 0.0
    %4767 = vadd.xlane.f32.xlu0 %v4766
    %v4768 = vpop.xlane.xlu0 %4767
    %v4769 = vsel %vm4519, %v4760, 0.0
    %4770 = vadd.xlane.f32.xlu0 %v4769
    %v4771 = vpop.xlane.xlu0 %4770
    %v4772 = vsel %vm4521, %v4762, 0.0
    %4773 = vadd.xlane.f32.xlu0 %v4772
    %v4774 = vpop.xlane.xlu0 %4773
    %v4775 = vlog2.pop %v4765
    %v4776 = vmul.f32 %v4775, 0.6931472
    %v4777 = vlog2.pop %v4768
    %v4778 = vmul.f32 %v4777, 0.6931472
    %v4779 = vlog2.pop %v4771
    %v4780 = vmul.f32 %v4779, 0.6931472
    %v4781 = vlog2.pop %v4774
    %v4782 = vmul.f32 %v4781, 0.6931472
    %v4783 = vadd.f32 %v4776, %v4741
    %v4784 = vadd.f32 %v4778, %v4744
    %v4785 = vadd.f32 %v4780, %v4747
    %v4786 = vadd.f32 %v4782, %v4750
    %v4791 = vlaneseq
    %v4792 = vshrl.u32 %v4791, 7
    %v4793 = vsub.s32 %v4534, %v4792
    %v4794 = vrot.slane %v4783, %v4793
    %v4795 = vlaneseq
    %v4796 = vshrl.u32 %v4795, 7
    %v4797 = vsub.s32 %v4597, %v4796
    %v4798 = vrot.slane %v4784, %v4797
    %v4799 = vsel %vm4602, %v4798, %v4794
    %v4800 = vlaneseq
    %v4801 = vshrl.u32 %v4800, 7
    %v4802 = vsub.s32 %v4534, %v4801
    %v4803 = vrot.slane %v4785, %v4802
    %v4804 = vlaneseq
    %v4805 = vshrl.u32 %v4804, 7
    %v4806 = vsub.s32 %v4597, %v4805
    %v4807 = vrot.slane %v4786, %v4806
    %v4808 = vsel %vm4602, %v4807, %v4803
    %v4809 = vsel %vm4613, %v4808, %v4799
    %v4811 = vsub.f32 %v4536, %v4809
    %v4812 = vlaneseq
    %v4813 = vshrl.u32 %v4812, 7
    %v4814 = vsub.s32 0, %v4813
    %v4815 = vrot.slane %v4811, %v4814
    %4817 = vbcast.lane.b32.xlu0 %v4815, 256
    %v4818 = vpop.permute.xlu0 %4817
    %s4820 = sor.u32 256, 8
    %4821 = vbcast.lane.b32.xlu0 %v4815, %s4820
    %v4822 = vpop.permute.xlu0 %4821
    %v4823 = vlaneseq
    %v4824 = vshrl.u32 %v4823, 7
    %v4825 = vsub.s32 1, %v4824
    %v4826 = vrot.slane %v4811, %v4825
    %4828 = vbcast.lane.b32.xlu0 %v4826, 256
    %v4829 = vpop.permute.xlu0 %4828
    %s4831 = sor.u32 256, 8
    %4832 = vbcast.lane.b32.xlu0 %v4826, %s4831
    %v4833 = vpop.permute.xlu0 %4832
    %v4834 = vadd.f32 %v4529, %v4818
    %v4835 = vadd.f32 %v4530, %v4822
    %v4836 = vadd.f32 %v4531, %v4829
    %v4837 = vadd.f32 %v4532, %v4833
    %v4838 = vsel %vm4519, %v4834, -inf
    %v4839 = vsel %vm4521, %v4835, -inf
    %v4840 = vmax.f32 %v4838, %v4839
    %v4841 = vrot.slane %v4840, 4
    %v4842 = vmax.f32 %v4840, %v4841
    %v4843 = vrot.slane %v4842, 2
    %v4844 = vmax.f32 %v4842, %v4843
    %v4845 = vrot.slane %v4844, 1
    %v4846 = vmax.f32 %v4844, %v4845
    %v4847 = vsel %vm4519, %v4836, -inf
    %v4848 = vsel %vm4521, %v4837, -inf
    %v4849 = vmax.f32 %v4847, %v4848
    %v4850 = vrot.slane %v4849, 4
    %v4851 = vmax.f32 %v4849, %v4850
    %v4852 = vrot.slane %v4851, 2
    %v4853 = vmax.f32 %v4851, %v4852
    %v4854 = vrot.slane %v4853, 1
    %v4855 = vmax.f32 %v4853, %v4854
    %v4856 = vsub.f32 %v4834, %v4846
    %v4857 = vsub.f32 %v4835, %v4846
    %v4858 = vsub.f32 %v4836, %v4855
    %v4859 = vsub.f32 %v4837, %v4855
    %v4860 = vmul.f32 %v4856, 1.442695
    %v4861 = vpow.pop %v4860
    %v4862 = vmul.f32 %v4857, 1.442695
    %v4863 = vpow.pop %v4862
    %v4864 = vmul.f32 %v4858, 1.442695
    %v4865 = vpow.pop %v4864
    %v4866 = vmul.f32 %v4859, 1.442695
    %v4867 = vpow.pop %v4866
    %v4868 = vsel %vm4519, %v4861, 0.0
    %v4869 = vsel %vm4521, %v4863, 0.0
    %v4870 = vadd.f32 %v4868, %v4869
    %v4871 = vrot.slane %v4870, 4
    %v4872 = vadd.f32 %v4870, %v4871
    %v4873 = vrot.slane %v4872, 2
    %v4874 = vadd.f32 %v4872, %v4873
    %v4875 = vrot.slane %v4874, 1
    %v4876 = vadd.f32 %v4874, %v4875
    %v4877 = vsel %vm4519, %v4865, 0.0
    %v4878 = vsel %vm4521, %v4867, 0.0
    %v4879 = vadd.f32 %v4877, %v4878
    %v4880 = vrot.slane %v4879, 4
    %v4881 = vadd.f32 %v4879, %v4880
    %v4882 = vrot.slane %v4881, 2
    %v4883 = vadd.f32 %v4881, %v4882
    %v4884 = vrot.slane %v4883, 1
    %v4885 = vadd.f32 %v4883, %v4884
    %v4886 = vlog2.pop %v4876
    %v4887 = vmul.f32 %v4886, 0.6931472
    %v4888 = vlog2.pop %v4885
    %v4889 = vmul.f32 %v4888, 0.6931472
    %v4890 = vadd.f32 %v4887, %v4846
    %v4891 = vadd.f32 %v4889, %v4855
    %v4894 = vsel %vm4613, %v4891, %v4890
    %v4896 = vsub.f32 %v4536, %v4894
    %v4899 = vunpack.c.l.s4 1966171168
    %v4900 = vunpack.c.0.s8 %v4899
    %v4901 = vlaneseq
    %v4902 = vshrl.u32 %v4901, 7
    %v4903 = vsub.s32 %v4900, %v4902
    %v4904 = vrot.slane %v4896, %v4903
    %v4905 = vcombine.high %v4904, %v4904
    %v4907 = vunpack.c.l.s4 1966171168
    %v4908 = vunpack.c.0.s8 %v4907
    %v4909 = vlaneseq
    %v4910 = vshrl.u32 %v4909, 7
    %v4911 = vsub.s32 %v4908, %v4910
    %v4912 = vrot.slane %v4904, %v4911
    %v4914 = vunpack.c.l.s4 1966171168
    %v4915 = vunpack.c.0.s8 %v4914
    %v4916 = vlaneseq
    %v4917 = vshrl.u32 %v4916, 7
    %v4918 = vsub.s32 %v4915, %v4917
    %v4919 = vrot.slane %v4905, %v4918
    %v4920 = vlaneseq
    %v4921 = vshrl.u32 %v4920, 7
    %v4922 = vsub.s32 0, %v4921
    %v4923 = vrot.slane %v4912, %v4922
    %v4924 = vlaneseq
    %v4925 = vshrl.u32 %v4924, 7
    %v4926 = vsub.s32 0, %v4925
    %v4927 = vrot.slane %v4919, %v4926
    %v4930 = vadd.f32 %v4529, %v4923
    %v4931 = vadd.f32 %v4530, %v4923
    %v4932 = vadd.f32 %v4531, %v4927
    %v4933 = vadd.f32 %v4532, %v4927
    %v4934 = vsel %vm4519, %v4930, -inf
    %4935 = vmax.xlane.f32.xlu0 %v4934
    %v4936 = vpop.xlane.xlu0 %4935
    %v4937 = vsel %vm4521, %v4931, -inf
    %4938 = vmax.xlane.f32.xlu0 %v4937
    %v4939 = vpop.xlane.xlu0 %4938
    %v4940 = vsel %vm4519, %v4932, -inf
    %4941 = vmax.xlane.f32.xlu0 %v4940
    %v4942 = vpop.xlane.xlu0 %4941
    %v4943 = vsel %vm4521, %v4933, -inf
    %4944 = vmax.xlane.f32.xlu0 %v4943
    %v4945 = vpop.xlane.xlu0 %4944
    %v4946 = vsub.f32 %v4930, %v4936
    %v4947 = vsub.f32 %v4931, %v4939
    %v4948 = vsub.f32 %v4932, %v4942
    %v4949 = vsub.f32 %v4933, %v4945
    %v4950 = vmul.f32 %v4946, 1.442695
    %v4951 = vpow.pop %v4950
    %v4952 = vmul.f32 %v4947, 1.442695
    %v4953 = vpow.pop %v4952
    %v4954 = vmul.f32 %v4948, 1.442695
    %v4955 = vpow.pop %v4954
    %v4956 = vmul.f32 %v4949, 1.442695
    %v4957 = vpow.pop %v4956
    %v4958 = vsel %vm4519, %v4951, 0.0
    %4959 = vadd.xlane.f32.xlu0 %v4958
    %v4960 = vpop.xlane.xlu0 %4959
    %v4961 = vsel %vm4521, %v4953, 0.0
    %4962 = vadd.xlane.f32.xlu0 %v4961
    %v4963 = vpop.xlane.xlu0 %4962
    %v4964 = vsel %vm4519, %v4955, 0.0
    %4965 = vadd.xlane.f32.xlu0 %v4964
    %v4966 = vpop.xlane.xlu0 %4965
    %v4967 = vsel %vm4521, %v4957, 0.0
    %4968 = vadd.xlane.f32.xlu0 %v4967
    %v4969 = vpop.xlane.xlu0 %4968
    %v4970 = vlog2.pop %v4960
    %v4971 = vmul.f32 %v4970, 0.6931472
    %v4972 = vlog2.pop %v4963
    %v4973 = vmul.f32 %v4972, 0.6931472
    %v4974 = vlog2.pop %v4966
    %v4975 = vmul.f32 %v4974, 0.6931472
    %v4976 = vlog2.pop %v4969
    %v4977 = vmul.f32 %v4976, 0.6931472
    %v4978 = vadd.f32 %v4971, %v4936
    %v4979 = vadd.f32 %v4973, %v4939
    %v4980 = vadd.f32 %v4975, %v4942
    %v4981 = vadd.f32 %v4977, %v4945
    %v4986 = vlaneseq
    %v4987 = vshrl.u32 %v4986, 7
    %v4988 = vsub.s32 %v4534, %v4987
    %v4989 = vrot.slane %v4978, %v4988
    %v4990 = vlaneseq
    %v4991 = vshrl.u32 %v4990, 7
    %v4992 = vsub.s32 %v4597, %v4991
    %v4993 = vrot.slane %v4979, %v4992
    %v4994 = vsel %vm4602, %v4993, %v4989
    %v4995 = vlaneseq
    %v4996 = vshrl.u32 %v4995, 7
    %v4997 = vsub.s32 %v4534, %v4996
    %v4998 = vrot.slane %v4980, %v4997
    %v4999 = vlaneseq
    %v5000 = vshrl.u32 %v4999, 7
    %v5001 = vsub.s32 %v4597, %v5000
    %v5002 = vrot.slane %v4981, %v5001
    %v5003 = vsel %vm4602, %v5002, %v4998
    %v5004 = vsel %vm4613, %v5003, %v4994
    %v5006 = vsub.f32 %v4536, %v5004
    %v5007 = vlaneseq
    %v5008 = vshrl.u32 %v5007, 7
    %v5009 = vsub.s32 0, %v5008
    %v5010 = vrot.slane %v5006, %v5009
    %5012 = vbcast.lane.b32.xlu0 %v5010, 256
    %v5013 = vpop.permute.xlu0 %5012
    %s5015 = sor.u32 256, 8
    %5016 = vbcast.lane.b32.xlu0 %v5010, %s5015
    %v5017 = vpop.permute.xlu0 %5016
    %v5018 = vlaneseq
    %v5019 = vshrl.u32 %v5018, 7
    %v5020 = vsub.s32 1, %v5019
    %v5021 = vrot.slane %v5006, %v5020
    %5023 = vbcast.lane.b32.xlu0 %v5021, 256
    %v5024 = vpop.permute.xlu0 %5023
    %s5026 = sor.u32 256, 8
    %5027 = vbcast.lane.b32.xlu0 %v5021, %s5026
    %v5028 = vpop.permute.xlu0 %5027
    %v5029 = vadd.f32 %v4529, %v5013
    %v5030 = vadd.f32 %v4530, %v5017
    %v5031 = vadd.f32 %v4531, %v5024
    %v5032 = vadd.f32 %v4532, %v5028
    %v5033 = vsel %vm4519, %v5029, -inf
    %v5034 = vsel %vm4521, %v5030, -inf
    %v5035 = vmax.f32 %v5033, %v5034
    %v5036 = vrot.slane %v5035, 4
    %v5037 = vmax.f32 %v5035, %v5036
    %v5038 = vrot.slane %v5037, 2
    %v5039 = vmax.f32 %v5037, %v5038
    %v5040 = vrot.slane %v5039, 1
    %v5041 = vmax.f32 %v5039, %v5040
    %v5042 = vsel %vm4519, %v5031, -inf
    %v5043 = vsel %vm4521, %v5032, -inf
    %v5044 = vmax.f32 %v5042, %v5043
    %v5045 = vrot.slane %v5044, 4
    %v5046 = vmax.f32 %v5044, %v5045
    %v5047 = vrot.slane %v5046, 2
    %v5048 = vmax.f32 %v5046, %v5047
    %v5049 = vrot.slane %v5048, 1
    %v5050 = vmax.f32 %v5048, %v5049
    %v5051 = vsub.f32 %v5029, %v5041
    %v5052 = vsub.f32 %v5030, %v5041
    %v5053 = vsub.f32 %v5031, %v5050
    %v5054 = vsub.f32 %v5032, %v5050
    %v5055 = vmul.f32 %v5051, 1.442695
    %v5056 = vpow.pop %v5055
    %v5057 = vmul.f32 %v5052, 1.442695
    %v5058 = vpow.pop %v5057
    %v5059 = vmul.f32 %v5053, 1.442695
    %v5060 = vpow.pop %v5059
    %v5061 = vmul.f32 %v5054, 1.442695
    %v5062 = vpow.pop %v5061
    %v5063 = vsel %vm4519, %v5056, 0.0
    %v5064 = vsel %vm4521, %v5058, 0.0
    %v5065 = vadd.f32 %v5063, %v5064
    %v5066 = vrot.slane %v5065, 4
    %v5067 = vadd.f32 %v5065, %v5066
    %v5068 = vrot.slane %v5067, 2
    %v5069 = vadd.f32 %v5067, %v5068
    %v5070 = vrot.slane %v5069, 1
    %v5071 = vadd.f32 %v5069, %v5070
    %v5072 = vsel %vm4519, %v5060, 0.0
    %v5073 = vsel %vm4521, %v5062, 0.0
    %v5074 = vadd.f32 %v5072, %v5073
    %v5075 = vrot.slane %v5074, 4
    %v5076 = vadd.f32 %v5074, %v5075
    %v5077 = vrot.slane %v5076, 2
    %v5078 = vadd.f32 %v5076, %v5077
    %v5079 = vrot.slane %v5078, 1
    %v5080 = vadd.f32 %v5078, %v5079
    %v5081 = vlog2.pop %v5071
    %v5082 = vmul.f32 %v5081, 0.6931472
    %v5083 = vlog2.pop %v5080
    %v5084 = vmul.f32 %v5083, 0.6931472
    %v5085 = vadd.f32 %v5082, %v5041
    %v5086 = vadd.f32 %v5084, %v5050
    %v5089 = vsel %vm4613, %v5086, %v5085
    %v5091 = vsub.f32 %v4536, %v5089
    %v5094 = vunpack.c.l.s4 1966171168
    %v5095 = vunpack.c.0.s8 %v5094
    %v5096 = vlaneseq
    %v5097 = vshrl.u32 %v5096, 7
    %v5098 = vsub.s32 %v5095, %v5097
    %v5099 = vrot.slane %v5091, %v5098
    %v5100 = vcombine.high %v5099, %v5099
    %v5102 = vunpack.c.l.s4 1966171168
    %v5103 = vunpack.c.0.s8 %v5102
    %v5104 = vlaneseq
    %v5105 = vshrl.u32 %v5104, 7
    %v5106 = vsub.s32 %v5103, %v5105
    %v5107 = vrot.slane %v5099, %v5106
    %v5109 = vunpack.c.l.s4 1966171168
    %v5110 = vunpack.c.0.s8 %v5109
    %v5111 = vlaneseq
    %v5112 = vshrl.u32 %v5111, 7
    %v5113 = vsub.s32 %v5110, %v5112
    %v5114 = vrot.slane %v5100, %v5113
    %v5115 = vlaneseq
    %v5116 = vshrl.u32 %v5115, 7
    %v5117 = vsub.s32 0, %v5116
    %v5118 = vrot.slane %v5107, %v5117
    %v5119 = vlaneseq
    %v5120 = vshrl.u32 %v5119, 7
    %v5121 = vsub.s32 0, %v5120
    %v5122 = vrot.slane %v5114, %v5121
    %v5125 = vadd.f32 %v4529, %v5118
    %v5126 = vadd.f32 %v4530, %v5118
    %v5127 = vadd.f32 %v4531, %v5122
    %v5128 = vadd.f32 %v4532, %v5122
    %v5129 = vsel %vm4519, %v5125, -inf
    %5130 = vmax.xlane.f32.xlu0 %v5129
    %v5131 = vpop.xlane.xlu0 %5130
    %v5132 = vsel %vm4521, %v5126, -inf
    %5133 = vmax.xlane.f32.xlu0 %v5132
    %v5134 = vpop.xlane.xlu0 %5133
    %v5135 = vsel %vm4519, %v5127, -inf
    %5136 = vmax.xlane.f32.xlu0 %v5135
    %v5137 = vpop.xlane.xlu0 %5136
    %v5138 = vsel %vm4521, %v5128, -inf
    %5139 = vmax.xlane.f32.xlu0 %v5138
    %v5140 = vpop.xlane.xlu0 %5139
    %v5141 = vsub.f32 %v5125, %v5131
    %v5142 = vsub.f32 %v5126, %v5134
    %v5143 = vsub.f32 %v5127, %v5137
    %v5144 = vsub.f32 %v5128, %v5140
    %v5145 = vmul.f32 %v5141, 1.442695
    %v5146 = vpow.pop %v5145
    %v5147 = vmul.f32 %v5142, 1.442695
    %v5148 = vpow.pop %v5147
    %v5149 = vmul.f32 %v5143, 1.442695
    %v5150 = vpow.pop %v5149
    %v5151 = vmul.f32 %v5144, 1.442695
    %v5152 = vpow.pop %v5151
    %v5153 = vsel %vm4519, %v5146, 0.0
    %5154 = vadd.xlane.f32.xlu0 %v5153
    %v5155 = vpop.xlane.xlu0 %5154
    %v5156 = vsel %vm4521, %v5148, 0.0
    %5157 = vadd.xlane.f32.xlu0 %v5156
    %v5158 = vpop.xlane.xlu0 %5157
    %v5159 = vsel %vm4519, %v5150, 0.0
    %5160 = vadd.xlane.f32.xlu0 %v5159
    %v5161 = vpop.xlane.xlu0 %5160
    %v5162 = vsel %vm4521, %v5152, 0.0
    %5163 = vadd.xlane.f32.xlu0 %v5162
    %v5164 = vpop.xlane.xlu0 %5163
    %v5165 = vlog2.pop %v5155
    %v5166 = vmul.f32 %v5165, 0.6931472
    %v5167 = vlog2.pop %v5158
    %v5168 = vmul.f32 %v5167, 0.6931472
    %v5169 = vlog2.pop %v5161
    %v5170 = vmul.f32 %v5169, 0.6931472
    %v5171 = vlog2.pop %v5164
    %v5172 = vmul.f32 %v5171, 0.6931472
    %v5173 = vadd.f32 %v5166, %v5131
    %v5174 = vadd.f32 %v5168, %v5134
    %v5175 = vadd.f32 %v5170, %v5137
    %v5176 = vadd.f32 %v5172, %v5140
    %v5181 = vlaneseq
    %v5182 = vshrl.u32 %v5181, 7
    %v5183 = vsub.s32 %v4534, %v5182
    %v5184 = vrot.slane %v5173, %v5183
    %v5185 = vlaneseq
    %v5186 = vshrl.u32 %v5185, 7
    %v5187 = vsub.s32 %v4597, %v5186
    %v5188 = vrot.slane %v5174, %v5187
    %v5189 = vsel %vm4602, %v5188, %v5184
    %v5190 = vlaneseq
    %v5191 = vshrl.u32 %v5190, 7
    %v5192 = vsub.s32 %v4534, %v5191
    %v5193 = vrot.slane %v5175, %v5192
    %v5194 = vlaneseq
    %v5195 = vshrl.u32 %v5194, 7
    %v5196 = vsub.s32 %v4597, %v5195
    %v5197 = vrot.slane %v5176, %v5196
    %v5198 = vsel %vm4602, %v5197, %v5193
    %v5199 = vsel %vm4613, %v5198, %v5189
    %v5201 = vsub.f32 %v4536, %v5199
    %v5202 = vlaneseq
    %v5203 = vshrl.u32 %v5202, 7
    %v5204 = vsub.s32 0, %v5203
    %v5205 = vrot.slane %v5201, %v5204
    %5207 = vbcast.lane.b32.xlu0 %v5205, 256
    %v5208 = vpop.permute.xlu0 %5207
    %s5210 = sor.u32 256, 8
    %5211 = vbcast.lane.b32.xlu0 %v5205, %s5210
    %v5212 = vpop.permute.xlu0 %5211
    %v5213 = vlaneseq
    %v5214 = vshrl.u32 %v5213, 7
    %v5215 = vsub.s32 1, %v5214
    %v5216 = vrot.slane %v5201, %v5215
    %5218 = vbcast.lane.b32.xlu0 %v5216, 256
    %v5219 = vpop.permute.xlu0 %5218
    %s5221 = sor.u32 256, 8
    %5222 = vbcast.lane.b32.xlu0 %v5216, %s5221
    %v5223 = vpop.permute.xlu0 %5222
    %v5224 = vadd.f32 %v4529, %v5208
    %v5225 = vadd.f32 %v4530, %v5212
    %v5226 = vadd.f32 %v4531, %v5219
    %v5227 = vadd.f32 %v4532, %v5223
    %v5228 = vsel %vm4519, %v5224, -inf
    %v5229 = vsel %vm4521, %v5225, -inf
    %v5230 = vmax.f32 %v5228, %v5229
    %v5231 = vrot.slane %v5230, 4
    %v5232 = vmax.f32 %v5230, %v5231
    %v5233 = vrot.slane %v5232, 2
    %v5234 = vmax.f32 %v5232, %v5233
    %v5235 = vrot.slane %v5234, 1
    %v5236 = vmax.f32 %v5234, %v5235
    %v5237 = vsel %vm4519, %v5226, -inf
    %v5238 = vsel %vm4521, %v5227, -inf
    %v5239 = vmax.f32 %v5237, %v5238
    %v5240 = vrot.slane %v5239, 4
    %v5241 = vmax.f32 %v5239, %v5240
    %v5242 = vrot.slane %v5241, 2
    %v5243 = vmax.f32 %v5241, %v5242
    %v5244 = vrot.slane %v5243, 1
    %v5245 = vmax.f32 %v5243, %v5244
    %v5246 = vsub.f32 %v5224, %v5236
    %v5247 = vsub.f32 %v5225, %v5236
    %v5248 = vsub.f32 %v5226, %v5245
    %v5249 = vsub.f32 %v5227, %v5245
    %v5250 = vmul.f32 %v5246, 1.442695
    %v5251 = vpow.pop %v5250
    %v5252 = vmul.f32 %v5247, 1.442695
    %v5253 = vpow.pop %v5252
    %v5254 = vmul.f32 %v5248, 1.442695
    %v5255 = vpow.pop %v5254
    %v5256 = vmul.f32 %v5249, 1.442695
    %v5257 = vpow.pop %v5256
    %v5258 = vsel %vm4519, %v5251, 0.0
    %v5259 = vsel %vm4521, %v5253, 0.0
    %v5260 = vadd.f32 %v5258, %v5259
    %v5261 = vrot.slane %v5260, 4
    %v5262 = vadd.f32 %v5260, %v5261
    %v5263 = vrot.slane %v5262, 2
    %v5264 = vadd.f32 %v5262, %v5263
    %v5265 = vrot.slane %v5264, 1
    %v5266 = vadd.f32 %v5264, %v5265
    %v5267 = vsel %vm4519, %v5255, 0.0
    %v5268 = vsel %vm4521, %v5257, 0.0
    %v5269 = vadd.f32 %v5267, %v5268
    %v5270 = vrot.slane %v5269, 4
    %v5271 = vadd.f32 %v5269, %v5270
    %v5272 = vrot.slane %v5271, 2
    %v5273 = vadd.f32 %v5271, %v5272
    %v5274 = vrot.slane %v5273, 1
    %v5275 = vadd.f32 %v5273, %v5274
    %v5276 = vlog2.pop %v5266
    %v5277 = vmul.f32 %v5276, 0.6931472
    %v5278 = vlog2.pop %v5275
    %v5279 = vmul.f32 %v5278, 0.6931472
    %v5280 = vadd.f32 %v5277, %v5236
    %v5281 = vadd.f32 %v5279, %v5245
    %v5284 = vsel %vm4613, %v5281, %v5280
    %v5286 = vsub.f32 %v4536, %v5284
    %v5289 = vunpack.c.l.s4 1966171168
    %v5290 = vunpack.c.0.s8 %v5289
    %v5291 = vlaneseq
    %v5292 = vshrl.u32 %v5291, 7
    %v5293 = vsub.s32 %v5290, %v5292
    %v5294 = vrot.slane %v5286, %v5293
    %v5295 = vcombine.high %v5294, %v5294
    %v5297 = vunpack.c.l.s4 1966171168
    %v5298 = vunpack.c.0.s8 %v5297
    %v5299 = vlaneseq
    %v5300 = vshrl.u32 %v5299, 7
    %v5301 = vsub.s32 %v5298, %v5300
    %v5302 = vrot.slane %v5294, %v5301
    %v5304 = vunpack.c.l.s4 1966171168
    %v5305 = vunpack.c.0.s8 %v5304
    %v5306 = vlaneseq
    %v5307 = vshrl.u32 %v5306, 7
    %v5308 = vsub.s32 %v5305, %v5307
    %v5309 = vrot.slane %v5295, %v5308
    %v5310 = vlaneseq
    %v5311 = vshrl.u32 %v5310, 7
    %v5312 = vsub.s32 0, %v5311
    %v5313 = vrot.slane %v5302, %v5312
    %v5314 = vlaneseq
    %v5315 = vshrl.u32 %v5314, 7
    %v5316 = vsub.s32 0, %v5315
    %v5317 = vrot.slane %v5309, %v5316
    %v5320 = vadd.f32 %v4529, %v5313
    %v5321 = vadd.f32 %v4530, %v5313
    %v5322 = vadd.f32 %v4531, %v5317
    %v5323 = vadd.f32 %v4532, %v5317
    %v5324 = vsel %vm4519, %v5320, -inf
    %5325 = vmax.xlane.f32.xlu0 %v5324
    %v5326 = vpop.xlane.xlu0 %5325
    %v5327 = vsel %vm4521, %v5321, -inf
    %5328 = vmax.xlane.f32.xlu0 %v5327
    %v5329 = vpop.xlane.xlu0 %5328
    %v5330 = vsel %vm4519, %v5322, -inf
    %5331 = vmax.xlane.f32.xlu0 %v5330
    %v5332 = vpop.xlane.xlu0 %5331
    %v5333 = vsel %vm4521, %v5323, -inf
    %5334 = vmax.xlane.f32.xlu0 %v5333
    %v5335 = vpop.xlane.xlu0 %5334
    %v5336 = vsub.f32 %v5320, %v5326
    %v5337 = vsub.f32 %v5321, %v5329
    %v5338 = vsub.f32 %v5322, %v5332
    %v5339 = vsub.f32 %v5323, %v5335
    %v5340 = vmul.f32 %v5336, 1.442695
    %v5341 = vpow.pop %v5340
    %v5342 = vmul.f32 %v5337, 1.442695
    %v5343 = vpow.pop %v5342
    %v5344 = vmul.f32 %v5338, 1.442695
    %v5345 = vpow.pop %v5344
    %v5346 = vmul.f32 %v5339, 1.442695
    %v5347 = vpow.pop %v5346
    %v5348 = vsel %vm4519, %v5341, 0.0
    %5349 = vadd.xlane.f32.xlu0 %v5348
    %v5350 = vpop.xlane.xlu0 %5349
    %v5351 = vsel %vm4521, %v5343, 0.0
    %5352 = vadd.xlane.f32.xlu0 %v5351
    %v5353 = vpop.xlane.xlu0 %5352
    %v5354 = vsel %vm4519, %v5345, 0.0
    %5355 = vadd.xlane.f32.xlu0 %v5354
    %v5356 = vpop.xlane.xlu0 %5355
    %v5357 = vsel %vm4521, %v5347, 0.0
    %5358 = vadd.xlane.f32.xlu0 %v5357
    %v5359 = vpop.xlane.xlu0 %5358
    %v5360 = vlog2.pop %v5350
    %v5361 = vmul.f32 %v5360, 0.6931472
    %v5362 = vlog2.pop %v5353
    %v5363 = vmul.f32 %v5362, 0.6931472
    %v5364 = vlog2.pop %v5356
    %v5365 = vmul.f32 %v5364, 0.6931472
    %v5366 = vlog2.pop %v5359
    %v5367 = vmul.f32 %v5366, 0.6931472
    %v5368 = vadd.f32 %v5361, %v5326
    %v5369 = vadd.f32 %v5363, %v5329
    %v5370 = vadd.f32 %v5365, %v5332
    %v5371 = vadd.f32 %v5367, %v5335
    %v5376 = vlaneseq
    %v5377 = vshrl.u32 %v5376, 7
    %v5378 = vsub.s32 %v4534, %v5377
    %v5379 = vrot.slane %v5368, %v5378
    %v5380 = vlaneseq
    %v5381 = vshrl.u32 %v5380, 7
    %v5382 = vsub.s32 %v4597, %v5381
    %v5383 = vrot.slane %v5369, %v5382
    %v5384 = vsel %vm4602, %v5383, %v5379
    %v5385 = vlaneseq
    %v5386 = vshrl.u32 %v5385, 7
    %v5387 = vsub.s32 %v4534, %v5386
    %v5388 = vrot.slane %v5370, %v5387
    %v5389 = vlaneseq
    %v5390 = vshrl.u32 %v5389, 7
    %v5391 = vsub.s32 %v4597, %v5390
    %v5392 = vrot.slane %v5371, %v5391
    %v5393 = vsel %vm4602, %v5392, %v5388
    %v5394 = vsel %vm4613, %v5393, %v5384
    %v5396 = vsub.f32 %v4536, %v5394
    %v5397 = vlaneseq
    %v5398 = vshrl.u32 %v5397, 7
    %v5399 = vsub.s32 0, %v5398
    %v5400 = vrot.slane %v5396, %v5399
    %5402 = vbcast.lane.b32.xlu0 %v5400, 256
    %v5403 = vpop.permute.xlu0 %5402
    %s5405 = sor.u32 256, 8
    %5406 = vbcast.lane.b32.xlu0 %v5400, %s5405
    %v5407 = vpop.permute.xlu0 %5406
    %v5408 = vlaneseq
    %v5409 = vshrl.u32 %v5408, 7
    %v5410 = vsub.s32 1, %v5409
    %v5411 = vrot.slane %v5396, %v5410
    %5413 = vbcast.lane.b32.xlu0 %v5411, 256
    %v5414 = vpop.permute.xlu0 %5413
    %s5416 = sor.u32 256, 8
    %5417 = vbcast.lane.b32.xlu0 %v5411, %s5416
    %v5418 = vpop.permute.xlu0 %5417
    %v5419 = vadd.f32 %v4529, %v5403
    %v5420 = vadd.f32 %v4530, %v5407
    %v5421 = vadd.f32 %v4531, %v5414
    %v5422 = vadd.f32 %v4532, %v5418
    %v5423 = vsel %vm4519, %v5419, -inf
    %v5424 = vsel %vm4521, %v5420, -inf
    %v5425 = vmax.f32 %v5423, %v5424
    %v5426 = vrot.slane %v5425, 4
    %v5427 = vmax.f32 %v5425, %v5426
    %v5428 = vrot.slane %v5427, 2
    %v5429 = vmax.f32 %v5427, %v5428
    %v5430 = vrot.slane %v5429, 1
    %v5431 = vmax.f32 %v5429, %v5430
    %v5432 = vsel %vm4519, %v5421, -inf
    %v5433 = vsel %vm4521, %v5422, -inf
    %v5434 = vmax.f32 %v5432, %v5433
    %v5435 = vrot.slane %v5434, 4
    %v5436 = vmax.f32 %v5434, %v5435
    %v5437 = vrot.slane %v5436, 2
    %v5438 = vmax.f32 %v5436, %v5437
    %v5439 = vrot.slane %v5438, 1
    %v5440 = vmax.f32 %v5438, %v5439
    %v5441 = vsub.f32 %v5419, %v5431
    %v5442 = vsub.f32 %v5420, %v5431
    %v5443 = vsub.f32 %v5421, %v5440
    %v5444 = vsub.f32 %v5422, %v5440
    %v5445 = vmul.f32 %v5441, 1.442695
    %v5446 = vpow.pop %v5445
    %v5447 = vmul.f32 %v5442, 1.442695
    %v5448 = vpow.pop %v5447
    %v5449 = vmul.f32 %v5443, 1.442695
    %v5450 = vpow.pop %v5449
    %v5451 = vmul.f32 %v5444, 1.442695
    %v5452 = vpow.pop %v5451
    %v5453 = vsel %vm4519, %v5446, 0.0
    %v5454 = vsel %vm4521, %v5448, 0.0
    %v5455 = vadd.f32 %v5453, %v5454
    %v5456 = vrot.slane %v5455, 4
    %v5457 = vadd.f32 %v5455, %v5456
    %v5458 = vrot.slane %v5457, 2
    %v5459 = vadd.f32 %v5457, %v5458
    %v5460 = vrot.slane %v5459, 1
    %v5461 = vadd.f32 %v5459, %v5460
    %v5462 = vsel %vm4519, %v5450, 0.0
    %v5463 = vsel %vm4521, %v5452, 0.0
    %v5464 = vadd.f32 %v5462, %v5463
    %v5465 = vrot.slane %v5464, 4
    %v5466 = vadd.f32 %v5464, %v5465
    %v5467 = vrot.slane %v5466, 2
    %v5468 = vadd.f32 %v5466, %v5467
    %v5469 = vrot.slane %v5468, 1
    %v5470 = vadd.f32 %v5468, %v5469
    %v5471 = vlog2.pop %v5461
    %v5472 = vmul.f32 %v5471, 0.6931472
    %v5473 = vlog2.pop %v5470
    %v5474 = vmul.f32 %v5473, 0.6931472
    %v5475 = vadd.f32 %v5472, %v5431
    %v5476 = vadd.f32 %v5474, %v5440
    %v5479 = vsel %vm4613, %v5476, %v5475
    %v5481 = vsub.f32 %v4536, %v5479
    %v5484 = vunpack.c.l.s4 1966171168
    %v5485 = vunpack.c.0.s8 %v5484
    %v5486 = vlaneseq
    %v5487 = vshrl.u32 %v5486, 7
    %v5488 = vsub.s32 %v5485, %v5487
    %v5489 = vrot.slane %v5481, %v5488
    %v5490 = vcombine.high %v5489, %v5489
    %v5492 = vunpack.c.l.s4 1966171168
    %v5493 = vunpack.c.0.s8 %v5492
    %v5494 = vlaneseq
    %v5495 = vshrl.u32 %v5494, 7
    %v5496 = vsub.s32 %v5493, %v5495
    %v5497 = vrot.slane %v5489, %v5496
    %v5499 = vunpack.c.l.s4 1966171168
    %v5500 = vunpack.c.0.s8 %v5499
    %v5501 = vlaneseq
    %v5502 = vshrl.u32 %v5501, 7
    %v5503 = vsub.s32 %v5500, %v5502
    %v5504 = vrot.slane %v5490, %v5503
    %v5505 = vlaneseq
    %v5506 = vshrl.u32 %v5505, 7
    %v5507 = vsub.s32 0, %v5506
    %v5508 = vrot.slane %v5497, %v5507
    %v5509 = vlaneseq
    %v5510 = vshrl.u32 %v5509, 7
    %v5511 = vsub.s32 0, %v5510
    %v5512 = vrot.slane %v5504, %v5511
    %v5515 = vadd.f32 %v4529, %v5508
    %v5516 = vadd.f32 %v4530, %v5508
    %v5517 = vadd.f32 %v4531, %v5512
    %v5518 = vadd.f32 %v4532, %v5512
    %v5519 = vsel %vm4519, %v5515, -inf
    %5520 = vmax.xlane.f32.xlu0 %v5519
    %v5521 = vpop.xlane.xlu0 %5520
    %v5522 = vsel %vm4521, %v5516, -inf
    %5523 = vmax.xlane.f32.xlu0 %v5522
    %v5524 = vpop.xlane.xlu0 %5523
    %v5525 = vsel %vm4519, %v5517, -inf
    %5526 = vmax.xlane.f32.xlu0 %v5525
    %v5527 = vpop.xlane.xlu0 %5526
    %v5528 = vsel %vm4521, %v5518, -inf
    %5529 = vmax.xlane.f32.xlu0 %v5528
    %v5530 = vpop.xlane.xlu0 %5529
    %v5531 = vsub.f32 %v5515, %v5521
    %v5532 = vsub.f32 %v5516, %v5524
    %v5533 = vsub.f32 %v5517, %v5527
    %v5534 = vsub.f32 %v5518, %v5530
    %v5535 = vmul.f32 %v5531, 1.442695
    %v5536 = vpow.pop %v5535
    %v5537 = vmul.f32 %v5532, 1.442695
    %v5538 = vpow.pop %v5537
    %v5539 = vmul.f32 %v5533, 1.442695
    %v5540 = vpow.pop %v5539
    %v5541 = vmul.f32 %v5534, 1.442695
    %v5542 = vpow.pop %v5541
    %v5543 = vsel %vm4519, %v5536, 0.0
    %5544 = vadd.xlane.f32.xlu0 %v5543
    %v5545 = vpop.xlane.xlu0 %5544
    %v5546 = vsel %vm4521, %v5538, 0.0
    %5547 = vadd.xlane.f32.xlu0 %v5546
    %v5548 = vpop.xlane.xlu0 %5547
    %v5549 = vsel %vm4519, %v5540, 0.0
    %5550 = vadd.xlane.f32.xlu0 %v5549
    %v5551 = vpop.xlane.xlu0 %5550
    %v5552 = vsel %vm4521, %v5542, 0.0
    %5553 = vadd.xlane.f32.xlu0 %v5552
    %v5554 = vpop.xlane.xlu0 %5553
    %v5555 = vlog2.pop %v5545
    %v5556 = vmul.f32 %v5555, 0.6931472
    %v5557 = vlog2.pop %v5548
    %v5558 = vmul.f32 %v5557, 0.6931472
    %v5559 = vlog2.pop %v5551
    %v5560 = vmul.f32 %v5559, 0.6931472
    %v5561 = vlog2.pop %v5554
    %v5562 = vmul.f32 %v5561, 0.6931472
    %v5563 = vadd.f32 %v5556, %v5521
    %v5564 = vadd.f32 %v5558, %v5524
    %v5565 = vadd.f32 %v5560, %v5527
    %v5566 = vadd.f32 %v5562, %v5530
    %v5571 = vlaneseq
    %v5572 = vshrl.u32 %v5571, 7
    %v5573 = vsub.s32 %v4534, %v5572
    %v5574 = vrot.slane %v5563, %v5573
    %v5575 = vlaneseq
    %v5576 = vshrl.u32 %v5575, 7
    %v5577 = vsub.s32 %v4597, %v5576
    %v5578 = vrot.slane %v5564, %v5577
    %v5579 = vsel %vm4602, %v5578, %v5574
    %v5580 = vlaneseq
    %v5581 = vshrl.u32 %v5580, 7
    %v5582 = vsub.s32 %v4534, %v5581
    %v5583 = vrot.slane %v5565, %v5582
    %v5584 = vlaneseq
    %v5585 = vshrl.u32 %v5584, 7
    %v5586 = vsub.s32 %v4597, %v5585
    %v5587 = vrot.slane %v5566, %v5586
    %v5588 = vsel %vm4602, %v5587, %v5583
    %v5589 = vsel %vm4613, %v5588, %v5579
    %v5591 = vsub.f32 %v4536, %v5589
    %v5592 = vlaneseq
    %v5593 = vshrl.u32 %v5592, 7
    %v5594 = vsub.s32 0, %v5593
    %v5595 = vrot.slane %v5591, %v5594
    %5597 = vbcast.lane.b32.xlu0 %v5595, 256
    %v5598 = vpop.permute.xlu0 %5597
    %s5600 = sor.u32 256, 8
    %5601 = vbcast.lane.b32.xlu0 %v5595, %s5600
    %v5602 = vpop.permute.xlu0 %5601
    %v5603 = vlaneseq
    %v5604 = vshrl.u32 %v5603, 7
    %v5605 = vsub.s32 1, %v5604
    %v5606 = vrot.slane %v5591, %v5605
    %5608 = vbcast.lane.b32.xlu0 %v5606, 256
    %v5609 = vpop.permute.xlu0 %5608
    %s5611 = sor.u32 256, 8
    %5612 = vbcast.lane.b32.xlu0 %v5606, %s5611
    %v5613 = vpop.permute.xlu0 %5612
    %v5614 = vadd.f32 %v4529, %v5598
    %v5615 = vadd.f32 %v4530, %v5602
    %v5616 = vadd.f32 %v4531, %v5609
    %v5617 = vadd.f32 %v4532, %v5613
    %v5618 = vsel %vm4519, %v5614, -inf
    %v5619 = vsel %vm4521, %v5615, -inf
    %v5620 = vmax.f32 %v5618, %v5619
    %v5621 = vrot.slane %v5620, 4
    %v5622 = vmax.f32 %v5620, %v5621
    %v5623 = vrot.slane %v5622, 2
    %v5624 = vmax.f32 %v5622, %v5623
    %v5625 = vrot.slane %v5624, 1
    %v5626 = vmax.f32 %v5624, %v5625
    %v5627 = vsel %vm4519, %v5616, -inf
    %v5628 = vsel %vm4521, %v5617, -inf
    %v5629 = vmax.f32 %v5627, %v5628
    %v5630 = vrot.slane %v5629, 4
    %v5631 = vmax.f32 %v5629, %v5630
    %v5632 = vrot.slane %v5631, 2
    %v5633 = vmax.f32 %v5631, %v5632
    %v5634 = vrot.slane %v5633, 1
    %v5635 = vmax.f32 %v5633, %v5634
    %v5636 = vsub.f32 %v5614, %v5626
    %v5637 = vsub.f32 %v5615, %v5626
    %v5638 = vsub.f32 %v5616, %v5635
    %v5639 = vsub.f32 %v5617, %v5635
    %v5640 = vmul.f32 %v5636, 1.442695
    %v5641 = vpow.pop %v5640
    %v5642 = vmul.f32 %v5637, 1.442695
    %v5643 = vpow.pop %v5642
    %v5644 = vmul.f32 %v5638, 1.442695
    %v5645 = vpow.pop %v5644
    %v5646 = vmul.f32 %v5639, 1.442695
    %v5647 = vpow.pop %v5646
    %v5648 = vsel %vm4519, %v5641, 0.0
    %v5649 = vsel %vm4521, %v5643, 0.0
    %v5650 = vadd.f32 %v5648, %v5649
    %v5651 = vrot.slane %v5650, 4
    %v5652 = vadd.f32 %v5650, %v5651
    %v5653 = vrot.slane %v5652, 2
    %v5654 = vadd.f32 %v5652, %v5653
    %v5655 = vrot.slane %v5654, 1
    %v5656 = vadd.f32 %v5654, %v5655
    %v5657 = vsel %vm4519, %v5645, 0.0
    %v5658 = vsel %vm4521, %v5647, 0.0
    %v5659 = vadd.f32 %v5657, %v5658
    %v5660 = vrot.slane %v5659, 4
    %v5661 = vadd.f32 %v5659, %v5660
    %v5662 = vrot.slane %v5661, 2
    %v5663 = vadd.f32 %v5661, %v5662
    %v5664 = vrot.slane %v5663, 1
    %v5665 = vadd.f32 %v5663, %v5664
    %v5666 = vlog2.pop %v5656
    %v5667 = vmul.f32 %v5666, 0.6931472
    %v5668 = vlog2.pop %v5665
    %v5669 = vmul.f32 %v5668, 0.6931472
    %v5670 = vadd.f32 %v5667, %v5626
    %v5671 = vadd.f32 %v5669, %v5635
    %v5674 = vsel %vm4613, %v5671, %v5670
    %v5676 = vsub.f32 %v4536, %v5674
    %v5679 = vunpack.c.l.s4 1966171168
    %v5680 = vunpack.c.0.s8 %v5679
    %v5681 = vlaneseq
    %v5682 = vshrl.u32 %v5681, 7
    %v5683 = vsub.s32 %v5680, %v5682
    %v5684 = vrot.slane %v5676, %v5683
    %v5685 = vcombine.high %v5684, %v5684
    %v5687 = vunpack.c.l.s4 1966171168
    %v5688 = vunpack.c.0.s8 %v5687
    %v5689 = vlaneseq
    %v5690 = vshrl.u32 %v5689, 7
    %v5691 = vsub.s32 %v5688, %v5690
    %v5692 = vrot.slane %v5684, %v5691
    %v5694 = vunpack.c.l.s4 1966171168
    %v5695 = vunpack.c.0.s8 %v5694
    %v5696 = vlaneseq
    %v5697 = vshrl.u32 %v5696, 7
    %v5698 = vsub.s32 %v5695, %v5697
    %v5699 = vrot.slane %v5685, %v5698
    %v5700 = vlaneseq
    %v5701 = vshrl.u32 %v5700, 7
    %v5702 = vsub.s32 0, %v5701
    %v5703 = vrot.slane %v5692, %v5702
    %v5704 = vlaneseq
    %v5705 = vshrl.u32 %v5704, 7
    %v5706 = vsub.s32 0, %v5705
    %v5707 = vrot.slane %v5699, %v5706
    %v5710 = vadd.f32 %v4529, %v5703
    %v5711 = vadd.f32 %v4530, %v5703
    %v5712 = vadd.f32 %v4531, %v5707
    %v5713 = vadd.f32 %v4532, %v5707
    %v5714 = vsel %vm4519, %v5710, -inf
    %5715 = vmax.xlane.f32.xlu0 %v5714
    %v5716 = vpop.xlane.xlu0 %5715
    %v5717 = vsel %vm4521, %v5711, -inf
    %5718 = vmax.xlane.f32.xlu0 %v5717
    %v5719 = vpop.xlane.xlu0 %5718
    %v5720 = vsel %vm4519, %v5712, -inf
    %5721 = vmax.xlane.f32.xlu0 %v5720
    %v5722 = vpop.xlane.xlu0 %5721
    %v5723 = vsel %vm4521, %v5713, -inf
    %5724 = vmax.xlane.f32.xlu0 %v5723
    %v5725 = vpop.xlane.xlu0 %5724
    %v5726 = vsub.f32 %v5710, %v5716
    %v5727 = vsub.f32 %v5711, %v5719
    %v5728 = vsub.f32 %v5712, %v5722
    %v5729 = vsub.f32 %v5713, %v5725
    %v5730 = vmul.f32 %v5726, 1.442695
    %v5731 = vpow.pop %v5730
    %v5732 = vmul.f32 %v5727, 1.442695
    %v5733 = vpow.pop %v5732
    %v5734 = vmul.f32 %v5728, 1.442695
    %v5735 = vpow.pop %v5734
    %v5736 = vmul.f32 %v5729, 1.442695
    %v5737 = vpow.pop %v5736
    %v5738 = vsel %vm4519, %v5731, 0.0
    %5739 = vadd.xlane.f32.xlu0 %v5738
    %v5740 = vpop.xlane.xlu0 %5739
    %v5741 = vsel %vm4521, %v5733, 0.0
    %5742 = vadd.xlane.f32.xlu0 %v5741
    %v5743 = vpop.xlane.xlu0 %5742
    %v5744 = vsel %vm4519, %v5735, 0.0
    %5745 = vadd.xlane.f32.xlu0 %v5744
    %v5746 = vpop.xlane.xlu0 %5745
    %v5747 = vsel %vm4521, %v5737, 0.0
    %5748 = vadd.xlane.f32.xlu0 %v5747
    %v5749 = vpop.xlane.xlu0 %5748
    %v5750 = vlog2.pop %v5740
    %v5751 = vmul.f32 %v5750, 0.6931472
    %v5752 = vlog2.pop %v5743
    %v5753 = vmul.f32 %v5752, 0.6931472
    %v5754 = vlog2.pop %v5746
    %v5755 = vmul.f32 %v5754, 0.6931472
    %v5756 = vlog2.pop %v5749
    %v5757 = vmul.f32 %v5756, 0.6931472
    %v5758 = vadd.f32 %v5751, %v5716
    %v5759 = vadd.f32 %v5753, %v5719
    %v5760 = vadd.f32 %v5755, %v5722
    %v5761 = vadd.f32 %v5757, %v5725
    %v5766 = vlaneseq
    %v5767 = vshrl.u32 %v5766, 7
    %v5768 = vsub.s32 %v4534, %v5767
    %v5769 = vrot.slane %v5758, %v5768
    %v5770 = vlaneseq
    %v5771 = vshrl.u32 %v5770, 7
    %v5772 = vsub.s32 %v4597, %v5771
    %v5773 = vrot.slane %v5759, %v5772
    %v5774 = vsel %vm4602, %v5773, %v5769
    %v5775 = vlaneseq
    %v5776 = vshrl.u32 %v5775, 7
    %v5777 = vsub.s32 %v4534, %v5776
    %v5778 = vrot.slane %v5760, %v5777
    %v5779 = vlaneseq
    %v5780 = vshrl.u32 %v5779, 7
    %v5781 = vsub.s32 %v4597, %v5780
    %v5782 = vrot.slane %v5761, %v5781
    %v5783 = vsel %vm4602, %v5782, %v5778
    %v5784 = vsel %vm4613, %v5783, %v5774
    %v5786 = vsub.f32 %v4536, %v5784
    %v5787 = vlaneseq
    %v5788 = vshrl.u32 %v5787, 7
    %v5789 = vsub.s32 0, %v5788
    %v5790 = vrot.slane %v5786, %v5789
    %5792 = vbcast.lane.b32.xlu0 %v5790, 256
    %v5793 = vpop.permute.xlu0 %5792
    %s5795 = sor.u32 256, 8
    %5796 = vbcast.lane.b32.xlu0 %v5790, %s5795
    %v5797 = vpop.permute.xlu0 %5796
    %v5798 = vlaneseq
    %v5799 = vshrl.u32 %v5798, 7
    %v5800 = vsub.s32 1, %v5799
    %v5801 = vrot.slane %v5786, %v5800
    %5803 = vbcast.lane.b32.xlu0 %v5801, 256
    %v5804 = vpop.permute.xlu0 %5803
    %s5806 = sor.u32 256, 8
    %5807 = vbcast.lane.b32.xlu0 %v5801, %s5806
    %v5808 = vpop.permute.xlu0 %5807
    %v5809 = vadd.f32 %v4529, %v5793
    %v5810 = vadd.f32 %v4530, %v5797
    %v5811 = vadd.f32 %v4531, %v5804
    %v5812 = vadd.f32 %v4532, %v5808
    %v5813 = vsel %vm4519, %v5809, -inf
    %v5814 = vsel %vm4521, %v5810, -inf
    %v5815 = vmax.f32 %v5813, %v5814
    %v5816 = vrot.slane %v5815, 4
    %v5817 = vmax.f32 %v5815, %v5816
    %v5818 = vrot.slane %v5817, 2
    %v5819 = vmax.f32 %v5817, %v5818
    %v5820 = vrot.slane %v5819, 1
    %v5821 = vmax.f32 %v5819, %v5820
    %v5822 = vsel %vm4519, %v5811, -inf
    %v5823 = vsel %vm4521, %v5812, -inf
    %v5824 = vmax.f32 %v5822, %v5823
    %v5825 = vrot.slane %v5824, 4
    %v5826 = vmax.f32 %v5824, %v5825
    %v5827 = vrot.slane %v5826, 2
    %v5828 = vmax.f32 %v5826, %v5827
    %v5829 = vrot.slane %v5828, 1
    %v5830 = vmax.f32 %v5828, %v5829
    %v5831 = vsub.f32 %v5809, %v5821
    %v5832 = vsub.f32 %v5810, %v5821
    %v5833 = vsub.f32 %v5811, %v5830
    %v5834 = vsub.f32 %v5812, %v5830
    %v5835 = vmul.f32 %v5831, 1.442695
    %v5836 = vpow.pop %v5835
    %v5837 = vmul.f32 %v5832, 1.442695
    %v5838 = vpow.pop %v5837
    %v5839 = vmul.f32 %v5833, 1.442695
    %v5840 = vpow.pop %v5839
    %v5841 = vmul.f32 %v5834, 1.442695
    %v5842 = vpow.pop %v5841
    %v5843 = vsel %vm4519, %v5836, 0.0
    %v5844 = vsel %vm4521, %v5838, 0.0
    %v5845 = vadd.f32 %v5843, %v5844
    %v5846 = vrot.slane %v5845, 4
    %v5847 = vadd.f32 %v5845, %v5846
    %v5848 = vrot.slane %v5847, 2
    %v5849 = vadd.f32 %v5847, %v5848
    %v5850 = vrot.slane %v5849, 1
    %v5851 = vadd.f32 %v5849, %v5850
    %v5852 = vsel %vm4519, %v5840, 0.0
    %v5853 = vsel %vm4521, %v5842, 0.0
    %v5854 = vadd.f32 %v5852, %v5853
    %v5855 = vrot.slane %v5854, 4
    %v5856 = vadd.f32 %v5854, %v5855
    %v5857 = vrot.slane %v5856, 2
    %v5858 = vadd.f32 %v5856, %v5857
    %v5859 = vrot.slane %v5858, 1
    %v5860 = vadd.f32 %v5858, %v5859
    %v5861 = vlog2.pop %v5851
    %v5862 = vmul.f32 %v5861, 0.6931472
    %v5863 = vlog2.pop %v5860
    %v5864 = vmul.f32 %v5863, 0.6931472
    %v5865 = vadd.f32 %v5862, %v5821
    %v5866 = vadd.f32 %v5864, %v5830
    %v5869 = vsel %vm4613, %v5866, %v5865
    %v5871 = vsub.f32 %v4536, %v5869
    %v5874 = vunpack.c.l.s4 1966171168
    %v5875 = vunpack.c.0.s8 %v5874
    %v5876 = vlaneseq
    %v5877 = vshrl.u32 %v5876, 7
    %v5878 = vsub.s32 %v5875, %v5877
    %v5879 = vrot.slane %v5871, %v5878
    %v5880 = vcombine.high %v5879, %v5879
    %v5882 = vunpack.c.l.s4 1966171168
    %v5883 = vunpack.c.0.s8 %v5882
    %v5884 = vlaneseq
    %v5885 = vshrl.u32 %v5884, 7
    %v5886 = vsub.s32 %v5883, %v5885
    %v5887 = vrot.slane %v5879, %v5886
    %v5889 = vunpack.c.l.s4 1966171168
    %v5890 = vunpack.c.0.s8 %v5889
    %v5891 = vlaneseq
    %v5892 = vshrl.u32 %v5891, 7
    %v5893 = vsub.s32 %v5890, %v5892
    %v5894 = vrot.slane %v5880, %v5893
    %v5895 = vlaneseq
    %v5896 = vshrl.u32 %v5895, 7
    %v5897 = vsub.s32 0, %v5896
    %v5898 = vrot.slane %v5887, %v5897
    %v5899 = vlaneseq
    %v5900 = vshrl.u32 %v5899, 7
    %v5901 = vsub.s32 0, %v5900
    %v5902 = vrot.slane %v5894, %v5901
    %v5905 = vadd.f32 %v4529, %v5898
    %v5906 = vadd.f32 %v4530, %v5898
    %v5907 = vadd.f32 %v4531, %v5902
    %v5908 = vadd.f32 %v4532, %v5902
    %v5909 = vsel %vm4519, %v5905, -inf
    %5910 = vmax.xlane.f32.xlu0 %v5909
    %v5911 = vpop.xlane.xlu0 %5910
    %v5912 = vsel %vm4521, %v5906, -inf
    %5913 = vmax.xlane.f32.xlu0 %v5912
    %v5914 = vpop.xlane.xlu0 %5913
    %v5915 = vsel %vm4519, %v5907, -inf
    %5916 = vmax.xlane.f32.xlu0 %v5915
    %v5917 = vpop.xlane.xlu0 %5916
    %v5918 = vsel %vm4521, %v5908, -inf
    %5919 = vmax.xlane.f32.xlu0 %v5918
    %v5920 = vpop.xlane.xlu0 %5919
    %v5921 = vsub.f32 %v5905, %v5911
    %v5922 = vsub.f32 %v5906, %v5914
    %v5923 = vsub.f32 %v5907, %v5917
    %v5924 = vsub.f32 %v5908, %v5920
    %v5925 = vmul.f32 %v5921, 1.442695
    %v5926 = vpow.pop %v5925
    %v5927 = vmul.f32 %v5922, 1.442695
    %v5928 = vpow.pop %v5927
    %v5929 = vmul.f32 %v5923, 1.442695
    %v5930 = vpow.pop %v5929
    %v5931 = vmul.f32 %v5924, 1.442695
    %v5932 = vpow.pop %v5931
    %v5933 = vsel %vm4519, %v5926, 0.0
    %5934 = vadd.xlane.f32.xlu0 %v5933
    %v5935 = vpop.xlane.xlu0 %5934
    %v5936 = vsel %vm4521, %v5928, 0.0
    %5937 = vadd.xlane.f32.xlu0 %v5936
    %v5938 = vpop.xlane.xlu0 %5937
    %v5939 = vsel %vm4519, %v5930, 0.0
    %5940 = vadd.xlane.f32.xlu0 %v5939
    %v5941 = vpop.xlane.xlu0 %5940
    %v5942 = vsel %vm4521, %v5932, 0.0
    %5943 = vadd.xlane.f32.xlu0 %v5942
    %v5944 = vpop.xlane.xlu0 %5943
    %v5945 = vlog2.pop %v5935
    %v5946 = vmul.f32 %v5945, 0.6931472
    %v5947 = vlog2.pop %v5938
    %v5948 = vmul.f32 %v5947, 0.6931472
    %v5949 = vlog2.pop %v5941
    %v5950 = vmul.f32 %v5949, 0.6931472
    %v5951 = vlog2.pop %v5944
    %v5952 = vmul.f32 %v5951, 0.6931472
    %v5953 = vadd.f32 %v5946, %v5911
    %v5954 = vadd.f32 %v5948, %v5914
    %v5955 = vadd.f32 %v5950, %v5917
    %v5956 = vadd.f32 %v5952, %v5920
    %v5961 = vlaneseq
    %v5962 = vshrl.u32 %v5961, 7
    %v5963 = vsub.s32 %v4534, %v5962
    %v5964 = vrot.slane %v5953, %v5963
    %v5965 = vlaneseq
    %v5966 = vshrl.u32 %v5965, 7
    %v5967 = vsub.s32 %v4597, %v5966
    %v5968 = vrot.slane %v5954, %v5967
    %v5969 = vsel %vm4602, %v5968, %v5964
    %v5970 = vlaneseq
    %v5971 = vshrl.u32 %v5970, 7
    %v5972 = vsub.s32 %v4534, %v5971
    %v5973 = vrot.slane %v5955, %v5972
    %v5974 = vlaneseq
    %v5975 = vshrl.u32 %v5974, 7
    %v5976 = vsub.s32 %v4597, %v5975
    %v5977 = vrot.slane %v5956, %v5976
    %v5978 = vsel %vm4602, %v5977, %v5973
    %v5979 = vsel %vm4613, %v5978, %v5969
    %v5981 = vsub.f32 %v4536, %v5979
    %v5982 = vlaneseq
    %v5983 = vshrl.u32 %v5982, 7
    %v5984 = vsub.s32 0, %v5983
    %v5985 = vrot.slane %v5981, %v5984
    %5987 = vbcast.lane.b32.xlu0 %v5985, 256
    %v5988 = vpop.permute.xlu0 %5987
    %s5990 = sor.u32 256, 8
    %5991 = vbcast.lane.b32.xlu0 %v5985, %s5990
    %v5992 = vpop.permute.xlu0 %5991
    %v5993 = vlaneseq
    %v5994 = vshrl.u32 %v5993, 7
    %v5995 = vsub.s32 1, %v5994
    %v5996 = vrot.slane %v5981, %v5995
    %5998 = vbcast.lane.b32.xlu0 %v5996, 256
    %v5999 = vpop.permute.xlu0 %5998
    %s6001 = sor.u32 256, 8
    %6002 = vbcast.lane.b32.xlu0 %v5996, %s6001
    %v6003 = vpop.permute.xlu0 %6002
    %v6004 = vadd.f32 %v4529, %v5988
    %v6005 = vadd.f32 %v4530, %v5992
    %v6006 = vadd.f32 %v4531, %v5999
    %v6007 = vadd.f32 %v4532, %v6003
    %v6008 = vsel %vm4519, %v6004, -inf
    %v6009 = vsel %vm4521, %v6005, -inf
    %v6010 = vmax.f32 %v6008, %v6009
    %v6011 = vrot.slane %v6010, 4
    %v6012 = vmax.f32 %v6010, %v6011
    %v6013 = vrot.slane %v6012, 2
    %v6014 = vmax.f32 %v6012, %v6013
    %v6015 = vrot.slane %v6014, 1
    %v6016 = vmax.f32 %v6014, %v6015
    %v6017 = vsel %vm4519, %v6006, -inf
    %v6018 = vsel %vm4521, %v6007, -inf
    %v6019 = vmax.f32 %v6017, %v6018
    %v6020 = vrot.slane %v6019, 4
    %v6021 = vmax.f32 %v6019, %v6020
    %v6022 = vrot.slane %v6021, 2
    %v6023 = vmax.f32 %v6021, %v6022
    %v6024 = vrot.slane %v6023, 1
    %v6025 = vmax.f32 %v6023, %v6024
    %v6026 = vsub.f32 %v6004, %v6016
    %v6027 = vsub.f32 %v6005, %v6016
    %v6028 = vsub.f32 %v6006, %v6025
    %v6029 = vsub.f32 %v6007, %v6025
    %v6030 = vmul.f32 %v6026, 1.442695
    %v6031 = vpow.pop %v6030
    %v6032 = vmul.f32 %v6027, 1.442695
    %v6033 = vpow.pop %v6032
    %v6034 = vmul.f32 %v6028, 1.442695
    %v6035 = vpow.pop %v6034
    %v6036 = vmul.f32 %v6029, 1.442695
    %v6037 = vpow.pop %v6036
    %v6038 = vsel %vm4519, %v6031, 0.0
    %v6039 = vsel %vm4521, %v6033, 0.0
    %v6040 = vadd.f32 %v6038, %v6039
    %v6041 = vrot.slane %v6040, 4
    %v6042 = vadd.f32 %v6040, %v6041
    %v6043 = vrot.slane %v6042, 2
    %v6044 = vadd.f32 %v6042, %v6043
    %v6045 = vrot.slane %v6044, 1
    %v6046 = vadd.f32 %v6044, %v6045
    %v6047 = vsel %vm4519, %v6035, 0.0
    %v6048 = vsel %vm4521, %v6037, 0.0
    %v6049 = vadd.f32 %v6047, %v6048
    %v6050 = vrot.slane %v6049, 4
    %v6051 = vadd.f32 %v6049, %v6050
    %v6052 = vrot.slane %v6051, 2
    %v6053 = vadd.f32 %v6051, %v6052
    %v6054 = vrot.slane %v6053, 1
    %v6055 = vadd.f32 %v6053, %v6054
    %v6056 = vlog2.pop %v6046
    %v6057 = vmul.f32 %v6056, 0.6931472
    %v6058 = vlog2.pop %v6055
    %v6059 = vmul.f32 %v6058, 0.6931472
    %v6060 = vadd.f32 %v6057, %v6016
    %v6061 = vadd.f32 %v6059, %v6025
    %v6064 = vsel %vm4613, %v6061, %v6060
    %v6066 = vsub.f32 %v4536, %v6064
    %v6069 = vunpack.c.l.s4 1966171168
    %v6070 = vunpack.c.0.s8 %v6069
    %v6071 = vlaneseq
    %v6072 = vshrl.u32 %v6071, 7
    %v6073 = vsub.s32 %v6070, %v6072
    %v6074 = vrot.slane %v6066, %v6073
    %v6075 = vcombine.high %v6074, %v6074
    %v6077 = vunpack.c.l.s4 1966171168
    %v6078 = vunpack.c.0.s8 %v6077
    %v6079 = vlaneseq
    %v6080 = vshrl.u32 %v6079, 7
    %v6081 = vsub.s32 %v6078, %v6080
    %v6082 = vrot.slane %v6074, %v6081
    %v6084 = vunpack.c.l.s4 1966171168
    %v6085 = vunpack.c.0.s8 %v6084
    %v6086 = vlaneseq
    %v6087 = vshrl.u32 %v6086, 7
    %v6088 = vsub.s32 %v6085, %v6087
    %v6089 = vrot.slane %v6075, %v6088
    %v6090 = vlaneseq
    %v6091 = vshrl.u32 %v6090, 7
    %v6092 = vsub.s32 0, %v6091
    %v6093 = vrot.slane %v6082, %v6092
    %v6094 = vlaneseq
    %v6095 = vshrl.u32 %v6094, 7
    %v6096 = vsub.s32 0, %v6095
    %v6097 = vrot.slane %v6089, %v6096
    %v6100 = vadd.f32 %v4529, %v6093
    %v6101 = vadd.f32 %v4530, %v6093
    %v6102 = vadd.f32 %v4531, %v6097
    %v6103 = vadd.f32 %v4532, %v6097
    %v6104 = vsel %vm4519, %v6100, -inf
    %6105 = vmax.xlane.f32.xlu0 %v6104
    %v6106 = vpop.xlane.xlu0 %6105
    %v6107 = vsel %vm4521, %v6101, -inf
    %6108 = vmax.xlane.f32.xlu0 %v6107
    %v6109 = vpop.xlane.xlu0 %6108
    %v6110 = vsel %vm4519, %v6102, -inf
    %6111 = vmax.xlane.f32.xlu0 %v6110
    %v6112 = vpop.xlane.xlu0 %6111
    %v6113 = vsel %vm4521, %v6103, -inf
    %6114 = vmax.xlane.f32.xlu0 %v6113
    %v6115 = vpop.xlane.xlu0 %6114
    %v6116 = vsub.f32 %v6100, %v6106
    %v6117 = vsub.f32 %v6101, %v6109
    %v6118 = vsub.f32 %v6102, %v6112
    %v6119 = vsub.f32 %v6103, %v6115
    %v6120 = vmul.f32 %v6116, 1.442695
    %v6121 = vpow.pop %v6120
    %v6122 = vmul.f32 %v6117, 1.442695
    %v6123 = vpow.pop %v6122
    %v6124 = vmul.f32 %v6118, 1.442695
    %v6125 = vpow.pop %v6124
    %v6126 = vmul.f32 %v6119, 1.442695
    %v6127 = vpow.pop %v6126
    %v6128 = vsel %vm4519, %v6121, 0.0
    %6129 = vadd.xlane.f32.xlu0 %v6128
    %v6130 = vpop.xlane.xlu0 %6129
    %v6131 = vsel %vm4521, %v6123, 0.0
    %6132 = vadd.xlane.f32.xlu0 %v6131
    %v6133 = vpop.xlane.xlu0 %6132
    %v6134 = vsel %vm4519, %v6125, 0.0
    %6135 = vadd.xlane.f32.xlu0 %v6134
    %v6136 = vpop.xlane.xlu0 %6135
    %v6137 = vsel %vm4521, %v6127, 0.0
    %6138 = vadd.xlane.f32.xlu0 %v6137
    %v6139 = vpop.xlane.xlu0 %6138
    %v6140 = vlog2.pop %v6130
    %v6141 = vmul.f32 %v6140, 0.6931472
    %v6142 = vlog2.pop %v6133
    %v6143 = vmul.f32 %v6142, 0.6931472
    %v6144 = vlog2.pop %v6136
    %v6145 = vmul.f32 %v6144, 0.6931472
    %v6146 = vlog2.pop %v6139
    %v6147 = vmul.f32 %v6146, 0.6931472
    %v6148 = vadd.f32 %v6141, %v6106
    %v6149 = vadd.f32 %v6143, %v6109
    %v6150 = vadd.f32 %v6145, %v6112
    %v6151 = vadd.f32 %v6147, %v6115
    %v6156 = vlaneseq
    %v6157 = vshrl.u32 %v6156, 7
    %v6158 = vsub.s32 %v4534, %v6157
    %v6159 = vrot.slane %v6148, %v6158
    %v6160 = vlaneseq
    %v6161 = vshrl.u32 %v6160, 7
    %v6162 = vsub.s32 %v4597, %v6161
    %v6163 = vrot.slane %v6149, %v6162
    %v6164 = vsel %vm4602, %v6163, %v6159
    %v6165 = vlaneseq
    %v6166 = vshrl.u32 %v6165, 7
    %v6167 = vsub.s32 %v4534, %v6166
    %v6168 = vrot.slane %v6150, %v6167
    %v6169 = vlaneseq
    %v6170 = vshrl.u32 %v6169, 7
    %v6171 = vsub.s32 %v4597, %v6170
    %v6172 = vrot.slane %v6151, %v6171
    %v6173 = vsel %vm4602, %v6172, %v6168
    %v6174 = vsel %vm4613, %v6173, %v6164
    %v6176 = vsub.f32 %v4536, %v6174
    %v6177 = vlaneseq
    %v6178 = vshrl.u32 %v6177, 7
    %v6179 = vsub.s32 0, %v6178
    %v6180 = vrot.slane %v6176, %v6179
    %6182 = vbcast.lane.b32.xlu0 %v6180, 256
    %v6183 = vpop.permute.xlu0 %6182
    %s6185 = sor.u32 256, 8
    %6186 = vbcast.lane.b32.xlu0 %v6180, %s6185
    %v6187 = vpop.permute.xlu0 %6186
    %v6188 = vlaneseq
    %v6189 = vshrl.u32 %v6188, 7
    %v6190 = vsub.s32 1, %v6189
    %v6191 = vrot.slane %v6176, %v6190
    %6193 = vbcast.lane.b32.xlu0 %v6191, 256
    %v6194 = vpop.permute.xlu0 %6193
    %s6196 = sor.u32 256, 8
    %6197 = vbcast.lane.b32.xlu0 %v6191, %s6196
    %v6198 = vpop.permute.xlu0 %6197
    %v6199 = vadd.f32 %v4529, %v6183
    %v6200 = vadd.f32 %v4530, %v6187
    %v6201 = vadd.f32 %v4531, %v6194
    %v6202 = vadd.f32 %v4532, %v6198
    %v6203 = vsel %vm4519, %v6199, -inf
    %v6204 = vsel %vm4521, %v6200, -inf
    %v6205 = vmax.f32 %v6203, %v6204
    %v6206 = vrot.slane %v6205, 4
    %v6207 = vmax.f32 %v6205, %v6206
    %v6208 = vrot.slane %v6207, 2
    %v6209 = vmax.f32 %v6207, %v6208
    %v6210 = vrot.slane %v6209, 1
    %v6211 = vmax.f32 %v6209, %v6210
    %v6212 = vsel %vm4519, %v6201, -inf
    %v6213 = vsel %vm4521, %v6202, -inf
    %v6214 = vmax.f32 %v6212, %v6213
    %v6215 = vrot.slane %v6214, 4
    %v6216 = vmax.f32 %v6214, %v6215
    %v6217 = vrot.slane %v6216, 2
    %v6218 = vmax.f32 %v6216, %v6217
    %v6219 = vrot.slane %v6218, 1
    %v6220 = vmax.f32 %v6218, %v6219
    %v6221 = vsub.f32 %v6199, %v6211
    %v6222 = vsub.f32 %v6200, %v6211
    %v6223 = vsub.f32 %v6201, %v6220
    %v6224 = vsub.f32 %v6202, %v6220
    %v6225 = vmul.f32 %v6221, 1.442695
    %v6226 = vpow.pop %v6225
    %v6227 = vmul.f32 %v6222, 1.442695
    %v6228 = vpow.pop %v6227
    %v6229 = vmul.f32 %v6223, 1.442695
    %v6230 = vpow.pop %v6229
    %v6231 = vmul.f32 %v6224, 1.442695
    %v6232 = vpow.pop %v6231
    %v6233 = vsel %vm4519, %v6226, 0.0
    %v6234 = vsel %vm4521, %v6228, 0.0
    %v6235 = vadd.f32 %v6233, %v6234
    %v6236 = vrot.slane %v6235, 4
    %v6237 = vadd.f32 %v6235, %v6236
    %v6238 = vrot.slane %v6237, 2
    %v6239 = vadd.f32 %v6237, %v6238
    %v6240 = vrot.slane %v6239, 1
    %v6241 = vadd.f32 %v6239, %v6240
    %v6242 = vsel %vm4519, %v6230, 0.0
    %v6243 = vsel %vm4521, %v6232, 0.0
    %v6244 = vadd.f32 %v6242, %v6243
    %v6245 = vrot.slane %v6244, 4
    %v6246 = vadd.f32 %v6244, %v6245
    %v6247 = vrot.slane %v6246, 2
    %v6248 = vadd.f32 %v6246, %v6247
    %v6249 = vrot.slane %v6248, 1
    %v6250 = vadd.f32 %v6248, %v6249
    %v6251 = vlog2.pop %v6241
    %v6252 = vmul.f32 %v6251, 0.6931472
    %v6253 = vlog2.pop %v6250
    %v6254 = vmul.f32 %v6253, 0.6931472
    %v6255 = vadd.f32 %v6252, %v6211
    %v6256 = vadd.f32 %v6254, %v6220
    %v6259 = vsel %vm4613, %v6256, %v6255
    %v6261 = vsub.f32 %v4536, %v6259
    %v6264 = vunpack.c.l.s4 1966171168
    %v6265 = vunpack.c.0.s8 %v6264
    %v6266 = vlaneseq
    %v6267 = vshrl.u32 %v6266, 7
    %v6268 = vsub.s32 %v6265, %v6267
    %v6269 = vrot.slane %v6261, %v6268
    %v6270 = vcombine.high %v6269, %v6269
    %v6272 = vunpack.c.l.s4 1966171168
    %v6273 = vunpack.c.0.s8 %v6272
    %v6274 = vlaneseq
    %v6275 = vshrl.u32 %v6274, 7
    %v6276 = vsub.s32 %v6273, %v6275
    %v6277 = vrot.slane %v6269, %v6276
    %v6279 = vunpack.c.l.s4 1966171168
    %v6280 = vunpack.c.0.s8 %v6279
    %v6281 = vlaneseq
    %v6282 = vshrl.u32 %v6281, 7
    %v6283 = vsub.s32 %v6280, %v6282
    %v6284 = vrot.slane %v6270, %v6283
    %v6285 = vlaneseq
    %v6286 = vshrl.u32 %v6285, 7
    %v6287 = vsub.s32 0, %v6286
    %v6288 = vrot.slane %v6277, %v6287
    %v6289 = vlaneseq
    %v6290 = vshrl.u32 %v6289, 7
    %v6291 = vsub.s32 0, %v6290
    %v6292 = vrot.slane %v6284, %v6291
    %v6295 = vadd.f32 %v4529, %v6288
    %v6296 = vadd.f32 %v4530, %v6288
    %v6297 = vadd.f32 %v4531, %v6292
    %v6298 = vadd.f32 %v4532, %v6292
    %v6299 = vsel %vm4519, %v6295, -inf
    %6300 = vmax.xlane.f32.xlu0 %v6299
    %v6301 = vpop.xlane.xlu0 %6300
    %v6302 = vsel %vm4521, %v6296, -inf
    %6303 = vmax.xlane.f32.xlu0 %v6302
    %v6304 = vpop.xlane.xlu0 %6303
    %v6305 = vsel %vm4519, %v6297, -inf
    %6306 = vmax.xlane.f32.xlu0 %v6305
    %v6307 = vpop.xlane.xlu0 %6306
    %v6308 = vsel %vm4521, %v6298, -inf
    %6309 = vmax.xlane.f32.xlu0 %v6308
    %v6310 = vpop.xlane.xlu0 %6309
    %v6311 = vsub.f32 %v6295, %v6301
    %v6312 = vsub.f32 %v6296, %v6304
    %v6313 = vsub.f32 %v6297, %v6307
    %v6314 = vsub.f32 %v6298, %v6310
    %v6315 = vmul.f32 %v6311, 1.442695
    %v6316 = vpow.pop %v6315
    %v6317 = vmul.f32 %v6312, 1.442695
    %v6318 = vpow.pop %v6317
    %v6319 = vmul.f32 %v6313, 1.442695
    %v6320 = vpow.pop %v6319
    %v6321 = vmul.f32 %v6314, 1.442695
    %v6322 = vpow.pop %v6321
    %v6323 = vsel %vm4519, %v6316, 0.0
    %6324 = vadd.xlane.f32.xlu0 %v6323
    %v6325 = vpop.xlane.xlu0 %6324
    %v6326 = vsel %vm4521, %v6318, 0.0
    %6327 = vadd.xlane.f32.xlu0 %v6326
    %v6328 = vpop.xlane.xlu0 %6327
    %v6329 = vsel %vm4519, %v6320, 0.0
    %6330 = vadd.xlane.f32.xlu0 %v6329
    %v6331 = vpop.xlane.xlu0 %6330
    %v6332 = vsel %vm4521, %v6322, 0.0
    %6333 = vadd.xlane.f32.xlu0 %v6332
    %v6334 = vpop.xlane.xlu0 %6333
    %v6335 = vlog2.pop %v6325
    %v6336 = vmul.f32 %v6335, 0.6931472
    %v6337 = vlog2.pop %v6328
    %v6338 = vmul.f32 %v6337, 0.6931472
    %v6339 = vlog2.pop %v6331
    %v6340 = vmul.f32 %v6339, 0.6931472
    %v6341 = vlog2.pop %v6334
    %v6342 = vmul.f32 %v6341, 0.6931472
    %v6343 = vadd.f32 %v6336, %v6301
    %v6344 = vadd.f32 %v6338, %v6304
    %v6345 = vadd.f32 %v6340, %v6307
    %v6346 = vadd.f32 %v6342, %v6310
    %v6351 = vlaneseq
    %v6352 = vshrl.u32 %v6351, 7
    %v6353 = vsub.s32 %v4534, %v6352
    %v6354 = vrot.slane %v6343, %v6353
    %v6355 = vlaneseq
    %v6356 = vshrl.u32 %v6355, 7
    %v6357 = vsub.s32 %v4597, %v6356
    %v6358 = vrot.slane %v6344, %v6357
    %v6359 = vsel %vm4602, %v6358, %v6354
    %v6360 = vlaneseq
    %v6361 = vshrl.u32 %v6360, 7
    %v6362 = vsub.s32 %v4534, %v6361
    %v6363 = vrot.slane %v6345, %v6362
    %v6364 = vlaneseq
    %v6365 = vshrl.u32 %v6364, 7
    %v6366 = vsub.s32 %v4597, %v6365
    %v6367 = vrot.slane %v6346, %v6366
    %v6368 = vsel %vm4602, %v6367, %v6363
    %v6369 = vsel %vm4613, %v6368, %v6359
    %v6371 = vsub.f32 %v4536, %v6369
    %v6372 = vlaneseq
    %v6373 = vshrl.u32 %v6372, 7
    %v6374 = vsub.s32 0, %v6373
    %v6375 = vrot.slane %v6371, %v6374
    %6377 = vbcast.lane.b32.xlu0 %v6375, 256
    %v6378 = vpop.permute.xlu0 %6377
    %s6380 = sor.u32 256, 8
    %6381 = vbcast.lane.b32.xlu0 %v6375, %s6380
    %v6382 = vpop.permute.xlu0 %6381
    %v6383 = vlaneseq
    %v6384 = vshrl.u32 %v6383, 7
    %v6385 = vsub.s32 1, %v6384
    %v6386 = vrot.slane %v6371, %v6385
    %6388 = vbcast.lane.b32.xlu0 %v6386, 256
    %v6389 = vpop.permute.xlu0 %6388
    %s6391 = sor.u32 256, 8
    %6392 = vbcast.lane.b32.xlu0 %v6386, %s6391
    %v6393 = vpop.permute.xlu0 %6392
    %v6394 = vadd.f32 %v4529, %v6378
    %v6395 = vadd.f32 %v4530, %v6382
    %v6396 = vadd.f32 %v4531, %v6389
    %v6397 = vadd.f32 %v4532, %v6393
    %v6398 = vsel %vm4519, %v6394, -inf
    %v6399 = vsel %vm4521, %v6395, -inf
    %v6400 = vmax.f32 %v6398, %v6399
    %v6401 = vrot.slane %v6400, 4
    %v6402 = vmax.f32 %v6400, %v6401
    %v6403 = vrot.slane %v6402, 2
    %v6404 = vmax.f32 %v6402, %v6403
    %v6405 = vrot.slane %v6404, 1
    %v6406 = vmax.f32 %v6404, %v6405
    %v6407 = vsel %vm4519, %v6396, -inf
    %v6408 = vsel %vm4521, %v6397, -inf
    %v6409 = vmax.f32 %v6407, %v6408
    %v6410 = vrot.slane %v6409, 4
    %v6411 = vmax.f32 %v6409, %v6410
    %v6412 = vrot.slane %v6411, 2
    %v6413 = vmax.f32 %v6411, %v6412
    %v6414 = vrot.slane %v6413, 1
    %v6415 = vmax.f32 %v6413, %v6414
    %v6416 = vsub.f32 %v6394, %v6406
    %v6417 = vsub.f32 %v6395, %v6406
    %v6418 = vsub.f32 %v6396, %v6415
    %v6419 = vsub.f32 %v6397, %v6415
    %v6420 = vmul.f32 %v6416, 1.442695
    %v6421 = vpow.pop %v6420
    %v6422 = vmul.f32 %v6417, 1.442695
    %v6423 = vpow.pop %v6422
    %v6424 = vmul.f32 %v6418, 1.442695
    %v6425 = vpow.pop %v6424
    %v6426 = vmul.f32 %v6419, 1.442695
    %v6427 = vpow.pop %v6426
    %v6428 = vsel %vm4519, %v6421, 0.0
    %v6429 = vsel %vm4521, %v6423, 0.0
    %v6430 = vadd.f32 %v6428, %v6429
    %v6431 = vrot.slane %v6430, 4
    %v6432 = vadd.f32 %v6430, %v6431
    %v6433 = vrot.slane %v6432, 2
    %v6434 = vadd.f32 %v6432, %v6433
    %v6435 = vrot.slane %v6434, 1
    %v6436 = vadd.f32 %v6434, %v6435
    %v6437 = vsel %vm4519, %v6425, 0.0
    %v6438 = vsel %vm4521, %v6427, 0.0
    %v6439 = vadd.f32 %v6437, %v6438
    %v6440 = vrot.slane %v6439, 4
    %v6441 = vadd.f32 %v6439, %v6440
    %v6442 = vrot.slane %v6441, 2
    %v6443 = vadd.f32 %v6441, %v6442
    %v6444 = vrot.slane %v6443, 1
    %v6445 = vadd.f32 %v6443, %v6444
    %v6446 = vlog2.pop %v6436
    %v6447 = vmul.f32 %v6446, 0.6931472
    %v6448 = vlog2.pop %v6445
    %v6449 = vmul.f32 %v6448, 0.6931472
    %v6450 = vadd.f32 %v6447, %v6406
    %v6451 = vadd.f32 %v6449, %v6415
    %v6454 = vsel %vm4613, %v6451, %v6450
    %v6456 = vsub.f32 %v4536, %v6454
    %v6459 = vunpack.c.l.s4 1966171168
    %v6460 = vunpack.c.0.s8 %v6459
    %v6461 = vlaneseq
    %v6462 = vshrl.u32 %v6461, 7
    %v6463 = vsub.s32 %v6460, %v6462
    %v6464 = vrot.slane %v6456, %v6463
    %v6465 = vcombine.high %v6464, %v6464
    %v6467 = vunpack.c.l.s4 1966171168
    %v6468 = vunpack.c.0.s8 %v6467
    %v6469 = vlaneseq
    %v6470 = vshrl.u32 %v6469, 7
    %v6471 = vsub.s32 %v6468, %v6470
    %v6472 = vrot.slane %v6464, %v6471
    %v6474 = vunpack.c.l.s4 1966171168
    %v6475 = vunpack.c.0.s8 %v6474
    %v6476 = vlaneseq
    %v6477 = vshrl.u32 %v6476, 7
    %v6478 = vsub.s32 %v6475, %v6477
    %v6479 = vrot.slane %v6465, %v6478
    %v6480 = vlaneseq
    %v6481 = vshrl.u32 %v6480, 7
    %v6482 = vsub.s32 0, %v6481
    %v6483 = vrot.slane %v6472, %v6482
    %v6484 = vlaneseq
    %v6485 = vshrl.u32 %v6484, 7
    %v6486 = vsub.s32 0, %v6485
    %v6487 = vrot.slane %v6479, %v6486
    %v6490 = vadd.f32 %v6394, %v6483
    %v6491 = vadd.f32 %v6396, %v6487
    %v6492 = vsub.f32 %v6490, -2.7725887
    %v6493 = vsub.f32 %v6491, -2.7725887
    %v6494 = vsel %vm4525, %v6492, -inf
    %6495 = vmax.xlane.f32.xlu0 %v6494
    %v6496 = vpop.xlane.xlu0 %6495
    %v6497 = vsel %vm4525, %v6493, -inf
    %6498 = vmax.xlane.f32.xlu0 %v6497
    %v6499 = vpop.xlane.xlu0 %6498
    %v6500 = vsub.f32 %v6492, %v6496
    %v6501 = vsub.f32 %v6493, %v6499
    %v6502 = vmul.f32 %v6500, 1.442695
    %v6503 = vpow.pop %v6502
    %v6504 = vmul.f32 %v6501, 1.442695
    %v6505 = vpow.pop %v6504
    %v6506 = vsel %vm4525, %v6503, 0.0
    %6507 = vadd.xlane.f32.xlu0 %v6506
    %v6508 = vpop.xlane.xlu0 %6507
    %v6509 = vsel %vm4525, %v6505, 0.0
    %6510 = vadd.xlane.f32.xlu0 %v6509
    %v6511 = vpop.xlane.xlu0 %6510
    %v6512 = vrcp.pop %v6508
    %v6513 = vrcp.pop %v6511
    %v6514 = vmul.f32 %v6503, %v6512
    %v6515 = vmul.f32 %v6505, %v6513
    %6516 = vst.msk [vmem:[#allocation6] sm:$0xff] %vm4525, %v6514
    %6517 = vst.msk [vmem:[#allocation6 + $0x8] sm:$0xff] %vm4525, %v6515
    // Predicated region
    $region146: #{encoder_decoder_with_encoded_images_forward.1} parent=1 // pred_check
      _
    $region147: #{encoder_decoder_with_encoded_images_forward.1} parent=1 // pred_check_branch
      %6519 = sbr.rel (0) target = $region149
    $region148: #{encoder_decoder_with_encoded_images_forward.1} parent=1 // pred_region
      %s6521 = ssub.s32 256, 256
      %6522 = vsyncadd [#allocation7], %s6521
      %s6523 = sshll.u32 [#allocation6], 4
      %s6524 = int_to_ptr.vmem [resolvable:$true] %s6523
      %6529 = dma.vmem_to_hbm [thread:$0]  %s6524, 256, %s73, [#allocation7], 128, 128, 8
    $region149: #{encoder_decoder_with_encoded_images_forward.1} parent=1 // pred_fallthru
      _
    // Predicated region
    $region150: #{encoder_decoder_with_encoded_images_forward.1} parent=1 // pred_check
      _
    $region151: #{encoder_decoder_with_encoded_images_forward.1} parent=1 // pred_check_branch
      %6531 = sbr.rel (0) target = $region153
    $region152: #{encoder_decoder_with_encoded_images_forward.1} parent=1 // pred_region
      %6532 = dma.done [#allocation7], 256
    $region153: #{encoder_decoder_with_encoded_images_forward.1} parent=1 // pred_fallthru
      _
    %6533 = vsyncpa [#allocation7], 1

</llo_original>
